<compile_context>
chip_gen: v7x
topology: tpu7x:2x2x1
jax: 0.10.0
libtpu: 0.0.40
codegen_flags: <defaults>
</compile_context>

<pallas_src>
import jax
import jax.numpy as jnp
from jax import lax
from jax.experimental import pallas as pl
from jax.experimental.pallas import tpu as pltpu


# Model dimensions of the wrapped module.
CIN, COUT, KSIZE, H, W, NUM_CLASSES = 4, 8, 3, 16, 16, 10
HW = H * W


# ----------------------------------------------------------------------------
# Fused Pallas kernel: conv3x3(pad=1)+bias -> ReLU -> flatten -> Linear+bias
# ----------------------------------------------------------------------------
def _fused_forward_kernel(cols_ref, wc_ref, bc_ref, fcw_ref, fcb_ref, o_ref,
                          flat_ref):
    """Whole forward in one kernel; all operands VMEM resident.

    cols_ref : (9*CIN, N*HW)     lane-dense im2col operand (pad already folded in)
    wc_ref   : (COUT, 9*CIN)     conv weight, one column per (tap, cin)
    bc_ref   : (COUT, 1)         conv bias (column, lane-broadcast)
    fcw_ref  : (COUT*HW, NCLS)   FC weight, rows in PyTorch NCHW-flatten order
    fcb_ref  : (1, NCLS)         FC bias
    o_ref    : (N, NCLS)         logits
    flat_ref : (N, COUT*HW)      VMEM scratch: sample-major flattened activation
    """
    nb, _ = o_ref.shape
    cout = wc_ref.shape[0]
    hw = fcw_ref.shape[0] // cout

    # (1) Conv as ONE stacked-K matmul on the MXU: (COUT, 36) x (36, N*HW).
    rt = lax.dot_general(
        wc_ref[...], cols_ref[...],
        dimension_numbers=(((1,), (0,)), ((), ())),
        precision=lax.Precision.HIGHEST,
        preferred_element_type=jnp.float32)              # (COUT, N*HW)
    rt = jnp.maximum(rt + bc_ref[...], 0.0)              # bias + ReLU, f32

    # (2) Channel-major -> sample-major flatten: N*COUT aligned (1, HW)
    #     lane-block copies into the VMEM scratch.  This replaces the 16 M=1
    #     matmuls + serial adds of the old FC; it is the only layout change
    #     left in the kernel (static, 128-aligned lane slices only).
    for b in range(nb):
        for c in range(cout):
            flat_ref[b:b + 1, c * hw:(c + 1) * hw] = rt[c:c + 1, b * hw:(b + 1) * hw]

    # (3) FC as ONE matmul: (N, COUT*HW) x (COUT*HW, NCLS); the K=2048
    #     accumulation stays in the MXU accumulator.  Logits stored directly.
    logits = lax.dot_general(
        flat_ref[...], fcw_ref[...],
        dimension_numbers=(((1,), (0,)), ((), ())),
        precision=lax.Precision.HIGHEST,
        preferred_element_type=jnp.float32)              # (N, NCLS)
    o_ref[...] = (logits + fcb_ref[...]).astype(o_ref.dtype)


def _fused_pallas_forward(cols, conv_w2d, conv_b_col, fc_w_mat, fc_b_row):
    cout = conv_w2d.shape[0]
    ncls = fc_b_row.shape[1]
    hw = fc_w_mat.shape[0] // cout
    nb = cols.shape[1] // hw
    return pl.pallas_call(
        _fused_forward_kernel,
        out_shape=jax.ShapeDtypeStruct((nb, ncls), jnp.float32),
        in_specs=[pl.BlockSpec(memory_space=pltpu.MemorySpace.VMEM)] * 5,
        out_specs=pl.BlockSpec(memory_space=pltpu.MemorySpace.VMEM),
        scratch_shapes=[pltpu.VMEM((nb, cout * hw), jnp.float32)],
    )(cols, conv_w2d, conv_b_col, fc_w_mat, fc_b_row)


# ----------------------------------------------------------------------------
# Wrapped module: params (PyTorch layouts) + one-time layout preparation
# ----------------------------------------------------------------------------
def init_params(key, cin=CIN, cout=COUT, k=KSIZE, h=H, w=W, num_classes=NUM_CLASSES):
    k1, k2, k3, k4 = jax.random.split(key, 4)
    conv_w = jax.random.normal(k1, (cout, cin, k, k), jnp.float32) * 0.05
    conv_b = jax.random.normal(k2, (cout,), jnp.float32) * 0.01
    fc_in = cout * h * w
    fc_w = jax.random.normal(k3, (num_classes, fc_in), jnp.float32) * 0.02
    fc_b = jax.random.normal(k4, (num_classes,), jnp.float32) * 0.01
    return {"conv_w": conv_w, "conv_b": conv_b, "fc_w": fc_w, "fc_b": fc_b}


def prepare_params(params):
    """One-time (init-time) layout transforms so the hot path has no transposes.

    - conv weight (Cout, Cin, 3, 3) -> (Cout, 9*Cin): column index = tap*Cin + c,
      matching the stacked-K im2col operand rows.
    - FC weight (NCLS, Cout*H*W) -> transposed (Cout*H*W, NCLS); row order is
      PyTorch's NCHW flatten order (o*HW + h*W + w), which is exactly the
      order the kernel's in-kernel flatten produces.
    """
    cout, cin, k, _ = params["conv_w"].shape
    ncls, _ = params["fc_w"].shape
    conv_w2d = jnp.transpose(params["conv_w"], (0, 2, 3, 1)).reshape(cout, k * k * cin)
    conv_b_col = params["conv_b"].reshape(cout, 1)
    fc_w_mat = params["fc_w"].T                     # (COUT*H*W, NCLS)
    fc_b_row = params["fc_b"].reshape(1, ncls)
    return {"conv_w2d": conv_w2d, "conv_b_col": conv_b_col,
            "fc_w_mat": fc_w_mat, "fc_b_row": fc_b_row}


@jax.jit
def wrapped_module_forward(prep, x_nchw):
    """Conv3x3(pad=1)+bias -> ReLU -> flatten -> Linear+bias.  x: NCHW.

    Single jitted prep + pallas_call: the SAME-pad and the nine statically
    shifted views (im2col) are one fused layout-prep producing the lane-dense
    (9*CIN, N*HW) operand; there is no standalone NHWC transpose of x and no
    per-tap relayout inside the kernel.
    """
    n = x_nchw.shape[0]
    xpad = jnp.pad(x_nchw, ((0, 0), (0, 0), (1, 1), (1, 1)))          # (N,CIN,H+2,W+2)
    taps = [xpad[:, :, kh:kh + H, kw:kw + W]
            for kh in range(KSIZE) for kw in range(KSIZE)]            # 9 x (N,CIN,H,W)
    cols = jnp.stack(taps, axis=0)                                    # (9,N,CIN,H,W)
    cols = cols.transpose(0, 2, 1, 3, 4).reshape(KSIZE * KSIZE * CIN, n * H * W)
    return _fused_pallas_forward(cols, prep["conv_w2d"], prep["conv_b_col"],
                                 prep["fc_w_mat"], prep["fc_b_row"])


# ----------------------------------------------------------------------------
# GossipDataParallel forward (single-node emulation: device_ids=[0])
# ----------------------------------------------------------------------------
class GossipDataParallelJAX:
    """Single-node emulation: device_ids=[0], world_size=1, rank=0."""

    def __init__(self, params, device_ids=(0,), gamma=1.0, growth_rate=1.0):
        self.params = params
        self.prep = prepare_params(params)        # one-time layout transforms
        self.device_ids = list(device_ids)
        self.epsilon = 1e-8
        self.averaging_rate = jnp.ones((1,), jnp.float32) * gamma
        self.beta2 = jnp.ones((1,), jnp.float32) * 0.999
        self.growth_rate = growth_rate
        # gossip buffers (clone of params) -- exist for parity with __init__,
        # not used in forward.
        self.send_params = jax.tree_util.tree_map(jnp.copy, params)
        self.avg_err_sq = jax.tree_util.tree_map(jnp.zeros_like, params)
        # TODO(synk): SGD_DS gossiper / mixing / dist.* collectives (transfer_params,
        # gossip_averaging, barriers) are multi-process comm glue, not emulated.

    def scatter(self, x):
        """scatter_kwargs(dim=0): split batch into len(device_ids) chunks."""
        return jnp.array_split(x, len(self.device_ids), axis=0)

    def forward(self, x):
        # forward = module applied to the FIRST device's shard only.
        shards = self.scatter(x)
        return wrapped_module_forward(self.prep, shards[0])

    __call__ = forward


# ----------------------------------------------------------------------------
if __name__ == "__main__":
    key = jax.random.PRNGKey(0)
    kp, kx = jax.random.split(key)

    params = init_params(kp)
    x = jax.random.normal(kx, (2, CIN, H, W), jnp.float32)        # NCHW input

    model = GossipDataParallelJAX(params, device_ids=[0])
    out = jax.block_until_ready(model(x))

    # reference check against plain-JAX conv/linear (PyTorch layouts/semantics)
    ref_conv = lax.conv_general_dilated(
        x, params["conv_w"], window_strides=(1, 1), padding="SAME",
        dimension_numbers=("NCHW", "OIHW", "NCHW"),
        precision=lax.Precision.HIGHEST)
    ref_conv = jnp.maximum(ref_conv + params["conv_b"][None, :, None, None], 0.0)
    ref = jnp.dot(ref_conv.reshape(x.shape[0], -1), params["fc_w"].T,
                  precision=lax.Precision.HIGHEST) + params["fc_b"]

    assert out.shape == (2, NUM_CLASSES), out.shape
    max_err = float(jnp.max(jnp.abs(out - ref)))
    assert jnp.allclose(out, ref, atol=1e-3, rtol=1e-3), ("mismatch vs reference", max_err)

    print("KERNEL_OK")
</pallas_src>

<mosaic_0001>
module attributes {stable_mosaic.version = 11 : i64} {
  func.func @_fused_forward_kernel(%arg0: memref<36x512xf32, #tpu.memory_space<vmem>>, %arg1: memref<8x36xf32, #tpu.memory_space<vmem>>, %arg2: memref<8x1xf32, #tpu.memory_space<vmem>>, %arg3: memref<2048x10xf32, #tpu.memory_space<vmem>>, %arg4: memref<1x10xf32, #tpu.memory_space<vmem>>, %arg5: memref<2x10xf32, #tpu.memory_space<vmem>>, %arg6: memref<2x2048xf32, #tpu.memory_space<vmem>>) attributes {dimension_semantics = [], scalar_prefetch = 0 : i64, scratch_operands = 1 : i64, tpu.core_type = #tpu.core_type<tc>} {
    %c0 = arith.constant 0 : index
    %c0_0 = arith.constant 0 : index
    %0 = vector.load %arg1[%c0, %c0_0] : memref<8x36xf32, #tpu.memory_space<vmem>>, vector<8x36xf32>
    %c0_1 = arith.constant 0 : index
    %c0_2 = arith.constant 0 : index
    %1 = vector.load %arg0[%c0_1, %c0_2] : memref<36x512xf32, #tpu.memory_space<vmem>>, vector<36x512xf32>
    %cst = arith.constant dense<0.000000e+00> : vector<8x512xf32>
    %2 = tpu.matmul %0, %1, %cst {dimension_numbers = #tpu.dot_dimension_numbers<[1], [0], [0], [1], [0, 0, 1, 1], [], []>, precision = #tpu.contract_precision<fp32>} : vector<8x36xf32>, vector<36x512xf32>, vector<8x512xf32> -> vector<8x512xf32>
    %c0_3 = arith.constant 0 : index
    %c0_4 = arith.constant 0 : index
    %3 = vector.load %arg2[%c0_3, %c0_4] : memref<8x1xf32, #tpu.memory_space<vmem>>, vector<8x1xf32>
    %4 = vector.broadcast %3 : vector<8x1xf32> to vector<8x512xf32>
    %5 = arith.addf %2, %4 : vector<8x512xf32>
    %cst_5 = arith.constant 0.000000e+00 : f32
    %6 = vector.broadcast %cst_5 : f32 to vector<8x512xf32>
    %7 = arith.maximumf %5, %6 : vector<8x512xf32>
    %8 = vector.extract_strided_slice %7 {offsets = [0, 0], sizes = [1, 256], strides = [1, 1]} : vector<8x512xf32> to vector<1x256xf32>
    %c0_6 = arith.constant 0 : index
    %c0_7 = arith.constant 0 : index
    %9 = vector.load %arg6[%c0_6, %c0_7] : memref<2x2048xf32, #tpu.memory_space<vmem>>, vector<1x256xf32>
    tpu.vector_store %arg6[%c0_6, %c0_7], %8 {strides = array<i32>} : memref<2x2048xf32, #tpu.memory_space<vmem>>, vector<1x256xf32>,
    %10 = vector.extract_strided_slice %7 {offsets = [1, 0], sizes = [1, 256], strides = [1, 1]} : vector<8x512xf32> to vector<1x256xf32>
    %c0_8 = arith.constant 0 : index
    %c256 = arith.constant 256 : index
    %11 = vector.load %arg6[%c0_8, %c256] : memref<2x2048xf32, #tpu.memory_space<vmem>>, vector<1x256xf32>
    tpu.vector_store %arg6[%c0_8, %c256], %10 {strides = array<i32>} : memref<2x2048xf32, #tpu.memory_space<vmem>>, vector<1x256xf32>,
    %12 = vector.extract_strided_slice %7 {offsets = [2, 0], sizes = [1, 256], strides = [1, 1]} : vector<8x512xf32> to vector<1x256xf32>
    %c0_9 = arith.constant 0 : index
    %c512 = arith.constant 512 : index
    %13 = vector.load %arg6[%c0_9, %c512] : memref<2x2048xf32, #tpu.memory_space<vmem>>, vector<1x256xf32>
    tpu.vector_store %arg6[%c0_9, %c512], %12 {strides = array<i32>} : memref<2x2048xf32, #tpu.memory_space<vmem>>, vector<1x256xf32>,
    %14 = vector.extract_strided_slice %7 {offsets = [3, 0], sizes = [1, 256], strides = [1, 1]} : vector<8x512xf32> to vector<1x256xf32>
    %c0_10 = arith.constant 0 : index
    %c768 = arith.constant 768 : index
    %15 = vector.load %arg6[%c0_10, %c768] : memref<2x2048xf32, #tpu.memory_space<vmem>>, vector<1x256xf32>
    tpu.vector_store %arg6[%c0_10, %c768], %14 {strides = array<i32>} : memref<2x2048xf32, #tpu.memory_space<vmem>>, vector<1x256xf32>,
    %16 = vector.extract_strided_slice %7 {offsets = [4, 0], sizes = [1, 256], strides = [1, 1]} : vector<8x512xf32> to vector<1x256xf32>
    %c0_11 = arith.constant 0 : index
    %c1024 = arith.constant 1024 : index
    %17 = vector.load %arg6[%c0_11, %c1024] : memref<2x2048xf32, #tpu.memory_space<vmem>>, vector<1x256xf32>
    tpu.vector_store %arg6[%c0_11, %c1024], %16 {strides = array<i32>} : memref<2x2048xf32, #tpu.memory_space<vmem>>, vector<1x256xf32>,
    %18 = vector.extract_strided_slice %7 {offsets = [5, 0], sizes = [1, 256], strides = [1, 1]} : vector<8x512xf32> to vector<1x256xf32>
    %c0_12 = arith.constant 0 : index
    %c1280 = arith.constant 1280 : index
    %19 = vector.load %arg6[%c0_12, %c1280] : memref<2x2048xf32, #tpu.memory_space<vmem>>, vector<1x256xf32>
    tpu.vector_store %arg6[%c0_12, %c1280], %18 {strides = array<i32>} : memref<2x2048xf32, #tpu.memory_space<vmem>>, vector<1x256xf32>,
    %20 = vector.extract_strided_slice %7 {offsets = [6, 0], sizes = [1, 256], strides = [1, 1]} : vector<8x512xf32> to vector<1x256xf32>
    %c0_13 = arith.constant 0 : index
    %c1536 = arith.constant 1536 : index
    %21 = vector.load %arg6[%c0_13, %c1536] : memref<2x2048xf32, #tpu.memory_space<vmem>>, vector<1x256xf32>
    tpu.vector_store %arg6[%c0_13, %c1536], %20 {strides = array<i32>} : memref<2x2048xf32, #tpu.memory_space<vmem>>, vector<1x256xf32>,
    %22 = vector.extract_strided_slice %7 {offsets = [7, 0], sizes = [1, 256], strides = [1, 1]} : vector<8x512xf32> to vector<1x256xf32>
    %c0_14 = arith.constant 0 : index
    %c1792 = arith.constant 1792 : index
    %23 = vector.load %arg6[%c0_14, %c1792] : memref<2x2048xf32, #tpu.memory_space<vmem>>, vector<1x256xf32>
    tpu.vector_store %arg6[%c0_14, %c1792], %22 {strides = array<i32>} : memref<2x2048xf32, #tpu.memory_space<vmem>>, vector<1x256xf32>,
    %24 = vector.extract_strided_slice %7 {offsets = [0, 256], sizes = [1, 256], strides = [1, 1]} : vector<8x512xf32> to vector<1x256xf32>
    %c1 = arith.constant 1 : index
    %c0_15 = arith.constant 0 : index
    %25 = vector.load %arg6[%c1, %c0_15] : memref<2x2048xf32, #tpu.memory_space<vmem>>, vector<1x256xf32>
    tpu.vector_store %arg6[%c1, %c0_15], %24 {strides = array<i32>} : memref<2x2048xf32, #tpu.memory_space<vmem>>, vector<1x256xf32>,
    %26 = vector.extract_strided_slice %7 {offsets = [1, 256], sizes = [1, 256], strides = [1, 1]} : vector<8x512xf32> to vector<1x256xf32>
    %c1_16 = arith.constant 1 : index
    %c256_17 = arith.constant 256 : index
    %27 = vector.load %arg6[%c1_16, %c256_17] : memref<2x2048xf32, #tpu.memory_space<vmem>>, vector<1x256xf32>
    tpu.vector_store %arg6[%c1_16, %c256_17], %26 {strides = array<i32>} : memref<2x2048xf32, #tpu.memory_space<vmem>>, vector<1x256xf32>,
    %28 = vector.extract_strided_slice %7 {offsets = [2, 256], sizes = [1, 256], strides = [1, 1]} : vector<8x512xf32> to vector<1x256xf32>
    %c1_18 = arith.constant 1 : index
    %c512_19 = arith.constant 512 : index
    %29 = vector.load %arg6[%c1_18, %c512_19] : memref<2x2048xf32, #tpu.memory_space<vmem>>, vector<1x256xf32>
    tpu.vector_store %arg6[%c1_18, %c512_19], %28 {strides = array<i32>} : memref<2x2048xf32, #tpu.memory_space<vmem>>, vector<1x256xf32>,
    %30 = vector.extract_strided_slice %7 {offsets = [3, 256], sizes = [1, 256], strides = [1, 1]} : vector<8x512xf32> to vector<1x256xf32>
    %c1_20 = arith.constant 1 : index
    %c768_21 = arith.constant 768 : index
    %31 = vector.load %arg6[%c1_20, %c768_21] : memref<2x2048xf32, #tpu.memory_space<vmem>>, vector<1x256xf32>
    tpu.vector_store %arg6[%c1_20, %c768_21], %30 {strides = array<i32>} : memref<2x2048xf32, #tpu.memory_space<vmem>>, vector<1x256xf32>,
    %32 = vector.extract_strided_slice %7 {offsets = [4, 256], sizes = [1, 256], strides = [1, 1]} : vector<8x512xf32> to vector<1x256xf32>
    %c1_22 = arith.constant 1 : index
    %c1024_23 = arith.constant 1024 : index
    %33 = vector.load %arg6[%c1_22, %c1024_23] : memref<2x2048xf32, #tpu.memory_space<vmem>>, vector<1x256xf32>
    tpu.vector_store %arg6[%c1_22, %c1024_23], %32 {strides = array<i32>} : memref<2x2048xf32, #tpu.memory_space<vmem>>, vector<1x256xf32>,
    %34 = vector.extract_strided_slice %7 {offsets = [5, 256], sizes = [1, 256], strides = [1, 1]} : vector<8x512xf32> to vector<1x256xf32>
    %c1_24 = arith.constant 1 : index
    %c1280_25 = arith.constant 1280 : index
    %35 = vector.load %arg6[%c1_24, %c1280_25] : memref<2x2048xf32, #tpu.memory_space<vmem>>, vector<1x256xf32>
    tpu.vector_store %arg6[%c1_24, %c1280_25], %34 {strides = array<i32>} : memref<2x2048xf32, #tpu.memory_space<vmem>>, vector<1x256xf32>,
    %36 = vector.extract_strided_slice %7 {offsets = [6, 256], sizes = [1, 256], strides = [1, 1]} : vector<8x512xf32> to vector<1x256xf32>
    %c1_26 = arith.constant 1 : index
    %c1536_27 = arith.constant 1536 : index
    %37 = vector.load %arg6[%c1_26, %c1536_27] : memref<2x2048xf32, #tpu.memory_space<vmem>>, vector<1x256xf32>
    tpu.vector_store %arg6[%c1_26, %c1536_27], %36 {strides = array<i32>} : memref<2x2048xf32, #tpu.memory_space<vmem>>, vector<1x256xf32>,
    %38 = vector.extract_strided_slice %7 {offsets = [7, 256], sizes = [1, 256], strides = [1, 1]} : vector<8x512xf32> to vector<1x256xf32>
    %c1_28 = arith.constant 1 : index
    %c1792_29 = arith.constant 1792 : index
    %39 = vector.load %arg6[%c1_28, %c1792_29] : memref<2x2048xf32, #tpu.memory_space<vmem>>, vector<1x256xf32>
    tpu.vector_store %arg6[%c1_28, %c1792_29], %38 {strides = array<i32>} : memref<2x2048xf32, #tpu.memory_space<vmem>>, vector<1x256xf32>,
    %c0_30 = arith.constant 0 : index
    %c0_31 = arith.constant 0 : index
    %40 = vector.load %arg6[%c0_30, %c0_31] : memref<2x2048xf32, #tpu.memory_space<vmem>>, vector<2x2048xf32>
    %c0_32 = arith.constant 0 : index
    %c0_33 = arith.constant 0 : index
    %41 = vector.load %arg3[%c0_32, %c0_33] : memref<2048x10xf32, #tpu.memory_space<vmem>>, vector<2048x10xf32>
    %cst_34 = arith.constant dense<0.000000e+00> : vector<2x10xf32>
    %42 = tpu.matmul %40, %41, %cst_34 {dimension_numbers = #tpu.dot_dimension_numbers<[1], [0], [0], [1], [0, 0, 1, 1], [], []>, precision = #tpu.contract_precision<fp32>} : vector<2x2048xf32>, vector<2048x10xf32>, vector<2x10xf32> -> vector<2x10xf32>
    %c0_35 = arith.constant 0 : index
    %c0_36 = arith.constant 0 : index
    %43 = vector.load %arg4[%c0_35, %c0_36] : memref<1x10xf32, #tpu.memory_space<vmem>>, vector<1x10xf32>
    %44 = vector.broadcast %43 : vector<1x10xf32> to vector<2x10xf32>
    %45 = arith.addf %42, %44 : vector<2x10xf32>
    %c0_37 = arith.constant 0 : index
    %c0_38 = arith.constant 0 : index
    %46 = vector.load %arg5[%c0_37, %c0_38] : memref<2x10xf32, #tpu.memory_space<vmem>>, vector<2x10xf32>
    tpu.vector_store %arg5[%c0_37, %c0_38], %45 {strides = array<i32>} : memref<2x10xf32, #tpu.memory_space<vmem>>, vector<2x10xf32>,
    return
  }
}

</mosaic_0001>

<llo_original>
// kernel: wrapped_module_forward.1
$region0: #{wrapped_module_forward.1}
  #allocation0 [shape = 'u32[]', space=smem, size = 0x4, offset = 0x4, fixed_abs, tag = 'smem constant byte address 0x4 - core index']
  #allocation1 [shape = 'u32[144,128]{1,0:T(1,128)}', space=vmem, size = 0x12000, scoped, tag = 'internal scratch']
  #allocation2 [shape = 'f32[2,2048]{1,0:T(2,128)}', space=vmem, size = 0x4000, scoped, tag = 'scratch operand']
  %s0 = inlined_call_operand.vmem [shape: f32[36,512], index: 0, kind: input, shape index: {}]
  %s1 = inlined_call_operand.vmem [shape: f32[8,36], index: 1, kind: input, shape index: {}]
  %s2 = inlined_call_operand.vmem [shape: f32[8,1], index: 2, kind: input, shape index: {}]
  %s3 = inlined_call_operand.vmem [shape: f32[2048,10], index: 3, kind: input, shape index: {}]
  %s4 = inlined_call_operand.vmem [shape: f32[1,10], index: 4, kind: input, shape index: {}]
  %s5 = inlined_call_operand.hbm [shape: f32[2,10], index: 5, kind: output, shape index: {}]
  %s6 = sld [smem:[#allocation0]]
  $region30: #{wrapped_module_forward.1} parent=0
    _
  %s8 = ssub.s32 1, %s6
  %s9 = scalar_select 0, %s8, %s6
  $region1: #{wrapped_module_forward.1} parent=0
    #allocation3 [shape = 'u8[1024]{0}', space=vmem, size = 0x400, scoped, tag = 'output window, operand 0, single buffered']
    #allocation4 [shape = 's32[1]{0}', space=sflag, size = 0x4, scoped, tag = 'scoped memory for wrapped_module_forward.1']
    %10 = vsyncpa [#allocation4], 0
    // Predicated region
    $region2: #{wrapped_module_forward.1} parent=1 // pred_check
      _
    $region3: #{wrapped_module_forward.1} parent=1 // pred_check_branch
      %12 = sbr.rel (0) target = $region5
    $region4: #{wrapped_module_forward.1} parent=1 // pred_region
      _
    $region5: #{wrapped_module_forward.1} parent=1 // pred_fallthru
      _
    // Predicated region
    $region6: #{wrapped_module_forward.1} parent=1 // pred_check
      _
    $region7: #{wrapped_module_forward.1} parent=1 // pred_check_branch
      %14 = sbr.rel (0) target = $region9
    $region8: #{wrapped_module_forward.1} parent=1 // pred_region
      _
    $region9: #{wrapped_module_forward.1} parent=1 // pred_fallthru
      _
    // Predicated region
    $region10: #{wrapped_module_forward.1} parent=1 // pred_check
      _
    $region11: #{wrapped_module_forward.1} parent=1 // pred_check_branch
      %16 = sbr.rel (0) target = $region13
    $region12: #{wrapped_module_forward.1} parent=1 // pred_region
      _
    $region13: #{wrapped_module_forward.1} parent=1 // pred_fallthru
      _
    // Predicated region
    $region14: #{wrapped_module_forward.1} parent=1 // pred_check
      _
    $region15: #{wrapped_module_forward.1} parent=1 // pred_check_branch
      %18 = sbr.rel (0) target = $region17
    $region16: #{wrapped_module_forward.1} parent=1 // pred_region
      _
    $region17: #{wrapped_module_forward.1} parent=1 // pred_fallthru
      _
    // Predicated region
    $region18: #{wrapped_module_forward.1} parent=1 // pred_check
      _
    $region19: #{wrapped_module_forward.1} parent=1 // pred_check_branch
      %20 = sbr.rel (0) target = $region21
    $region20: #{wrapped_module_forward.1} parent=1 // pred_region
      _
    $region21: #{wrapped_module_forward.1} parent=1 // pred_fallthru
      _
    %v21 = vld [vmem:[%s1] sm:$0xff]
    %v22 = vld [vmem:[%s0] sm:$0xff]
    %v23 = vld [vmem:[%s0 + $0x8] sm:$0xff]
    %v24 = vld [vmem:[%s0 + $0x10] sm:$0xff]
    %v25 = vld [vmem:[%s0 + $0x18] sm:$0xff]
    %v26 = vld [vmem:[%s0 + $0x20] sm:$0xff]
    %v27 = vld [vmem:[%s0 + $0x28] sm:$0xff]
    %v28 = vld [vmem:[%s0 + $0x30] sm:$0xff]
    %v29 = vld [vmem:[%s0 + $0x38] sm:$0xff]
    %v30 = vld [vmem:[%s0 + $0x40] sm:$0xff]
    %v31 = vld [vmem:[%s0 + $0x48] sm:$0xff]
    %v32 = vld [vmem:[%s0 + $0x50] sm:$0xff]
    %v33 = vld [vmem:[%s0 + $0x58] sm:$0xff]
    %v34 = vld [vmem:[%s0 + $0x60] sm:$0xff]
    %v35 = vld [vmem:[%s0 + $0x68] sm:$0xff]
    %v36 = vld [vmem:[%s0 + $0x70] sm:$0xff]
    %v37 = vld [vmem:[%s0 + $0x78] sm:$0xff]
    %v38 = vld [vmem:[%s0 + $0x80] sm:$0xf]
    %v39 = vld [vmem:[%s0 + $0x88] sm:$0xf]
    %v40 = vld [vmem:[%s0 + $0x90] sm:$0xf]
    %v41 = vld [vmem:[%s0 + $0x98] sm:$0xf]
    %v42 = vld [vmem:[%s2] sm:$0xff]
    %44 = vset.pattern.permute.xlu0 0
    %45 = vperm.xlu0 %44, %v42
    %v46 = vpop.permute.xlu0 %45
    %vm48 = vcmask 293888
    %v50 = vsel %vm48, %v21, 0
    %vm52 = vcmask 1043456
    %v54 = vsel %vm52, %v38, 0
    %v57 = vsel %vm52, %v39, 0
    %v60 = vsel %vm52, %v40, 0
    %v63 = vsel %vm52, %v41, 0
    %v65 = vand.u32 %v23, 4294901760
    %66 = vmatprep.subr.mxu0 %v65
    %v67 = vand.u32 %v22, 4294901760
    %68 = vmatpush1.msra.mxu0 %v67
    %v69 = vand.u32 %v27, 4294901760
    %70 = vmatprep.subr.mxu0 %v69
    %v71 = vand.u32 %v26, 4294901760
    %72 = vmatpush1.msra.mxu0 %v71
    %v73 = vand.u32 %v31, 4294901760
    %74 = vmatprep.subr.mxu0 %v73
    %v75 = vand.u32 %v30, 4294901760
    %76 = vmatpush1.msra.mxu0 %v75
    %v77 = vand.u32 %v35, 4294901760
    %78 = vmatprep.subr.mxu0 %v77
    %v79 = vand.u32 %v34, 4294901760
    %80 = vmatpush1.msra.mxu0 %v79
    %v81 = vand.u32 %v57, 4294901760
    %82 = vmatprep.subr.mxu0 %v81
    %v83 = vand.u32 %v54, 4294901760
    %84 = vmatpush1.msra.mxu0 %v83
    %85 = vmatprep.subr.mxu0 0.0
    %86 = vmatpush1.msra.mxu0 0.0
    %87 = vmatprep.subr.mxu0 0.0
    %88 = vmatpush1.msra.mxu0 0.0
    %89 = vmatprep.subr.mxu0 0.0
    %90 = vmatpush1.msra.mxu0 0.0
    %91 = vmatprep.subr.mxu0 0.0
    %92 = vmatpush1.msra.mxu0 0.0
    %93 = vmatprep.subr.mxu0 0.0
    %94 = vmatpush1.msra.mxu0 0.0
    %95 = vmatprep.subr.mxu0 0.0
    %96 = vmatpush1.msra.mxu0 0.0
    %97 = vmatprep.subr.mxu0 0.0
    %98 = vmatpush1.msra.mxu0 0.0
    %99 = vmatprep.subr.mxu0 0.0
    %100 = vmatpush1.msra.mxu0 0.0
    %101 = vmatprep.subr.mxu0 0.0
    %102 = vmatpush1.msra.mxu0 0.0
    %103 = vmatprep.subr.mxu0 0.0
    %104 = vmatpush1.msra.mxu0 0.0
    %105 = vmatprep.subr.mxu0 0.0
    %106 = vmatpush1.msra.mxu0 0.0
    %107 = vmatprep.subr.mxu0 0.0
    %108 = vmatpush1.msra.mxu0 0.0
    %109 = vmatprep.subr.mxu0 0.0
    %110 = vmatpush1.msra.mxu0 0.0
    %111 = vmatprep.subr.mxu0 0.0
    %112 = vmatpush1.msra.mxu0 0.0
    %113 = vmatprep.subr.mxu0 0.0
    %114 = vmatpush1.msra.mxu0 0.0
    %115 = vmatprep.subr.mxu0 0.0
    %116 = vmatpush1.msra.mxu0 0.0
    %117 = vmatprep.subr.mxu0 0.0
    %118 = vmatpush1.msra.mxu0 0.0
    %119 = vmatprep.subr.mxu0 0.0
    %120 = vmatpush1.msra.mxu0 0.0
    %121 = vmatprep.subr.mxu0 0.0
    %122 = vmatpush1.msra.mxu0 0.0
    %123 = vmatprep.subr.mxu0 0.0
    %124 = vmatpush1.msra.mxu0 0.0
    %125 = vmatprep.subr.mxu0 0.0
    %126 = vmatpush1.msra.mxu0 0.0
    %127 = vmatprep.subr.mxu0 0.0
    %128 = vmatpush1.msra.mxu0 0.0
    %129 = vmatprep.subr.mxu0 0.0
    %130 = vmatpush1.msra.mxu0 0.0
    %131 = vmatprep.subr.mxu0 0.0
    %132 = vmatpush1.msra.mxu0 0.0
    %133 = vmatprep.subr.mxu0 0.0
    %134 = vmatpush1.msra.mxu0 0.0
    %135 = vmatprep.subr.mxu0 0.0
    %136 = vmatpush1.msra.mxu0 0.0
    %137 = vmatprep.subr.mxu0 0.0
    %138 = vmatpush1.msra.mxu0 0.0
    %139 = vmatprep.mubr.f32.mxu0 0.0
    %v140 = vand.u32 %v50, 4294901760
    %v141 = vsub.f32 %v50, %v140
    %v142 = vand.u32 %v141, 4294901760
    %v143 = vsub.f32 %v141, %v142
    %v144 = vand.u32 %v143, 4294901760
    %145 = vmatmul.mubr.f32.gmra.mrb[0].mxu0 %v144
    %v146 = vpop.f32.mrb[0].mxu0
    %v147 = vadd.f32 %v46, %v146
    %v148 = vpop.f32.mrb[0].mxu0
    %v149 = vadd.f32 %v46, %v148
    %150 = vdwg.mxu0
    %v151 = vand.u32 %v23, 4294901760
    %v152 = vsub.f32 %v23, %v151
    %v153 = vand.u32 %v152, 4294901760
    %v154 = vsub.f32 %v152, %v153
    %v155 = vand.u32 %v154, 4294901760
    %156 = vmatprep.subr.mxu0 %v155
    %v157 = vand.u32 %v22, 4294901760
    %v158 = vsub.f32 %v22, %v157
    %v159 = vand.u32 %v158, 4294901760
    %v160 = vsub.f32 %v158, %v159
    %v161 = vand.u32 %v160, 4294901760
    %162 = vmatpush1.msra.mxu0 %v161
    %v163 = vand.u32 %v27, 4294901760
    %v164 = vsub.f32 %v27, %v163
    %v165 = vand.u32 %v164, 4294901760
    %v166 = vsub.f32 %v164, %v165
    %v167 = vand.u32 %v166, 4294901760
    %168 = vmatprep.subr.mxu0 %v167
    %v169 = vand.u32 %v26, 4294901760
    %v170 = vsub.f32 %v26, %v169
    %v171 = vand.u32 %v170, 4294901760
    %v172 = vsub.f32 %v170, %v171
    %v173 = vand.u32 %v172, 4294901760
    %174 = vmatpush1.msra.mxu0 %v173
    %v175 = vand.u32 %v31, 4294901760
    %v176 = vsub.f32 %v31, %v175
    %v177 = vand.u32 %v176, 4294901760
    %v178 = vsub.f32 %v176, %v177
    %v179 = vand.u32 %v178, 4294901760
    %180 = vmatprep.subr.mxu0 %v179
    %v181 = vand.u32 %v30, 4294901760
    %v182 = vsub.f32 %v30, %v181
    %v183 = vand.u32 %v182, 4294901760
    %v184 = vsub.f32 %v182, %v183
    %v185 = vand.u32 %v184, 4294901760
    %186 = vmatpush1.msra.mxu0 %v185
    %v187 = vand.u32 %v35, 4294901760
    %v188 = vsub.f32 %v35, %v187
    %v189 = vand.u32 %v188, 4294901760
    %v190 = vsub.f32 %v188, %v189
    %v191 = vand.u32 %v190, 4294901760
    %192 = vmatprep.subr.mxu0 %v191
    %v193 = vand.u32 %v34, 4294901760
    %v194 = vsub.f32 %v34, %v193
    %v195 = vand.u32 %v194, 4294901760
    %v196 = vsub.f32 %v194, %v195
    %v197 = vand.u32 %v196, 4294901760
    %198 = vmatpush1.msra.mxu0 %v197
    %v199 = vand.u32 %v57, 4294901760
    %v200 = vsub.f32 %v57, %v199
    %v201 = vand.u32 %v200, 4294901760
    %v202 = vsub.f32 %v200, %v201
    %v203 = vand.u32 %v202, 4294901760
    %204 = vmatprep.subr.mxu0 %v203
    %v205 = vand.u32 %v54, 4294901760
    %v206 = vsub.f32 %v54, %v205
    %v207 = vand.u32 %v206, 4294901760
    %v208 = vsub.f32 %v206, %v207
    %v209 = vand.u32 %v208, 4294901760
    %210 = vmatpush1.msra.mxu0 %v209
    %211 = vmatprep.subr.mxu0 0.0
    %212 = vmatpush1.msra.mxu0 0.0
    %213 = vmatprep.subr.mxu0 0.0
    %214 = vmatpush1.msra.mxu0 0.0
    %215 = vmatprep.subr.mxu0 0.0
    %216 = vmatpush1.msra.mxu0 0.0
    %217 = vmatprep.subr.mxu0 0.0
    %218 = vmatpush1.msra.mxu0 0.0
    %219 = vmatprep.subr.mxu0 0.0
    %220 = vmatpush1.msra.mxu0 0.0
    %221 = vmatprep.subr.mxu0 0.0
    %222 = vmatpush1.msra.mxu0 0.0
    %223 = vmatprep.subr.mxu0 0.0
    %224 = vmatpush1.msra.mxu0 0.0
    %225 = vmatprep.subr.mxu0 0.0
    %226 = vmatpush1.msra.mxu0 0.0
    %227 = vmatprep.subr.mxu0 0.0
    %228 = vmatpush1.msra.mxu0 0.0
    %229 = vmatprep.subr.mxu0 0.0
    %230 = vmatpush1.msra.mxu0 0.0
    %231 = vmatprep.subr.mxu0 0.0
    %232 = vmatpush1.msra.mxu0 0.0
    %233 = vmatprep.subr.mxu0 0.0
    %234 = vmatpush1.msra.mxu0 0.0
    %235 = vmatprep.subr.mxu0 0.0
    %236 = vmatpush1.msra.mxu0 0.0
    %237 = vmatprep.subr.mxu0 0.0
    %238 = vmatpush1.msra.mxu0 0.0
    %239 = vmatprep.subr.mxu0 0.0
    %240 = vmatpush1.msra.mxu0 0.0
    %241 = vmatprep.subr.mxu0 0.0
    %242 = vmatpush1.msra.mxu0 0.0
    %243 = vmatprep.subr.mxu0 0.0
    %244 = vmatpush1.msra.mxu0 0.0
    %245 = vmatprep.subr.mxu0 0.0
    %246 = vmatpush1.msra.mxu0 0.0
    %247 = vmatprep.subr.mxu0 0.0
    %248 = vmatpush1.msra.mxu0 0.0
    %249 = vmatprep.subr.mxu0 0.0
    %250 = vmatpush1.msra.mxu0 0.0
    %251 = vmatprep.subr.mxu0 0.0
    %252 = vmatpush1.msra.mxu0 0.0
    %253 = vmatprep.subr.mxu0 0.0
    %254 = vmatpush1.msra.mxu0 0.0
    %255 = vmatprep.subr.mxu0 0.0
    %256 = vmatpush1.msra.mxu0 0.0
    %257 = vmatprep.subr.mxu0 0.0
    %258 = vmatpush1.msra.mxu0 0.0
    %259 = vmatprep.subr.mxu0 0.0
    %260 = vmatpush1.msra.mxu0 0.0
    %261 = vmatprep.subr.mxu0 0.0
    %262 = vmatpush1.msra.mxu0 0.0
    %263 = vmatprep.subr.mxu0 0.0
    %264 = vmatpush1.msra.mxu0 0.0
    %265 = vmatprep.mubr.f32.mxu0 0.0
    %v266 = vand.u32 %v50, 4294901760
    %267 = vmatmul.mubr.f32.gmra.mrb[0].mxu0 %v266
    %v268 = vpop.f32.mrb[0].mxu0
    %v269 = vadd.f32 %v147, %v268
    %v270 = vpop.f32.mrb[0].mxu0
    %v271 = vadd.f32 %v149, %v270
    %272 = vdwg.mxu0
    %v273 = vand.u32 %v23, 4294901760
    %v274 = vsub.f32 %v23, %v273
    %275 = vmatprep.subr.mxu0 %v274
    %v276 = vand.u32 %v22, 4294901760
    %v277 = vsub.f32 %v22, %v276
    %278 = vmatpush1.msra.mxu0 %v277
    %v279 = vand.u32 %v27, 4294901760
    %v280 = vsub.f32 %v27, %v279
    %281 = vmatprep.subr.mxu0 %v280
    %v282 = vand.u32 %v26, 4294901760
    %v283 = vsub.f32 %v26, %v282
    %284 = vmatpush1.msra.mxu0 %v283
    %v285 = vand.u32 %v31, 4294901760
    %v286 = vsub.f32 %v31, %v285
    %287 = vmatprep.subr.mxu0 %v286
    %v288 = vand.u32 %v30, 4294901760
    %v289 = vsub.f32 %v30, %v288
    %290 = vmatpush1.msra.mxu0 %v289
    %v291 = vand.u32 %v35, 4294901760
    %v292 = vsub.f32 %v35, %v291
    %293 = vmatprep.subr.mxu0 %v292
    %v294 = vand.u32 %v34, 4294901760
    %v295 = vsub.f32 %v34, %v294
    %296 = vmatpush1.msra.mxu0 %v295
    %v297 = vand.u32 %v57, 4294901760
    %v298 = vsub.f32 %v57, %v297
    %299 = vmatprep.subr.mxu0 %v298
    %v300 = vand.u32 %v54, 4294901760
    %v301 = vsub.f32 %v54, %v300
    %302 = vmatpush1.msra.mxu0 %v301
    %303 = vmatprep.subr.mxu0 0.0
    %304 = vmatpush1.msra.mxu0 0.0
    %305 = vmatprep.subr.mxu0 0.0
    %306 = vmatpush1.msra.mxu0 0.0
    %307 = vmatprep.subr.mxu0 0.0
    %308 = vmatpush1.msra.mxu0 0.0
    %309 = vmatprep.subr.mxu0 0.0
    %310 = vmatpush1.msra.mxu0 0.0
    %311 = vmatprep.subr.mxu0 0.0
    %312 = vmatpush1.msra.mxu0 0.0
    %313 = vmatprep.subr.mxu0 0.0
    %314 = vmatpush1.msra.mxu0 0.0
    %315 = vmatprep.subr.mxu0 0.0
    %316 = vmatpush1.msra.mxu0 0.0
    %317 = vmatprep.subr.mxu0 0.0
    %318 = vmatpush1.msra.mxu0 0.0
    %319 = vmatprep.subr.mxu0 0.0
    %320 = vmatpush1.msra.mxu0 0.0
    %321 = vmatprep.subr.mxu0 0.0
    %322 = vmatpush1.msra.mxu0 0.0
    %323 = vmatprep.subr.mxu0 0.0
    %324 = vmatpush1.msra.mxu0 0.0
    %325 = vmatprep.subr.mxu0 0.0
    %326 = vmatpush1.msra.mxu0 0.0
    %327 = vmatprep.subr.mxu0 0.0
    %328 = vmatpush1.msra.mxu0 0.0
    %329 = vmatprep.subr.mxu0 0.0
    %330 = vmatpush1.msra.mxu0 0.0
    %331 = vmatprep.subr.mxu0 0.0
    %332 = vmatpush1.msra.mxu0 0.0
    %333 = vmatprep.subr.mxu0 0.0
    %334 = vmatpush1.msra.mxu0 0.0
    %335 = vmatprep.subr.mxu0 0.0
    %336 = vmatpush1.msra.mxu0 0.0
    %337 = vmatprep.subr.mxu0 0.0
    %338 = vmatpush1.msra.mxu0 0.0
    %339 = vmatprep.subr.mxu0 0.0
    %340 = vmatpush1.msra.mxu0 0.0
    %341 = vmatprep.subr.mxu0 0.0
    %342 = vmatpush1.msra.mxu0 0.0
    %343 = vmatprep.subr.mxu0 0.0
    %344 = vmatpush1.msra.mxu0 0.0
    %345 = vmatprep.subr.mxu0 0.0
    %346 = vmatpush1.msra.mxu0 0.0
    %347 = vmatprep.subr.mxu0 0.0
    %348 = vmatpush1.msra.mxu0 0.0
    %349 = vmatprep.subr.mxu0 0.0
    %350 = vmatpush1.msra.mxu0 0.0
    %351 = vmatprep.subr.mxu0 0.0
    %352 = vmatpush1.msra.mxu0 0.0
    %353 = vmatprep.subr.mxu0 0.0
    %354 = vmatpush1.msra.mxu0 0.0
    %355 = vmatprep.subr.mxu0 0.0
    %356 = vmatpush1.msra.mxu0 0.0
    %357 = vmatprep.mubr.f32.mxu0 0.0
    %v358 = vand.u32 %v50, 4294901760
    %v359 = vsub.f32 %v50, %v358
    %360 = vmatmul.mubr.f32.gmra.mrb[0].mxu0 %v359
    %v361 = vpop.f32.mrb[0].mxu0
    %v362 = vadd.f32 %v269, %v361
    %v363 = vpop.f32.mrb[0].mxu0
    %v364 = vadd.f32 %v271, %v363
    %365 = vdwg.mxu0
    %v366 = vand.u32 %v23, 4294901760
    %367 = vmatprep.subr.mxu0 %v366
    %v368 = vand.u32 %v22, 4294901760
    %369 = vmatpush1.msra.mxu0 %v368
    %v370 = vand.u32 %v27, 4294901760
    %371 = vmatprep.subr.mxu0 %v370
    %v372 = vand.u32 %v26, 4294901760
    %373 = vmatpush1.msra.mxu0 %v372
    %v374 = vand.u32 %v31, 4294901760
    %375 = vmatprep.subr.mxu0 %v374
    %v376 = vand.u32 %v30, 4294901760
    %377 = vmatpush1.msra.mxu0 %v376
    %v378 = vand.u32 %v35, 4294901760
    %379 = vmatprep.subr.mxu0 %v378
    %v380 = vand.u32 %v34, 4294901760
    %381 = vmatpush1.msra.mxu0 %v380
    %v382 = vand.u32 %v57, 4294901760
    %383 = vmatprep.subr.mxu0 %v382
    %v384 = vand.u32 %v54, 4294901760
    %385 = vmatpush1.msra.mxu0 %v384
    %386 = vmatprep.subr.mxu0 0.0
    %387 = vmatpush1.msra.mxu0 0.0
    %388 = vmatprep.subr.mxu0 0.0
    %389 = vmatpush1.msra.mxu0 0.0
    %390 = vmatprep.subr.mxu0 0.0
    %391 = vmatpush1.msra.mxu0 0.0
    %392 = vmatprep.subr.mxu0 0.0
    %393 = vmatpush1.msra.mxu0 0.0
    %394 = vmatprep.subr.mxu0 0.0
    %395 = vmatpush1.msra.mxu0 0.0
    %396 = vmatprep.subr.mxu0 0.0
    %397 = vmatpush1.msra.mxu0 0.0
    %398 = vmatprep.subr.mxu0 0.0
    %399 = vmatpush1.msra.mxu0 0.0
    %400 = vmatprep.subr.mxu0 0.0
    %401 = vmatpush1.msra.mxu0 0.0
    %402 = vmatprep.subr.mxu0 0.0
    %403 = vmatpush1.msra.mxu0 0.0
    %404 = vmatprep.subr.mxu0 0.0
    %405 = vmatpush1.msra.mxu0 0.0
    %406 = vmatprep.subr.mxu0 0.0
    %407 = vmatpush1.msra.mxu0 0.0
    %408 = vmatprep.subr.mxu0 0.0
    %409 = vmatpush1.msra.mxu0 0.0
    %410 = vmatprep.subr.mxu0 0.0
    %411 = vmatpush1.msra.mxu0 0.0
    %412 = vmatprep.subr.mxu0 0.0
    %413 = vmatpush1.msra.mxu0 0.0
    %414 = vmatprep.subr.mxu0 0.0
    %415 = vmatpush1.msra.mxu0 0.0
    %416 = vmatprep.subr.mxu0 0.0
    %417 = vmatpush1.msra.mxu0 0.0
    %418 = vmatprep.subr.mxu0 0.0
    %419 = vmatpush1.msra.mxu0 0.0
    %420 = vmatprep.subr.mxu0 0.0
    %421 = vmatpush1.msra.mxu0 0.0
    %422 = vmatprep.subr.mxu0 0.0
    %423 = vmatpush1.msra.mxu0 0.0
    %424 = vmatprep.subr.mxu0 0.0
    %425 = vmatpush1.msra.mxu0 0.0
    %426 = vmatprep.subr.mxu0 0.0
    %427 = vmatpush1.msra.mxu0 0.0
    %428 = vmatprep.subr.mxu0 0.0
    %429 = vmatpush1.msra.mxu0 0.0
    %430 = vmatprep.subr.mxu0 0.0
    %431 = vmatpush1.msra.mxu0 0.0
    %432 = vmatprep.subr.mxu0 0.0
    %433 = vmatpush1.msra.mxu0 0.0
    %434 = vmatprep.subr.mxu0 0.0
    %435 = vmatpush1.msra.mxu0 0.0
    %436 = vmatprep.subr.mxu0 0.0
    %437 = vmatpush1.msra.mxu0 0.0
    %438 = vmatprep.subr.mxu0 0.0
    %439 = vmatpush1.msra.mxu0 0.0
    %440 = vmatprep.mubr.f32.mxu0 0.0
    %v441 = vand.u32 %v50, 4294901760
    %v442 = vsub.f32 %v50, %v441
    %v443 = vand.u32 %v442, 4294901760
    %444 = vmatmul.mubr.f32.gmra.mrb[0].mxu0 %v443
    %v445 = vpop.f32.mrb[0].mxu0
    %v446 = vadd.f32 %v362, %v445
    %v447 = vpop.f32.mrb[0].mxu0
    %v448 = vadd.f32 %v364, %v447
    %449 = vdwg.mxu0
    %v450 = vand.u32 %v23, 4294901760
    %v451 = vsub.f32 %v23, %v450
    %v452 = vand.u32 %v451, 4294901760
    %453 = vmatprep.subr.mxu0 %v452
    %v454 = vand.u32 %v22, 4294901760
    %v455 = vsub.f32 %v22, %v454
    %v456 = vand.u32 %v455, 4294901760
    %457 = vmatpush1.msra.mxu0 %v456
    %v458 = vand.u32 %v27, 4294901760
    %v459 = vsub.f32 %v27, %v458
    %v460 = vand.u32 %v459, 4294901760
    %461 = vmatprep.subr.mxu0 %v460
    %v462 = vand.u32 %v26, 4294901760
    %v463 = vsub.f32 %v26, %v462
    %v464 = vand.u32 %v463, 4294901760
    %465 = vmatpush1.msra.mxu0 %v464
    %v466 = vand.u32 %v31, 4294901760
    %v467 = vsub.f32 %v31, %v466
    %v468 = vand.u32 %v467, 4294901760
    %469 = vmatprep.subr.mxu0 %v468
    %v470 = vand.u32 %v30, 4294901760
    %v471 = vsub.f32 %v30, %v470
    %v472 = vand.u32 %v471, 4294901760
    %473 = vmatpush1.msra.mxu0 %v472
    %v474 = vand.u32 %v35, 4294901760
    %v475 = vsub.f32 %v35, %v474
    %v476 = vand.u32 %v475, 4294901760
    %477 = vmatprep.subr.mxu0 %v476
    %v478 = vand.u32 %v34, 4294901760
    %v479 = vsub.f32 %v34, %v478
    %v480 = vand.u32 %v479, 4294901760
    %481 = vmatpush1.msra.mxu0 %v480
    %v482 = vand.u32 %v57, 4294901760
    %v483 = vsub.f32 %v57, %v482
    %v484 = vand.u32 %v483, 4294901760
    %485 = vmatprep.subr.mxu0 %v484
    %v486 = vand.u32 %v54, 4294901760
    %v487 = vsub.f32 %v54, %v486
    %v488 = vand.u32 %v487, 4294901760
    %489 = vmatpush1.msra.mxu0 %v488
    %490 = vmatprep.subr.mxu0 0.0
    %491 = vmatpush1.msra.mxu0 0.0
    %492 = vmatprep.subr.mxu0 0.0
    %493 = vmatpush1.msra.mxu0 0.0
    %494 = vmatprep.subr.mxu0 0.0
    %495 = vmatpush1.msra.mxu0 0.0
    %496 = vmatprep.subr.mxu0 0.0
    %497 = vmatpush1.msra.mxu0 0.0
    %498 = vmatprep.subr.mxu0 0.0
    %499 = vmatpush1.msra.mxu0 0.0
    %500 = vmatprep.subr.mxu0 0.0
    %501 = vmatpush1.msra.mxu0 0.0
    %502 = vmatprep.subr.mxu0 0.0
    %503 = vmatpush1.msra.mxu0 0.0
    %504 = vmatprep.subr.mxu0 0.0
    %505 = vmatpush1.msra.mxu0 0.0
    %506 = vmatprep.subr.mxu0 0.0
    %507 = vmatpush1.msra.mxu0 0.0
    %508 = vmatprep.subr.mxu0 0.0
    %509 = vmatpush1.msra.mxu0 0.0
    %510 = vmatprep.subr.mxu0 0.0
    %511 = vmatpush1.msra.mxu0 0.0
    %512 = vmatprep.subr.mxu0 0.0
    %513 = vmatpush1.msra.mxu0 0.0
    %514 = vmatprep.subr.mxu0 0.0
    %515 = vmatpush1.msra.mxu0 0.0
    %516 = vmatprep.subr.mxu0 0.0
    %517 = vmatpush1.msra.mxu0 0.0
    %518 = vmatprep.subr.mxu0 0.0
    %519 = vmatpush1.msra.mxu0 0.0
    %520 = vmatprep.subr.mxu0 0.0
    %521 = vmatpush1.msra.mxu0 0.0
    %522 = vmatprep.subr.mxu0 0.0
    %523 = vmatpush1.msra.mxu0 0.0
    %524 = vmatprep.subr.mxu0 0.0
    %525 = vmatpush1.msra.mxu0 0.0
    %526 = vmatprep.subr.mxu0 0.0
    %527 = vmatpush1.msra.mxu0 0.0
    %528 = vmatprep.subr.mxu0 0.0
    %529 = vmatpush1.msra.mxu0 0.0
    %530 = vmatprep.subr.mxu0 0.0
    %531 = vmatpush1.msra.mxu0 0.0
    %532 = vmatprep.subr.mxu0 0.0
    %533 = vmatpush1.msra.mxu0 0.0
    %534 = vmatprep.subr.mxu0 0.0
    %535 = vmatpush1.msra.mxu0 0.0
    %536 = vmatprep.subr.mxu0 0.0
    %537 = vmatpush1.msra.mxu0 0.0
    %538 = vmatprep.subr.mxu0 0.0
    %539 = vmatpush1.msra.mxu0 0.0
    %540 = vmatprep.subr.mxu0 0.0
    %541 = vmatpush1.msra.mxu0 0.0
    %542 = vmatprep.subr.mxu0 0.0
    %543 = vmatpush1.msra.mxu0 0.0
    %544 = vmatprep.mubr.f32.mxu0 0.0
    %v545 = vand.u32 %v50, 4294901760
    %546 = vmatmul.mubr.f32.gmra.mrb[0].mxu0 %v545
    %v547 = vpop.f32.mrb[0].mxu0
    %v548 = vadd.f32 %v446, %v547
    %v549 = vpop.f32.mrb[0].mxu0
    %v550 = vadd.f32 %v448, %v549
    %551 = vdwg.mxu0
    %v552 = vand.u32 %v23, 4294901760
    %553 = vmatprep.subr.mxu0 %v552
    %v554 = vand.u32 %v22, 4294901760
    %555 = vmatpush1.msra.mxu0 %v554
    %v556 = vand.u32 %v27, 4294901760
    %557 = vmatprep.subr.mxu0 %v556
    %v558 = vand.u32 %v26, 4294901760
    %559 = vmatpush1.msra.mxu0 %v558
    %v560 = vand.u32 %v31, 4294901760
    %561 = vmatprep.subr.mxu0 %v560
    %v562 = vand.u32 %v30, 4294901760
    %563 = vmatpush1.msra.mxu0 %v562
    %v564 = vand.u32 %v35, 4294901760
    %565 = vmatprep.subr.mxu0 %v564
    %v566 = vand.u32 %v34, 4294901760
    %567 = vmatpush1.msra.mxu0 %v566
    %v568 = vand.u32 %v57, 4294901760
    %569 = vmatprep.subr.mxu0 %v568
    %v570 = vand.u32 %v54, 4294901760
    %571 = vmatpush1.msra.mxu0 %v570
    %572 = vmatprep.subr.mxu0 0.0
    %573 = vmatpush1.msra.mxu0 0.0
    %574 = vmatprep.subr.mxu0 0.0
    %575 = vmatpush1.msra.mxu0 0.0
    %576 = vmatprep.subr.mxu0 0.0
    %577 = vmatpush1.msra.mxu0 0.0
    %578 = vmatprep.subr.mxu0 0.0
    %579 = vmatpush1.msra.mxu0 0.0
    %580 = vmatprep.subr.mxu0 0.0
    %581 = vmatpush1.msra.mxu0 0.0
    %582 = vmatprep.subr.mxu0 0.0
    %583 = vmatpush1.msra.mxu0 0.0
    %584 = vmatprep.subr.mxu0 0.0
    %585 = vmatpush1.msra.mxu0 0.0
    %586 = vmatprep.subr.mxu0 0.0
    %587 = vmatpush1.msra.mxu0 0.0
    %588 = vmatprep.subr.mxu0 0.0
    %589 = vmatpush1.msra.mxu0 0.0
    %590 = vmatprep.subr.mxu0 0.0
    %591 = vmatpush1.msra.mxu0 0.0
    %592 = vmatprep.subr.mxu0 0.0
    %593 = vmatpush1.msra.mxu0 0.0
    %594 = vmatprep.subr.mxu0 0.0
    %595 = vmatpush1.msra.mxu0 0.0
    %596 = vmatprep.subr.mxu0 0.0
    %597 = vmatpush1.msra.mxu0 0.0
    %598 = vmatprep.subr.mxu0 0.0
    %599 = vmatpush1.msra.mxu0 0.0
    %600 = vmatprep.subr.mxu0 0.0
    %601 = vmatpush1.msra.mxu0 0.0
    %602 = vmatprep.subr.mxu0 0.0
    %603 = vmatpush1.msra.mxu0 0.0
    %604 = vmatprep.subr.mxu0 0.0
    %605 = vmatpush1.msra.mxu0 0.0
    %606 = vmatprep.subr.mxu0 0.0
    %607 = vmatpush1.msra.mxu0 0.0
    %608 = vmatprep.subr.mxu0 0.0
    %609 = vmatpush1.msra.mxu0 0.0
    %610 = vmatprep.subr.mxu0 0.0
    %611 = vmatpush1.msra.mxu0 0.0
    %612 = vmatprep.subr.mxu0 0.0
    %613 = vmatpush1.msra.mxu0 0.0
    %614 = vmatprep.subr.mxu0 0.0
    %615 = vmatpush1.msra.mxu0 0.0
    %616 = vmatprep.subr.mxu0 0.0
    %617 = vmatpush1.msra.mxu0 0.0
    %618 = vmatprep.subr.mxu0 0.0
    %619 = vmatpush1.msra.mxu0 0.0
    %620 = vmatprep.subr.mxu0 0.0
    %621 = vmatpush1.msra.mxu0 0.0
    %622 = vmatprep.subr.mxu0 0.0
    %623 = vmatpush1.msra.mxu0 0.0
    %624 = vmatprep.subr.mxu0 0.0
    %625 = vmatpush1.msra.mxu0 0.0
    %626 = vmatprep.mubr.f32.mxu0 0.0
    %v627 = vand.u32 %v50, 4294901760
    %628 = vmatmul.mubr.f32.gmra.mrb[0].mxu0 %v627
    %v629 = vpop.f32.mrb[0].mxu0
    %v630 = vadd.f32 %v548, %v629
    %v631 = vpop.f32.mrb[0].mxu0
    %v632 = vadd.f32 %v550, %v631
    %633 = vdwg.mxu0
    %v634 = vand.u32 %v25, 4294901760
    %635 = vmatprep.subr.mxu0 %v634
    %v636 = vand.u32 %v24, 4294901760
    %637 = vmatpush1.msra.mxu0 %v636
    %v638 = vand.u32 %v29, 4294901760
    %639 = vmatprep.subr.mxu0 %v638
    %v640 = vand.u32 %v28, 4294901760
    %641 = vmatpush1.msra.mxu0 %v640
    %v642 = vand.u32 %v33, 4294901760
    %643 = vmatprep.subr.mxu0 %v642
    %v644 = vand.u32 %v32, 4294901760
    %645 = vmatpush1.msra.mxu0 %v644
    %v646 = vand.u32 %v37, 4294901760
    %647 = vmatprep.subr.mxu0 %v646
    %v648 = vand.u32 %v36, 4294901760
    %649 = vmatpush1.msra.mxu0 %v648
    %v650 = vand.u32 %v63, 4294901760
    %651 = vmatprep.subr.mxu0 %v650
    %v652 = vand.u32 %v60, 4294901760
    %653 = vmatpush1.msra.mxu0 %v652
    %654 = vmatprep.subr.mxu0 0.0
    %655 = vmatpush1.msra.mxu0 0.0
    %656 = vmatprep.subr.mxu0 0.0
    %657 = vmatpush1.msra.mxu0 0.0
    %658 = vmatprep.subr.mxu0 0.0
    %659 = vmatpush1.msra.mxu0 0.0
    %660 = vmatprep.subr.mxu0 0.0
    %661 = vmatpush1.msra.mxu0 0.0
    %662 = vmatprep.subr.mxu0 0.0
    %663 = vmatpush1.msra.mxu0 0.0
    %664 = vmatprep.subr.mxu0 0.0
    %665 = vmatpush1.msra.mxu0 0.0
    %666 = vmatprep.subr.mxu0 0.0
    %667 = vmatpush1.msra.mxu0 0.0
    %668 = vmatprep.subr.mxu0 0.0
    %669 = vmatpush1.msra.mxu0 0.0
    %670 = vmatprep.subr.mxu0 0.0
    %671 = vmatpush1.msra.mxu0 0.0
    %672 = vmatprep.subr.mxu0 0.0
    %673 = vmatpush1.msra.mxu0 0.0
    %674 = vmatprep.subr.mxu0 0.0
    %675 = vmatpush1.msra.mxu0 0.0
    %676 = vmatprep.subr.mxu0 0.0
    %677 = vmatpush1.msra.mxu0 0.0
    %678 = vmatprep.subr.mxu0 0.0
    %679 = vmatpush1.msra.mxu0 0.0
    %680 = vmatprep.subr.mxu0 0.0
    %681 = vmatpush1.msra.mxu0 0.0
    %682 = vmatprep.subr.mxu0 0.0
    %683 = vmatpush1.msra.mxu0 0.0
    %684 = vmatprep.subr.mxu0 0.0
    %685 = vmatpush1.msra.mxu0 0.0
    %686 = vmatprep.subr.mxu0 0.0
    %687 = vmatpush1.msra.mxu0 0.0
    %688 = vmatprep.subr.mxu0 0.0
    %689 = vmatpush1.msra.mxu0 0.0
    %690 = vmatprep.subr.mxu0 0.0
    %691 = vmatpush1.msra.mxu0 0.0
    %692 = vmatprep.subr.mxu0 0.0
    %693 = vmatpush1.msra.mxu0 0.0
    %694 = vmatprep.subr.mxu0 0.0
    %695 = vmatpush1.msra.mxu0 0.0
    %696 = vmatprep.subr.mxu0 0.0
    %697 = vmatpush1.msra.mxu0 0.0
    %698 = vmatprep.subr.mxu0 0.0
    %699 = vmatpush1.msra.mxu0 0.0
    %700 = vmatprep.subr.mxu0 0.0
    %701 = vmatpush1.msra.mxu0 0.0
    %702 = vmatprep.subr.mxu0 0.0
    %703 = vmatpush1.msra.mxu0 0.0
    %704 = vmatprep.subr.mxu0 0.0
    %705 = vmatpush1.msra.mxu0 0.0
    %706 = vmatprep.subr.mxu0 0.0
    %707 = vmatpush1.msra.mxu0 0.0
    %708 = vmatprep.mubr.f32.mxu0 0.0
    %v709 = vand.u32 %v50, 4294901760
    %v710 = vsub.f32 %v50, %v709
    %v711 = vand.u32 %v710, 4294901760
    %v712 = vsub.f32 %v710, %v711
    %v713 = vand.u32 %v712, 4294901760
    %714 = vmatmul.mubr.f32.gmra.mrb[0].mxu0 %v713
    %v715 = vpop.f32.mrb[0].mxu0
    %v716 = vadd.f32 %v46, %v715
    %v717 = vpop.f32.mrb[0].mxu0
    %v718 = vadd.f32 %v46, %v717
    %719 = vdwg.mxu0
    %v720 = vand.u32 %v25, 4294901760
    %v721 = vsub.f32 %v25, %v720
    %v722 = vand.u32 %v721, 4294901760
    %v723 = vsub.f32 %v721, %v722
    %v724 = vand.u32 %v723, 4294901760
    %725 = vmatprep.subr.mxu0 %v724
    %v726 = vand.u32 %v24, 4294901760
    %v727 = vsub.f32 %v24, %v726
    %v728 = vand.u32 %v727, 4294901760
    %v729 = vsub.f32 %v727, %v728
    %v730 = vand.u32 %v729, 4294901760
    %731 = vmatpush1.msra.mxu0 %v730
    %v732 = vand.u32 %v29, 4294901760
    %v733 = vsub.f32 %v29, %v732
    %v734 = vand.u32 %v733, 4294901760
    %v735 = vsub.f32 %v733, %v734
    %v736 = vand.u32 %v735, 4294901760
    %737 = vmatprep.subr.mxu0 %v736
    %v738 = vand.u32 %v28, 4294901760
    %v739 = vsub.f32 %v28, %v738
    %v740 = vand.u32 %v739, 4294901760
    %v741 = vsub.f32 %v739, %v740
    %v742 = vand.u32 %v741, 4294901760
    %743 = vmatpush1.msra.mxu0 %v742
    %v744 = vand.u32 %v33, 4294901760
    %v745 = vsub.f32 %v33, %v744
    %v746 = vand.u32 %v745, 4294901760
    %v747 = vsub.f32 %v745, %v746
    %v748 = vand.u32 %v747, 4294901760
    %749 = vmatprep.subr.mxu0 %v748
    %v750 = vand.u32 %v32, 4294901760
    %v751 = vsub.f32 %v32, %v750
    %v752 = vand.u32 %v751, 4294901760
    %v753 = vsub.f32 %v751, %v752
    %v754 = vand.u32 %v753, 4294901760
    %755 = vmatpush1.msra.mxu0 %v754
    %v756 = vand.u32 %v37, 4294901760
    %v757 = vsub.f32 %v37, %v756
    %v758 = vand.u32 %v757, 4294901760
    %v759 = vsub.f32 %v757, %v758
    %v760 = vand.u32 %v759, 4294901760
    %761 = vmatprep.subr.mxu0 %v760
    %v762 = vand.u32 %v36, 4294901760
    %v763 = vsub.f32 %v36, %v762
    %v764 = vand.u32 %v763, 4294901760
    %v765 = vsub.f32 %v763, %v764
    %v766 = vand.u32 %v765, 4294901760
    %767 = vmatpush1.msra.mxu0 %v766
    %v768 = vand.u32 %v63, 4294901760
    %v769 = vsub.f32 %v63, %v768
    %v770 = vand.u32 %v769, 4294901760
    %v771 = vsub.f32 %v769, %v770
    %v772 = vand.u32 %v771, 4294901760
    %773 = vmatprep.subr.mxu0 %v772
    %v774 = vand.u32 %v60, 4294901760
    %v775 = vsub.f32 %v60, %v774
    %v776 = vand.u32 %v775, 4294901760
    %v777 = vsub.f32 %v775, %v776
    %v778 = vand.u32 %v777, 4294901760
    %779 = vmatpush1.msra.mxu0 %v778
    %780 = vmatprep.subr.mxu0 0.0
    %781 = vmatpush1.msra.mxu0 0.0
    %782 = vmatprep.subr.mxu0 0.0
    %783 = vmatpush1.msra.mxu0 0.0
    %784 = vmatprep.subr.mxu0 0.0
    %785 = vmatpush1.msra.mxu0 0.0
    %786 = vmatprep.subr.mxu0 0.0
    %787 = vmatpush1.msra.mxu0 0.0
    %788 = vmatprep.subr.mxu0 0.0
    %789 = vmatpush1.msra.mxu0 0.0
    %790 = vmatprep.subr.mxu0 0.0
    %791 = vmatpush1.msra.mxu0 0.0
    %792 = vmatprep.subr.mxu0 0.0
    %793 = vmatpush1.msra.mxu0 0.0
    %794 = vmatprep.subr.mxu0 0.0
    %795 = vmatpush1.msra.mxu0 0.0
    %796 = vmatprep.subr.mxu0 0.0
    %797 = vmatpush1.msra.mxu0 0.0
    %798 = vmatprep.subr.mxu0 0.0
    %799 = vmatpush1.msra.mxu0 0.0
    %800 = vmatprep.subr.mxu0 0.0
    %801 = vmatpush1.msra.mxu0 0.0
    %802 = vmatprep.subr.mxu0 0.0
    %803 = vmatpush1.msra.mxu0 0.0
    %804 = vmatprep.subr.mxu0 0.0
    %805 = vmatpush1.msra.mxu0 0.0
    %806 = vmatprep.subr.mxu0 0.0
    %807 = vmatpush1.msra.mxu0 0.0
    %808 = vmatprep.subr.mxu0 0.0
    %809 = vmatpush1.msra.mxu0 0.0
    %810 = vmatprep.subr.mxu0 0.0
    %811 = vmatpush1.msra.mxu0 0.0
    %812 = vmatprep.subr.mxu0 0.0
    %813 = vmatpush1.msra.mxu0 0.0
    %814 = vmatprep.subr.mxu0 0.0
    %815 = vmatpush1.msra.mxu0 0.0
    %816 = vmatprep.subr.mxu0 0.0
    %817 = vmatpush1.msra.mxu0 0.0
    %818 = vmatprep.subr.mxu0 0.0
    %819 = vmatpush1.msra.mxu0 0.0
    %820 = vmatprep.subr.mxu0 0.0
    %821 = vmatpush1.msra.mxu0 0.0
    %822 = vmatprep.subr.mxu0 0.0
    %823 = vmatpush1.msra.mxu0 0.0
    %824 = vmatprep.subr.mxu0 0.0
    %825 = vmatpush1.msra.mxu0 0.0
    %826 = vmatprep.subr.mxu0 0.0
    %827 = vmatpush1.msra.mxu0 0.0
    %828 = vmatprep.subr.mxu0 0.0
    %829 = vmatpush1.msra.mxu0 0.0
    %830 = vmatprep.subr.mxu0 0.0
    %831 = vmatpush1.msra.mxu0 0.0
    %832 = vmatprep.subr.mxu0 0.0
    %833 = vmatpush1.msra.mxu0 0.0
    %834 = vmatprep.mubr.f32.mxu0 0.0
    %v835 = vand.u32 %v50, 4294901760
    %836 = vmatmul.mubr.f32.gmra.mrb[0].mxu0 %v835
    %v837 = vpop.f32.mrb[0].mxu0
    %v838 = vadd.f32 %v716, %v837
    %v839 = vpop.f32.mrb[0].mxu0
    %v840 = vadd.f32 %v718, %v839
    %841 = vdwg.mxu0
    %v842 = vand.u32 %v25, 4294901760
    %v843 = vsub.f32 %v25, %v842
    %844 = vmatprep.subr.mxu0 %v843
    %v845 = vand.u32 %v24, 4294901760
    %v846 = vsub.f32 %v24, %v845
    %847 = vmatpush1.msra.mxu0 %v846
    %v848 = vand.u32 %v29, 4294901760
    %v849 = vsub.f32 %v29, %v848
    %850 = vmatprep.subr.mxu0 %v849
    %v851 = vand.u32 %v28, 4294901760
    %v852 = vsub.f32 %v28, %v851
    %853 = vmatpush1.msra.mxu0 %v852
    %v854 = vand.u32 %v33, 4294901760
    %v855 = vsub.f32 %v33, %v854
    %856 = vmatprep.subr.mxu0 %v855
    %v857 = vand.u32 %v32, 4294901760
    %v858 = vsub.f32 %v32, %v857
    %859 = vmatpush1.msra.mxu0 %v858
    %v860 = vand.u32 %v37, 4294901760
    %v861 = vsub.f32 %v37, %v860
    %862 = vmatprep.subr.mxu0 %v861
    %v863 = vand.u32 %v36, 4294901760
    %v864 = vsub.f32 %v36, %v863
    %865 = vmatpush1.msra.mxu0 %v864
    %v866 = vand.u32 %v63, 4294901760
    %v867 = vsub.f32 %v63, %v866
    %868 = vmatprep.subr.mxu0 %v867
    %v869 = vand.u32 %v60, 4294901760
    %v870 = vsub.f32 %v60, %v869
    %871 = vmatpush1.msra.mxu0 %v870
    %872 = vmatprep.subr.mxu0 0.0
    %873 = vmatpush1.msra.mxu0 0.0
    %874 = vmatprep.subr.mxu0 0.0
    %875 = vmatpush1.msra.mxu0 0.0
    %876 = vmatprep.subr.mxu0 0.0
    %877 = vmatpush1.msra.mxu0 0.0
    %878 = vmatprep.subr.mxu0 0.0
    %879 = vmatpush1.msra.mxu0 0.0
    %880 = vmatprep.subr.mxu0 0.0
    %881 = vmatpush1.msra.mxu0 0.0
    %882 = vmatprep.subr.mxu0 0.0
    %883 = vmatpush1.msra.mxu0 0.0
    %884 = vmatprep.subr.mxu0 0.0
    %885 = vmatpush1.msra.mxu0 0.0
    %886 = vmatprep.subr.mxu0 0.0
    %887 = vmatpush1.msra.mxu0 0.0
    %888 = vmatprep.subr.mxu0 0.0
    %889 = vmatpush1.msra.mxu0 0.0
    %890 = vmatprep.subr.mxu0 0.0
    %891 = vmatpush1.msra.mxu0 0.0
    %892 = vmatprep.subr.mxu0 0.0
    %893 = vmatpush1.msra.mxu0 0.0
    %894 = vmatprep.subr.mxu0 0.0
    %895 = vmatpush1.msra.mxu0 0.0
    %896 = vmatprep.subr.mxu0 0.0
    %897 = vmatpush1.msra.mxu0 0.0
    %898 = vmatprep.subr.mxu0 0.0
    %899 = vmatpush1.msra.mxu0 0.0
    %900 = vmatprep.subr.mxu0 0.0
    %901 = vmatpush1.msra.mxu0 0.0
    %902 = vmatprep.subr.mxu0 0.0
    %903 = vmatpush1.msra.mxu0 0.0
    %904 = vmatprep.subr.mxu0 0.0
    %905 = vmatpush1.msra.mxu0 0.0
    %906 = vmatprep.subr.mxu0 0.0
    %907 = vmatpush1.msra.mxu0 0.0
    %908 = vmatprep.subr.mxu0 0.0
    %909 = vmatpush1.msra.mxu0 0.0
    %910 = vmatprep.subr.mxu0 0.0
    %911 = vmatpush1.msra.mxu0 0.0
    %912 = vmatprep.subr.mxu0 0.0
    %913 = vmatpush1.msra.mxu0 0.0
    %914 = vmatprep.subr.mxu0 0.0
    %915 = vmatpush1.msra.mxu0 0.0
    %916 = vmatprep.subr.mxu0 0.0
    %917 = vmatpush1.msra.mxu0 0.0
    %918 = vmatprep.subr.mxu0 0.0
    %919 = vmatpush1.msra.mxu0 0.0
    %920 = vmatprep.subr.mxu0 0.0
    %921 = vmatpush1.msra.mxu0 0.0
    %922 = vmatprep.subr.mxu0 0.0
    %923 = vmatpush1.msra.mxu0 0.0
    %924 = vmatprep.subr.mxu0 0.0
    %925 = vmatpush1.msra.mxu0 0.0
    %926 = vmatprep.mubr.f32.mxu0 0.0
    %v927 = vand.u32 %v50, 4294901760
    %v928 = vsub.f32 %v50, %v927
    %929 = vmatmul.mubr.f32.gmra.mrb[0].mxu0 %v928
    %v930 = vpop.f32.mrb[0].mxu0
    %v931 = vadd.f32 %v838, %v930
    %v932 = vpop.f32.mrb[0].mxu0
    %v933 = vadd.f32 %v840, %v932
    %934 = vdwg.mxu0
    %v935 = vand.u32 %v25, 4294901760
    %936 = vmatprep.subr.mxu0 %v935
    %v937 = vand.u32 %v24, 4294901760
    %938 = vmatpush1.msra.mxu0 %v937
    %v939 = vand.u32 %v29, 4294901760
    %940 = vmatprep.subr.mxu0 %v939
    %v941 = vand.u32 %v28, 4294901760
    %942 = vmatpush1.msra.mxu0 %v941
    %v943 = vand.u32 %v33, 4294901760
    %944 = vmatprep.subr.mxu0 %v943
    %v945 = vand.u32 %v32, 4294901760
    %946 = vmatpush1.msra.mxu0 %v945
    %v947 = vand.u32 %v37, 4294901760
    %948 = vmatprep.subr.mxu0 %v947
    %v949 = vand.u32 %v36, 4294901760
    %950 = vmatpush1.msra.mxu0 %v949
    %v951 = vand.u32 %v63, 4294901760
    %952 = vmatprep.subr.mxu0 %v951
    %v953 = vand.u32 %v60, 4294901760
    %954 = vmatpush1.msra.mxu0 %v953
    %955 = vmatprep.subr.mxu0 0.0
    %956 = vmatpush1.msra.mxu0 0.0
    %957 = vmatprep.subr.mxu0 0.0
    %958 = vmatpush1.msra.mxu0 0.0
    %959 = vmatprep.subr.mxu0 0.0
    %960 = vmatpush1.msra.mxu0 0.0
    %961 = vmatprep.subr.mxu0 0.0
    %962 = vmatpush1.msra.mxu0 0.0
    %963 = vmatprep.subr.mxu0 0.0
    %964 = vmatpush1.msra.mxu0 0.0
    %965 = vmatprep.subr.mxu0 0.0
    %966 = vmatpush1.msra.mxu0 0.0
    %967 = vmatprep.subr.mxu0 0.0
    %968 = vmatpush1.msra.mxu0 0.0
    %969 = vmatprep.subr.mxu0 0.0
    %970 = vmatpush1.msra.mxu0 0.0
    %971 = vmatprep.subr.mxu0 0.0
    %972 = vmatpush1.msra.mxu0 0.0
    %973 = vmatprep.subr.mxu0 0.0
    %974 = vmatpush1.msra.mxu0 0.0
    %975 = vmatprep.subr.mxu0 0.0
    %976 = vmatpush1.msra.mxu0 0.0
    %977 = vmatprep.subr.mxu0 0.0
    %978 = vmatpush1.msra.mxu0 0.0
    %979 = vmatprep.subr.mxu0 0.0
    %980 = vmatpush1.msra.mxu0 0.0
    %981 = vmatprep.subr.mxu0 0.0
    %982 = vmatpush1.msra.mxu0 0.0
    %983 = vmatprep.subr.mxu0 0.0
    %984 = vmatpush1.msra.mxu0 0.0
    %985 = vmatprep.subr.mxu0 0.0
    %986 = vmatpush1.msra.mxu0 0.0
    %987 = vmatprep.subr.mxu0 0.0
    %988 = vmatpush1.msra.mxu0 0.0
    %989 = vmatprep.subr.mxu0 0.0
    %990 = vmatpush1.msra.mxu0 0.0
    %991 = vmatprep.subr.mxu0 0.0
    %992 = vmatpush1.msra.mxu0 0.0
    %993 = vmatprep.subr.mxu0 0.0
    %994 = vmatpush1.msra.mxu0 0.0
    %995 = vmatprep.subr.mxu0 0.0
    %996 = vmatpush1.msra.mxu0 0.0
    %997 = vmatprep.subr.mxu0 0.0
    %998 = vmatpush1.msra.mxu0 0.0
    %999 = vmatprep.subr.mxu0 0.0
    %1000 = vmatpush1.msra.mxu0 0.0
    %1001 = vmatprep.subr.mxu0 0.0
    %1002 = vmatpush1.msra.mxu0 0.0
    %1003 = vmatprep.subr.mxu0 0.0
    %1004 = vmatpush1.msra.mxu0 0.0
    %1005 = vmatprep.subr.mxu0 0.0
    %1006 = vmatpush1.msra.mxu0 0.0
    %1007 = vmatprep.subr.mxu0 0.0
    %1008 = vmatpush1.msra.mxu0 0.0
    %1009 = vmatprep.mubr.f32.mxu0 0.0
    %v1010 = vand.u32 %v50, 4294901760
    %v1011 = vsub.f32 %v50, %v1010
    %v1012 = vand.u32 %v1011, 4294901760
    %1013 = vmatmul.mubr.f32.gmra.mrb[0].mxu0 %v1012
    %v1014 = vpop.f32.mrb[0].mxu0
    %v1015 = vadd.f32 %v931, %v1014
    %v1016 = vpop.f32.mrb[0].mxu0
    %v1017 = vadd.f32 %v933, %v1016
    %1018 = vdwg.mxu0
    %v1019 = vand.u32 %v25, 4294901760
    %v1020 = vsub.f32 %v25, %v1019
    %v1021 = vand.u32 %v1020, 4294901760
    %1022 = vmatprep.subr.mxu0 %v1021
    %v1023 = vand.u32 %v24, 4294901760
    %v1024 = vsub.f32 %v24, %v1023
    %v1025 = vand.u32 %v1024, 4294901760
    %1026 = vmatpush1.msra.mxu0 %v1025
    %v1027 = vand.u32 %v29, 4294901760
    %v1028 = vsub.f32 %v29, %v1027
    %v1029 = vand.u32 %v1028, 4294901760
    %1030 = vmatprep.subr.mxu0 %v1029
    %v1031 = vand.u32 %v28, 4294901760
    %v1032 = vsub.f32 %v28, %v1031
    %v1033 = vand.u32 %v1032, 4294901760
    %1034 = vmatpush1.msra.mxu0 %v1033
    %v1035 = vand.u32 %v33, 4294901760
    %v1036 = vsub.f32 %v33, %v1035
    %v1037 = vand.u32 %v1036, 4294901760
    %1038 = vmatprep.subr.mxu0 %v1037
    %v1039 = vand.u32 %v32, 4294901760
    %v1040 = vsub.f32 %v32, %v1039
    %v1041 = vand.u32 %v1040, 4294901760
    %1042 = vmatpush1.msra.mxu0 %v1041
    %v1043 = vand.u32 %v37, 4294901760
    %v1044 = vsub.f32 %v37, %v1043
    %v1045 = vand.u32 %v1044, 4294901760
    %1046 = vmatprep.subr.mxu0 %v1045
    %v1047 = vand.u32 %v36, 4294901760
    %v1048 = vsub.f32 %v36, %v1047
    %v1049 = vand.u32 %v1048, 4294901760
    %1050 = vmatpush1.msra.mxu0 %v1049
    %v1051 = vand.u32 %v63, 4294901760
    %v1052 = vsub.f32 %v63, %v1051
    %v1053 = vand.u32 %v1052, 4294901760
    %1054 = vmatprep.subr.mxu0 %v1053
    %v1055 = vand.u32 %v60, 4294901760
    %v1056 = vsub.f32 %v60, %v1055
    %v1057 = vand.u32 %v1056, 4294901760
    %1058 = vmatpush1.msra.mxu0 %v1057
    %1059 = vmatprep.subr.mxu0 0.0
    %1060 = vmatpush1.msra.mxu0 0.0
    %1061 = vmatprep.subr.mxu0 0.0
    %1062 = vmatpush1.msra.mxu0 0.0
    %1063 = vmatprep.subr.mxu0 0.0
    %1064 = vmatpush1.msra.mxu0 0.0
    %1065 = vmatprep.subr.mxu0 0.0
    %1066 = vmatpush1.msra.mxu0 0.0
    %1067 = vmatprep.subr.mxu0 0.0
    %1068 = vmatpush1.msra.mxu0 0.0
    %1069 = vmatprep.subr.mxu0 0.0
    %1070 = vmatpush1.msra.mxu0 0.0
    %1071 = vmatprep.subr.mxu0 0.0
    %1072 = vmatpush1.msra.mxu0 0.0
    %1073 = vmatprep.subr.mxu0 0.0
    %1074 = vmatpush1.msra.mxu0 0.0
    %1075 = vmatprep.subr.mxu0 0.0
    %1076 = vmatpush1.msra.mxu0 0.0
    %1077 = vmatprep.subr.mxu0 0.0
    %1078 = vmatpush1.msra.mxu0 0.0
    %1079 = vmatprep.subr.mxu0 0.0
    %1080 = vmatpush1.msra.mxu0 0.0
    %1081 = vmatprep.subr.mxu0 0.0
    %1082 = vmatpush1.msra.mxu0 0.0
    %1083 = vmatprep.subr.mxu0 0.0
    %1084 = vmatpush1.msra.mxu0 0.0
    %1085 = vmatprep.subr.mxu0 0.0
    %1086 = vmatpush1.msra.mxu0 0.0
    %1087 = vmatprep.subr.mxu0 0.0
    %1088 = vmatpush1.msra.mxu0 0.0
    %1089 = vmatprep.subr.mxu0 0.0
    %1090 = vmatpush1.msra.mxu0 0.0
    %1091 = vmatprep.subr.mxu0 0.0
    %1092 = vmatpush1.msra.mxu0 0.0
    %1093 = vmatprep.subr.mxu0 0.0
    %1094 = vmatpush1.msra.mxu0 0.0
    %1095 = vmatprep.subr.mxu0 0.0
    %1096 = vmatpush1.msra.mxu0 0.0
    %1097 = vmatprep.subr.mxu0 0.0
    %1098 = vmatpush1.msra.mxu0 0.0
    %1099 = vmatprep.subr.mxu0 0.0
    %1100 = vmatpush1.msra.mxu0 0.0
    %1101 = vmatprep.subr.mxu0 0.0
    %1102 = vmatpush1.msra.mxu0 0.0
    %1103 = vmatprep.subr.mxu0 0.0
    %1104 = vmatpush1.msra.mxu0 0.0
    %1105 = vmatprep.subr.mxu0 0.0
    %1106 = vmatpush1.msra.mxu0 0.0
    %1107 = vmatprep.subr.mxu0 0.0
    %1108 = vmatpush1.msra.mxu0 0.0
    %1109 = vmatprep.subr.mxu0 0.0
    %1110 = vmatpush1.msra.mxu0 0.0
    %1111 = vmatprep.subr.mxu0 0.0
    %1112 = vmatpush1.msra.mxu0 0.0
    %1113 = vmatprep.mubr.f32.mxu0 0.0
    %v1114 = vand.u32 %v50, 4294901760
    %1115 = vmatmul.mubr.f32.gmra.mrb[0].mxu0 %v1114
    %v1116 = vpop.f32.mrb[0].mxu0
    %v1117 = vadd.f32 %v1015, %v1116
    %v1118 = vpop.f32.mrb[0].mxu0
    %v1119 = vadd.f32 %v1017, %v1118
    %1120 = vdwg.mxu0
    %v1121 = vand.u32 %v25, 4294901760
    %1122 = vmatprep.subr.mxu0 %v1121
    %v1123 = vand.u32 %v24, 4294901760
    %1124 = vmatpush1.msra.mxu0 %v1123
    %v1125 = vand.u32 %v29, 4294901760
    %1126 = vmatprep.subr.mxu0 %v1125
    %v1127 = vand.u32 %v28, 4294901760
    %1128 = vmatpush1.msra.mxu0 %v1127
    %v1129 = vand.u32 %v33, 4294901760
    %1130 = vmatprep.subr.mxu0 %v1129
    %v1131 = vand.u32 %v32, 4294901760
    %1132 = vmatpush1.msra.mxu0 %v1131
    %v1133 = vand.u32 %v37, 4294901760
    %1134 = vmatprep.subr.mxu0 %v1133
    %v1135 = vand.u32 %v36, 4294901760
    %1136 = vmatpush1.msra.mxu0 %v1135
    %v1137 = vand.u32 %v63, 4294901760
    %1138 = vmatprep.subr.mxu0 %v1137
    %v1139 = vand.u32 %v60, 4294901760
    %1140 = vmatpush1.msra.mxu0 %v1139
    %1141 = vmatprep.subr.mxu0 0.0
    %1142 = vmatpush1.msra.mxu0 0.0
    %1143 = vmatprep.subr.mxu0 0.0
    %1144 = vmatpush1.msra.mxu0 0.0
    %1145 = vmatprep.subr.mxu0 0.0
    %1146 = vmatpush1.msra.mxu0 0.0
    %1147 = vmatprep.subr.mxu0 0.0
    %1148 = vmatpush1.msra.mxu0 0.0
    %1149 = vmatprep.subr.mxu0 0.0
    %1150 = vmatpush1.msra.mxu0 0.0
    %1151 = vmatprep.subr.mxu0 0.0
    %1152 = vmatpush1.msra.mxu0 0.0
    %1153 = vmatprep.subr.mxu0 0.0
    %1154 = vmatpush1.msra.mxu0 0.0
    %1155 = vmatprep.subr.mxu0 0.0
    %1156 = vmatpush1.msra.mxu0 0.0
    %1157 = vmatprep.subr.mxu0 0.0
    %1158 = vmatpush1.msra.mxu0 0.0
    %1159 = vmatprep.subr.mxu0 0.0
    %1160 = vmatpush1.msra.mxu0 0.0
    %1161 = vmatprep.subr.mxu0 0.0
    %1162 = vmatpush1.msra.mxu0 0.0
    %1163 = vmatprep.subr.mxu0 0.0
    %1164 = vmatpush1.msra.mxu0 0.0
    %1165 = vmatprep.subr.mxu0 0.0
    %1166 = vmatpush1.msra.mxu0 0.0
    %1167 = vmatprep.subr.mxu0 0.0
    %1168 = vmatpush1.msra.mxu0 0.0
    %1169 = vmatprep.subr.mxu0 0.0
    %1170 = vmatpush1.msra.mxu0 0.0
    %1171 = vmatprep.subr.mxu0 0.0
    %1172 = vmatpush1.msra.mxu0 0.0
    %1173 = vmatprep.subr.mxu0 0.0
    %1174 = vmatpush1.msra.mxu0 0.0
    %1175 = vmatprep.subr.mxu0 0.0
    %1176 = vmatpush1.msra.mxu0 0.0
    %1177 = vmatprep.subr.mxu0 0.0
    %1178 = vmatpush1.msra.mxu0 0.0
    %1179 = vmatprep.subr.mxu0 0.0
    %1180 = vmatpush1.msra.mxu0 0.0
    %1181 = vmatprep.subr.mxu0 0.0
    %1182 = vmatpush1.msra.mxu0 0.0
    %1183 = vmatprep.subr.mxu0 0.0
    %1184 = vmatpush1.msra.mxu0 0.0
    %1185 = vmatprep.subr.mxu0 0.0
    %1186 = vmatpush1.msra.mxu0 0.0
    %1187 = vmatprep.subr.mxu0 0.0
    %1188 = vmatpush1.msra.mxu0 0.0
    %1189 = vmatprep.subr.mxu0 0.0
    %1190 = vmatpush1.msra.mxu0 0.0
    %1191 = vmatprep.subr.mxu0 0.0
    %1192 = vmatpush1.msra.mxu0 0.0
    %1193 = vmatprep.subr.mxu0 0.0
    %1194 = vmatpush1.msra.mxu0 0.0
    %1195 = vmatprep.mubr.f32.mxu0 0.0
    %v1196 = vand.u32 %v50, 4294901760
    %1197 = vmatmul.mubr.f32.gmra.mrb[0].mxu0 %v1196
    %v1198 = vpop.f32.mrb[0].mxu0
    %v1199 = vadd.f32 %v1117, %v1198
    %v1200 = vpop.f32.mrb[0].mxu0
    %v1201 = vadd.f32 %v1119, %v1200
    %1202 = vdwg.mxu0
    %v1203 = vmax.f32 %v630, 0.0
    %v1204 = vmax.f32 %v632, 0.0
    %v1205 = vmax.f32 %v1199, 0.0
    %v1206 = vmax.f32 %v1201, 0.0
    %v1209 = vcombine.low %v1203, %v1204
    %v1211 = vunpack.c.l.s4 1966171168
    %v1212 = vunpack.c.0.s8 %v1211
    %v1213 = vlaneseq
    %v1214 = vshrl.u32 %v1213, 7
    %v1215 = vsub.s32 %v1212, %v1214
    %v1216 = vrot.slane %v1209, %v1215
    %v1218 = vunpack.c.l.s4 1966171168
    %v1219 = vunpack.c.0.s8 %v1218
    %v1220 = vlaneseq
    %v1221 = vshrl.u32 %v1220, 7
    %v1222 = vsub.s32 %v1219, %v1221
    %v1223 = vrot.slane %v1216, %v1222
    %v1225 = vlaneseq
    %vm1226 = vcmp.ge.s32.totalorder %v1225, 0
    %vm1227 = vcmp.lt.s32.totalorder %v1225, 256
    %vm1228 = vmand %vm1226, %vm1227
    %1229 = vst.msk [vmem:[#allocation2] ss:$2 sm:$0x3] %vm1228, %v1223
    %v1230 = vcombine.high %v1216, %v1216
    %v1232 = vunpack.c.l.s4 1966171168
    %v1233 = vunpack.c.0.s8 %v1232
    %v1234 = vlaneseq
    %v1235 = vshrl.u32 %v1234, 7
    %v1236 = vsub.s32 %v1233, %v1235
    %v1237 = vrot.slane %v1230, %v1236
    %s1239 = scalar_lea.vmem [#allocation2], 4
    %1240 = vst.msk [vmem:[%s1239] ss:$2 sm:$0x3] %vm1228, %v1237
    %v1241 = vcombine.high %v1223, %v1223
    %s1243 = scalar_lea.vmem [#allocation2], 8
    %1244 = vst.msk [vmem:[%s1243] ss:$2 sm:$0x3] %vm1228, %v1241
    %v1245 = vcombine.high %v1237, %v1237
    %s1247 = scalar_lea.vmem [#allocation2], 12
    %1248 = vst.msk [vmem:[%s1247] ss:$2 sm:$0x3] %vm1228, %v1245
    %v1249 = vcombine.high %v1203, %v1204
    %v1251 = vunpack.c.l.s4 1966171168
    %v1252 = vunpack.c.0.s8 %v1251
    %v1253 = vlaneseq
    %v1254 = vshrl.u32 %v1253, 7
    %v1255 = vsub.s32 %v1252, %v1254
    %v1256 = vrot.slane %v1249, %v1255
    %v1258 = vunpack.c.l.s4 1966171168
    %v1259 = vunpack.c.0.s8 %v1258
    %v1260 = vlaneseq
    %v1261 = vshrl.u32 %v1260, 7
    %v1262 = vsub.s32 %v1259, %v1261
    %v1263 = vrot.slane %v1256, %v1262
    %s1265 = scalar_lea.vmem [#allocation2], 16
    %1266 = vst.msk [vmem:[%s1265] ss:$2 sm:$0x3] %vm1228, %v1263
    %v1267 = vcombine.high %v1256, %v1256
    %v1269 = vunpack.c.l.s4 1966171168
    %v1270 = vunpack.c.0.s8 %v1269
    %v1271 = vlaneseq
    %v1272 = vshrl.u32 %v1271, 7
    %v1273 = vsub.s32 %v1270, %v1272
    %v1274 = vrot.slane %v1267, %v1273
    %s1276 = scalar_lea.vmem [#allocation2], 20
    %1277 = vst.msk [vmem:[%s1276] ss:$2 sm:$0x3] %vm1228, %v1274
    %v1278 = vcombine.high %v1263, %v1263
    %s1280 = scalar_lea.vmem [#allocation2], 24
    %1281 = vst.msk [vmem:[%s1280] ss:$2 sm:$0x3] %vm1228, %v1278
    %v1282 = vcombine.high %v1274, %v1274
    %s1284 = scalar_lea.vmem [#allocation2], 28
    %1285 = vst.msk [vmem:[%s1284] ss:$2 sm:$0x3] %vm1228, %v1282
    %v1288 = vcombine.low %v1205, %v1206
    %v1290 = vunpack.c.l.s4 1966171168
    %v1291 = vunpack.c.0.s8 %v1290
    %v1292 = vlaneseq
    %v1293 = vshrl.u32 %v1292, 7
    %v1294 = vsub.s32 %v1291, %v1293
    %v1295 = vrot.slane %v1288, %v1294
    %v1297 = vunpack.c.l.s4 1966171168
    %v1298 = vunpack.c.0.s8 %v1297
    %v1299 = vlaneseq
    %v1300 = vshrl.u32 %v1299, 7
    %v1301 = vsub.s32 %v1298, %v1300
    %v1302 = vrot.slane %v1295, %v1301
    %s1304 = scalar_lea.vmem [#allocation2], 1
    %1305 = vst.msk [vmem:[%s1304] ss:$2 sm:$0x3] %vm1228, %v1302
    %v1306 = vcombine.high %v1295, %v1295
    %v1308 = vunpack.c.l.s4 1966171168
    %v1309 = vunpack.c.0.s8 %v1308
    %v1310 = vlaneseq
    %v1311 = vshrl.u32 %v1310, 7
    %v1312 = vsub.s32 %v1309, %v1311
    %v1313 = vrot.slane %v1306, %v1312
    %s1315 = scalar_lea.vmem [#allocation2], 5
    %1316 = vst.msk [vmem:[%s1315] ss:$2 sm:$0x3] %vm1228, %v1313
    %v1317 = vcombine.high %v1302, %v1302
    %s1319 = scalar_lea.vmem [#allocation2], 9
    %1320 = vst.msk [vmem:[%s1319] ss:$2 sm:$0x3] %vm1228, %v1317
    %v1321 = vcombine.high %v1313, %v1313
    %s1323 = scalar_lea.vmem [#allocation2], 13
    %1324 = vst.msk [vmem:[%s1323] ss:$2 sm:$0x3] %vm1228, %v1321
    %v1325 = vcombine.high %v1205, %v1206
    %v1327 = vunpack.c.l.s4 1966171168
    %v1328 = vunpack.c.0.s8 %v1327
    %v1329 = vlaneseq
    %v1330 = vshrl.u32 %v1329, 7
    %v1331 = vsub.s32 %v1328, %v1330
    %v1332 = vrot.slane %v1325, %v1331
    %v1334 = vunpack.c.l.s4 1966171168
    %v1335 = vunpack.c.0.s8 %v1334
    %v1336 = vlaneseq
    %v1337 = vshrl.u32 %v1336, 7
    %v1338 = vsub.s32 %v1335, %v1337
    %v1339 = vrot.slane %v1332, %v1338
    %s1341 = scalar_lea.vmem [#allocation2], 17
    %1342 = vst.msk [vmem:[%s1341] ss:$2 sm:$0x3] %vm1228, %v1339
    %v1343 = vcombine.high %v1332, %v1332
    %v1345 = vunpack.c.l.s4 1966171168
    %v1346 = vunpack.c.0.s8 %v1345
    %v1347 = vlaneseq
    %v1348 = vshrl.u32 %v1347, 7
    %v1349 = vsub.s32 %v1346, %v1348
    %v1350 = vrot.slane %v1343, %v1349
    %s1352 = scalar_lea.vmem [#allocation2], 21
    %1353 = vst.msk [vmem:[%s1352] ss:$2 sm:$0x3] %vm1228, %v1350
    %v1354 = vcombine.high %v1339, %v1339
    %s1356 = scalar_lea.vmem [#allocation2], 25
    %1357 = vst.msk [vmem:[%s1356] ss:$2 sm:$0x3] %vm1228, %v1354
    %v1358 = vcombine.high %v1350, %v1350
    %s1360 = scalar_lea.vmem [#allocation2], 29
    %1361 = vst.msk [vmem:[%s1360] ss:$2 sm:$0x3] %vm1228, %v1358
    %v1362 = vld [vmem:[#allocation2] sm:$0xff]
    %v1363 = vld [vmem:[#allocation2 + $0x8] sm:$0xff]
    %v1364 = vld [vmem:[#allocation2 + $0x10] sm:$0xff]
    %v1365 = vld [vmem:[#allocation2 + $0x18] sm:$0xff]
    %v1366 = vld [vmem:[%s3] sm:$0xff]
    %v1367 = vld [vmem:[%s3 + $0x8] sm:$0xff]
    %v1368 = vld [vmem:[%s3 + $0x10] sm:$0xff]
    %v1369 = vld [vmem:[%s3 + $0x18] sm:$0xff]
    %v1370 = vld [vmem:[%s3 + $0x20] sm:$0xff]
    %v1371 = vld [vmem:[%s3 + $0x28] sm:$0xff]
    %v1372 = vld [vmem:[%s3 + $0x30] sm:$0xff]
    %v1373 = vld [vmem:[%s3 + $0x38] sm:$0xff]
    %v1374 = vld [vmem:[%s3 + $0x40] sm:$0xff]
    %v1375 = vld [vmem:[%s3 + $0x48] sm:$0xff]
    %v1376 = vld [vmem:[%s3 + $0x50] sm:$0xff]
    %v1377 = vld [vmem:[%s3 + $0x58] sm:$0xff]
    %v1378 = vld [vmem:[%s3 + $0x60] sm:$0xff]
    %v1379 = vld [vmem:[%s3 + $0x68] sm:$0xff]
    %v1380 = vld [vmem:[%s3 + $0x70] sm:$0xff]
    %v1381 = vld [vmem:[%s3 + $0x78] sm:$0xff]
    %v1382 = vld [vmem:[%s3 + $0x80] sm:$0xff]
    %v1383 = vld [vmem:[%s3 + $0x88] sm:$0xff]
    %v1384 = vld [vmem:[%s3 + $0x90] sm:$0xff]
    %v1385 = vld [vmem:[%s3 + $0x98] sm:$0xff]
    %v1386 = vld [vmem:[%s3 + $0xa0] sm:$0xff]
    %v1387 = vld [vmem:[%s3 + $0xa8] sm:$0xff]
    %v1388 = vld [vmem:[%s3 + $0xb0] sm:$0xff]
    %v1389 = vld [vmem:[%s3 + $0xb8] sm:$0xff]
    %v1390 = vld [vmem:[%s3 + $0xc0] sm:$0xff]
    %v1391 = vld [vmem:[%s3 + $0xc8] sm:$0xff]
    %v1392 = vld [vmem:[%s3 + $0xd0] sm:$0xff]
    %v1393 = vld [vmem:[%s3 + $0xd8] sm:$0xff]
    %v1394 = vld [vmem:[%s3 + $0xe0] sm:$0xff]
    %v1395 = vld [vmem:[%s3 + $0xe8] sm:$0xff]
    %v1396 = vld [vmem:[%s3 + $0xf0] sm:$0xff]
    %v1397 = vld [vmem:[%s3 + $0xf8] sm:$0xff]
    %v1398 = vld [vmem:[%s3 + $0x100] sm:$0xff]
    %v1399 = vld [vmem:[%s3 + $0x108] sm:$0xff]
    %v1400 = vld [vmem:[%s3 + $0x110] sm:$0xff]
    %v1401 = vld [vmem:[%s3 + $0x118] sm:$0xff]
    %v1402 = vld [vmem:[%s3 + $0x120] sm:$0xff]
    %v1403 = vld [vmem:[%s3 + $0x128] sm:$0xff]
    %v1404 = vld [vmem:[%s3 + $0x130] sm:$0xff]
    %v1405 = vld [vmem:[%s3 + $0x138] sm:$0xff]
    %v1406 = vld [vmem:[%s3 + $0x140] sm:$0xff]
    %v1407 = vld [vmem:[%s3 + $0x148] sm:$0xff]
    %v1408 = vld [vmem:[%s3 + $0x150] sm:$0xff]
    %v1409 = vld [vmem:[%s3 + $0x158] sm:$0xff]
    %v1410 = vld [vmem:[%s3 + $0x160] sm:$0xff]
    %v1411 = vld [vmem:[%s3 + $0x168] sm:$0xff]
    %v1412 = vld [vmem:[%s3 + $0x170] sm:$0xff]
    %v1413 = vld [vmem:[%s3 + $0x178] sm:$0xff]
    %v1414 = vld [vmem:[%s3 + $0x180] sm:$0xff]
    %v1415 = vld [vmem:[%s3 + $0x188] sm:$0xff]
    %v1416 = vld [vmem:[%s3 + $0x190] sm:$0xff]
    %v1417 = vld [vmem:[%s3 + $0x198] sm:$0xff]
    %v1418 = vld [vmem:[%s3 + $0x1a0] sm:$0xff]
    %v1419 = vld [vmem:[%s3 + $0x1a8] sm:$0xff]
    %v1420 = vld [vmem:[%s3 + $0x1b0] sm:$0xff]
    %v1421 = vld [vmem:[%s3 + $0x1b8] sm:$0xff]
    %v1422 = vld [vmem:[%s3 + $0x1c0] sm:$0xff]
    %v1423 = vld [vmem:[%s3 + $0x1c8] sm:$0xff]
    %v1424 = vld [vmem:[%s3 + $0x1d0] sm:$0xff]
    %v1425 = vld [vmem:[%s3 + $0x1d8] sm:$0xff]
    %v1426 = vld [vmem:[%s3 + $0x1e0] sm:$0xff]
    %v1427 = vld [vmem:[%s3 + $0x1e8] sm:$0xff]
    %v1428 = vld [vmem:[%s3 + $0x1f0] sm:$0xff]
    %v1429 = vld [vmem:[%s3 + $0x1f8] sm:$0xff]
    %v1430 = vld [vmem:[%s3 + $0x200] sm:$0xff]
    %v1431 = vld [vmem:[%s3 + $0x208] sm:$0xff]
    %v1432 = vld [vmem:[%s3 + $0x210] sm:$0xff]
    %v1433 = vld [vmem:[%s3 + $0x218] sm:$0xff]
    %v1434 = vld [vmem:[%s3 + $0x220] sm:$0xff]
    %v1435 = vld [vmem:[%s3 + $0x228] sm:$0xff]
    %v1436 = vld [vmem:[%s3 + $0x230] sm:$0xff]
    %v1437 = vld [vmem:[%s3 + $0x238] sm:$0xff]
    %v1438 = vld [vmem:[%s3 + $0x240] sm:$0xff]
    %v1439 = vld [vmem:[%s3 + $0x248] sm:$0xff]
    %v1440 = vld [vmem:[%s3 + $0x250] sm:$0xff]
    %v1441 = vld [vmem:[%s3 + $0x258] sm:$0xff]
    %v1442 = vld [vmem:[%s3 + $0x260] sm:$0xff]
    %v1443 = vld [vmem:[%s3 + $0x268] sm:$0xff]
    %v1444 = vld [vmem:[%s3 + $0x270] sm:$0xff]
    %v1445 = vld [vmem:[%s3 + $0x278] sm:$0xff]
    %v1446 = vld [vmem:[%s3 + $0x280] sm:$0xff]
    %v1447 = vld [vmem:[%s3 + $0x288] sm:$0xff]
    %v1448 = vld [vmem:[%s3 + $0x290] sm:$0xff]
    %v1449 = vld [vmem:[%s3 + $0x298] sm:$0xff]
    %v1450 = vld [vmem:[%s3 + $0x2a0] sm:$0xff]
    %v1451 = vld [vmem:[%s3 + $0x2a8] sm:$0xff]
    %v1452 = vld [vmem:[%s3 + $0x2b0] sm:$0xff]
    %v1453 = vld [vmem:[%s3 + $0x2b8] sm:$0xff]
    %v1454 = vld [vmem:[%s3 + $0x2c0] sm:$0xff]
    %v1455 = vld [vmem:[%s3 + $0x2c8] sm:$0xff]
    %v1456 = vld [vmem:[%s3 + $0x2d0] sm:$0xff]
    %v1457 = vld [vmem:[%s3 + $0x2d8] sm:$0xff]
    %v1458 = vld [vmem:[%s3 + $0x2e0] sm:$0xff]
    %v1459 = vld [vmem:[%s3 + $0x2e8] sm:$0xff]
    %v1460 = vld [vmem:[%s3 + $0x2f0] sm:$0xff]
    %v1461 = vld [vmem:[%s3 + $0x2f8] sm:$0xff]
    %v1462 = vld [vmem:[%s3 + $0x300] sm:$0xff]
    %v1463 = vld [vmem:[%s3 + $0x308] sm:$0xff]
    %v1464 = vld [vmem:[%s3 + $0x310] sm:$0xff]
    %v1465 = vld [vmem:[%s3 + $0x318] sm:$0xff]
    %v1466 = vld [vmem:[%s3 + $0x320] sm:$0xff]
    %v1467 = vld [vmem:[%s3 + $0x328] sm:$0xff]
    %v1468 = vld [vmem:[%s3 + $0x330] sm:$0xff]
    %v1469 = vld [vmem:[%s3 + $0x338] sm:$0xff]
    %v1470 = vld [vmem:[%s3 + $0x340] sm:$0xff]
    %v1471 = vld [vmem:[%s3 + $0x348] sm:$0xff]
    %v1472 = vld [vmem:[%s3 + $0x350] sm:$0xff]
    %v1473 = vld [vmem:[%s3 + $0x358] sm:$0xff]
    %v1474 = vld [vmem:[%s3 + $0x360] sm:$0xff]
    %v1475 = vld [vmem:[%s3 + $0x368] sm:$0xff]
    %v1476 = vld [vmem:[%s3 + $0x370] sm:$0xff]
    %v1477 = vld [vmem:[%s3 + $0x378] sm:$0xff]
    %v1478 = vld [vmem:[%s3 + $0x380] sm:$0xff]
    %v1479 = vld [vmem:[%s3 + $0x388] sm:$0xff]
    %v1480 = vld [vmem:[%s3 + $0x390] sm:$0xff]
    %v1481 = vld [vmem:[%s3 + $0x398] sm:$0xff]
    %v1482 = vld [vmem:[%s3 + $0x3a0] sm:$0xff]
    %v1483 = vld [vmem:[%s3 + $0x3a8] sm:$0xff]
    %v1484 = vld [vmem:[%s3 + $0x3b0] sm:$0xff]
    %v1485 = vld [vmem:[%s3 + $0x3b8] sm:$0xff]
    %v1486 = vld [vmem:[%s3 + $0x3c0] sm:$0xff]
    %v1487 = vld [vmem:[%s3 + $0x3c8] sm:$0xff]
    %v1488 = vld [vmem:[%s3 + $0x3d0] sm:$0xff]
    %v1489 = vld [vmem:[%s3 + $0x3d8] sm:$0xff]
    %v1490 = vld [vmem:[%s3 + $0x3e0] sm:$0xff]
    %v1491 = vld [vmem:[%s3 + $0x3e8] sm:$0xff]
    %v1492 = vld [vmem:[%s3 + $0x3f0] sm:$0xff]
    %v1493 = vld [vmem:[%s3 + $0x3f8] sm:$0xff]
    %v1494 = vld [vmem:[%s3 + $0x400] sm:$0xff]
    %v1495 = vld [vmem:[%s3 + $0x408] sm:$0xff]
    %v1496 = vld [vmem:[%s3 + $0x410] sm:$0xff]
    %v1497 = vld [vmem:[%s3 + $0x418] sm:$0xff]
    %v1498 = vld [vmem:[%s3 + $0x420] sm:$0xff]
    %v1499 = vld [vmem:[%s3 + $0x428] sm:$0xff]
    %v1500 = vld [vmem:[%s3 + $0x430] sm:$0xff]
    %v1501 = vld [vmem:[%s3 + $0x438] sm:$0xff]
    %v1502 = vld [vmem:[%s3 + $0x440] sm:$0xff]
    %v1503 = vld [vmem:[%s3 + $0x448] sm:$0xff]
    %v1504 = vld [vmem:[%s3 + $0x450] sm:$0xff]
    %v1505 = vld [vmem:[%s3 + $0x458] sm:$0xff]
    %v1506 = vld [vmem:[%s3 + $0x460] sm:$0xff]
    %v1507 = vld [vmem:[%s3 + $0x468] sm:$0xff]
    %v1508 = vld [vmem:[%s3 + $0x470] sm:$0xff]
    %v1509 = vld [vmem:[%s3 + $0x478] sm:$0xff]
    %v1510 = vld [vmem:[%s3 + $0x480] sm:$0xff]
    %v1511 = vld [vmem:[%s3 + $0x488] sm:$0xff]
    %v1512 = vld [vmem:[%s3 + $0x490] sm:$0xff]
    %v1513 = vld [vmem:[%s3 + $0x498] sm:$0xff]
    %v1514 = vld [vmem:[%s3 + $0x4a0] sm:$0xff]
    %v1515 = vld [vmem:[%s3 + $0x4a8] sm:$0xff]
    %v1516 = vld [vmem:[%s3 + $0x4b0] sm:$0xff]
    %v1517 = vld [vmem:[%s3 + $0x4b8] sm:$0xff]
    %v1518 = vld [vmem:[%s3 + $0x4c0] sm:$0xff]
    %v1519 = vld [vmem:[%s3 + $0x4c8] sm:$0xff]
    %v1520 = vld [vmem:[%s3 + $0x4d0] sm:$0xff]
    %v1521 = vld [vmem:[%s3 + $0x4d8] sm:$0xff]
    %v1522 = vld [vmem:[%s3 + $0x4e0] sm:$0xff]
    %v1523 = vld [vmem:[%s3 + $0x4e8] sm:$0xff]
    %v1524 = vld [vmem:[%s3 + $0x4f0] sm:$0xff]
    %v1525 = vld [vmem:[%s3 + $0x4f8] sm:$0xff]
    %v1526 = vld [vmem:[%s3 + $0x500] sm:$0xff]
    %v1527 = vld [vmem:[%s3 + $0x508] sm:$0xff]
    %v1528 = vld [vmem:[%s3 + $0x510] sm:$0xff]
    %v1529 = vld [vmem:[%s3 + $0x518] sm:$0xff]
    %v1530 = vld [vmem:[%s3 + $0x520] sm:$0xff]
    %v1531 = vld [vmem:[%s3 + $0x528] sm:$0xff]
    %v1532 = vld [vmem:[%s3 + $0x530] sm:$0xff]
    %v1533 = vld [vmem:[%s3 + $0x538] sm:$0xff]
    %v1534 = vld [vmem:[%s3 + $0x540] sm:$0xff]
    %v1535 = vld [vmem:[%s3 + $0x548] sm:$0xff]
    %v1536 = vld [vmem:[%s3 + $0x550] sm:$0xff]
    %v1537 = vld [vmem:[%s3 + $0x558] sm:$0xff]
    %v1538 = vld [vmem:[%s3 + $0x560] sm:$0xff]
    %v1539 = vld [vmem:[%s3 + $0x568] sm:$0xff]
    %v1540 = vld [vmem:[%s3 + $0x570] sm:$0xff]
    %v1541 = vld [vmem:[%s3 + $0x578] sm:$0xff]
    %v1542 = vld [vmem:[%s3 + $0x580] sm:$0xff]
    %v1543 = vld [vmem:[%s3 + $0x588] sm:$0xff]
    %v1544 = vld [vmem:[%s3 + $0x590] sm:$0xff]
    %v1545 = vld [vmem:[%s3 + $0x598] sm:$0xff]
    %v1546 = vld [vmem:[%s3 + $0x5a0] sm:$0xff]
    %v1547 = vld [vmem:[%s3 + $0x5a8] sm:$0xff]
    %v1548 = vld [vmem:[%s3 + $0x5b0] sm:$0xff]
    %v1549 = vld [vmem:[%s3 + $0x5b8] sm:$0xff]
    %v1550 = vld [vmem:[%s3 + $0x5c0] sm:$0xff]
    %v1551 = vld [vmem:[%s3 + $0x5c8] sm:$0xff]
    %v1552 = vld [vmem:[%s3 + $0x5d0] sm:$0xff]
    %v1553 = vld [vmem:[%s3 + $0x5d8] sm:$0xff]
    %v1554 = vld [vmem:[%s3 + $0x5e0] sm:$0xff]
    %v1555 = vld [vmem:[%s3 + $0x5e8] sm:$0xff]
    %v1556 = vld [vmem:[%s3 + $0x5f0] sm:$0xff]
    %v1557 = vld [vmem:[%s3 + $0x5f8] sm:$0xff]
    %v1558 = vld [vmem:[%s3 + $0x600] sm:$0xff]
    %v1559 = vld [vmem:[%s3 + $0x608] sm:$0xff]
    %v1560 = vld [vmem:[%s3 + $0x610] sm:$0xff]
    %v1561 = vld [vmem:[%s3 + $0x618] sm:$0xff]
    %v1562 = vld [vmem:[%s3 + $0x620] sm:$0xff]
    %v1563 = vld [vmem:[%s3 + $0x628] sm:$0xff]
    %v1564 = vld [vmem:[%s3 + $0x630] sm:$0xff]
    %v1565 = vld [vmem:[%s3 + $0x638] sm:$0xff]
    %v1566 = vld [vmem:[%s3 + $0x640] sm:$0xff]
    %v1567 = vld [vmem:[%s3 + $0x648] sm:$0xff]
    %v1568 = vld [vmem:[%s3 + $0x650] sm:$0xff]
    %v1569 = vld [vmem:[%s3 + $0x658] sm:$0xff]
    %v1570 = vld [vmem:[%s3 + $0x660] sm:$0xff]
    %v1571 = vld [vmem:[%s3 + $0x668] sm:$0xff]
    %v1572 = vld [vmem:[%s3 + $0x670] sm:$0xff]
    %v1573 = vld [vmem:[%s3 + $0x678] sm:$0xff]
    %v1574 = vld [vmem:[%s3 + $0x680] sm:$0xff]
    %v1575 = vld [vmem:[%s3 + $0x688] sm:$0xff]
    %v1576 = vld [vmem:[%s3 + $0x690] sm:$0xff]
    %v1577 = vld [vmem:[%s3 + $0x698] sm:$0xff]
    %v1578 = vld [vmem:[%s3 + $0x6a0] sm:$0xff]
    %v1579 = vld [vmem:[%s3 + $0x6a8] sm:$0xff]
    %v1580 = vld [vmem:[%s3 + $0x6b0] sm:$0xff]
    %v1581 = vld [vmem:[%s3 + $0x6b8] sm:$0xff]
    %v1582 = vld [vmem:[%s3 + $0x6c0] sm:$0xff]
    %v1583 = vld [vmem:[%s3 + $0x6c8] sm:$0xff]
    %v1584 = vld [vmem:[%s3 + $0x6d0] sm:$0xff]
    %v1585 = vld [vmem:[%s3 + $0x6d8] sm:$0xff]
    %v1586 = vld [vmem:[%s3 + $0x6e0] sm:$0xff]
    %v1587 = vld [vmem:[%s3 + $0x6e8] sm:$0xff]
    %v1588 = vld [vmem:[%s3 + $0x6f0] sm:$0xff]
    %v1589 = vld [vmem:[%s3 + $0x6f8] sm:$0xff]
    %v1590 = vld [vmem:[%s3 + $0x700] sm:$0xff]
    %v1591 = vld [vmem:[%s3 + $0x708] sm:$0xff]
    %v1592 = vld [vmem:[%s3 + $0x710] sm:$0xff]
    %v1593 = vld [vmem:[%s3 + $0x718] sm:$0xff]
    %v1594 = vld [vmem:[%s3 + $0x720] sm:$0xff]
    %v1595 = vld [vmem:[%s3 + $0x728] sm:$0xff]
    %v1596 = vld [vmem:[%s3 + $0x730] sm:$0xff]
    %v1597 = vld [vmem:[%s3 + $0x738] sm:$0xff]
    %v1598 = vld [vmem:[%s3 + $0x740] sm:$0xff]
    %v1599 = vld [vmem:[%s3 + $0x748] sm:$0xff]
    %v1600 = vld [vmem:[%s3 + $0x750] sm:$0xff]
    %v1601 = vld [vmem:[%s3 + $0x758] sm:$0xff]
    %v1602 = vld [vmem:[%s3 + $0x760] sm:$0xff]
    %v1603 = vld [vmem:[%s3 + $0x768] sm:$0xff]
    %v1604 = vld [vmem:[%s3 + $0x770] sm:$0xff]
    %v1605 = vld [vmem:[%s3 + $0x778] sm:$0xff]
    %v1606 = vld [vmem:[%s3 + $0x780] sm:$0xff]
    %v1607 = vld [vmem:[%s3 + $0x788] sm:$0xff]
    %v1608 = vld [vmem:[%s3 + $0x790] sm:$0xff]
    %v1609 = vld [vmem:[%s3 + $0x798] sm:$0xff]
    %v1610 = vld [vmem:[%s3 + $0x7a0] sm:$0xff]
    %v1611 = vld [vmem:[%s3 + $0x7a8] sm:$0xff]
    %v1612 = vld [vmem:[%s3 + $0x7b0] sm:$0xff]
    %v1613 = vld [vmem:[%s3 + $0x7b8] sm:$0xff]
    %v1614 = vld [vmem:[%s3 + $0x7c0] sm:$0xff]
    %v1615 = vld [vmem:[%s3 + $0x7c8] sm:$0xff]
    %v1616 = vld [vmem:[%s3 + $0x7d0] sm:$0xff]
    %v1617 = vld [vmem:[%s3 + $0x7d8] sm:$0xff]
    %v1618 = vld [vmem:[%s3 + $0x7e0] sm:$0xff]
    %v1619 = vld [vmem:[%s3 + $0x7e8] sm:$0xff]
    %v1620 = vld [vmem:[%s3 + $0x7f0] sm:$0xff]
    %v1621 = vld [vmem:[%s3 + $0x7f8] sm:$0xff]
    %v1622 = vld [vmem:[%s4] sm:$0x1]
    %v1624 = vlaneseq
    %v1625 = vshrl.u32 %v1624, 7
    %v1626 = vsub.s32 0, %v1625
    %v1627 = vrot.slane %v1622, %v1626
    %v1633 = vcombine.high %v1362, %v1362
    %v1635 = vunpack.c.l.s4 1983009808
    %v1636 = vunpack.c.0.s8 %v1635
    %v1637 = vlaneseq
    %v1638 = vshrl.u32 %v1637, 7
    %v1639 = vsub.s32 %v1636, %v1638
    %v1640 = vrot.slane %v1362, %v1639
    %v1642 = vunpack.c.l.s4 1983009808
    %v1643 = vunpack.c.0.s8 %v1642
    %v1644 = vlaneseq
    %v1645 = vshrl.u32 %v1644, 7
    %v1646 = vsub.s32 %v1643, %v1645
    %v1647 = vrot.slane %v1633, %v1646
    %v1648 = vcombine.high %v1640, %v1640
    %v1649 = vcombine.high %v1647, %v1647
    %v1650 = vcombine.high %v1363, %v1363
    %v1652 = vunpack.c.l.s4 1983009808
    %v1653 = vunpack.c.0.s8 %v1652
    %v1654 = vlaneseq
    %v1655 = vshrl.u32 %v1654, 7
    %v1656 = vsub.s32 %v1653, %v1655
    %v1657 = vrot.slane %v1363, %v1656
    %v1659 = vunpack.c.l.s4 1983009808
    %v1660 = vunpack.c.0.s8 %v1659
    %v1661 = vlaneseq
    %v1662 = vshrl.u32 %v1661, 7
    %v1663 = vsub.s32 %v1660, %v1662
    %v1664 = vrot.slane %v1650, %v1663
    %v1665 = vcombine.high %v1657, %v1657
    %v1666 = vcombine.high %v1664, %v1664
    %v1667 = vcombine.high %v1364, %v1364
    %v1669 = vunpack.c.l.s4 1983009808
    %v1670 = vunpack.c.0.s8 %v1669
    %v1671 = vlaneseq
    %v1672 = vshrl.u32 %v1671, 7
    %v1673 = vsub.s32 %v1670, %v1672
    %v1674 = vrot.slane %v1364, %v1673
    %v1676 = vunpack.c.l.s4 1983009808
    %v1677 = vunpack.c.0.s8 %v1676
    %v1678 = vlaneseq
    %v1679 = vshrl.u32 %v1678, 7
    %v1680 = vsub.s32 %v1677, %v1679
    %v1681 = vrot.slane %v1667, %v1680
    %v1682 = vcombine.high %v1674, %v1674
    %v1683 = vcombine.high %v1681, %v1681
    %v1684 = vcombine.high %v1365, %v1365
    %v1686 = vunpack.c.l.s4 1983009808
    %v1687 = vunpack.c.0.s8 %v1686
    %v1688 = vlaneseq
    %v1689 = vshrl.u32 %v1688, 7
    %v1690 = vsub.s32 %v1687, %v1689
    %v1691 = vrot.slane %v1365, %v1690
    %v1693 = vunpack.c.l.s4 1983009808
    %v1694 = vunpack.c.0.s8 %v1693
    %v1695 = vlaneseq
    %v1696 = vshrl.u32 %v1695, 7
    %v1697 = vsub.s32 %v1694, %v1696
    %v1698 = vrot.slane %v1684, %v1697
    %v1699 = vcombine.high %v1691, %v1691
    %v1700 = vcombine.high %v1698, %v1698
    %1717 = vmatprep.subr.mxu0 0.0
    %v1718 = vand.u32 %v1366, 4294901760
    %1719 = vmatpush1.msra.mxu0 %v1718
    %1720 = vmatprep.subr.mxu0 0.0
    %v1721 = vand.u32 %v1367, 4294901760
    %1722 = vmatpush1.msra.mxu0 %v1721
    %1723 = vmatprep.subr.mxu0 0.0
    %v1724 = vand.u32 %v1368, 4294901760
    %1725 = vmatpush1.msra.mxu0 %v1724
    %1726 = vmatprep.subr.mxu0 0.0
    %v1727 = vand.u32 %v1369, 4294901760
    %1728 = vmatpush1.msra.mxu0 %v1727
    %1729 = vmatprep.subr.mxu0 0.0
    %v1730 = vand.u32 %v1370, 4294901760
    %1731 = vmatpush1.msra.mxu0 %v1730
    %1732 = vmatprep.subr.mxu0 0.0
    %v1733 = vand.u32 %v1371, 4294901760
    %1734 = vmatpush1.msra.mxu0 %v1733
    %1735 = vmatprep.subr.mxu0 0.0
    %v1736 = vand.u32 %v1372, 4294901760
    %1737 = vmatpush1.msra.mxu0 %v1736
    %1738 = vmatprep.subr.mxu0 0.0
    %v1739 = vand.u32 %v1373, 4294901760
    %1740 = vmatpush1.msra.mxu0 %v1739
    %1741 = vmatprep.subr.mxu0 0.0
    %v1742 = vand.u32 %v1374, 4294901760
    %1743 = vmatpush1.msra.mxu0 %v1742
    %1744 = vmatprep.subr.mxu0 0.0
    %v1745 = vand.u32 %v1375, 4294901760
    %1746 = vmatpush1.msra.mxu0 %v1745
    %1747 = vmatprep.subr.mxu0 0.0
    %v1748 = vand.u32 %v1376, 4294901760
    %1749 = vmatpush1.msra.mxu0 %v1748
    %1750 = vmatprep.subr.mxu0 0.0
    %v1751 = vand.u32 %v1377, 4294901760
    %1752 = vmatpush1.msra.mxu0 %v1751
    %1753 = vmatprep.subr.mxu0 0.0
    %v1754 = vand.u32 %v1378, 4294901760
    %1755 = vmatpush1.msra.mxu0 %v1754
    %1756 = vmatprep.subr.mxu0 0.0
    %v1757 = vand.u32 %v1379, 4294901760
    %1758 = vmatpush1.msra.mxu0 %v1757
    %1759 = vmatprep.subr.mxu0 0.0
    %v1760 = vand.u32 %v1380, 4294901760
    %1761 = vmatpush1.msra.mxu0 %v1760
    %1762 = vmatprep.subr.mxu0 0.0
    %v1763 = vand.u32 %v1381, 4294901760
    %1764 = vmatpush1.msra.mxu0 %v1763
    %1765 = vmatprep.subr.mxu0 0.0
    %v1766 = vand.u32 %v1382, 4294901760
    %1767 = vmatpush1.msra.mxu0 %v1766
    %1768 = vmatprep.subr.mxu0 0.0
    %v1769 = vand.u32 %v1383, 4294901760
    %1770 = vmatpush1.msra.mxu0 %v1769
    %1771 = vmatprep.subr.mxu0 0.0
    %v1772 = vand.u32 %v1384, 4294901760
    %1773 = vmatpush1.msra.mxu0 %v1772
    %1774 = vmatprep.subr.mxu0 0.0
    %v1775 = vand.u32 %v1385, 4294901760
    %1776 = vmatpush1.msra.mxu0 %v1775
    %1777 = vmatprep.subr.mxu0 0.0
    %v1778 = vand.u32 %v1386, 4294901760
    %1779 = vmatpush1.msra.mxu0 %v1778
    %1780 = vmatprep.subr.mxu0 0.0
    %v1781 = vand.u32 %v1387, 4294901760
    %1782 = vmatpush1.msra.mxu0 %v1781
    %1783 = vmatprep.subr.mxu0 0.0
    %v1784 = vand.u32 %v1388, 4294901760
    %1785 = vmatpush1.msra.mxu0 %v1784
    %1786 = vmatprep.subr.mxu0 0.0
    %v1787 = vand.u32 %v1389, 4294901760
    %1788 = vmatpush1.msra.mxu0 %v1787
    %1789 = vmatprep.subr.mxu0 0.0
    %v1790 = vand.u32 %v1390, 4294901760
    %1791 = vmatpush1.msra.mxu0 %v1790
    %1792 = vmatprep.subr.mxu0 0.0
    %v1793 = vand.u32 %v1391, 4294901760
    %1794 = vmatpush1.msra.mxu0 %v1793
    %1795 = vmatprep.subr.mxu0 0.0
    %v1796 = vand.u32 %v1392, 4294901760
    %1797 = vmatpush1.msra.mxu0 %v1796
    %1798 = vmatprep.subr.mxu0 0.0
    %v1799 = vand.u32 %v1393, 4294901760
    %1800 = vmatpush1.msra.mxu0 %v1799
    %1801 = vmatprep.subr.mxu0 0.0
    %v1802 = vand.u32 %v1394, 4294901760
    %1803 = vmatpush1.msra.mxu0 %v1802
    %1804 = vmatprep.subr.mxu0 0.0
    %v1805 = vand.u32 %v1395, 4294901760
    %1806 = vmatpush1.msra.mxu0 %v1805
    %1807 = vmatprep.subr.mxu0 0.0
    %v1808 = vand.u32 %v1396, 4294901760
    %1809 = vmatpush1.msra.mxu0 %v1808
    %1810 = vmatprep.subr.mxu0 0.0
    %v1811 = vand.u32 %v1397, 4294901760
    %1812 = vmatpush1.msra.mxu0 %v1811
    %v1813 = vand.u32 %v1648, 4294901760
    %v1814 = vsub.f32 %v1648, %v1813
    %v1815 = vand.u32 %v1814, 4294901760
    %v1816 = vsub.f32 %v1814, %v1815
    %v1817 = vand.u32 %v1816, 4294901760
    %1818 = vmatprep.mubr.f32.mxu0 %v1817
    %v1819 = vand.u32 %v1640, 4294901760
    %v1820 = vsub.f32 %v1640, %v1819
    %v1821 = vand.u32 %v1820, 4294901760
    %v1822 = vsub.f32 %v1820, %v1821
    %v1823 = vand.u32 %v1822, 4294901760
    %1824 = vmatmul.mubr.f32.gmra.mrb[0].mxu0 %v1823
    %v1825 = vpop.f32.mrb[0].mxu0
    %v1826 = vadd.f32 %v1627, %v1825
    %v1827 = vpop.f32.mrb[0].mxu0
    %1828 = vdwg.mxu0
    %1829 = vmatprep.subr.mxu0 0.0
    %v1830 = vand.u32 %v1366, 4294901760
    %v1831 = vsub.f32 %v1366, %v1830
    %v1832 = vand.u32 %v1831, 4294901760
    %v1833 = vsub.f32 %v1831, %v1832
    %v1834 = vand.u32 %v1833, 4294901760
    %1835 = vmatpush1.msra.mxu0 %v1834
    %1836 = vmatprep.subr.mxu0 0.0
    %v1837 = vand.u32 %v1367, 4294901760
    %v1838 = vsub.f32 %v1367, %v1837
    %v1839 = vand.u32 %v1838, 4294901760
    %v1840 = vsub.f32 %v1838, %v1839
    %v1841 = vand.u32 %v1840, 4294901760
    %1842 = vmatpush1.msra.mxu0 %v1841
    %1843 = vmatprep.subr.mxu0 0.0
    %v1844 = vand.u32 %v1368, 4294901760
    %v1845 = vsub.f32 %v1368, %v1844
    %v1846 = vand.u32 %v1845, 4294901760
    %v1847 = vsub.f32 %v1845, %v1846
    %v1848 = vand.u32 %v1847, 4294901760
    %1849 = vmatpush1.msra.mxu0 %v1848
    %1850 = vmatprep.subr.mxu0 0.0
    %v1851 = vand.u32 %v1369, 4294901760
    %v1852 = vsub.f32 %v1369, %v1851
    %v1853 = vand.u32 %v1852, 4294901760
    %v1854 = vsub.f32 %v1852, %v1853
    %v1855 = vand.u32 %v1854, 4294901760
    %1856 = vmatpush1.msra.mxu0 %v1855
    %1857 = vmatprep.subr.mxu0 0.0
    %v1858 = vand.u32 %v1370, 4294901760
    %v1859 = vsub.f32 %v1370, %v1858
    %v1860 = vand.u32 %v1859, 4294901760
    %v1861 = vsub.f32 %v1859, %v1860
    %v1862 = vand.u32 %v1861, 4294901760
    %1863 = vmatpush1.msra.mxu0 %v1862
    %1864 = vmatprep.subr.mxu0 0.0
    %v1865 = vand.u32 %v1371, 4294901760
    %v1866 = vsub.f32 %v1371, %v1865
    %v1867 = vand.u32 %v1866, 4294901760
    %v1868 = vsub.f32 %v1866, %v1867
    %v1869 = vand.u32 %v1868, 4294901760
    %1870 = vmatpush1.msra.mxu0 %v1869
    %1871 = vmatprep.subr.mxu0 0.0
    %v1872 = vand.u32 %v1372, 4294901760
    %v1873 = vsub.f32 %v1372, %v1872
    %v1874 = vand.u32 %v1873, 4294901760
    %v1875 = vsub.f32 %v1873, %v1874
    %v1876 = vand.u32 %v1875, 4294901760
    %1877 = vmatpush1.msra.mxu0 %v1876
    %1878 = vmatprep.subr.mxu0 0.0
    %v1879 = vand.u32 %v1373, 4294901760
    %v1880 = vsub.f32 %v1373, %v1879
    %v1881 = vand.u32 %v1880, 4294901760
    %v1882 = vsub.f32 %v1880, %v1881
    %v1883 = vand.u32 %v1882, 4294901760
    %1884 = vmatpush1.msra.mxu0 %v1883
    %1885 = vmatprep.subr.mxu0 0.0
    %v1886 = vand.u32 %v1374, 4294901760
    %v1887 = vsub.f32 %v1374, %v1886
    %v1888 = vand.u32 %v1887, 4294901760
    %v1889 = vsub.f32 %v1887, %v1888
    %v1890 = vand.u32 %v1889, 4294901760
    %1891 = vmatpush1.msra.mxu0 %v1890
    %1892 = vmatprep.subr.mxu0 0.0
    %v1893 = vand.u32 %v1375, 4294901760
    %v1894 = vsub.f32 %v1375, %v1893
    %v1895 = vand.u32 %v1894, 4294901760
    %v1896 = vsub.f32 %v1894, %v1895
    %v1897 = vand.u32 %v1896, 4294901760
    %1898 = vmatpush1.msra.mxu0 %v1897
    %1899 = vmatprep.subr.mxu0 0.0
    %v1900 = vand.u32 %v1376, 4294901760
    %v1901 = vsub.f32 %v1376, %v1900
    %v1902 = vand.u32 %v1901, 4294901760
    %v1903 = vsub.f32 %v1901, %v1902
    %v1904 = vand.u32 %v1903, 4294901760
    %1905 = vmatpush1.msra.mxu0 %v1904
    %1906 = vmatprep.subr.mxu0 0.0
    %v1907 = vand.u32 %v1377, 4294901760
    %v1908 = vsub.f32 %v1377, %v1907
    %v1909 = vand.u32 %v1908, 4294901760
    %v1910 = vsub.f32 %v1908, %v1909
    %v1911 = vand.u32 %v1910, 4294901760
    %1912 = vmatpush1.msra.mxu0 %v1911
    %1913 = vmatprep.subr.mxu0 0.0
    %v1914 = vand.u32 %v1378, 4294901760
    %v1915 = vsub.f32 %v1378, %v1914
    %v1916 = vand.u32 %v1915, 4294901760
    %v1917 = vsub.f32 %v1915, %v1916
    %v1918 = vand.u32 %v1917, 4294901760
    %1919 = vmatpush1.msra.mxu0 %v1918
    %1920 = vmatprep.subr.mxu0 0.0
    %v1921 = vand.u32 %v1379, 4294901760
    %v1922 = vsub.f32 %v1379, %v1921
    %v1923 = vand.u32 %v1922, 4294901760
    %v1924 = vsub.f32 %v1922, %v1923
    %v1925 = vand.u32 %v1924, 4294901760
    %1926 = vmatpush1.msra.mxu0 %v1925
    %1927 = vmatprep.subr.mxu0 0.0
    %v1928 = vand.u32 %v1380, 4294901760
    %v1929 = vsub.f32 %v1380, %v1928
    %v1930 = vand.u32 %v1929, 4294901760
    %v1931 = vsub.f32 %v1929, %v1930
    %v1932 = vand.u32 %v1931, 4294901760
    %1933 = vmatpush1.msra.mxu0 %v1932
    %1934 = vmatprep.subr.mxu0 0.0
    %v1935 = vand.u32 %v1381, 4294901760
    %v1936 = vsub.f32 %v1381, %v1935
    %v1937 = vand.u32 %v1936, 4294901760
    %v1938 = vsub.f32 %v1936, %v1937
    %v1939 = vand.u32 %v1938, 4294901760
    %1940 = vmatpush1.msra.mxu0 %v1939
    %1941 = vmatprep.subr.mxu0 0.0
    %v1942 = vand.u32 %v1382, 4294901760
    %v1943 = vsub.f32 %v1382, %v1942
    %v1944 = vand.u32 %v1943, 4294901760
    %v1945 = vsub.f32 %v1943, %v1944
    %v1946 = vand.u32 %v1945, 4294901760
    %1947 = vmatpush1.msra.mxu0 %v1946
    %1948 = vmatprep.subr.mxu0 0.0
    %v1949 = vand.u32 %v1383, 4294901760
    %v1950 = vsub.f32 %v1383, %v1949
    %v1951 = vand.u32 %v1950, 4294901760
    %v1952 = vsub.f32 %v1950, %v1951
    %v1953 = vand.u32 %v1952, 4294901760
    %1954 = vmatpush1.msra.mxu0 %v1953
    %1955 = vmatprep.subr.mxu0 0.0
    %v1956 = vand.u32 %v1384, 4294901760
    %v1957 = vsub.f32 %v1384, %v1956
    %v1958 = vand.u32 %v1957, 4294901760
    %v1959 = vsub.f32 %v1957, %v1958
    %v1960 = vand.u32 %v1959, 4294901760
    %1961 = vmatpush1.msra.mxu0 %v1960
    %1962 = vmatprep.subr.mxu0 0.0
    %v1963 = vand.u32 %v1385, 4294901760
    %v1964 = vsub.f32 %v1385, %v1963
    %v1965 = vand.u32 %v1964, 4294901760
    %v1966 = vsub.f32 %v1964, %v1965
    %v1967 = vand.u32 %v1966, 4294901760
    %1968 = vmatpush1.msra.mxu0 %v1967
    %1969 = vmatprep.subr.mxu0 0.0
    %v1970 = vand.u32 %v1386, 4294901760
    %v1971 = vsub.f32 %v1386, %v1970
    %v1972 = vand.u32 %v1971, 4294901760
    %v1973 = vsub.f32 %v1971, %v1972
    %v1974 = vand.u32 %v1973, 4294901760
    %1975 = vmatpush1.msra.mxu0 %v1974
    %1976 = vmatprep.subr.mxu0 0.0
    %v1977 = vand.u32 %v1387, 4294901760
    %v1978 = vsub.f32 %v1387, %v1977
    %v1979 = vand.u32 %v1978, 4294901760
    %v1980 = vsub.f32 %v1978, %v1979
    %v1981 = vand.u32 %v1980, 4294901760
    %1982 = vmatpush1.msra.mxu0 %v1981
    %1983 = vmatprep.subr.mxu0 0.0
    %v1984 = vand.u32 %v1388, 4294901760
    %v1985 = vsub.f32 %v1388, %v1984
    %v1986 = vand.u32 %v1985, 4294901760
    %v1987 = vsub.f32 %v1985, %v1986
    %v1988 = vand.u32 %v1987, 4294901760
    %1989 = vmatpush1.msra.mxu0 %v1988
    %1990 = vmatprep.subr.mxu0 0.0
    %v1991 = vand.u32 %v1389, 4294901760
    %v1992 = vsub.f32 %v1389, %v1991
    %v1993 = vand.u32 %v1992, 4294901760
    %v1994 = vsub.f32 %v1992, %v1993
    %v1995 = vand.u32 %v1994, 4294901760
    %1996 = vmatpush1.msra.mxu0 %v1995
    %1997 = vmatprep.subr.mxu0 0.0
    %v1998 = vand.u32 %v1390, 4294901760
    %v1999 = vsub.f32 %v1390, %v1998
    %v2000 = vand.u32 %v1999, 4294901760
    %v2001 = vsub.f32 %v1999, %v2000
    %v2002 = vand.u32 %v2001, 4294901760
    %2003 = vmatpush1.msra.mxu0 %v2002
    %2004 = vmatprep.subr.mxu0 0.0
    %v2005 = vand.u32 %v1391, 4294901760
    %v2006 = vsub.f32 %v1391, %v2005
    %v2007 = vand.u32 %v2006, 4294901760
    %v2008 = vsub.f32 %v2006, %v2007
    %v2009 = vand.u32 %v2008, 4294901760
    %2010 = vmatpush1.msra.mxu0 %v2009
    %2011 = vmatprep.subr.mxu0 0.0
    %v2012 = vand.u32 %v1392, 4294901760
    %v2013 = vsub.f32 %v1392, %v2012
    %v2014 = vand.u32 %v2013, 4294901760
    %v2015 = vsub.f32 %v2013, %v2014
    %v2016 = vand.u32 %v2015, 4294901760
    %2017 = vmatpush1.msra.mxu0 %v2016
    %2018 = vmatprep.subr.mxu0 0.0
    %v2019 = vand.u32 %v1393, 4294901760
    %v2020 = vsub.f32 %v1393, %v2019
    %v2021 = vand.u32 %v2020, 4294901760
    %v2022 = vsub.f32 %v2020, %v2021
    %v2023 = vand.u32 %v2022, 4294901760
    %2024 = vmatpush1.msra.mxu0 %v2023
    %2025 = vmatprep.subr.mxu0 0.0
    %v2026 = vand.u32 %v1394, 4294901760
    %v2027 = vsub.f32 %v1394, %v2026
    %v2028 = vand.u32 %v2027, 4294901760
    %v2029 = vsub.f32 %v2027, %v2028
    %v2030 = vand.u32 %v2029, 4294901760
    %2031 = vmatpush1.msra.mxu0 %v2030
    %2032 = vmatprep.subr.mxu0 0.0
    %v2033 = vand.u32 %v1395, 4294901760
    %v2034 = vsub.f32 %v1395, %v2033
    %v2035 = vand.u32 %v2034, 4294901760
    %v2036 = vsub.f32 %v2034, %v2035
    %v2037 = vand.u32 %v2036, 4294901760
    %2038 = vmatpush1.msra.mxu0 %v2037
    %2039 = vmatprep.subr.mxu0 0.0
    %v2040 = vand.u32 %v1396, 4294901760
    %v2041 = vsub.f32 %v1396, %v2040
    %v2042 = vand.u32 %v2041, 4294901760
    %v2043 = vsub.f32 %v2041, %v2042
    %v2044 = vand.u32 %v2043, 4294901760
    %2045 = vmatpush1.msra.mxu0 %v2044
    %2046 = vmatprep.subr.mxu0 0.0
    %v2047 = vand.u32 %v1397, 4294901760
    %v2048 = vsub.f32 %v1397, %v2047
    %v2049 = vand.u32 %v2048, 4294901760
    %v2050 = vsub.f32 %v2048, %v2049
    %v2051 = vand.u32 %v2050, 4294901760
    %2052 = vmatpush1.msra.mxu0 %v2051
    %v2053 = vand.u32 %v1648, 4294901760
    %2054 = vmatprep.mubr.f32.mxu0 %v2053
    %v2055 = vand.u32 %v1640, 4294901760
    %2056 = vmatmul.mubr.f32.gmra.mrb[0].mxu0 %v2055
    %v2057 = vpop.f32.mrb[0].mxu0
    %v2058 = vadd.f32 %v1826, %v2057
    %v2059 = vpop.f32.mrb[0].mxu0
    %2060 = vdwg.mxu0
    %2061 = vmatprep.subr.mxu0 0.0
    %v2062 = vand.u32 %v1366, 4294901760
    %v2063 = vsub.f32 %v1366, %v2062
    %2064 = vmatpush1.msra.mxu0 %v2063
    %2065 = vmatprep.subr.mxu0 0.0
    %v2066 = vand.u32 %v1367, 4294901760
    %v2067 = vsub.f32 %v1367, %v2066
    %2068 = vmatpush1.msra.mxu0 %v2067
    %2069 = vmatprep.subr.mxu0 0.0
    %v2070 = vand.u32 %v1368, 4294901760
    %v2071 = vsub.f32 %v1368, %v2070
    %2072 = vmatpush1.msra.mxu0 %v2071
    %2073 = vmatprep.subr.mxu0 0.0
    %v2074 = vand.u32 %v1369, 4294901760
    %v2075 = vsub.f32 %v1369, %v2074
    %2076 = vmatpush1.msra.mxu0 %v2075
    %2077 = vmatprep.subr.mxu0 0.0
    %v2078 = vand.u32 %v1370, 4294901760
    %v2079 = vsub.f32 %v1370, %v2078
    %2080 = vmatpush1.msra.mxu0 %v2079
    %2081 = vmatprep.subr.mxu0 0.0
    %v2082 = vand.u32 %v1371, 4294901760
    %v2083 = vsub.f32 %v1371, %v2082
    %2084 = vmatpush1.msra.mxu0 %v2083
    %2085 = vmatprep.subr.mxu0 0.0
    %v2086 = vand.u32 %v1372, 4294901760
    %v2087 = vsub.f32 %v1372, %v2086
    %2088 = vmatpush1.msra.mxu0 %v2087
    %2089 = vmatprep.subr.mxu0 0.0
    %v2090 = vand.u32 %v1373, 4294901760
    %v2091 = vsub.f32 %v1373, %v2090
    %2092 = vmatpush1.msra.mxu0 %v2091
    %2093 = vmatprep.subr.mxu0 0.0
    %v2094 = vand.u32 %v1374, 4294901760
    %v2095 = vsub.f32 %v1374, %v2094
    %2096 = vmatpush1.msra.mxu0 %v2095
    %2097 = vmatprep.subr.mxu0 0.0
    %v2098 = vand.u32 %v1375, 4294901760
    %v2099 = vsub.f32 %v1375, %v2098
    %2100 = vmatpush1.msra.mxu0 %v2099
    %2101 = vmatprep.subr.mxu0 0.0
    %v2102 = vand.u32 %v1376, 4294901760
    %v2103 = vsub.f32 %v1376, %v2102
    %2104 = vmatpush1.msra.mxu0 %v2103
    %2105 = vmatprep.subr.mxu0 0.0
    %v2106 = vand.u32 %v1377, 4294901760
    %v2107 = vsub.f32 %v1377, %v2106
    %2108 = vmatpush1.msra.mxu0 %v2107
    %2109 = vmatprep.subr.mxu0 0.0
    %v2110 = vand.u32 %v1378, 4294901760
    %v2111 = vsub.f32 %v1378, %v2110
    %2112 = vmatpush1.msra.mxu0 %v2111
    %2113 = vmatprep.subr.mxu0 0.0
    %v2114 = vand.u32 %v1379, 4294901760
    %v2115 = vsub.f32 %v1379, %v2114
    %2116 = vmatpush1.msra.mxu0 %v2115
    %2117 = vmatprep.subr.mxu0 0.0
    %v2118 = vand.u32 %v1380, 4294901760
    %v2119 = vsub.f32 %v1380, %v2118
    %2120 = vmatpush1.msra.mxu0 %v2119
    %2121 = vmatprep.subr.mxu0 0.0
    %v2122 = vand.u32 %v1381, 4294901760
    %v2123 = vsub.f32 %v1381, %v2122
    %2124 = vmatpush1.msra.mxu0 %v2123
    %2125 = vmatprep.subr.mxu0 0.0
    %v2126 = vand.u32 %v1382, 4294901760
    %v2127 = vsub.f32 %v1382, %v2126
    %2128 = vmatpush1.msra.mxu0 %v2127
    %2129 = vmatprep.subr.mxu0 0.0
    %v2130 = vand.u32 %v1383, 4294901760
    %v2131 = vsub.f32 %v1383, %v2130
    %2132 = vmatpush1.msra.mxu0 %v2131
    %2133 = vmatprep.subr.mxu0 0.0
    %v2134 = vand.u32 %v1384, 4294901760
    %v2135 = vsub.f32 %v1384, %v2134
    %2136 = vmatpush1.msra.mxu0 %v2135
    %2137 = vmatprep.subr.mxu0 0.0
    %v2138 = vand.u32 %v1385, 4294901760
    %v2139 = vsub.f32 %v1385, %v2138
    %2140 = vmatpush1.msra.mxu0 %v2139
    %2141 = vmatprep.subr.mxu0 0.0
    %v2142 = vand.u32 %v1386, 4294901760
    %v2143 = vsub.f32 %v1386, %v2142
    %2144 = vmatpush1.msra.mxu0 %v2143
    %2145 = vmatprep.subr.mxu0 0.0
    %v2146 = vand.u32 %v1387, 4294901760
    %v2147 = vsub.f32 %v1387, %v2146
    %2148 = vmatpush1.msra.mxu0 %v2147
    %2149 = vmatprep.subr.mxu0 0.0
    %v2150 = vand.u32 %v1388, 4294901760
    %v2151 = vsub.f32 %v1388, %v2150
    %2152 = vmatpush1.msra.mxu0 %v2151
    %2153 = vmatprep.subr.mxu0 0.0
    %v2154 = vand.u32 %v1389, 4294901760
    %v2155 = vsub.f32 %v1389, %v2154
    %2156 = vmatpush1.msra.mxu0 %v2155
    %2157 = vmatprep.subr.mxu0 0.0
    %v2158 = vand.u32 %v1390, 4294901760
    %v2159 = vsub.f32 %v1390, %v2158
    %2160 = vmatpush1.msra.mxu0 %v2159
    %2161 = vmatprep.subr.mxu0 0.0
    %v2162 = vand.u32 %v1391, 4294901760
    %v2163 = vsub.f32 %v1391, %v2162
    %2164 = vmatpush1.msra.mxu0 %v2163
    %2165 = vmatprep.subr.mxu0 0.0
    %v2166 = vand.u32 %v1392, 4294901760
    %v2167 = vsub.f32 %v1392, %v2166
    %2168 = vmatpush1.msra.mxu0 %v2167
    %2169 = vmatprep.subr.mxu0 0.0
    %v2170 = vand.u32 %v1393, 4294901760
    %v2171 = vsub.f32 %v1393, %v2170
    %2172 = vmatpush1.msra.mxu0 %v2171
    %2173 = vmatprep.subr.mxu0 0.0
    %v2174 = vand.u32 %v1394, 4294901760
    %v2175 = vsub.f32 %v1394, %v2174
    %2176 = vmatpush1.msra.mxu0 %v2175
    %2177 = vmatprep.subr.mxu0 0.0
    %v2178 = vand.u32 %v1395, 4294901760
    %v2179 = vsub.f32 %v1395, %v2178
    %2180 = vmatpush1.msra.mxu0 %v2179
    %2181 = vmatprep.subr.mxu0 0.0
    %v2182 = vand.u32 %v1396, 4294901760
    %v2183 = vsub.f32 %v1396, %v2182
    %2184 = vmatpush1.msra.mxu0 %v2183
    %2185 = vmatprep.subr.mxu0 0.0
    %v2186 = vand.u32 %v1397, 4294901760
    %v2187 = vsub.f32 %v1397, %v2186
    %2188 = vmatpush1.msra.mxu0 %v2187
    %v2189 = vand.u32 %v1648, 4294901760
    %v2190 = vsub.f32 %v1648, %v2189
    %2191 = vmatprep.mubr.f32.mxu0 %v2190
    %v2192 = vand.u32 %v1640, 4294901760
    %v2193 = vsub.f32 %v1640, %v2192
    %2194 = vmatmul.mubr.f32.gmra.mrb[0].mxu0 %v2193
    %v2195 = vpop.f32.mrb[0].mxu0
    %v2196 = vadd.f32 %v2058, %v2195
    %v2197 = vpop.f32.mrb[0].mxu0
    %2198 = vdwg.mxu0
    %2199 = vmatprep.subr.mxu0 0.0
    %v2200 = vand.u32 %v1366, 4294901760
    %2201 = vmatpush1.msra.mxu0 %v2200
    %2202 = vmatprep.subr.mxu0 0.0
    %v2203 = vand.u32 %v1367, 4294901760
    %2204 = vmatpush1.msra.mxu0 %v2203
    %2205 = vmatprep.subr.mxu0 0.0
    %v2206 = vand.u32 %v1368, 4294901760
    %2207 = vmatpush1.msra.mxu0 %v2206
    %2208 = vmatprep.subr.mxu0 0.0
    %v2209 = vand.u32 %v1369, 4294901760
    %2210 = vmatpush1.msra.mxu0 %v2209
    %2211 = vmatprep.subr.mxu0 0.0
    %v2212 = vand.u32 %v1370, 4294901760
    %2213 = vmatpush1.msra.mxu0 %v2212
    %2214 = vmatprep.subr.mxu0 0.0
    %v2215 = vand.u32 %v1371, 4294901760
    %2216 = vmatpush1.msra.mxu0 %v2215
    %2217 = vmatprep.subr.mxu0 0.0
    %v2218 = vand.u32 %v1372, 4294901760
    %2219 = vmatpush1.msra.mxu0 %v2218
    %2220 = vmatprep.subr.mxu0 0.0
    %v2221 = vand.u32 %v1373, 4294901760
    %2222 = vmatpush1.msra.mxu0 %v2221
    %2223 = vmatprep.subr.mxu0 0.0
    %v2224 = vand.u32 %v1374, 4294901760
    %2225 = vmatpush1.msra.mxu0 %v2224
    %2226 = vmatprep.subr.mxu0 0.0
    %v2227 = vand.u32 %v1375, 4294901760
    %2228 = vmatpush1.msra.mxu0 %v2227
    %2229 = vmatprep.subr.mxu0 0.0
    %v2230 = vand.u32 %v1376, 4294901760
    %2231 = vmatpush1.msra.mxu0 %v2230
    %2232 = vmatprep.subr.mxu0 0.0
    %v2233 = vand.u32 %v1377, 4294901760
    %2234 = vmatpush1.msra.mxu0 %v2233
    %2235 = vmatprep.subr.mxu0 0.0
    %v2236 = vand.u32 %v1378, 4294901760
    %2237 = vmatpush1.msra.mxu0 %v2236
    %2238 = vmatprep.subr.mxu0 0.0
    %v2239 = vand.u32 %v1379, 4294901760
    %2240 = vmatpush1.msra.mxu0 %v2239
    %2241 = vmatprep.subr.mxu0 0.0
    %v2242 = vand.u32 %v1380, 4294901760
    %2243 = vmatpush1.msra.mxu0 %v2242
    %2244 = vmatprep.subr.mxu0 0.0
    %v2245 = vand.u32 %v1381, 4294901760
    %2246 = vmatpush1.msra.mxu0 %v2245
    %2247 = vmatprep.subr.mxu0 0.0
    %v2248 = vand.u32 %v1382, 4294901760
    %2249 = vmatpush1.msra.mxu0 %v2248
    %2250 = vmatprep.subr.mxu0 0.0
    %v2251 = vand.u32 %v1383, 4294901760
    %2252 = vmatpush1.msra.mxu0 %v2251
    %2253 = vmatprep.subr.mxu0 0.0
    %v2254 = vand.u32 %v1384, 4294901760
    %2255 = vmatpush1.msra.mxu0 %v2254
    %2256 = vmatprep.subr.mxu0 0.0
    %v2257 = vand.u32 %v1385, 4294901760
    %2258 = vmatpush1.msra.mxu0 %v2257
    %2259 = vmatprep.subr.mxu0 0.0
    %v2260 = vand.u32 %v1386, 4294901760
    %2261 = vmatpush1.msra.mxu0 %v2260
    %2262 = vmatprep.subr.mxu0 0.0
    %v2263 = vand.u32 %v1387, 4294901760
    %2264 = vmatpush1.msra.mxu0 %v2263
    %2265 = vmatprep.subr.mxu0 0.0
    %v2266 = vand.u32 %v1388, 4294901760
    %2267 = vmatpush1.msra.mxu0 %v2266
    %2268 = vmatprep.subr.mxu0 0.0
    %v2269 = vand.u32 %v1389, 4294901760
    %2270 = vmatpush1.msra.mxu0 %v2269
    %2271 = vmatprep.subr.mxu0 0.0
    %v2272 = vand.u32 %v1390, 4294901760
    %2273 = vmatpush1.msra.mxu0 %v2272
    %2274 = vmatprep.subr.mxu0 0.0
    %v2275 = vand.u32 %v1391, 4294901760
    %2276 = vmatpush1.msra.mxu0 %v2275
    %2277 = vmatprep.subr.mxu0 0.0
    %v2278 = vand.u32 %v1392, 4294901760
    %2279 = vmatpush1.msra.mxu0 %v2278
    %2280 = vmatprep.subr.mxu0 0.0
    %v2281 = vand.u32 %v1393, 4294901760
    %2282 = vmatpush1.msra.mxu0 %v2281
    %2283 = vmatprep.subr.mxu0 0.0
    %v2284 = vand.u32 %v1394, 4294901760
    %2285 = vmatpush1.msra.mxu0 %v2284
    %2286 = vmatprep.subr.mxu0 0.0
    %v2287 = vand.u32 %v1395, 4294901760
    %2288 = vmatpush1.msra.mxu0 %v2287
    %2289 = vmatprep.subr.mxu0 0.0
    %v2290 = vand.u32 %v1396, 4294901760
    %2291 = vmatpush1.msra.mxu0 %v2290
    %2292 = vmatprep.subr.mxu0 0.0
    %v2293 = vand.u32 %v1397, 4294901760
    %2294 = vmatpush1.msra.mxu0 %v2293
    %v2295 = vand.u32 %v1648, 4294901760
    %v2296 = vsub.f32 %v1648, %v2295
    %v2297 = vand.u32 %v2296, 4294901760
    %2298 = vmatprep.mubr.f32.mxu0 %v2297
    %v2299 = vand.u32 %v1640, 4294901760
    %v2300 = vsub.f32 %v1640, %v2299
    %v2301 = vand.u32 %v2300, 4294901760
    %2302 = vmatmul.mubr.f32.gmra.mrb[0].mxu0 %v2301
    %v2303 = vpop.f32.mrb[0].mxu0
    %v2304 = vadd.f32 %v2196, %v2303
    %v2305 = vpop.f32.mrb[0].mxu0
    %2306 = vdwg.mxu0
    %2307 = vmatprep.subr.mxu0 0.0
    %v2308 = vand.u32 %v1366, 4294901760
    %v2309 = vsub.f32 %v1366, %v2308
    %v2310 = vand.u32 %v2309, 4294901760
    %2311 = vmatpush1.msra.mxu0 %v2310
    %2312 = vmatprep.subr.mxu0 0.0
    %v2313 = vand.u32 %v1367, 4294901760
    %v2314 = vsub.f32 %v1367, %v2313
    %v2315 = vand.u32 %v2314, 4294901760
    %2316 = vmatpush1.msra.mxu0 %v2315
    %2317 = vmatprep.subr.mxu0 0.0
    %v2318 = vand.u32 %v1368, 4294901760
    %v2319 = vsub.f32 %v1368, %v2318
    %v2320 = vand.u32 %v2319, 4294901760
    %2321 = vmatpush1.msra.mxu0 %v2320
    %2322 = vmatprep.subr.mxu0 0.0
    %v2323 = vand.u32 %v1369, 4294901760
    %v2324 = vsub.f32 %v1369, %v2323
    %v2325 = vand.u32 %v2324, 4294901760
    %2326 = vmatpush1.msra.mxu0 %v2325
    %2327 = vmatprep.subr.mxu0 0.0
    %v2328 = vand.u32 %v1370, 4294901760
    %v2329 = vsub.f32 %v1370, %v2328
    %v2330 = vand.u32 %v2329, 4294901760
    %2331 = vmatpush1.msra.mxu0 %v2330
    %2332 = vmatprep.subr.mxu0 0.0
    %v2333 = vand.u32 %v1371, 4294901760
    %v2334 = vsub.f32 %v1371, %v2333
    %v2335 = vand.u32 %v2334, 4294901760
    %2336 = vmatpush1.msra.mxu0 %v2335
    %2337 = vmatprep.subr.mxu0 0.0
    %v2338 = vand.u32 %v1372, 4294901760
    %v2339 = vsub.f32 %v1372, %v2338
    %v2340 = vand.u32 %v2339, 4294901760
    %2341 = vmatpush1.msra.mxu0 %v2340
    %2342 = vmatprep.subr.mxu0 0.0
    %v2343 = vand.u32 %v1373, 4294901760
    %v2344 = vsub.f32 %v1373, %v2343
    %v2345 = vand.u32 %v2344, 4294901760
    %2346 = vmatpush1.msra.mxu0 %v2345
    %2347 = vmatprep.subr.mxu0 0.0
    %v2348 = vand.u32 %v1374, 4294901760
    %v2349 = vsub.f32 %v1374, %v2348
    %v2350 = vand.u32 %v2349, 4294901760
    %2351 = vmatpush1.msra.mxu0 %v2350
    %2352 = vmatprep.subr.mxu0 0.0
    %v2353 = vand.u32 %v1375, 4294901760
    %v2354 = vsub.f32 %v1375, %v2353
    %v2355 = vand.u32 %v2354, 4294901760
    %2356 = vmatpush1.msra.mxu0 %v2355
    %2357 = vmatprep.subr.mxu0 0.0
    %v2358 = vand.u32 %v1376, 4294901760
    %v2359 = vsub.f32 %v1376, %v2358
    %v2360 = vand.u32 %v2359, 4294901760
    %2361 = vmatpush1.msra.mxu0 %v2360
    %2362 = vmatprep.subr.mxu0 0.0
    %v2363 = vand.u32 %v1377, 4294901760
    %v2364 = vsub.f32 %v1377, %v2363
    %v2365 = vand.u32 %v2364, 4294901760
    %2366 = vmatpush1.msra.mxu0 %v2365
    %2367 = vmatprep.subr.mxu0 0.0
    %v2368 = vand.u32 %v1378, 4294901760
    %v2369 = vsub.f32 %v1378, %v2368
    %v2370 = vand.u32 %v2369, 4294901760
    %2371 = vmatpush1.msra.mxu0 %v2370
    %2372 = vmatprep.subr.mxu0 0.0
    %v2373 = vand.u32 %v1379, 4294901760
    %v2374 = vsub.f32 %v1379, %v2373
    %v2375 = vand.u32 %v2374, 4294901760
    %2376 = vmatpush1.msra.mxu0 %v2375
    %2377 = vmatprep.subr.mxu0 0.0
    %v2378 = vand.u32 %v1380, 4294901760
    %v2379 = vsub.f32 %v1380, %v2378
    %v2380 = vand.u32 %v2379, 4294901760
    %2381 = vmatpush1.msra.mxu0 %v2380
    %2382 = vmatprep.subr.mxu0 0.0
    %v2383 = vand.u32 %v1381, 4294901760
    %v2384 = vsub.f32 %v1381, %v2383
    %v2385 = vand.u32 %v2384, 4294901760
    %2386 = vmatpush1.msra.mxu0 %v2385
    %2387 = vmatprep.subr.mxu0 0.0
    %v2388 = vand.u32 %v1382, 4294901760
    %v2389 = vsub.f32 %v1382, %v2388
    %v2390 = vand.u32 %v2389, 4294901760
    %2391 = vmatpush1.msra.mxu0 %v2390
    %2392 = vmatprep.subr.mxu0 0.0
    %v2393 = vand.u32 %v1383, 4294901760
    %v2394 = vsub.f32 %v1383, %v2393
    %v2395 = vand.u32 %v2394, 4294901760
    %2396 = vmatpush1.msra.mxu0 %v2395
    %2397 = vmatprep.subr.mxu0 0.0
    %v2398 = vand.u32 %v1384, 4294901760
    %v2399 = vsub.f32 %v1384, %v2398
    %v2400 = vand.u32 %v2399, 4294901760
    %2401 = vmatpush1.msra.mxu0 %v2400
    %2402 = vmatprep.subr.mxu0 0.0
    %v2403 = vand.u32 %v1385, 4294901760
    %v2404 = vsub.f32 %v1385, %v2403
    %v2405 = vand.u32 %v2404, 4294901760
    %2406 = vmatpush1.msra.mxu0 %v2405
    %2407 = vmatprep.subr.mxu0 0.0
    %v2408 = vand.u32 %v1386, 4294901760
    %v2409 = vsub.f32 %v1386, %v2408
    %v2410 = vand.u32 %v2409, 4294901760
    %2411 = vmatpush1.msra.mxu0 %v2410
    %2412 = vmatprep.subr.mxu0 0.0
    %v2413 = vand.u32 %v1387, 4294901760
    %v2414 = vsub.f32 %v1387, %v2413
    %v2415 = vand.u32 %v2414, 4294901760
    %2416 = vmatpush1.msra.mxu0 %v2415
    %2417 = vmatprep.subr.mxu0 0.0
    %v2418 = vand.u32 %v1388, 4294901760
    %v2419 = vsub.f32 %v1388, %v2418
    %v2420 = vand.u32 %v2419, 4294901760
    %2421 = vmatpush1.msra.mxu0 %v2420
    %2422 = vmatprep.subr.mxu0 0.0
    %v2423 = vand.u32 %v1389, 4294901760
    %v2424 = vsub.f32 %v1389, %v2423
    %v2425 = vand.u32 %v2424, 4294901760
    %2426 = vmatpush1.msra.mxu0 %v2425
    %2427 = vmatprep.subr.mxu0 0.0
    %v2428 = vand.u32 %v1390, 4294901760
    %v2429 = vsub.f32 %v1390, %v2428
    %v2430 = vand.u32 %v2429, 4294901760
    %2431 = vmatpush1.msra.mxu0 %v2430
    %2432 = vmatprep.subr.mxu0 0.0
    %v2433 = vand.u32 %v1391, 4294901760
    %v2434 = vsub.f32 %v1391, %v2433
    %v2435 = vand.u32 %v2434, 4294901760
    %2436 = vmatpush1.msra.mxu0 %v2435
    %2437 = vmatprep.subr.mxu0 0.0
    %v2438 = vand.u32 %v1392, 4294901760
    %v2439 = vsub.f32 %v1392, %v2438
    %v2440 = vand.u32 %v2439, 4294901760
    %2441 = vmatpush1.msra.mxu0 %v2440
    %2442 = vmatprep.subr.mxu0 0.0
    %v2443 = vand.u32 %v1393, 4294901760
    %v2444 = vsub.f32 %v1393, %v2443
    %v2445 = vand.u32 %v2444, 4294901760
    %2446 = vmatpush1.msra.mxu0 %v2445
    %2447 = vmatprep.subr.mxu0 0.0
    %v2448 = vand.u32 %v1394, 4294901760
    %v2449 = vsub.f32 %v1394, %v2448
    %v2450 = vand.u32 %v2449, 4294901760
    %2451 = vmatpush1.msra.mxu0 %v2450
    %2452 = vmatprep.subr.mxu0 0.0
    %v2453 = vand.u32 %v1395, 4294901760
    %v2454 = vsub.f32 %v1395, %v2453
    %v2455 = vand.u32 %v2454, 4294901760
    %2456 = vmatpush1.msra.mxu0 %v2455
    %2457 = vmatprep.subr.mxu0 0.0
    %v2458 = vand.u32 %v1396, 4294901760
    %v2459 = vsub.f32 %v1396, %v2458
    %v2460 = vand.u32 %v2459, 4294901760
    %2461 = vmatpush1.msra.mxu0 %v2460
    %2462 = vmatprep.subr.mxu0 0.0
    %v2463 = vand.u32 %v1397, 4294901760
    %v2464 = vsub.f32 %v1397, %v2463
    %v2465 = vand.u32 %v2464, 4294901760
    %2466 = vmatpush1.msra.mxu0 %v2465
    %v2467 = vand.u32 %v1648, 4294901760
    %2468 = vmatprep.mubr.f32.mxu0 %v2467
    %v2469 = vand.u32 %v1640, 4294901760
    %2470 = vmatmul.mubr.f32.gmra.mrb[0].mxu0 %v2469
    %v2471 = vpop.f32.mrb[0].mxu0
    %v2472 = vadd.f32 %v2304, %v2471
    %v2473 = vpop.f32.mrb[0].mxu0
    %2474 = vdwg.mxu0
    %2475 = vmatprep.subr.mxu0 0.0
    %v2476 = vand.u32 %v1366, 4294901760
    %2477 = vmatpush1.msra.mxu0 %v2476
    %2478 = vmatprep.subr.mxu0 0.0
    %v2479 = vand.u32 %v1367, 4294901760
    %2480 = vmatpush1.msra.mxu0 %v2479
    %2481 = vmatprep.subr.mxu0 0.0
    %v2482 = vand.u32 %v1368, 4294901760
    %2483 = vmatpush1.msra.mxu0 %v2482
    %2484 = vmatprep.subr.mxu0 0.0
    %v2485 = vand.u32 %v1369, 4294901760
    %2486 = vmatpush1.msra.mxu0 %v2485
    %2487 = vmatprep.subr.mxu0 0.0
    %v2488 = vand.u32 %v1370, 4294901760
    %2489 = vmatpush1.msra.mxu0 %v2488
    %2490 = vmatprep.subr.mxu0 0.0
    %v2491 = vand.u32 %v1371, 4294901760
    %2492 = vmatpush1.msra.mxu0 %v2491
    %2493 = vmatprep.subr.mxu0 0.0
    %v2494 = vand.u32 %v1372, 4294901760
    %2495 = vmatpush1.msra.mxu0 %v2494
    %2496 = vmatprep.subr.mxu0 0.0
    %v2497 = vand.u32 %v1373, 4294901760
    %2498 = vmatpush1.msra.mxu0 %v2497
    %2499 = vmatprep.subr.mxu0 0.0
    %v2500 = vand.u32 %v1374, 4294901760
    %2501 = vmatpush1.msra.mxu0 %v2500
    %2502 = vmatprep.subr.mxu0 0.0
    %v2503 = vand.u32 %v1375, 4294901760
    %2504 = vmatpush1.msra.mxu0 %v2503
    %2505 = vmatprep.subr.mxu0 0.0
    %v2506 = vand.u32 %v1376, 4294901760
    %2507 = vmatpush1.msra.mxu0 %v2506
    %2508 = vmatprep.subr.mxu0 0.0
    %v2509 = vand.u32 %v1377, 4294901760
    %2510 = vmatpush1.msra.mxu0 %v2509
    %2511 = vmatprep.subr.mxu0 0.0
    %v2512 = vand.u32 %v1378, 4294901760
    %2513 = vmatpush1.msra.mxu0 %v2512
    %2514 = vmatprep.subr.mxu0 0.0
    %v2515 = vand.u32 %v1379, 4294901760
    %2516 = vmatpush1.msra.mxu0 %v2515
    %2517 = vmatprep.subr.mxu0 0.0
    %v2518 = vand.u32 %v1380, 4294901760
    %2519 = vmatpush1.msra.mxu0 %v2518
    %2520 = vmatprep.subr.mxu0 0.0
    %v2521 = vand.u32 %v1381, 4294901760
    %2522 = vmatpush1.msra.mxu0 %v2521
    %2523 = vmatprep.subr.mxu0 0.0
    %v2524 = vand.u32 %v1382, 4294901760
    %2525 = vmatpush1.msra.mxu0 %v2524
    %2526 = vmatprep.subr.mxu0 0.0
    %v2527 = vand.u32 %v1383, 4294901760
    %2528 = vmatpush1.msra.mxu0 %v2527
    %2529 = vmatprep.subr.mxu0 0.0
    %v2530 = vand.u32 %v1384, 4294901760
    %2531 = vmatpush1.msra.mxu0 %v2530
    %2532 = vmatprep.subr.mxu0 0.0
    %v2533 = vand.u32 %v1385, 4294901760
    %2534 = vmatpush1.msra.mxu0 %v2533
    %2535 = vmatprep.subr.mxu0 0.0
    %v2536 = vand.u32 %v1386, 4294901760
    %2537 = vmatpush1.msra.mxu0 %v2536
    %2538 = vmatprep.subr.mxu0 0.0
    %v2539 = vand.u32 %v1387, 4294901760
    %2540 = vmatpush1.msra.mxu0 %v2539
    %2541 = vmatprep.subr.mxu0 0.0
    %v2542 = vand.u32 %v1388, 4294901760
    %2543 = vmatpush1.msra.mxu0 %v2542
    %2544 = vmatprep.subr.mxu0 0.0
    %v2545 = vand.u32 %v1389, 4294901760
    %2546 = vmatpush1.msra.mxu0 %v2545
    %2547 = vmatprep.subr.mxu0 0.0
    %v2548 = vand.u32 %v1390, 4294901760
    %2549 = vmatpush1.msra.mxu0 %v2548
    %2550 = vmatprep.subr.mxu0 0.0
    %v2551 = vand.u32 %v1391, 4294901760
    %2552 = vmatpush1.msra.mxu0 %v2551
    %2553 = vmatprep.subr.mxu0 0.0
    %v2554 = vand.u32 %v1392, 4294901760
    %2555 = vmatpush1.msra.mxu0 %v2554
    %2556 = vmatprep.subr.mxu0 0.0
    %v2557 = vand.u32 %v1393, 4294901760
    %2558 = vmatpush1.msra.mxu0 %v2557
    %2559 = vmatprep.subr.mxu0 0.0
    %v2560 = vand.u32 %v1394, 4294901760
    %2561 = vmatpush1.msra.mxu0 %v2560
    %2562 = vmatprep.subr.mxu0 0.0
    %v2563 = vand.u32 %v1395, 4294901760
    %2564 = vmatpush1.msra.mxu0 %v2563
    %2565 = vmatprep.subr.mxu0 0.0
    %v2566 = vand.u32 %v1396, 4294901760
    %2567 = vmatpush1.msra.mxu0 %v2566
    %2568 = vmatprep.subr.mxu0 0.0
    %v2569 = vand.u32 %v1397, 4294901760
    %2570 = vmatpush1.msra.mxu0 %v2569
    %v2571 = vand.u32 %v1648, 4294901760
    %2572 = vmatprep.mubr.f32.mxu0 %v2571
    %v2573 = vand.u32 %v1640, 4294901760
    %2574 = vmatmul.mubr.f32.gmra.mrb[0].mxu0 %v2573
    %v2575 = vpop.f32.mrb[0].mxu0
    %v2576 = vadd.f32 %v2472, %v2575
    %v2577 = vpop.f32.mrb[0].mxu0
    %2578 = vdwg.mxu0
    %2579 = vmatprep.subr.mxu0 0.0
    %v2580 = vand.u32 %v1398, 4294901760
    %2581 = vmatpush1.msra.mxu0 %v2580
    %2582 = vmatprep.subr.mxu0 0.0
    %v2583 = vand.u32 %v1399, 4294901760
    %2584 = vmatpush1.msra.mxu0 %v2583
    %2585 = vmatprep.subr.mxu0 0.0
    %v2586 = vand.u32 %v1400, 4294901760
    %2587 = vmatpush1.msra.mxu0 %v2586
    %2588 = vmatprep.subr.mxu0 0.0
    %v2589 = vand.u32 %v1401, 4294901760
    %2590 = vmatpush1.msra.mxu0 %v2589
    %2591 = vmatprep.subr.mxu0 0.0
    %v2592 = vand.u32 %v1402, 4294901760
    %2593 = vmatpush1.msra.mxu0 %v2592
    %2594 = vmatprep.subr.mxu0 0.0
    %v2595 = vand.u32 %v1403, 4294901760
    %2596 = vmatpush1.msra.mxu0 %v2595
    %2597 = vmatprep.subr.mxu0 0.0
    %v2598 = vand.u32 %v1404, 4294901760
    %2599 = vmatpush1.msra.mxu0 %v2598
    %2600 = vmatprep.subr.mxu0 0.0
    %v2601 = vand.u32 %v1405, 4294901760
    %2602 = vmatpush1.msra.mxu0 %v2601
    %2603 = vmatprep.subr.mxu0 0.0
    %v2604 = vand.u32 %v1406, 4294901760
    %2605 = vmatpush1.msra.mxu0 %v2604
    %2606 = vmatprep.subr.mxu0 0.0
    %v2607 = vand.u32 %v1407, 4294901760
    %2608 = vmatpush1.msra.mxu0 %v2607
    %2609 = vmatprep.subr.mxu0 0.0
    %v2610 = vand.u32 %v1408, 4294901760
    %2611 = vmatpush1.msra.mxu0 %v2610
    %2612 = vmatprep.subr.mxu0 0.0
    %v2613 = vand.u32 %v1409, 4294901760
    %2614 = vmatpush1.msra.mxu0 %v2613
    %2615 = vmatprep.subr.mxu0 0.0
    %v2616 = vand.u32 %v1410, 4294901760
    %2617 = vmatpush1.msra.mxu0 %v2616
    %2618 = vmatprep.subr.mxu0 0.0
    %v2619 = vand.u32 %v1411, 4294901760
    %2620 = vmatpush1.msra.mxu0 %v2619
    %2621 = vmatprep.subr.mxu0 0.0
    %v2622 = vand.u32 %v1412, 4294901760
    %2623 = vmatpush1.msra.mxu0 %v2622
    %2624 = vmatprep.subr.mxu0 0.0
    %v2625 = vand.u32 %v1413, 4294901760
    %2626 = vmatpush1.msra.mxu0 %v2625
    %2627 = vmatprep.subr.mxu0 0.0
    %v2628 = vand.u32 %v1414, 4294901760
    %2629 = vmatpush1.msra.mxu0 %v2628
    %2630 = vmatprep.subr.mxu0 0.0
    %v2631 = vand.u32 %v1415, 4294901760
    %2632 = vmatpush1.msra.mxu0 %v2631
    %2633 = vmatprep.subr.mxu0 0.0
    %v2634 = vand.u32 %v1416, 4294901760
    %2635 = vmatpush1.msra.mxu0 %v2634
    %2636 = vmatprep.subr.mxu0 0.0
    %v2637 = vand.u32 %v1417, 4294901760
    %2638 = vmatpush1.msra.mxu0 %v2637
    %2639 = vmatprep.subr.mxu0 0.0
    %v2640 = vand.u32 %v1418, 4294901760
    %2641 = vmatpush1.msra.mxu0 %v2640
    %2642 = vmatprep.subr.mxu0 0.0
    %v2643 = vand.u32 %v1419, 4294901760
    %2644 = vmatpush1.msra.mxu0 %v2643
    %2645 = vmatprep.subr.mxu0 0.0
    %v2646 = vand.u32 %v1420, 4294901760
    %2647 = vmatpush1.msra.mxu0 %v2646
    %2648 = vmatprep.subr.mxu0 0.0
    %v2649 = vand.u32 %v1421, 4294901760
    %2650 = vmatpush1.msra.mxu0 %v2649
    %2651 = vmatprep.subr.mxu0 0.0
    %v2652 = vand.u32 %v1422, 4294901760
    %2653 = vmatpush1.msra.mxu0 %v2652
    %2654 = vmatprep.subr.mxu0 0.0
    %v2655 = vand.u32 %v1423, 4294901760
    %2656 = vmatpush1.msra.mxu0 %v2655
    %2657 = vmatprep.subr.mxu0 0.0
    %v2658 = vand.u32 %v1424, 4294901760
    %2659 = vmatpush1.msra.mxu0 %v2658
    %2660 = vmatprep.subr.mxu0 0.0
    %v2661 = vand.u32 %v1425, 4294901760
    %2662 = vmatpush1.msra.mxu0 %v2661
    %2663 = vmatprep.subr.mxu0 0.0
    %v2664 = vand.u32 %v1426, 4294901760
    %2665 = vmatpush1.msra.mxu0 %v2664
    %2666 = vmatprep.subr.mxu0 0.0
    %v2667 = vand.u32 %v1427, 4294901760
    %2668 = vmatpush1.msra.mxu0 %v2667
    %2669 = vmatprep.subr.mxu0 0.0
    %v2670 = vand.u32 %v1428, 4294901760
    %2671 = vmatpush1.msra.mxu0 %v2670
    %2672 = vmatprep.subr.mxu0 0.0
    %v2673 = vand.u32 %v1429, 4294901760
    %2674 = vmatpush1.msra.mxu0 %v2673
    %v2675 = vand.u32 %v1649, 4294901760
    %v2676 = vsub.f32 %v1649, %v2675
    %v2677 = vand.u32 %v2676, 4294901760
    %v2678 = vsub.f32 %v2676, %v2677
    %v2679 = vand.u32 %v2678, 4294901760
    %2680 = vmatprep.mubr.f32.mxu0 %v2679
    %v2681 = vand.u32 %v1647, 4294901760
    %v2682 = vsub.f32 %v1647, %v2681
    %v2683 = vand.u32 %v2682, 4294901760
    %v2684 = vsub.f32 %v2682, %v2683
    %v2685 = vand.u32 %v2684, 4294901760
    %2686 = vmatmul.mubr.f32.gmra.mrb[0].mxu0 %v2685
    %v2687 = vpop.f32.mrb[0].mxu0
    %v2688 = vadd.f32 %v2576, %v2687
    %v2689 = vpop.f32.mrb[0].mxu0
    %2690 = vdwg.mxu0
    %2691 = vmatprep.subr.mxu0 0.0
    %v2692 = vand.u32 %v1398, 4294901760
    %v2693 = vsub.f32 %v1398, %v2692
    %v2694 = vand.u32 %v2693, 4294901760
    %v2695 = vsub.f32 %v2693, %v2694
    %v2696 = vand.u32 %v2695, 4294901760
    %2697 = vmatpush1.msra.mxu0 %v2696
    %2698 = vmatprep.subr.mxu0 0.0
    %v2699 = vand.u32 %v1399, 4294901760
    %v2700 = vsub.f32 %v1399, %v2699
    %v2701 = vand.u32 %v2700, 4294901760
    %v2702 = vsub.f32 %v2700, %v2701
    %v2703 = vand.u32 %v2702, 4294901760
    %2704 = vmatpush1.msra.mxu0 %v2703
    %2705 = vmatprep.subr.mxu0 0.0
    %v2706 = vand.u32 %v1400, 4294901760
    %v2707 = vsub.f32 %v1400, %v2706
    %v2708 = vand.u32 %v2707, 4294901760
    %v2709 = vsub.f32 %v2707, %v2708
    %v2710 = vand.u32 %v2709, 4294901760
    %2711 = vmatpush1.msra.mxu0 %v2710
    %2712 = vmatprep.subr.mxu0 0.0
    %v2713 = vand.u32 %v1401, 4294901760
    %v2714 = vsub.f32 %v1401, %v2713
    %v2715 = vand.u32 %v2714, 4294901760
    %v2716 = vsub.f32 %v2714, %v2715
    %v2717 = vand.u32 %v2716, 4294901760
    %2718 = vmatpush1.msra.mxu0 %v2717
    %2719 = vmatprep.subr.mxu0 0.0
    %v2720 = vand.u32 %v1402, 4294901760
    %v2721 = vsub.f32 %v1402, %v2720
    %v2722 = vand.u32 %v2721, 4294901760
    %v2723 = vsub.f32 %v2721, %v2722
    %v2724 = vand.u32 %v2723, 4294901760
    %2725 = vmatpush1.msra.mxu0 %v2724
    %2726 = vmatprep.subr.mxu0 0.0
    %v2727 = vand.u32 %v1403, 4294901760
    %v2728 = vsub.f32 %v1403, %v2727
    %v2729 = vand.u32 %v2728, 4294901760
    %v2730 = vsub.f32 %v2728, %v2729
    %v2731 = vand.u32 %v2730, 4294901760
    %2732 = vmatpush1.msra.mxu0 %v2731
    %2733 = vmatprep.subr.mxu0 0.0
    %v2734 = vand.u32 %v1404, 4294901760
    %v2735 = vsub.f32 %v1404, %v2734
    %v2736 = vand.u32 %v2735, 4294901760
    %v2737 = vsub.f32 %v2735, %v2736
    %v2738 = vand.u32 %v2737, 4294901760
    %2739 = vmatpush1.msra.mxu0 %v2738
    %2740 = vmatprep.subr.mxu0 0.0
    %v2741 = vand.u32 %v1405, 4294901760
    %v2742 = vsub.f32 %v1405, %v2741
    %v2743 = vand.u32 %v2742, 4294901760
    %v2744 = vsub.f32 %v2742, %v2743
    %v2745 = vand.u32 %v2744, 4294901760
    %2746 = vmatpush1.msra.mxu0 %v2745
    %2747 = vmatprep.subr.mxu0 0.0
    %v2748 = vand.u32 %v1406, 4294901760
    %v2749 = vsub.f32 %v1406, %v2748
    %v2750 = vand.u32 %v2749, 4294901760
    %v2751 = vsub.f32 %v2749, %v2750
    %v2752 = vand.u32 %v2751, 4294901760
    %2753 = vmatpush1.msra.mxu0 %v2752
    %2754 = vmatprep.subr.mxu0 0.0
    %v2755 = vand.u32 %v1407, 4294901760
    %v2756 = vsub.f32 %v1407, %v2755
    %v2757 = vand.u32 %v2756, 4294901760
    %v2758 = vsub.f32 %v2756, %v2757
    %v2759 = vand.u32 %v2758, 4294901760
    %2760 = vmatpush1.msra.mxu0 %v2759
    %2761 = vmatprep.subr.mxu0 0.0
    %v2762 = vand.u32 %v1408, 4294901760
    %v2763 = vsub.f32 %v1408, %v2762
    %v2764 = vand.u32 %v2763, 4294901760
    %v2765 = vsub.f32 %v2763, %v2764
    %v2766 = vand.u32 %v2765, 4294901760
    %2767 = vmatpush1.msra.mxu0 %v2766
    %2768 = vmatprep.subr.mxu0 0.0
    %v2769 = vand.u32 %v1409, 4294901760
    %v2770 = vsub.f32 %v1409, %v2769
    %v2771 = vand.u32 %v2770, 4294901760
    %v2772 = vsub.f32 %v2770, %v2771
    %v2773 = vand.u32 %v2772, 4294901760
    %2774 = vmatpush1.msra.mxu0 %v2773
    %2775 = vmatprep.subr.mxu0 0.0
    %v2776 = vand.u32 %v1410, 4294901760
    %v2777 = vsub.f32 %v1410, %v2776
    %v2778 = vand.u32 %v2777, 4294901760
    %v2779 = vsub.f32 %v2777, %v2778
    %v2780 = vand.u32 %v2779, 4294901760
    %2781 = vmatpush1.msra.mxu0 %v2780
    %2782 = vmatprep.subr.mxu0 0.0
    %v2783 = vand.u32 %v1411, 4294901760
    %v2784 = vsub.f32 %v1411, %v2783
    %v2785 = vand.u32 %v2784, 4294901760
    %v2786 = vsub.f32 %v2784, %v2785
    %v2787 = vand.u32 %v2786, 4294901760
    %2788 = vmatpush1.msra.mxu0 %v2787
    %2789 = vmatprep.subr.mxu0 0.0
    %v2790 = vand.u32 %v1412, 4294901760
    %v2791 = vsub.f32 %v1412, %v2790
    %v2792 = vand.u32 %v2791, 4294901760
    %v2793 = vsub.f32 %v2791, %v2792
    %v2794 = vand.u32 %v2793, 4294901760
    %2795 = vmatpush1.msra.mxu0 %v2794
    %2796 = vmatprep.subr.mxu0 0.0
    %v2797 = vand.u32 %v1413, 4294901760
    %v2798 = vsub.f32 %v1413, %v2797
    %v2799 = vand.u32 %v2798, 4294901760
    %v2800 = vsub.f32 %v2798, %v2799
    %v2801 = vand.u32 %v2800, 4294901760
    %2802 = vmatpush1.msra.mxu0 %v2801
    %2803 = vmatprep.subr.mxu0 0.0
    %v2804 = vand.u32 %v1414, 4294901760
    %v2805 = vsub.f32 %v1414, %v2804
    %v2806 = vand.u32 %v2805, 4294901760
    %v2807 = vsub.f32 %v2805, %v2806
    %v2808 = vand.u32 %v2807, 4294901760
    %2809 = vmatpush1.msra.mxu0 %v2808
    %2810 = vmatprep.subr.mxu0 0.0
    %v2811 = vand.u32 %v1415, 4294901760
    %v2812 = vsub.f32 %v1415, %v2811
    %v2813 = vand.u32 %v2812, 4294901760
    %v2814 = vsub.f32 %v2812, %v2813
    %v2815 = vand.u32 %v2814, 4294901760
    %2816 = vmatpush1.msra.mxu0 %v2815
    %2817 = vmatprep.subr.mxu0 0.0
    %v2818 = vand.u32 %v1416, 4294901760
    %v2819 = vsub.f32 %v1416, %v2818
    %v2820 = vand.u32 %v2819, 4294901760
    %v2821 = vsub.f32 %v2819, %v2820
    %v2822 = vand.u32 %v2821, 4294901760
    %2823 = vmatpush1.msra.mxu0 %v2822
    %2824 = vmatprep.subr.mxu0 0.0
    %v2825 = vand.u32 %v1417, 4294901760
    %v2826 = vsub.f32 %v1417, %v2825
    %v2827 = vand.u32 %v2826, 4294901760
    %v2828 = vsub.f32 %v2826, %v2827
    %v2829 = vand.u32 %v2828, 4294901760
    %2830 = vmatpush1.msra.mxu0 %v2829
    %2831 = vmatprep.subr.mxu0 0.0
    %v2832 = vand.u32 %v1418, 4294901760
    %v2833 = vsub.f32 %v1418, %v2832
    %v2834 = vand.u32 %v2833, 4294901760
    %v2835 = vsub.f32 %v2833, %v2834
    %v2836 = vand.u32 %v2835, 4294901760
    %2837 = vmatpush1.msra.mxu0 %v2836
    %2838 = vmatprep.subr.mxu0 0.0
    %v2839 = vand.u32 %v1419, 4294901760
    %v2840 = vsub.f32 %v1419, %v2839
    %v2841 = vand.u32 %v2840, 4294901760
    %v2842 = vsub.f32 %v2840, %v2841
    %v2843 = vand.u32 %v2842, 4294901760
    %2844 = vmatpush1.msra.mxu0 %v2843
    %2845 = vmatprep.subr.mxu0 0.0
    %v2846 = vand.u32 %v1420, 4294901760
    %v2847 = vsub.f32 %v1420, %v2846
    %v2848 = vand.u32 %v2847, 4294901760
    %v2849 = vsub.f32 %v2847, %v2848
    %v2850 = vand.u32 %v2849, 4294901760
    %2851 = vmatpush1.msra.mxu0 %v2850
    %2852 = vmatprep.subr.mxu0 0.0
    %v2853 = vand.u32 %v1421, 4294901760
    %v2854 = vsub.f32 %v1421, %v2853
    %v2855 = vand.u32 %v2854, 4294901760
    %v2856 = vsub.f32 %v2854, %v2855
    %v2857 = vand.u32 %v2856, 4294901760
    %2858 = vmatpush1.msra.mxu0 %v2857
    %2859 = vmatprep.subr.mxu0 0.0
    %v2860 = vand.u32 %v1422, 4294901760
    %v2861 = vsub.f32 %v1422, %v2860
    %v2862 = vand.u32 %v2861, 4294901760
    %v2863 = vsub.f32 %v2861, %v2862
    %v2864 = vand.u32 %v2863, 4294901760
    %2865 = vmatpush1.msra.mxu0 %v2864
    %2866 = vmatprep.subr.mxu0 0.0
    %v2867 = vand.u32 %v1423, 4294901760
    %v2868 = vsub.f32 %v1423, %v2867
    %v2869 = vand.u32 %v2868, 4294901760
    %v2870 = vsub.f32 %v2868, %v2869
    %v2871 = vand.u32 %v2870, 4294901760
    %2872 = vmatpush1.msra.mxu0 %v2871
    %2873 = vmatprep.subr.mxu0 0.0
    %v2874 = vand.u32 %v1424, 4294901760
    %v2875 = vsub.f32 %v1424, %v2874
    %v2876 = vand.u32 %v2875, 4294901760
    %v2877 = vsub.f32 %v2875, %v2876
    %v2878 = vand.u32 %v2877, 4294901760
    %2879 = vmatpush1.msra.mxu0 %v2878
    %2880 = vmatprep.subr.mxu0 0.0
    %v2881 = vand.u32 %v1425, 4294901760
    %v2882 = vsub.f32 %v1425, %v2881
    %v2883 = vand.u32 %v2882, 4294901760
    %v2884 = vsub.f32 %v2882, %v2883
    %v2885 = vand.u32 %v2884, 4294901760
    %2886 = vmatpush1.msra.mxu0 %v2885
    %2887 = vmatprep.subr.mxu0 0.0
    %v2888 = vand.u32 %v1426, 4294901760
    %v2889 = vsub.f32 %v1426, %v2888
    %v2890 = vand.u32 %v2889, 4294901760
    %v2891 = vsub.f32 %v2889, %v2890
    %v2892 = vand.u32 %v2891, 4294901760
    %2893 = vmatpush1.msra.mxu0 %v2892
    %2894 = vmatprep.subr.mxu0 0.0
    %v2895 = vand.u32 %v1427, 4294901760
    %v2896 = vsub.f32 %v1427, %v2895
    %v2897 = vand.u32 %v2896, 4294901760
    %v2898 = vsub.f32 %v2896, %v2897
    %v2899 = vand.u32 %v2898, 4294901760
    %2900 = vmatpush1.msra.mxu0 %v2899
    %2901 = vmatprep.subr.mxu0 0.0
    %v2902 = vand.u32 %v1428, 4294901760
    %v2903 = vsub.f32 %v1428, %v2902
    %v2904 = vand.u32 %v2903, 4294901760
    %v2905 = vsub.f32 %v2903, %v2904
    %v2906 = vand.u32 %v2905, 4294901760
    %2907 = vmatpush1.msra.mxu0 %v2906
    %2908 = vmatprep.subr.mxu0 0.0
    %v2909 = vand.u32 %v1429, 4294901760
    %v2910 = vsub.f32 %v1429, %v2909
    %v2911 = vand.u32 %v2910, 4294901760
    %v2912 = vsub.f32 %v2910, %v2911
    %v2913 = vand.u32 %v2912, 4294901760
    %2914 = vmatpush1.msra.mxu0 %v2913
    %v2915 = vand.u32 %v1649, 4294901760
    %2916 = vmatprep.mubr.f32.mxu0 %v2915
    %v2917 = vand.u32 %v1647, 4294901760
    %2918 = vmatmul.mubr.f32.gmra.mrb[0].mxu0 %v2917
    %v2919 = vpop.f32.mrb[0].mxu0
    %v2920 = vadd.f32 %v2688, %v2919
    %v2921 = vpop.f32.mrb[0].mxu0
    %2922 = vdwg.mxu0
    %2923 = vmatprep.subr.mxu0 0.0
    %v2924 = vand.u32 %v1398, 4294901760
    %v2925 = vsub.f32 %v1398, %v2924
    %2926 = vmatpush1.msra.mxu0 %v2925
    %2927 = vmatprep.subr.mxu0 0.0
    %v2928 = vand.u32 %v1399, 4294901760
    %v2929 = vsub.f32 %v1399, %v2928
    %2930 = vmatpush1.msra.mxu0 %v2929
    %2931 = vmatprep.subr.mxu0 0.0
    %v2932 = vand.u32 %v1400, 4294901760
    %v2933 = vsub.f32 %v1400, %v2932
    %2934 = vmatpush1.msra.mxu0 %v2933
    %2935 = vmatprep.subr.mxu0 0.0
    %v2936 = vand.u32 %v1401, 4294901760
    %v2937 = vsub.f32 %v1401, %v2936
    %2938 = vmatpush1.msra.mxu0 %v2937
    %2939 = vmatprep.subr.mxu0 0.0
    %v2940 = vand.u32 %v1402, 4294901760
    %v2941 = vsub.f32 %v1402, %v2940
    %2942 = vmatpush1.msra.mxu0 %v2941
    %2943 = vmatprep.subr.mxu0 0.0
    %v2944 = vand.u32 %v1403, 4294901760
    %v2945 = vsub.f32 %v1403, %v2944
    %2946 = vmatpush1.msra.mxu0 %v2945
    %2947 = vmatprep.subr.mxu0 0.0
    %v2948 = vand.u32 %v1404, 4294901760
    %v2949 = vsub.f32 %v1404, %v2948
    %2950 = vmatpush1.msra.mxu0 %v2949
    %2951 = vmatprep.subr.mxu0 0.0
    %v2952 = vand.u32 %v1405, 4294901760
    %v2953 = vsub.f32 %v1405, %v2952
    %2954 = vmatpush1.msra.mxu0 %v2953
    %2955 = vmatprep.subr.mxu0 0.0
    %v2956 = vand.u32 %v1406, 4294901760
    %v2957 = vsub.f32 %v1406, %v2956
    %2958 = vmatpush1.msra.mxu0 %v2957
    %2959 = vmatprep.subr.mxu0 0.0
    %v2960 = vand.u32 %v1407, 4294901760
    %v2961 = vsub.f32 %v1407, %v2960
    %2962 = vmatpush1.msra.mxu0 %v2961
    %2963 = vmatprep.subr.mxu0 0.0
    %v2964 = vand.u32 %v1408, 4294901760
    %v2965 = vsub.f32 %v1408, %v2964
    %2966 = vmatpush1.msra.mxu0 %v2965
    %2967 = vmatprep.subr.mxu0 0.0
    %v2968 = vand.u32 %v1409, 4294901760
    %v2969 = vsub.f32 %v1409, %v2968
    %2970 = vmatpush1.msra.mxu0 %v2969
    %2971 = vmatprep.subr.mxu0 0.0
    %v2972 = vand.u32 %v1410, 4294901760
    %v2973 = vsub.f32 %v1410, %v2972
    %2974 = vmatpush1.msra.mxu0 %v2973
    %2975 = vmatprep.subr.mxu0 0.0
    %v2976 = vand.u32 %v1411, 4294901760
    %v2977 = vsub.f32 %v1411, %v2976
    %2978 = vmatpush1.msra.mxu0 %v2977
    %2979 = vmatprep.subr.mxu0 0.0
    %v2980 = vand.u32 %v1412, 4294901760
    %v2981 = vsub.f32 %v1412, %v2980
    %2982 = vmatpush1.msra.mxu0 %v2981
    %2983 = vmatprep.subr.mxu0 0.0
    %v2984 = vand.u32 %v1413, 4294901760
    %v2985 = vsub.f32 %v1413, %v2984
    %2986 = vmatpush1.msra.mxu0 %v2985
    %2987 = vmatprep.subr.mxu0 0.0
    %v2988 = vand.u32 %v1414, 4294901760
    %v2989 = vsub.f32 %v1414, %v2988
    %2990 = vmatpush1.msra.mxu0 %v2989
    %2991 = vmatprep.subr.mxu0 0.0
    %v2992 = vand.u32 %v1415, 4294901760
    %v2993 = vsub.f32 %v1415, %v2992
    %2994 = vmatpush1.msra.mxu0 %v2993
    %2995 = vmatprep.subr.mxu0 0.0
    %v2996 = vand.u32 %v1416, 4294901760
    %v2997 = vsub.f32 %v1416, %v2996
    %2998 = vmatpush1.msra.mxu0 %v2997
    %2999 = vmatprep.subr.mxu0 0.0
    %v3000 = vand.u32 %v1417, 4294901760
    %v3001 = vsub.f32 %v1417, %v3000
    %3002 = vmatpush1.msra.mxu0 %v3001
    %3003 = vmatprep.subr.mxu0 0.0
    %v3004 = vand.u32 %v1418, 4294901760
    %v3005 = vsub.f32 %v1418, %v3004
    %3006 = vmatpush1.msra.mxu0 %v3005
    %3007 = vmatprep.subr.mxu0 0.0
    %v3008 = vand.u32 %v1419, 4294901760
    %v3009 = vsub.f32 %v1419, %v3008
    %3010 = vmatpush1.msra.mxu0 %v3009
    %3011 = vmatprep.subr.mxu0 0.0
    %v3012 = vand.u32 %v1420, 4294901760
    %v3013 = vsub.f32 %v1420, %v3012
    %3014 = vmatpush1.msra.mxu0 %v3013
    %3015 = vmatprep.subr.mxu0 0.0
    %v3016 = vand.u32 %v1421, 4294901760
    %v3017 = vsub.f32 %v1421, %v3016
    %3018 = vmatpush1.msra.mxu0 %v3017
    %3019 = vmatprep.subr.mxu0 0.0
    %v3020 = vand.u32 %v1422, 4294901760
    %v3021 = vsub.f32 %v1422, %v3020
    %3022 = vmatpush1.msra.mxu0 %v3021
    %3023 = vmatprep.subr.mxu0 0.0
    %v3024 = vand.u32 %v1423, 4294901760
    %v3025 = vsub.f32 %v1423, %v3024
    %3026 = vmatpush1.msra.mxu0 %v3025
    %3027 = vmatprep.subr.mxu0 0.0
    %v3028 = vand.u32 %v1424, 4294901760
    %v3029 = vsub.f32 %v1424, %v3028
    %3030 = vmatpush1.msra.mxu0 %v3029
    %3031 = vmatprep.subr.mxu0 0.0
    %v3032 = vand.u32 %v1425, 4294901760
    %v3033 = vsub.f32 %v1425, %v3032
    %3034 = vmatpush1.msra.mxu0 %v3033
    %3035 = vmatprep.subr.mxu0 0.0
    %v3036 = vand.u32 %v1426, 4294901760
    %v3037 = vsub.f32 %v1426, %v3036
    %3038 = vmatpush1.msra.mxu0 %v3037
    %3039 = vmatprep.subr.mxu0 0.0
    %v3040 = vand.u32 %v1427, 4294901760
    %v3041 = vsub.f32 %v1427, %v3040
    %3042 = vmatpush1.msra.mxu0 %v3041
    %3043 = vmatprep.subr.mxu0 0.0
    %v3044 = vand.u32 %v1428, 4294901760
    %v3045 = vsub.f32 %v1428, %v3044
    %3046 = vmatpush1.msra.mxu0 %v3045
    %3047 = vmatprep.subr.mxu0 0.0
    %v3048 = vand.u32 %v1429, 4294901760
    %v3049 = vsub.f32 %v1429, %v3048
    %3050 = vmatpush1.msra.mxu0 %v3049
    %v3051 = vand.u32 %v1649, 4294901760
    %v3052 = vsub.f32 %v1649, %v3051
    %3053 = vmatprep.mubr.f32.mxu0 %v3052
    %v3054 = vand.u32 %v1647, 4294901760
    %v3055 = vsub.f32 %v1647, %v3054
    %3056 = vmatmul.mubr.f32.gmra.mrb[0].mxu0 %v3055
    %v3057 = vpop.f32.mrb[0].mxu0
    %v3058 = vadd.f32 %v2920, %v3057
    %v3059 = vpop.f32.mrb[0].mxu0
    %3060 = vdwg.mxu0
    %3061 = vmatprep.subr.mxu0 0.0
    %v3062 = vand.u32 %v1398, 4294901760
    %3063 = vmatpush1.msra.mxu0 %v3062
    %3064 = vmatprep.subr.mxu0 0.0
    %v3065 = vand.u32 %v1399, 4294901760
    %3066 = vmatpush1.msra.mxu0 %v3065
    %3067 = vmatprep.subr.mxu0 0.0
    %v3068 = vand.u32 %v1400, 4294901760
    %3069 = vmatpush1.msra.mxu0 %v3068
    %3070 = vmatprep.subr.mxu0 0.0
    %v3071 = vand.u32 %v1401, 4294901760
    %3072 = vmatpush1.msra.mxu0 %v3071
    %3073 = vmatprep.subr.mxu0 0.0
    %v3074 = vand.u32 %v1402, 4294901760
    %3075 = vmatpush1.msra.mxu0 %v3074
    %3076 = vmatprep.subr.mxu0 0.0
    %v3077 = vand.u32 %v1403, 4294901760
    %3078 = vmatpush1.msra.mxu0 %v3077
    %3079 = vmatprep.subr.mxu0 0.0
    %v3080 = vand.u32 %v1404, 4294901760
    %3081 = vmatpush1.msra.mxu0 %v3080
    %3082 = vmatprep.subr.mxu0 0.0
    %v3083 = vand.u32 %v1405, 4294901760
    %3084 = vmatpush1.msra.mxu0 %v3083
    %3085 = vmatprep.subr.mxu0 0.0
    %v3086 = vand.u32 %v1406, 4294901760
    %3087 = vmatpush1.msra.mxu0 %v3086
    %3088 = vmatprep.subr.mxu0 0.0
    %v3089 = vand.u32 %v1407, 4294901760
    %3090 = vmatpush1.msra.mxu0 %v3089
    %3091 = vmatprep.subr.mxu0 0.0
    %v3092 = vand.u32 %v1408, 4294901760
    %3093 = vmatpush1.msra.mxu0 %v3092
    %3094 = vmatprep.subr.mxu0 0.0
    %v3095 = vand.u32 %v1409, 4294901760
    %3096 = vmatpush1.msra.mxu0 %v3095
    %3097 = vmatprep.subr.mxu0 0.0
    %v3098 = vand.u32 %v1410, 4294901760
    %3099 = vmatpush1.msra.mxu0 %v3098
    %3100 = vmatprep.subr.mxu0 0.0
    %v3101 = vand.u32 %v1411, 4294901760
    %3102 = vmatpush1.msra.mxu0 %v3101
    %3103 = vmatprep.subr.mxu0 0.0
    %v3104 = vand.u32 %v1412, 4294901760
    %3105 = vmatpush1.msra.mxu0 %v3104
    %3106 = vmatprep.subr.mxu0 0.0
    %v3107 = vand.u32 %v1413, 4294901760
    %3108 = vmatpush1.msra.mxu0 %v3107
    %3109 = vmatprep.subr.mxu0 0.0
    %v3110 = vand.u32 %v1414, 4294901760
    %3111 = vmatpush1.msra.mxu0 %v3110
    %3112 = vmatprep.subr.mxu0 0.0
    %v3113 = vand.u32 %v1415, 4294901760
    %3114 = vmatpush1.msra.mxu0 %v3113
    %3115 = vmatprep.subr.mxu0 0.0
    %v3116 = vand.u32 %v1416, 4294901760
    %3117 = vmatpush1.msra.mxu0 %v3116
    %3118 = vmatprep.subr.mxu0 0.0
    %v3119 = vand.u32 %v1417, 4294901760
    %3120 = vmatpush1.msra.mxu0 %v3119
    %3121 = vmatprep.subr.mxu0 0.0
    %v3122 = vand.u32 %v1418, 4294901760
    %3123 = vmatpush1.msra.mxu0 %v3122
    %3124 = vmatprep.subr.mxu0 0.0
    %v3125 = vand.u32 %v1419, 4294901760
    %3126 = vmatpush1.msra.mxu0 %v3125
    %3127 = vmatprep.subr.mxu0 0.0
    %v3128 = vand.u32 %v1420, 4294901760
    %3129 = vmatpush1.msra.mxu0 %v3128
    %3130 = vmatprep.subr.mxu0 0.0
    %v3131 = vand.u32 %v1421, 4294901760
    %3132 = vmatpush1.msra.mxu0 %v3131
    %3133 = vmatprep.subr.mxu0 0.0
    %v3134 = vand.u32 %v1422, 4294901760
    %3135 = vmatpush1.msra.mxu0 %v3134
    %3136 = vmatprep.subr.mxu0 0.0
    %v3137 = vand.u32 %v1423, 4294901760
    %3138 = vmatpush1.msra.mxu0 %v3137
    %3139 = vmatprep.subr.mxu0 0.0
    %v3140 = vand.u32 %v1424, 4294901760
    %3141 = vmatpush1.msra.mxu0 %v3140
    %3142 = vmatprep.subr.mxu0 0.0
    %v3143 = vand.u32 %v1425, 4294901760
    %3144 = vmatpush1.msra.mxu0 %v3143
    %3145 = vmatprep.subr.mxu0 0.0
    %v3146 = vand.u32 %v1426, 4294901760
    %3147 = vmatpush1.msra.mxu0 %v3146
    %3148 = vmatprep.subr.mxu0 0.0
    %v3149 = vand.u32 %v1427, 4294901760
    %3150 = vmatpush1.msra.mxu0 %v3149
    %3151 = vmatprep.subr.mxu0 0.0
    %v3152 = vand.u32 %v1428, 4294901760
    %3153 = vmatpush1.msra.mxu0 %v3152
    %3154 = vmatprep.subr.mxu0 0.0
    %v3155 = vand.u32 %v1429, 4294901760
    %3156 = vmatpush1.msra.mxu0 %v3155
    %v3157 = vand.u32 %v1649, 4294901760
    %v3158 = vsub.f32 %v1649, %v3157
    %v3159 = vand.u32 %v3158, 4294901760
    %3160 = vmatprep.mubr.f32.mxu0 %v3159
    %v3161 = vand.u32 %v1647, 4294901760
    %v3162 = vsub.f32 %v1647, %v3161
    %v3163 = vand.u32 %v3162, 4294901760
    %3164 = vmatmul.mubr.f32.gmra.mrb[0].mxu0 %v3163
    %v3165 = vpop.f32.mrb[0].mxu0
    %v3166 = vadd.f32 %v3058, %v3165
    %v3167 = vpop.f32.mrb[0].mxu0
    %3168 = vdwg.mxu0
    %3169 = vmatprep.subr.mxu0 0.0
    %v3170 = vand.u32 %v1398, 4294901760
    %v3171 = vsub.f32 %v1398, %v3170
    %v3172 = vand.u32 %v3171, 4294901760
    %3173 = vmatpush1.msra.mxu0 %v3172
    %3174 = vmatprep.subr.mxu0 0.0
    %v3175 = vand.u32 %v1399, 4294901760
    %v3176 = vsub.f32 %v1399, %v3175
    %v3177 = vand.u32 %v3176, 4294901760
    %3178 = vmatpush1.msra.mxu0 %v3177
    %3179 = vmatprep.subr.mxu0 0.0
    %v3180 = vand.u32 %v1400, 4294901760
    %v3181 = vsub.f32 %v1400, %v3180
    %v3182 = vand.u32 %v3181, 4294901760
    %3183 = vmatpush1.msra.mxu0 %v3182
    %3184 = vmatprep.subr.mxu0 0.0
    %v3185 = vand.u32 %v1401, 4294901760
    %v3186 = vsub.f32 %v1401, %v3185
    %v3187 = vand.u32 %v3186, 4294901760
    %3188 = vmatpush1.msra.mxu0 %v3187
    %3189 = vmatprep.subr.mxu0 0.0
    %v3190 = vand.u32 %v1402, 4294901760
    %v3191 = vsub.f32 %v1402, %v3190
    %v3192 = vand.u32 %v3191, 4294901760
    %3193 = vmatpush1.msra.mxu0 %v3192
    %3194 = vmatprep.subr.mxu0 0.0
    %v3195 = vand.u32 %v1403, 4294901760
    %v3196 = vsub.f32 %v1403, %v3195
    %v3197 = vand.u32 %v3196, 4294901760
    %3198 = vmatpush1.msra.mxu0 %v3197
    %3199 = vmatprep.subr.mxu0 0.0
    %v3200 = vand.u32 %v1404, 4294901760
    %v3201 = vsub.f32 %v1404, %v3200
    %v3202 = vand.u32 %v3201, 4294901760
    %3203 = vmatpush1.msra.mxu0 %v3202
    %3204 = vmatprep.subr.mxu0 0.0
    %v3205 = vand.u32 %v1405, 4294901760
    %v3206 = vsub.f32 %v1405, %v3205
    %v3207 = vand.u32 %v3206, 4294901760
    %3208 = vmatpush1.msra.mxu0 %v3207
    %3209 = vmatprep.subr.mxu0 0.0
    %v3210 = vand.u32 %v1406, 4294901760
    %v3211 = vsub.f32 %v1406, %v3210
    %v3212 = vand.u32 %v3211, 4294901760
    %3213 = vmatpush1.msra.mxu0 %v3212
    %3214 = vmatprep.subr.mxu0 0.0
    %v3215 = vand.u32 %v1407, 4294901760
    %v3216 = vsub.f32 %v1407, %v3215
    %v3217 = vand.u32 %v3216, 4294901760
    %3218 = vmatpush1.msra.mxu0 %v3217
    %3219 = vmatprep.subr.mxu0 0.0
    %v3220 = vand.u32 %v1408, 4294901760
    %v3221 = vsub.f32 %v1408, %v3220
    %v3222 = vand.u32 %v3221, 4294901760
    %3223 = vmatpush1.msra.mxu0 %v3222
    %3224 = vmatprep.subr.mxu0 0.0
    %v3225 = vand.u32 %v1409, 4294901760
    %v3226 = vsub.f32 %v1409, %v3225
    %v3227 = vand.u32 %v3226, 4294901760
    %3228 = vmatpush1.msra.mxu0 %v3227
    %3229 = vmatprep.subr.mxu0 0.0
    %v3230 = vand.u32 %v1410, 4294901760
    %v3231 = vsub.f32 %v1410, %v3230
    %v3232 = vand.u32 %v3231, 4294901760
    %3233 = vmatpush1.msra.mxu0 %v3232
    %3234 = vmatprep.subr.mxu0 0.0
    %v3235 = vand.u32 %v1411, 4294901760
    %v3236 = vsub.f32 %v1411, %v3235
    %v3237 = vand.u32 %v3236, 4294901760
    %3238 = vmatpush1.msra.mxu0 %v3237
    %3239 = vmatprep.subr.mxu0 0.0
    %v3240 = vand.u32 %v1412, 4294901760
    %v3241 = vsub.f32 %v1412, %v3240
    %v3242 = vand.u32 %v3241, 4294901760
    %3243 = vmatpush1.msra.mxu0 %v3242
    %3244 = vmatprep.subr.mxu0 0.0
    %v3245 = vand.u32 %v1413, 4294901760
    %v3246 = vsub.f32 %v1413, %v3245
    %v3247 = vand.u32 %v3246, 4294901760
    %3248 = vmatpush1.msra.mxu0 %v3247
    %3249 = vmatprep.subr.mxu0 0.0
    %v3250 = vand.u32 %v1414, 4294901760
    %v3251 = vsub.f32 %v1414, %v3250
    %v3252 = vand.u32 %v3251, 4294901760
    %3253 = vmatpush1.msra.mxu0 %v3252
    %3254 = vmatprep.subr.mxu0 0.0
    %v3255 = vand.u32 %v1415, 4294901760
    %v3256 = vsub.f32 %v1415, %v3255
    %v3257 = vand.u32 %v3256, 4294901760
    %3258 = vmatpush1.msra.mxu0 %v3257
    %3259 = vmatprep.subr.mxu0 0.0
    %v3260 = vand.u32 %v1416, 4294901760
    %v3261 = vsub.f32 %v1416, %v3260
    %v3262 = vand.u32 %v3261, 4294901760
    %3263 = vmatpush1.msra.mxu0 %v3262
    %3264 = vmatprep.subr.mxu0 0.0
    %v3265 = vand.u32 %v1417, 4294901760
    %v3266 = vsub.f32 %v1417, %v3265
    %v3267 = vand.u32 %v3266, 4294901760
    %3268 = vmatpush1.msra.mxu0 %v3267
    %3269 = vmatprep.subr.mxu0 0.0
    %v3270 = vand.u32 %v1418, 4294901760
    %v3271 = vsub.f32 %v1418, %v3270
    %v3272 = vand.u32 %v3271, 4294901760
    %3273 = vmatpush1.msra.mxu0 %v3272
    %3274 = vmatprep.subr.mxu0 0.0
    %v3275 = vand.u32 %v1419, 4294901760
    %v3276 = vsub.f32 %v1419, %v3275
    %v3277 = vand.u32 %v3276, 4294901760
    %3278 = vmatpush1.msra.mxu0 %v3277
    %3279 = vmatprep.subr.mxu0 0.0
    %v3280 = vand.u32 %v1420, 4294901760
    %v3281 = vsub.f32 %v1420, %v3280
    %v3282 = vand.u32 %v3281, 4294901760
    %3283 = vmatpush1.msra.mxu0 %v3282
    %3284 = vmatprep.subr.mxu0 0.0
    %v3285 = vand.u32 %v1421, 4294901760
    %v3286 = vsub.f32 %v1421, %v3285
    %v3287 = vand.u32 %v3286, 4294901760
    %3288 = vmatpush1.msra.mxu0 %v3287
    %3289 = vmatprep.subr.mxu0 0.0
    %v3290 = vand.u32 %v1422, 4294901760
    %v3291 = vsub.f32 %v1422, %v3290
    %v3292 = vand.u32 %v3291, 4294901760
    %3293 = vmatpush1.msra.mxu0 %v3292
    %3294 = vmatprep.subr.mxu0 0.0
    %v3295 = vand.u32 %v1423, 4294901760
    %v3296 = vsub.f32 %v1423, %v3295
    %v3297 = vand.u32 %v3296, 4294901760
    %3298 = vmatpush1.msra.mxu0 %v3297
    %3299 = vmatprep.subr.mxu0 0.0
    %v3300 = vand.u32 %v1424, 4294901760
    %v3301 = vsub.f32 %v1424, %v3300
    %v3302 = vand.u32 %v3301, 4294901760
    %3303 = vmatpush1.msra.mxu0 %v3302
    %3304 = vmatprep.subr.mxu0 0.0
    %v3305 = vand.u32 %v1425, 4294901760
    %v3306 = vsub.f32 %v1425, %v3305
    %v3307 = vand.u32 %v3306, 4294901760
    %3308 = vmatpush1.msra.mxu0 %v3307
    %3309 = vmatprep.subr.mxu0 0.0
    %v3310 = vand.u32 %v1426, 4294901760
    %v3311 = vsub.f32 %v1426, %v3310
    %v3312 = vand.u32 %v3311, 4294901760
    %3313 = vmatpush1.msra.mxu0 %v3312
    %3314 = vmatprep.subr.mxu0 0.0
    %v3315 = vand.u32 %v1427, 4294901760
    %v3316 = vsub.f32 %v1427, %v3315
    %v3317 = vand.u32 %v3316, 4294901760
    %3318 = vmatpush1.msra.mxu0 %v3317
    %3319 = vmatprep.subr.mxu0 0.0
    %v3320 = vand.u32 %v1428, 4294901760
    %v3321 = vsub.f32 %v1428, %v3320
    %v3322 = vand.u32 %v3321, 4294901760
    %3323 = vmatpush1.msra.mxu0 %v3322
    %3324 = vmatprep.subr.mxu0 0.0
    %v3325 = vand.u32 %v1429, 4294901760
    %v3326 = vsub.f32 %v1429, %v3325
    %v3327 = vand.u32 %v3326, 4294901760
    %3328 = vmatpush1.msra.mxu0 %v3327
    %v3329 = vand.u32 %v1649, 4294901760
    %3330 = vmatprep.mubr.f32.mxu0 %v3329
    %v3331 = vand.u32 %v1647, 4294901760
    %3332 = vmatmul.mubr.f32.gmra.mrb[0].mxu0 %v3331
    %v3333 = vpop.f32.mrb[0].mxu0
    %v3334 = vadd.f32 %v3166, %v3333
    %v3335 = vpop.f32.mrb[0].mxu0
    %3336 = vdwg.mxu0
    %3337 = vmatprep.subr.mxu0 0.0
    %v3338 = vand.u32 %v1398, 4294901760
    %3339 = vmatpush1.msra.mxu0 %v3338
    %3340 = vmatprep.subr.mxu0 0.0
    %v3341 = vand.u32 %v1399, 4294901760
    %3342 = vmatpush1.msra.mxu0 %v3341
    %3343 = vmatprep.subr.mxu0 0.0
    %v3344 = vand.u32 %v1400, 4294901760
    %3345 = vmatpush1.msra.mxu0 %v3344
    %3346 = vmatprep.subr.mxu0 0.0
    %v3347 = vand.u32 %v1401, 4294901760
    %3348 = vmatpush1.msra.mxu0 %v3347
    %3349 = vmatprep.subr.mxu0 0.0
    %v3350 = vand.u32 %v1402, 4294901760
    %3351 = vmatpush1.msra.mxu0 %v3350
    %3352 = vmatprep.subr.mxu0 0.0
    %v3353 = vand.u32 %v1403, 4294901760
    %3354 = vmatpush1.msra.mxu0 %v3353
    %3355 = vmatprep.subr.mxu0 0.0
    %v3356 = vand.u32 %v1404, 4294901760
    %3357 = vmatpush1.msra.mxu0 %v3356
    %3358 = vmatprep.subr.mxu0 0.0
    %v3359 = vand.u32 %v1405, 4294901760
    %3360 = vmatpush1.msra.mxu0 %v3359
    %3361 = vmatprep.subr.mxu0 0.0
    %v3362 = vand.u32 %v1406, 4294901760
    %3363 = vmatpush1.msra.mxu0 %v3362
    %3364 = vmatprep.subr.mxu0 0.0
    %v3365 = vand.u32 %v1407, 4294901760
    %3366 = vmatpush1.msra.mxu0 %v3365
    %3367 = vmatprep.subr.mxu0 0.0
    %v3368 = vand.u32 %v1408, 4294901760
    %3369 = vmatpush1.msra.mxu0 %v3368
    %3370 = vmatprep.subr.mxu0 0.0
    %v3371 = vand.u32 %v1409, 4294901760
    %3372 = vmatpush1.msra.mxu0 %v3371
    %3373 = vmatprep.subr.mxu0 0.0
    %v3374 = vand.u32 %v1410, 4294901760
    %3375 = vmatpush1.msra.mxu0 %v3374
    %3376 = vmatprep.subr.mxu0 0.0
    %v3377 = vand.u32 %v1411, 4294901760
    %3378 = vmatpush1.msra.mxu0 %v3377
    %3379 = vmatprep.subr.mxu0 0.0
    %v3380 = vand.u32 %v1412, 4294901760
    %3381 = vmatpush1.msra.mxu0 %v3380
    %3382 = vmatprep.subr.mxu0 0.0
    %v3383 = vand.u32 %v1413, 4294901760
    %3384 = vmatpush1.msra.mxu0 %v3383
    %3385 = vmatprep.subr.mxu0 0.0
    %v3386 = vand.u32 %v1414, 4294901760
    %3387 = vmatpush1.msra.mxu0 %v3386
    %3388 = vmatprep.subr.mxu0 0.0
    %v3389 = vand.u32 %v1415, 4294901760
    %3390 = vmatpush1.msra.mxu0 %v3389
    %3391 = vmatprep.subr.mxu0 0.0
    %v3392 = vand.u32 %v1416, 4294901760
    %3393 = vmatpush1.msra.mxu0 %v3392
    %3394 = vmatprep.subr.mxu0 0.0
    %v3395 = vand.u32 %v1417, 4294901760
    %3396 = vmatpush1.msra.mxu0 %v3395
    %3397 = vmatprep.subr.mxu0 0.0
    %v3398 = vand.u32 %v1418, 4294901760
    %3399 = vmatpush1.msra.mxu0 %v3398
    %3400 = vmatprep.subr.mxu0 0.0
    %v3401 = vand.u32 %v1419, 4294901760
    %3402 = vmatpush1.msra.mxu0 %v3401
    %3403 = vmatprep.subr.mxu0 0.0
    %v3404 = vand.u32 %v1420, 4294901760
    %3405 = vmatpush1.msra.mxu0 %v3404
    %3406 = vmatprep.subr.mxu0 0.0
    %v3407 = vand.u32 %v1421, 4294901760
    %3408 = vmatpush1.msra.mxu0 %v3407
    %3409 = vmatprep.subr.mxu0 0.0
    %v3410 = vand.u32 %v1422, 4294901760
    %3411 = vmatpush1.msra.mxu0 %v3410
    %3412 = vmatprep.subr.mxu0 0.0
    %v3413 = vand.u32 %v1423, 4294901760
    %3414 = vmatpush1.msra.mxu0 %v3413
    %3415 = vmatprep.subr.mxu0 0.0
    %v3416 = vand.u32 %v1424, 4294901760
    %3417 = vmatpush1.msra.mxu0 %v3416
    %3418 = vmatprep.subr.mxu0 0.0
    %v3419 = vand.u32 %v1425, 4294901760
    %3420 = vmatpush1.msra.mxu0 %v3419
    %3421 = vmatprep.subr.mxu0 0.0
    %v3422 = vand.u32 %v1426, 4294901760
    %3423 = vmatpush1.msra.mxu0 %v3422
    %3424 = vmatprep.subr.mxu0 0.0
    %v3425 = vand.u32 %v1427, 4294901760
    %3426 = vmatpush1.msra.mxu0 %v3425
    %3427 = vmatprep.subr.mxu0 0.0
    %v3428 = vand.u32 %v1428, 4294901760
    %3429 = vmatpush1.msra.mxu0 %v3428
    %3430 = vmatprep.subr.mxu0 0.0
    %v3431 = vand.u32 %v1429, 4294901760
    %3432 = vmatpush1.msra.mxu0 %v3431
    %v3433 = vand.u32 %v1649, 4294901760
    %3434 = vmatprep.mubr.f32.mxu0 %v3433
    %v3435 = vand.u32 %v1647, 4294901760
    %3436 = vmatmul.mubr.f32.gmra.mrb[0].mxu0 %v3435
    %v3437 = vpop.f32.mrb[0].mxu0
    %v3438 = vadd.f32 %v3334, %v3437
    %v3439 = vpop.f32.mrb[0].mxu0
    %3440 = vdwg.mxu0
    %3441 = vmatprep.subr.mxu0 0.0
    %v3442 = vand.u32 %v1430, 4294901760
    %3443 = vmatpush1.msra.mxu0 %v3442
    %3444 = vmatprep.subr.mxu0 0.0
    %v3445 = vand.u32 %v1431, 4294901760
    %3446 = vmatpush1.msra.mxu0 %v3445
    %3447 = vmatprep.subr.mxu0 0.0
    %v3448 = vand.u32 %v1432, 4294901760
    %3449 = vmatpush1.msra.mxu0 %v3448
    %3450 = vmatprep.subr.mxu0 0.0
    %v3451 = vand.u32 %v1433, 4294901760
    %3452 = vmatpush1.msra.mxu0 %v3451
    %3453 = vmatprep.subr.mxu0 0.0
    %v3454 = vand.u32 %v1434, 4294901760
    %3455 = vmatpush1.msra.mxu0 %v3454
    %3456 = vmatprep.subr.mxu0 0.0
    %v3457 = vand.u32 %v1435, 4294901760
    %3458 = vmatpush1.msra.mxu0 %v3457
    %3459 = vmatprep.subr.mxu0 0.0
    %v3460 = vand.u32 %v1436, 4294901760
    %3461 = vmatpush1.msra.mxu0 %v3460
    %3462 = vmatprep.subr.mxu0 0.0
    %v3463 = vand.u32 %v1437, 4294901760
    %3464 = vmatpush1.msra.mxu0 %v3463
    %3465 = vmatprep.subr.mxu0 0.0
    %v3466 = vand.u32 %v1438, 4294901760
    %3467 = vmatpush1.msra.mxu0 %v3466
    %3468 = vmatprep.subr.mxu0 0.0
    %v3469 = vand.u32 %v1439, 4294901760
    %3470 = vmatpush1.msra.mxu0 %v3469
    %3471 = vmatprep.subr.mxu0 0.0
    %v3472 = vand.u32 %v1440, 4294901760
    %3473 = vmatpush1.msra.mxu0 %v3472
    %3474 = vmatprep.subr.mxu0 0.0
    %v3475 = vand.u32 %v1441, 4294901760
    %3476 = vmatpush1.msra.mxu0 %v3475
    %3477 = vmatprep.subr.mxu0 0.0
    %v3478 = vand.u32 %v1442, 4294901760
    %3479 = vmatpush1.msra.mxu0 %v3478
    %3480 = vmatprep.subr.mxu0 0.0
    %v3481 = vand.u32 %v1443, 4294901760
    %3482 = vmatpush1.msra.mxu0 %v3481
    %3483 = vmatprep.subr.mxu0 0.0
    %v3484 = vand.u32 %v1444, 4294901760
    %3485 = vmatpush1.msra.mxu0 %v3484
    %3486 = vmatprep.subr.mxu0 0.0
    %v3487 = vand.u32 %v1445, 4294901760
    %3488 = vmatpush1.msra.mxu0 %v3487
    %3489 = vmatprep.subr.mxu0 0.0
    %v3490 = vand.u32 %v1446, 4294901760
    %3491 = vmatpush1.msra.mxu0 %v3490
    %3492 = vmatprep.subr.mxu0 0.0
    %v3493 = vand.u32 %v1447, 4294901760
    %3494 = vmatpush1.msra.mxu0 %v3493
    %3495 = vmatprep.subr.mxu0 0.0
    %v3496 = vand.u32 %v1448, 4294901760
    %3497 = vmatpush1.msra.mxu0 %v3496
    %3498 = vmatprep.subr.mxu0 0.0
    %v3499 = vand.u32 %v1449, 4294901760
    %3500 = vmatpush1.msra.mxu0 %v3499
    %3501 = vmatprep.subr.mxu0 0.0
    %v3502 = vand.u32 %v1450, 4294901760
    %3503 = vmatpush1.msra.mxu0 %v3502
    %3504 = vmatprep.subr.mxu0 0.0
    %v3505 = vand.u32 %v1451, 4294901760
    %3506 = vmatpush1.msra.mxu0 %v3505
    %3507 = vmatprep.subr.mxu0 0.0
    %v3508 = vand.u32 %v1452, 4294901760
    %3509 = vmatpush1.msra.mxu0 %v3508
    %3510 = vmatprep.subr.mxu0 0.0
    %v3511 = vand.u32 %v1453, 4294901760
    %3512 = vmatpush1.msra.mxu0 %v3511
    %3513 = vmatprep.subr.mxu0 0.0
    %v3514 = vand.u32 %v1454, 4294901760
    %3515 = vmatpush1.msra.mxu0 %v3514
    %3516 = vmatprep.subr.mxu0 0.0
    %v3517 = vand.u32 %v1455, 4294901760
    %3518 = vmatpush1.msra.mxu0 %v3517
    %3519 = vmatprep.subr.mxu0 0.0
    %v3520 = vand.u32 %v1456, 4294901760
    %3521 = vmatpush1.msra.mxu0 %v3520
    %3522 = vmatprep.subr.mxu0 0.0
    %v3523 = vand.u32 %v1457, 4294901760
    %3524 = vmatpush1.msra.mxu0 %v3523
    %3525 = vmatprep.subr.mxu0 0.0
    %v3526 = vand.u32 %v1458, 4294901760
    %3527 = vmatpush1.msra.mxu0 %v3526
    %3528 = vmatprep.subr.mxu0 0.0
    %v3529 = vand.u32 %v1459, 4294901760
    %3530 = vmatpush1.msra.mxu0 %v3529
    %3531 = vmatprep.subr.mxu0 0.0
    %v3532 = vand.u32 %v1460, 4294901760
    %3533 = vmatpush1.msra.mxu0 %v3532
    %3534 = vmatprep.subr.mxu0 0.0
    %v3535 = vand.u32 %v1461, 4294901760
    %3536 = vmatpush1.msra.mxu0 %v3535
    %v3537 = vand.u32 %v1665, 4294901760
    %v3538 = vsub.f32 %v1665, %v3537
    %v3539 = vand.u32 %v3538, 4294901760
    %v3540 = vsub.f32 %v3538, %v3539
    %v3541 = vand.u32 %v3540, 4294901760
    %3542 = vmatprep.mubr.f32.mxu0 %v3541
    %v3543 = vand.u32 %v1657, 4294901760
    %v3544 = vsub.f32 %v1657, %v3543
    %v3545 = vand.u32 %v3544, 4294901760
    %v3546 = vsub.f32 %v3544, %v3545
    %v3547 = vand.u32 %v3546, 4294901760
    %3548 = vmatmul.mubr.f32.gmra.mrb[0].mxu0 %v3547
    %v3549 = vpop.f32.mrb[0].mxu0
    %v3550 = vadd.f32 %v3438, %v3549
    %v3551 = vpop.f32.mrb[0].mxu0
    %3552 = vdwg.mxu0
    %3553 = vmatprep.subr.mxu0 0.0
    %v3554 = vand.u32 %v1430, 4294901760
    %v3555 = vsub.f32 %v1430, %v3554
    %v3556 = vand.u32 %v3555, 4294901760
    %v3557 = vsub.f32 %v3555, %v3556
    %v3558 = vand.u32 %v3557, 4294901760
    %3559 = vmatpush1.msra.mxu0 %v3558
    %3560 = vmatprep.subr.mxu0 0.0
    %v3561 = vand.u32 %v1431, 4294901760
    %v3562 = vsub.f32 %v1431, %v3561
    %v3563 = vand.u32 %v3562, 4294901760
    %v3564 = vsub.f32 %v3562, %v3563
    %v3565 = vand.u32 %v3564, 4294901760
    %3566 = vmatpush1.msra.mxu0 %v3565
    %3567 = vmatprep.subr.mxu0 0.0
    %v3568 = vand.u32 %v1432, 4294901760
    %v3569 = vsub.f32 %v1432, %v3568
    %v3570 = vand.u32 %v3569, 4294901760
    %v3571 = vsub.f32 %v3569, %v3570
    %v3572 = vand.u32 %v3571, 4294901760
    %3573 = vmatpush1.msra.mxu0 %v3572
    %3574 = vmatprep.subr.mxu0 0.0
    %v3575 = vand.u32 %v1433, 4294901760
    %v3576 = vsub.f32 %v1433, %v3575
    %v3577 = vand.u32 %v3576, 4294901760
    %v3578 = vsub.f32 %v3576, %v3577
    %v3579 = vand.u32 %v3578, 4294901760
    %3580 = vmatpush1.msra.mxu0 %v3579
    %3581 = vmatprep.subr.mxu0 0.0
    %v3582 = vand.u32 %v1434, 4294901760
    %v3583 = vsub.f32 %v1434, %v3582
    %v3584 = vand.u32 %v3583, 4294901760
    %v3585 = vsub.f32 %v3583, %v3584
    %v3586 = vand.u32 %v3585, 4294901760
    %3587 = vmatpush1.msra.mxu0 %v3586
    %3588 = vmatprep.subr.mxu0 0.0
    %v3589 = vand.u32 %v1435, 4294901760
    %v3590 = vsub.f32 %v1435, %v3589
    %v3591 = vand.u32 %v3590, 4294901760
    %v3592 = vsub.f32 %v3590, %v3591
    %v3593 = vand.u32 %v3592, 4294901760
    %3594 = vmatpush1.msra.mxu0 %v3593
    %3595 = vmatprep.subr.mxu0 0.0
    %v3596 = vand.u32 %v1436, 4294901760
    %v3597 = vsub.f32 %v1436, %v3596
    %v3598 = vand.u32 %v3597, 4294901760
    %v3599 = vsub.f32 %v3597, %v3598
    %v3600 = vand.u32 %v3599, 4294901760
    %3601 = vmatpush1.msra.mxu0 %v3600
    %3602 = vmatprep.subr.mxu0 0.0
    %v3603 = vand.u32 %v1437, 4294901760
    %v3604 = vsub.f32 %v1437, %v3603
    %v3605 = vand.u32 %v3604, 4294901760
    %v3606 = vsub.f32 %v3604, %v3605
    %v3607 = vand.u32 %v3606, 4294901760
    %3608 = vmatpush1.msra.mxu0 %v3607
    %3609 = vmatprep.subr.mxu0 0.0
    %v3610 = vand.u32 %v1438, 4294901760
    %v3611 = vsub.f32 %v1438, %v3610
    %v3612 = vand.u32 %v3611, 4294901760
    %v3613 = vsub.f32 %v3611, %v3612
    %v3614 = vand.u32 %v3613, 4294901760
    %3615 = vmatpush1.msra.mxu0 %v3614
    %3616 = vmatprep.subr.mxu0 0.0
    %v3617 = vand.u32 %v1439, 4294901760
    %v3618 = vsub.f32 %v1439, %v3617
    %v3619 = vand.u32 %v3618, 4294901760
    %v3620 = vsub.f32 %v3618, %v3619
    %v3621 = vand.u32 %v3620, 4294901760
    %3622 = vmatpush1.msra.mxu0 %v3621
    %3623 = vmatprep.subr.mxu0 0.0
    %v3624 = vand.u32 %v1440, 4294901760
    %v3625 = vsub.f32 %v1440, %v3624
    %v3626 = vand.u32 %v3625, 4294901760
    %v3627 = vsub.f32 %v3625, %v3626
    %v3628 = vand.u32 %v3627, 4294901760
    %3629 = vmatpush1.msra.mxu0 %v3628
    %3630 = vmatprep.subr.mxu0 0.0
    %v3631 = vand.u32 %v1441, 4294901760
    %v3632 = vsub.f32 %v1441, %v3631
    %v3633 = vand.u32 %v3632, 4294901760
    %v3634 = vsub.f32 %v3632, %v3633
    %v3635 = vand.u32 %v3634, 4294901760
    %3636 = vmatpush1.msra.mxu0 %v3635
    %3637 = vmatprep.subr.mxu0 0.0
    %v3638 = vand.u32 %v1442, 4294901760
    %v3639 = vsub.f32 %v1442, %v3638
    %v3640 = vand.u32 %v3639, 4294901760
    %v3641 = vsub.f32 %v3639, %v3640
    %v3642 = vand.u32 %v3641, 4294901760
    %3643 = vmatpush1.msra.mxu0 %v3642
    %3644 = vmatprep.subr.mxu0 0.0
    %v3645 = vand.u32 %v1443, 4294901760
    %v3646 = vsub.f32 %v1443, %v3645
    %v3647 = vand.u32 %v3646, 4294901760
    %v3648 = vsub.f32 %v3646, %v3647
    %v3649 = vand.u32 %v3648, 4294901760
    %3650 = vmatpush1.msra.mxu0 %v3649
    %3651 = vmatprep.subr.mxu0 0.0
    %v3652 = vand.u32 %v1444, 4294901760
    %v3653 = vsub.f32 %v1444, %v3652
    %v3654 = vand.u32 %v3653, 4294901760
    %v3655 = vsub.f32 %v3653, %v3654
    %v3656 = vand.u32 %v3655, 4294901760
    %3657 = vmatpush1.msra.mxu0 %v3656
    %3658 = vmatprep.subr.mxu0 0.0
    %v3659 = vand.u32 %v1445, 4294901760
    %v3660 = vsub.f32 %v1445, %v3659
    %v3661 = vand.u32 %v3660, 4294901760
    %v3662 = vsub.f32 %v3660, %v3661
    %v3663 = vand.u32 %v3662, 4294901760
    %3664 = vmatpush1.msra.mxu0 %v3663
    %3665 = vmatprep.subr.mxu0 0.0
    %v3666 = vand.u32 %v1446, 4294901760
    %v3667 = vsub.f32 %v1446, %v3666
    %v3668 = vand.u32 %v3667, 4294901760
    %v3669 = vsub.f32 %v3667, %v3668
    %v3670 = vand.u32 %v3669, 4294901760
    %3671 = vmatpush1.msra.mxu0 %v3670
    %3672 = vmatprep.subr.mxu0 0.0
    %v3673 = vand.u32 %v1447, 4294901760
    %v3674 = vsub.f32 %v1447, %v3673
    %v3675 = vand.u32 %v3674, 4294901760
    %v3676 = vsub.f32 %v3674, %v3675
    %v3677 = vand.u32 %v3676, 4294901760
    %3678 = vmatpush1.msra.mxu0 %v3677
    %3679 = vmatprep.subr.mxu0 0.0
    %v3680 = vand.u32 %v1448, 4294901760
    %v3681 = vsub.f32 %v1448, %v3680
    %v3682 = vand.u32 %v3681, 4294901760
    %v3683 = vsub.f32 %v3681, %v3682
    %v3684 = vand.u32 %v3683, 4294901760
    %3685 = vmatpush1.msra.mxu0 %v3684
    %3686 = vmatprep.subr.mxu0 0.0
    %v3687 = vand.u32 %v1449, 4294901760
    %v3688 = vsub.f32 %v1449, %v3687
    %v3689 = vand.u32 %v3688, 4294901760
    %v3690 = vsub.f32 %v3688, %v3689
    %v3691 = vand.u32 %v3690, 4294901760
    %3692 = vmatpush1.msra.mxu0 %v3691
    %3693 = vmatprep.subr.mxu0 0.0
    %v3694 = vand.u32 %v1450, 4294901760
    %v3695 = vsub.f32 %v1450, %v3694
    %v3696 = vand.u32 %v3695, 4294901760
    %v3697 = vsub.f32 %v3695, %v3696
    %v3698 = vand.u32 %v3697, 4294901760
    %3699 = vmatpush1.msra.mxu0 %v3698
    %3700 = vmatprep.subr.mxu0 0.0
    %v3701 = vand.u32 %v1451, 4294901760
    %v3702 = vsub.f32 %v1451, %v3701
    %v3703 = vand.u32 %v3702, 4294901760
    %v3704 = vsub.f32 %v3702, %v3703
    %v3705 = vand.u32 %v3704, 4294901760
    %3706 = vmatpush1.msra.mxu0 %v3705
    %3707 = vmatprep.subr.mxu0 0.0
    %v3708 = vand.u32 %v1452, 4294901760
    %v3709 = vsub.f32 %v1452, %v3708
    %v3710 = vand.u32 %v3709, 4294901760
    %v3711 = vsub.f32 %v3709, %v3710
    %v3712 = vand.u32 %v3711, 4294901760
    %3713 = vmatpush1.msra.mxu0 %v3712
    %3714 = vmatprep.subr.mxu0 0.0
    %v3715 = vand.u32 %v1453, 4294901760
    %v3716 = vsub.f32 %v1453, %v3715
    %v3717 = vand.u32 %v3716, 4294901760
    %v3718 = vsub.f32 %v3716, %v3717
    %v3719 = vand.u32 %v3718, 4294901760
    %3720 = vmatpush1.msra.mxu0 %v3719
    %3721 = vmatprep.subr.mxu0 0.0
    %v3722 = vand.u32 %v1454, 4294901760
    %v3723 = vsub.f32 %v1454, %v3722
    %v3724 = vand.u32 %v3723, 4294901760
    %v3725 = vsub.f32 %v3723, %v3724
    %v3726 = vand.u32 %v3725, 4294901760
    %3727 = vmatpush1.msra.mxu0 %v3726
    %3728 = vmatprep.subr.mxu0 0.0
    %v3729 = vand.u32 %v1455, 4294901760
    %v3730 = vsub.f32 %v1455, %v3729
    %v3731 = vand.u32 %v3730, 4294901760
    %v3732 = vsub.f32 %v3730, %v3731
    %v3733 = vand.u32 %v3732, 4294901760
    %3734 = vmatpush1.msra.mxu0 %v3733
    %3735 = vmatprep.subr.mxu0 0.0
    %v3736 = vand.u32 %v1456, 4294901760
    %v3737 = vsub.f32 %v1456, %v3736
    %v3738 = vand.u32 %v3737, 4294901760
    %v3739 = vsub.f32 %v3737, %v3738
    %v3740 = vand.u32 %v3739, 4294901760
    %3741 = vmatpush1.msra.mxu0 %v3740
    %3742 = vmatprep.subr.mxu0 0.0
    %v3743 = vand.u32 %v1457, 4294901760
    %v3744 = vsub.f32 %v1457, %v3743
    %v3745 = vand.u32 %v3744, 4294901760
    %v3746 = vsub.f32 %v3744, %v3745
    %v3747 = vand.u32 %v3746, 4294901760
    %3748 = vmatpush1.msra.mxu0 %v3747
    %3749 = vmatprep.subr.mxu0 0.0
    %v3750 = vand.u32 %v1458, 4294901760
    %v3751 = vsub.f32 %v1458, %v3750
    %v3752 = vand.u32 %v3751, 4294901760
    %v3753 = vsub.f32 %v3751, %v3752
    %v3754 = vand.u32 %v3753, 4294901760
    %3755 = vmatpush1.msra.mxu0 %v3754
    %3756 = vmatprep.subr.mxu0 0.0
    %v3757 = vand.u32 %v1459, 4294901760
    %v3758 = vsub.f32 %v1459, %v3757
    %v3759 = vand.u32 %v3758, 4294901760
    %v3760 = vsub.f32 %v3758, %v3759
    %v3761 = vand.u32 %v3760, 4294901760
    %3762 = vmatpush1.msra.mxu0 %v3761
    %3763 = vmatprep.subr.mxu0 0.0
    %v3764 = vand.u32 %v1460, 4294901760
    %v3765 = vsub.f32 %v1460, %v3764
    %v3766 = vand.u32 %v3765, 4294901760
    %v3767 = vsub.f32 %v3765, %v3766
    %v3768 = vand.u32 %v3767, 4294901760
    %3769 = vmatpush1.msra.mxu0 %v3768
    %3770 = vmatprep.subr.mxu0 0.0
    %v3771 = vand.u32 %v1461, 4294901760
    %v3772 = vsub.f32 %v1461, %v3771
    %v3773 = vand.u32 %v3772, 4294901760
    %v3774 = vsub.f32 %v3772, %v3773
    %v3775 = vand.u32 %v3774, 4294901760
    %3776 = vmatpush1.msra.mxu0 %v3775
    %v3777 = vand.u32 %v1665, 4294901760
    %3778 = vmatprep.mubr.f32.mxu0 %v3777
    %v3779 = vand.u32 %v1657, 4294901760
    %3780 = vmatmul.mubr.f32.gmra.mrb[0].mxu0 %v3779
    %v3781 = vpop.f32.mrb[0].mxu0
    %v3782 = vadd.f32 %v3550, %v3781
    %v3783 = vpop.f32.mrb[0].mxu0
    %3784 = vdwg.mxu0
    %3785 = vmatprep.subr.mxu0 0.0
    %v3786 = vand.u32 %v1430, 4294901760
    %v3787 = vsub.f32 %v1430, %v3786
    %3788 = vmatpush1.msra.mxu0 %v3787
    %3789 = vmatprep.subr.mxu0 0.0
    %v3790 = vand.u32 %v1431, 4294901760
    %v3791 = vsub.f32 %v1431, %v3790
    %3792 = vmatpush1.msra.mxu0 %v3791
    %3793 = vmatprep.subr.mxu0 0.0
    %v3794 = vand.u32 %v1432, 4294901760
    %v3795 = vsub.f32 %v1432, %v3794
    %3796 = vmatpush1.msra.mxu0 %v3795
    %3797 = vmatprep.subr.mxu0 0.0
    %v3798 = vand.u32 %v1433, 4294901760
    %v3799 = vsub.f32 %v1433, %v3798
    %3800 = vmatpush1.msra.mxu0 %v3799
    %3801 = vmatprep.subr.mxu0 0.0
    %v3802 = vand.u32 %v1434, 4294901760
    %v3803 = vsub.f32 %v1434, %v3802
    %3804 = vmatpush1.msra.mxu0 %v3803
    %3805 = vmatprep.subr.mxu0 0.0
    %v3806 = vand.u32 %v1435, 4294901760
    %v3807 = vsub.f32 %v1435, %v3806
    %3808 = vmatpush1.msra.mxu0 %v3807
    %3809 = vmatprep.subr.mxu0 0.0
    %v3810 = vand.u32 %v1436, 4294901760
    %v3811 = vsub.f32 %v1436, %v3810
    %3812 = vmatpush1.msra.mxu0 %v3811
    %3813 = vmatprep.subr.mxu0 0.0
    %v3814 = vand.u32 %v1437, 4294901760
    %v3815 = vsub.f32 %v1437, %v3814
    %3816 = vmatpush1.msra.mxu0 %v3815
    %3817 = vmatprep.subr.mxu0 0.0
    %v3818 = vand.u32 %v1438, 4294901760
    %v3819 = vsub.f32 %v1438, %v3818
    %3820 = vmatpush1.msra.mxu0 %v3819
    %3821 = vmatprep.subr.mxu0 0.0
    %v3822 = vand.u32 %v1439, 4294901760
    %v3823 = vsub.f32 %v1439, %v3822
    %3824 = vmatpush1.msra.mxu0 %v3823
    %3825 = vmatprep.subr.mxu0 0.0
    %v3826 = vand.u32 %v1440, 4294901760
    %v3827 = vsub.f32 %v1440, %v3826
    %3828 = vmatpush1.msra.mxu0 %v3827
    %3829 = vmatprep.subr.mxu0 0.0
    %v3830 = vand.u32 %v1441, 4294901760
    %v3831 = vsub.f32 %v1441, %v3830
    %3832 = vmatpush1.msra.mxu0 %v3831
    %3833 = vmatprep.subr.mxu0 0.0
    %v3834 = vand.u32 %v1442, 4294901760
    %v3835 = vsub.f32 %v1442, %v3834
    %3836 = vmatpush1.msra.mxu0 %v3835
    %3837 = vmatprep.subr.mxu0 0.0
    %v3838 = vand.u32 %v1443, 4294901760
    %v3839 = vsub.f32 %v1443, %v3838
    %3840 = vmatpush1.msra.mxu0 %v3839
    %3841 = vmatprep.subr.mxu0 0.0
    %v3842 = vand.u32 %v1444, 4294901760
    %v3843 = vsub.f32 %v1444, %v3842
    %3844 = vmatpush1.msra.mxu0 %v3843
    %3845 = vmatprep.subr.mxu0 0.0
    %v3846 = vand.u32 %v1445, 4294901760
    %v3847 = vsub.f32 %v1445, %v3846
    %3848 = vmatpush1.msra.mxu0 %v3847
    %3849 = vmatprep.subr.mxu0 0.0
    %v3850 = vand.u32 %v1446, 4294901760
    %v3851 = vsub.f32 %v1446, %v3850
    %3852 = vmatpush1.msra.mxu0 %v3851
    %3853 = vmatprep.subr.mxu0 0.0
    %v3854 = vand.u32 %v1447, 4294901760
    %v3855 = vsub.f32 %v1447, %v3854
    %3856 = vmatpush1.msra.mxu0 %v3855
    %3857 = vmatprep.subr.mxu0 0.0
    %v3858 = vand.u32 %v1448, 4294901760
    %v3859 = vsub.f32 %v1448, %v3858
    %3860 = vmatpush1.msra.mxu0 %v3859
    %3861 = vmatprep.subr.mxu0 0.0
    %v3862 = vand.u32 %v1449, 4294901760
    %v3863 = vsub.f32 %v1449, %v3862
    %3864 = vmatpush1.msra.mxu0 %v3863
    %3865 = vmatprep.subr.mxu0 0.0
    %v3866 = vand.u32 %v1450, 4294901760
    %v3867 = vsub.f32 %v1450, %v3866
    %3868 = vmatpush1.msra.mxu0 %v3867
    %3869 = vmatprep.subr.mxu0 0.0
    %v3870 = vand.u32 %v1451, 4294901760
    %v3871 = vsub.f32 %v1451, %v3870
    %3872 = vmatpush1.msra.mxu0 %v3871
    %3873 = vmatprep.subr.mxu0 0.0
    %v3874 = vand.u32 %v1452, 4294901760
    %v3875 = vsub.f32 %v1452, %v3874
    %3876 = vmatpush1.msra.mxu0 %v3875
    %3877 = vmatprep.subr.mxu0 0.0
    %v3878 = vand.u32 %v1453, 4294901760
    %v3879 = vsub.f32 %v1453, %v3878
    %3880 = vmatpush1.msra.mxu0 %v3879
    %3881 = vmatprep.subr.mxu0 0.0
    %v3882 = vand.u32 %v1454, 4294901760
    %v3883 = vsub.f32 %v1454, %v3882
    %3884 = vmatpush1.msra.mxu0 %v3883
    %3885 = vmatprep.subr.mxu0 0.0
    %v3886 = vand.u32 %v1455, 4294901760
    %v3887 = vsub.f32 %v1455, %v3886
    %3888 = vmatpush1.msra.mxu0 %v3887
    %3889 = vmatprep.subr.mxu0 0.0
    %v3890 = vand.u32 %v1456, 4294901760
    %v3891 = vsub.f32 %v1456, %v3890
    %3892 = vmatpush1.msra.mxu0 %v3891
    %3893 = vmatprep.subr.mxu0 0.0
    %v3894 = vand.u32 %v1457, 4294901760
    %v3895 = vsub.f32 %v1457, %v3894
    %3896 = vmatpush1.msra.mxu0 %v3895
    %3897 = vmatprep.subr.mxu0 0.0
    %v3898 = vand.u32 %v1458, 4294901760
    %v3899 = vsub.f32 %v1458, %v3898
    %3900 = vmatpush1.msra.mxu0 %v3899
    %3901 = vmatprep.subr.mxu0 0.0
    %v3902 = vand.u32 %v1459, 4294901760
    %v3903 = vsub.f32 %v1459, %v3902
    %3904 = vmatpush1.msra.mxu0 %v3903
    %3905 = vmatprep.subr.mxu0 0.0
    %v3906 = vand.u32 %v1460, 4294901760
    %v3907 = vsub.f32 %v1460, %v3906
    %3908 = vmatpush1.msra.mxu0 %v3907
    %3909 = vmatprep.subr.mxu0 0.0
    %v3910 = vand.u32 %v1461, 4294901760
    %v3911 = vsub.f32 %v1461, %v3910
    %3912 = vmatpush1.msra.mxu0 %v3911
    %v3913 = vand.u32 %v1665, 4294901760
    %v3914 = vsub.f32 %v1665, %v3913
    %3915 = vmatprep.mubr.f32.mxu0 %v3914
    %v3916 = vand.u32 %v1657, 4294901760
    %v3917 = vsub.f32 %v1657, %v3916
    %3918 = vmatmul.mubr.f32.gmra.mrb[0].mxu0 %v3917
    %v3919 = vpop.f32.mrb[0].mxu0
    %v3920 = vadd.f32 %v3782, %v3919
    %v3921 = vpop.f32.mrb[0].mxu0
    %3922 = vdwg.mxu0
    %3923 = vmatprep.subr.mxu0 0.0
    %v3924 = vand.u32 %v1430, 4294901760
    %3925 = vmatpush1.msra.mxu0 %v3924
    %3926 = vmatprep.subr.mxu0 0.0
    %v3927 = vand.u32 %v1431, 4294901760
    %3928 = vmatpush1.msra.mxu0 %v3927
    %3929 = vmatprep.subr.mxu0 0.0
    %v3930 = vand.u32 %v1432, 4294901760
    %3931 = vmatpush1.msra.mxu0 %v3930
    %3932 = vmatprep.subr.mxu0 0.0
    %v3933 = vand.u32 %v1433, 4294901760
    %3934 = vmatpush1.msra.mxu0 %v3933
    %3935 = vmatprep.subr.mxu0 0.0
    %v3936 = vand.u32 %v1434, 4294901760
    %3937 = vmatpush1.msra.mxu0 %v3936
    %3938 = vmatprep.subr.mxu0 0.0
    %v3939 = vand.u32 %v1435, 4294901760
    %3940 = vmatpush1.msra.mxu0 %v3939
    %3941 = vmatprep.subr.mxu0 0.0
    %v3942 = vand.u32 %v1436, 4294901760
    %3943 = vmatpush1.msra.mxu0 %v3942
    %3944 = vmatprep.subr.mxu0 0.0
    %v3945 = vand.u32 %v1437, 4294901760
    %3946 = vmatpush1.msra.mxu0 %v3945
    %3947 = vmatprep.subr.mxu0 0.0
    %v3948 = vand.u32 %v1438, 4294901760
    %3949 = vmatpush1.msra.mxu0 %v3948
    %3950 = vmatprep.subr.mxu0 0.0
    %v3951 = vand.u32 %v1439, 4294901760
    %3952 = vmatpush1.msra.mxu0 %v3951
    %3953 = vmatprep.subr.mxu0 0.0
    %v3954 = vand.u32 %v1440, 4294901760
    %3955 = vmatpush1.msra.mxu0 %v3954
    %3956 = vmatprep.subr.mxu0 0.0
    %v3957 = vand.u32 %v1441, 4294901760
    %3958 = vmatpush1.msra.mxu0 %v3957
    %3959 = vmatprep.subr.mxu0 0.0
    %v3960 = vand.u32 %v1442, 4294901760
    %3961 = vmatpush1.msra.mxu0 %v3960
    %3962 = vmatprep.subr.mxu0 0.0
    %v3963 = vand.u32 %v1443, 4294901760
    %3964 = vmatpush1.msra.mxu0 %v3963
    %3965 = vmatprep.subr.mxu0 0.0
    %v3966 = vand.u32 %v1444, 4294901760
    %3967 = vmatpush1.msra.mxu0 %v3966
    %3968 = vmatprep.subr.mxu0 0.0
    %v3969 = vand.u32 %v1445, 4294901760
    %3970 = vmatpush1.msra.mxu0 %v3969
    %3971 = vmatprep.subr.mxu0 0.0
    %v3972 = vand.u32 %v1446, 4294901760
    %3973 = vmatpush1.msra.mxu0 %v3972
    %3974 = vmatprep.subr.mxu0 0.0
    %v3975 = vand.u32 %v1447, 4294901760
    %3976 = vmatpush1.msra.mxu0 %v3975
    %3977 = vmatprep.subr.mxu0 0.0
    %v3978 = vand.u32 %v1448, 4294901760
    %3979 = vmatpush1.msra.mxu0 %v3978
    %3980 = vmatprep.subr.mxu0 0.0
    %v3981 = vand.u32 %v1449, 4294901760
    %3982 = vmatpush1.msra.mxu0 %v3981
    %3983 = vmatprep.subr.mxu0 0.0
    %v3984 = vand.u32 %v1450, 4294901760
    %3985 = vmatpush1.msra.mxu0 %v3984
    %3986 = vmatprep.subr.mxu0 0.0
    %v3987 = vand.u32 %v1451, 4294901760
    %3988 = vmatpush1.msra.mxu0 %v3987
    %3989 = vmatprep.subr.mxu0 0.0
    %v3990 = vand.u32 %v1452, 4294901760
    %3991 = vmatpush1.msra.mxu0 %v3990
    %3992 = vmatprep.subr.mxu0 0.0
    %v3993 = vand.u32 %v1453, 4294901760
    %3994 = vmatpush1.msra.mxu0 %v3993
    %3995 = vmatprep.subr.mxu0 0.0
    %v3996 = vand.u32 %v1454, 4294901760
    %3997 = vmatpush1.msra.mxu0 %v3996
    %3998 = vmatprep.subr.mxu0 0.0
    %v3999 = vand.u32 %v1455, 4294901760
    %4000 = vmatpush1.msra.mxu0 %v3999
    %4001 = vmatprep.subr.mxu0 0.0
    %v4002 = vand.u32 %v1456, 4294901760
    %4003 = vmatpush1.msra.mxu0 %v4002
    %4004 = vmatprep.subr.mxu0 0.0
    %v4005 = vand.u32 %v1457, 4294901760
    %4006 = vmatpush1.msra.mxu0 %v4005
    %4007 = vmatprep.subr.mxu0 0.0
    %v4008 = vand.u32 %v1458, 4294901760
    %4009 = vmatpush1.msra.mxu0 %v4008
    %4010 = vmatprep.subr.mxu0 0.0
    %v4011 = vand.u32 %v1459, 4294901760
    %4012 = vmatpush1.msra.mxu0 %v4011
    %4013 = vmatprep.subr.mxu0 0.0
    %v4014 = vand.u32 %v1460, 4294901760
    %4015 = vmatpush1.msra.mxu0 %v4014
    %4016 = vmatprep.subr.mxu0 0.0
    %v4017 = vand.u32 %v1461, 4294901760
    %4018 = vmatpush1.msra.mxu0 %v4017
    %v4019 = vand.u32 %v1665, 4294901760
    %v4020 = vsub.f32 %v1665, %v4019
    %v4021 = vand.u32 %v4020, 4294901760
    %4022 = vmatprep.mubr.f32.mxu0 %v4021
    %v4023 = vand.u32 %v1657, 4294901760
    %v4024 = vsub.f32 %v1657, %v4023
    %v4025 = vand.u32 %v4024, 4294901760
    %4026 = vmatmul.mubr.f32.gmra.mrb[0].mxu0 %v4025
    %v4027 = vpop.f32.mrb[0].mxu0
    %v4028 = vadd.f32 %v3920, %v4027
    %v4029 = vpop.f32.mrb[0].mxu0
    %4030 = vdwg.mxu0
    %4031 = vmatprep.subr.mxu0 0.0
    %v4032 = vand.u32 %v1430, 4294901760
    %v4033 = vsub.f32 %v1430, %v4032
    %v4034 = vand.u32 %v4033, 4294901760
    %4035 = vmatpush1.msra.mxu0 %v4034
    %4036 = vmatprep.subr.mxu0 0.0
    %v4037 = vand.u32 %v1431, 4294901760
    %v4038 = vsub.f32 %v1431, %v4037
    %v4039 = vand.u32 %v4038, 4294901760
    %4040 = vmatpush1.msra.mxu0 %v4039
    %4041 = vmatprep.subr.mxu0 0.0
    %v4042 = vand.u32 %v1432, 4294901760
    %v4043 = vsub.f32 %v1432, %v4042
    %v4044 = vand.u32 %v4043, 4294901760
    %4045 = vmatpush1.msra.mxu0 %v4044
    %4046 = vmatprep.subr.mxu0 0.0
    %v4047 = vand.u32 %v1433, 4294901760
    %v4048 = vsub.f32 %v1433, %v4047
    %v4049 = vand.u32 %v4048, 4294901760
    %4050 = vmatpush1.msra.mxu0 %v4049
    %4051 = vmatprep.subr.mxu0 0.0
    %v4052 = vand.u32 %v1434, 4294901760
    %v4053 = vsub.f32 %v1434, %v4052
    %v4054 = vand.u32 %v4053, 4294901760
    %4055 = vmatpush1.msra.mxu0 %v4054
    %4056 = vmatprep.subr.mxu0 0.0
    %v4057 = vand.u32 %v1435, 4294901760
    %v4058 = vsub.f32 %v1435, %v4057
    %v4059 = vand.u32 %v4058, 4294901760
    %4060 = vmatpush1.msra.mxu0 %v4059
    %4061 = vmatprep.subr.mxu0 0.0
    %v4062 = vand.u32 %v1436, 4294901760
    %v4063 = vsub.f32 %v1436, %v4062
    %v4064 = vand.u32 %v4063, 4294901760
    %4065 = vmatpush1.msra.mxu0 %v4064
    %4066 = vmatprep.subr.mxu0 0.0
    %v4067 = vand.u32 %v1437, 4294901760
    %v4068 = vsub.f32 %v1437, %v4067
    %v4069 = vand.u32 %v4068, 4294901760
    %4070 = vmatpush1.msra.mxu0 %v4069
    %4071 = vmatprep.subr.mxu0 0.0
    %v4072 = vand.u32 %v1438, 4294901760
    %v4073 = vsub.f32 %v1438, %v4072
    %v4074 = vand.u32 %v4073, 4294901760
    %4075 = vmatpush1.msra.mxu0 %v4074
    %4076 = vmatprep.subr.mxu0 0.0
    %v4077 = vand.u32 %v1439, 4294901760
    %v4078 = vsub.f32 %v1439, %v4077
    %v4079 = vand.u32 %v4078, 4294901760
    %4080 = vmatpush1.msra.mxu0 %v4079
    %4081 = vmatprep.subr.mxu0 0.0
    %v4082 = vand.u32 %v1440, 4294901760
    %v4083 = vsub.f32 %v1440, %v4082
    %v4084 = vand.u32 %v4083, 4294901760
    %4085 = vmatpush1.msra.mxu0 %v4084
    %4086 = vmatprep.subr.mxu0 0.0
    %v4087 = vand.u32 %v1441, 4294901760
    %v4088 = vsub.f32 %v1441, %v4087
    %v4089 = vand.u32 %v4088, 4294901760
    %4090 = vmatpush1.msra.mxu0 %v4089
    %4091 = vmatprep.subr.mxu0 0.0
    %v4092 = vand.u32 %v1442, 4294901760
    %v4093 = vsub.f32 %v1442, %v4092
    %v4094 = vand.u32 %v4093, 4294901760
    %4095 = vmatpush1.msra.mxu0 %v4094
    %4096 = vmatprep.subr.mxu0 0.0
    %v4097 = vand.u32 %v1443, 4294901760
    %v4098 = vsub.f32 %v1443, %v4097
    %v4099 = vand.u32 %v4098, 4294901760
    %4100 = vmatpush1.msra.mxu0 %v4099
    %4101 = vmatprep.subr.mxu0 0.0
    %v4102 = vand.u32 %v1444, 4294901760
    %v4103 = vsub.f32 %v1444, %v4102
    %v4104 = vand.u32 %v4103, 4294901760
    %4105 = vmatpush1.msra.mxu0 %v4104
    %4106 = vmatprep.subr.mxu0 0.0
    %v4107 = vand.u32 %v1445, 4294901760
    %v4108 = vsub.f32 %v1445, %v4107
    %v4109 = vand.u32 %v4108, 4294901760
    %4110 = vmatpush1.msra.mxu0 %v4109
    %4111 = vmatprep.subr.mxu0 0.0
    %v4112 = vand.u32 %v1446, 4294901760
    %v4113 = vsub.f32 %v1446, %v4112
    %v4114 = vand.u32 %v4113, 4294901760
    %4115 = vmatpush1.msra.mxu0 %v4114
    %4116 = vmatprep.subr.mxu0 0.0
    %v4117 = vand.u32 %v1447, 4294901760
    %v4118 = vsub.f32 %v1447, %v4117
    %v4119 = vand.u32 %v4118, 4294901760
    %4120 = vmatpush1.msra.mxu0 %v4119
    %4121 = vmatprep.subr.mxu0 0.0
    %v4122 = vand.u32 %v1448, 4294901760
    %v4123 = vsub.f32 %v1448, %v4122
    %v4124 = vand.u32 %v4123, 4294901760
    %4125 = vmatpush1.msra.mxu0 %v4124
    %4126 = vmatprep.subr.mxu0 0.0
    %v4127 = vand.u32 %v1449, 4294901760
    %v4128 = vsub.f32 %v1449, %v4127
    %v4129 = vand.u32 %v4128, 4294901760
    %4130 = vmatpush1.msra.mxu0 %v4129
    %4131 = vmatprep.subr.mxu0 0.0
    %v4132 = vand.u32 %v1450, 4294901760
    %v4133 = vsub.f32 %v1450, %v4132
    %v4134 = vand.u32 %v4133, 4294901760
    %4135 = vmatpush1.msra.mxu0 %v4134
    %4136 = vmatprep.subr.mxu0 0.0
    %v4137 = vand.u32 %v1451, 4294901760
    %v4138 = vsub.f32 %v1451, %v4137
    %v4139 = vand.u32 %v4138, 4294901760
    %4140 = vmatpush1.msra.mxu0 %v4139
    %4141 = vmatprep.subr.mxu0 0.0
    %v4142 = vand.u32 %v1452, 4294901760
    %v4143 = vsub.f32 %v1452, %v4142
    %v4144 = vand.u32 %v4143, 4294901760
    %4145 = vmatpush1.msra.mxu0 %v4144
    %4146 = vmatprep.subr.mxu0 0.0
    %v4147 = vand.u32 %v1453, 4294901760
    %v4148 = vsub.f32 %v1453, %v4147
    %v4149 = vand.u32 %v4148, 4294901760
    %4150 = vmatpush1.msra.mxu0 %v4149
    %4151 = vmatprep.subr.mxu0 0.0
    %v4152 = vand.u32 %v1454, 4294901760
    %v4153 = vsub.f32 %v1454, %v4152
    %v4154 = vand.u32 %v4153, 4294901760
    %4155 = vmatpush1.msra.mxu0 %v4154
    %4156 = vmatprep.subr.mxu0 0.0
    %v4157 = vand.u32 %v1455, 4294901760
    %v4158 = vsub.f32 %v1455, %v4157
    %v4159 = vand.u32 %v4158, 4294901760
    %4160 = vmatpush1.msra.mxu0 %v4159
    %4161 = vmatprep.subr.mxu0 0.0
    %v4162 = vand.u32 %v1456, 4294901760
    %v4163 = vsub.f32 %v1456, %v4162
    %v4164 = vand.u32 %v4163, 4294901760
    %4165 = vmatpush1.msra.mxu0 %v4164
    %4166 = vmatprep.subr.mxu0 0.0
    %v4167 = vand.u32 %v1457, 4294901760
    %v4168 = vsub.f32 %v1457, %v4167
    %v4169 = vand.u32 %v4168, 4294901760
    %4170 = vmatpush1.msra.mxu0 %v4169
    %4171 = vmatprep.subr.mxu0 0.0
    %v4172 = vand.u32 %v1458, 4294901760
    %v4173 = vsub.f32 %v1458, %v4172
    %v4174 = vand.u32 %v4173, 4294901760
    %4175 = vmatpush1.msra.mxu0 %v4174
    %4176 = vmatprep.subr.mxu0 0.0
    %v4177 = vand.u32 %v1459, 4294901760
    %v4178 = vsub.f32 %v1459, %v4177
    %v4179 = vand.u32 %v4178, 4294901760
    %4180 = vmatpush1.msra.mxu0 %v4179
    %4181 = vmatprep.subr.mxu0 0.0
    %v4182 = vand.u32 %v1460, 4294901760
    %v4183 = vsub.f32 %v1460, %v4182
    %v4184 = vand.u32 %v4183, 4294901760
    %4185 = vmatpush1.msra.mxu0 %v4184
    %4186 = vmatprep.subr.mxu0 0.0
    %v4187 = vand.u32 %v1461, 4294901760
    %v4188 = vsub.f32 %v1461, %v4187
    %v4189 = vand.u32 %v4188, 4294901760
    %4190 = vmatpush1.msra.mxu0 %v4189
    %v4191 = vand.u32 %v1665, 4294901760
    %4192 = vmatprep.mubr.f32.mxu0 %v4191
    %v4193 = vand.u32 %v1657, 4294901760
    %4194 = vmatmul.mubr.f32.gmra.mrb[0].mxu0 %v4193
    %v4195 = vpop.f32.mrb[0].mxu0
    %v4196 = vadd.f32 %v4028, %v4195
    %v4197 = vpop.f32.mrb[0].mxu0
    %4198 = vdwg.mxu0
    %4199 = vmatprep.subr.mxu0 0.0
    %v4200 = vand.u32 %v1430, 4294901760
    %4201 = vmatpush1.msra.mxu0 %v4200
    %4202 = vmatprep.subr.mxu0 0.0
    %v4203 = vand.u32 %v1431, 4294901760
    %4204 = vmatpush1.msra.mxu0 %v4203
    %4205 = vmatprep.subr.mxu0 0.0
    %v4206 = vand.u32 %v1432, 4294901760
    %4207 = vmatpush1.msra.mxu0 %v4206
    %4208 = vmatprep.subr.mxu0 0.0
    %v4209 = vand.u32 %v1433, 4294901760
    %4210 = vmatpush1.msra.mxu0 %v4209
    %4211 = vmatprep.subr.mxu0 0.0
    %v4212 = vand.u32 %v1434, 4294901760
    %4213 = vmatpush1.msra.mxu0 %v4212
    %4214 = vmatprep.subr.mxu0 0.0
    %v4215 = vand.u32 %v1435, 4294901760
    %4216 = vmatpush1.msra.mxu0 %v4215
    %4217 = vmatprep.subr.mxu0 0.0
    %v4218 = vand.u32 %v1436, 4294901760
    %4219 = vmatpush1.msra.mxu0 %v4218
    %4220 = vmatprep.subr.mxu0 0.0
    %v4221 = vand.u32 %v1437, 4294901760
    %4222 = vmatpush1.msra.mxu0 %v4221
    %4223 = vmatprep.subr.mxu0 0.0
    %v4224 = vand.u32 %v1438, 4294901760
    %4225 = vmatpush1.msra.mxu0 %v4224
    %4226 = vmatprep.subr.mxu0 0.0
    %v4227 = vand.u32 %v1439, 4294901760
    %4228 = vmatpush1.msra.mxu0 %v4227
    %4229 = vmatprep.subr.mxu0 0.0
    %v4230 = vand.u32 %v1440, 4294901760
    %4231 = vmatpush1.msra.mxu0 %v4230
    %4232 = vmatprep.subr.mxu0 0.0
    %v4233 = vand.u32 %v1441, 4294901760
    %4234 = vmatpush1.msra.mxu0 %v4233
    %4235 = vmatprep.subr.mxu0 0.0
    %v4236 = vand.u32 %v1442, 4294901760
    %4237 = vmatpush1.msra.mxu0 %v4236
    %4238 = vmatprep.subr.mxu0 0.0
    %v4239 = vand.u32 %v1443, 4294901760
    %4240 = vmatpush1.msra.mxu0 %v4239
    %4241 = vmatprep.subr.mxu0 0.0
    %v4242 = vand.u32 %v1444, 4294901760
    %4243 = vmatpush1.msra.mxu0 %v4242
    %4244 = vmatprep.subr.mxu0 0.0
    %v4245 = vand.u32 %v1445, 4294901760
    %4246 = vmatpush1.msra.mxu0 %v4245
    %4247 = vmatprep.subr.mxu0 0.0
    %v4248 = vand.u32 %v1446, 4294901760
    %4249 = vmatpush1.msra.mxu0 %v4248
    %4250 = vmatprep.subr.mxu0 0.0
    %v4251 = vand.u32 %v1447, 4294901760
    %4252 = vmatpush1.msra.mxu0 %v4251
    %4253 = vmatprep.subr.mxu0 0.0
    %v4254 = vand.u32 %v1448, 4294901760
    %4255 = vmatpush1.msra.mxu0 %v4254
    %4256 = vmatprep.subr.mxu0 0.0
    %v4257 = vand.u32 %v1449, 4294901760
    %4258 = vmatpush1.msra.mxu0 %v4257
    %4259 = vmatprep.subr.mxu0 0.0
    %v4260 = vand.u32 %v1450, 4294901760
    %4261 = vmatpush1.msra.mxu0 %v4260
    %4262 = vmatprep.subr.mxu0 0.0
    %v4263 = vand.u32 %v1451, 4294901760
    %4264 = vmatpush1.msra.mxu0 %v4263
    %4265 = vmatprep.subr.mxu0 0.0
    %v4266 = vand.u32 %v1452, 4294901760
    %4267 = vmatpush1.msra.mxu0 %v4266
    %4268 = vmatprep.subr.mxu0 0.0
    %v4269 = vand.u32 %v1453, 4294901760
    %4270 = vmatpush1.msra.mxu0 %v4269
    %4271 = vmatprep.subr.mxu0 0.0
    %v4272 = vand.u32 %v1454, 4294901760
    %4273 = vmatpush1.msra.mxu0 %v4272
    %4274 = vmatprep.subr.mxu0 0.0
    %v4275 = vand.u32 %v1455, 4294901760
    %4276 = vmatpush1.msra.mxu0 %v4275
    %4277 = vmatprep.subr.mxu0 0.0
    %v4278 = vand.u32 %v1456, 4294901760
    %4279 = vmatpush1.msra.mxu0 %v4278
    %4280 = vmatprep.subr.mxu0 0.0
    %v4281 = vand.u32 %v1457, 4294901760
    %4282 = vmatpush1.msra.mxu0 %v4281
    %4283 = vmatprep.subr.mxu0 0.0
    %v4284 = vand.u32 %v1458, 4294901760
    %4285 = vmatpush1.msra.mxu0 %v4284
    %4286 = vmatprep.subr.mxu0 0.0
    %v4287 = vand.u32 %v1459, 4294901760
    %4288 = vmatpush1.msra.mxu0 %v4287
    %4289 = vmatprep.subr.mxu0 0.0
    %v4290 = vand.u32 %v1460, 4294901760
    %4291 = vmatpush1.msra.mxu0 %v4290
    %4292 = vmatprep.subr.mxu0 0.0
    %v4293 = vand.u32 %v1461, 4294901760
    %4294 = vmatpush1.msra.mxu0 %v4293
    %v4295 = vand.u32 %v1665, 4294901760
    %4296 = vmatprep.mubr.f32.mxu0 %v4295
    %v4297 = vand.u32 %v1657, 4294901760
    %4298 = vmatmul.mubr.f32.gmra.mrb[0].mxu0 %v4297
    %v4299 = vpop.f32.mrb[0].mxu0
    %v4300 = vadd.f32 %v4196, %v4299
    %v4301 = vpop.f32.mrb[0].mxu0
    %4302 = vdwg.mxu0
    %4303 = vmatprep.subr.mxu0 0.0
    %v4304 = vand.u32 %v1462, 4294901760
    %4305 = vmatpush1.msra.mxu0 %v4304
    %4306 = vmatprep.subr.mxu0 0.0
    %v4307 = vand.u32 %v1463, 4294901760
    %4308 = vmatpush1.msra.mxu0 %v4307
    %4309 = vmatprep.subr.mxu0 0.0
    %v4310 = vand.u32 %v1464, 4294901760
    %4311 = vmatpush1.msra.mxu0 %v4310
    %4312 = vmatprep.subr.mxu0 0.0
    %v4313 = vand.u32 %v1465, 4294901760
    %4314 = vmatpush1.msra.mxu0 %v4313
    %4315 = vmatprep.subr.mxu0 0.0
    %v4316 = vand.u32 %v1466, 4294901760
    %4317 = vmatpush1.msra.mxu0 %v4316
    %4318 = vmatprep.subr.mxu0 0.0
    %v4319 = vand.u32 %v1467, 4294901760
    %4320 = vmatpush1.msra.mxu0 %v4319
    %4321 = vmatprep.subr.mxu0 0.0
    %v4322 = vand.u32 %v1468, 4294901760
    %4323 = vmatpush1.msra.mxu0 %v4322
    %4324 = vmatprep.subr.mxu0 0.0
    %v4325 = vand.u32 %v1469, 4294901760
    %4326 = vmatpush1.msra.mxu0 %v4325
    %4327 = vmatprep.subr.mxu0 0.0
    %v4328 = vand.u32 %v1470, 4294901760
    %4329 = vmatpush1.msra.mxu0 %v4328
    %4330 = vmatprep.subr.mxu0 0.0
    %v4331 = vand.u32 %v1471, 4294901760
    %4332 = vmatpush1.msra.mxu0 %v4331
    %4333 = vmatprep.subr.mxu0 0.0
    %v4334 = vand.u32 %v1472, 4294901760
    %4335 = vmatpush1.msra.mxu0 %v4334
    %4336 = vmatprep.subr.mxu0 0.0
    %v4337 = vand.u32 %v1473, 4294901760
    %4338 = vmatpush1.msra.mxu0 %v4337
    %4339 = vmatprep.subr.mxu0 0.0
    %v4340 = vand.u32 %v1474, 4294901760
    %4341 = vmatpush1.msra.mxu0 %v4340
    %4342 = vmatprep.subr.mxu0 0.0
    %v4343 = vand.u32 %v1475, 4294901760
    %4344 = vmatpush1.msra.mxu0 %v4343
    %4345 = vmatprep.subr.mxu0 0.0
    %v4346 = vand.u32 %v1476, 4294901760
    %4347 = vmatpush1.msra.mxu0 %v4346
    %4348 = vmatprep.subr.mxu0 0.0
    %v4349 = vand.u32 %v1477, 4294901760
    %4350 = vmatpush1.msra.mxu0 %v4349
    %4351 = vmatprep.subr.mxu0 0.0
    %v4352 = vand.u32 %v1478, 4294901760
    %4353 = vmatpush1.msra.mxu0 %v4352
    %4354 = vmatprep.subr.mxu0 0.0
    %v4355 = vand.u32 %v1479, 4294901760
    %4356 = vmatpush1.msra.mxu0 %v4355
    %4357 = vmatprep.subr.mxu0 0.0
    %v4358 = vand.u32 %v1480, 4294901760
    %4359 = vmatpush1.msra.mxu0 %v4358
    %4360 = vmatprep.subr.mxu0 0.0
    %v4361 = vand.u32 %v1481, 4294901760
    %4362 = vmatpush1.msra.mxu0 %v4361
    %4363 = vmatprep.subr.mxu0 0.0
    %v4364 = vand.u32 %v1482, 4294901760
    %4365 = vmatpush1.msra.mxu0 %v4364
    %4366 = vmatprep.subr.mxu0 0.0
    %v4367 = vand.u32 %v1483, 4294901760
    %4368 = vmatpush1.msra.mxu0 %v4367
    %4369 = vmatprep.subr.mxu0 0.0
    %v4370 = vand.u32 %v1484, 4294901760
    %4371 = vmatpush1.msra.mxu0 %v4370
    %4372 = vmatprep.subr.mxu0 0.0
    %v4373 = vand.u32 %v1485, 4294901760
    %4374 = vmatpush1.msra.mxu0 %v4373
    %4375 = vmatprep.subr.mxu0 0.0
    %v4376 = vand.u32 %v1486, 4294901760
    %4377 = vmatpush1.msra.mxu0 %v4376
    %4378 = vmatprep.subr.mxu0 0.0
    %v4379 = vand.u32 %v1487, 4294901760
    %4380 = vmatpush1.msra.mxu0 %v4379
    %4381 = vmatprep.subr.mxu0 0.0
    %v4382 = vand.u32 %v1488, 4294901760
    %4383 = vmatpush1.msra.mxu0 %v4382
    %4384 = vmatprep.subr.mxu0 0.0
    %v4385 = vand.u32 %v1489, 4294901760
    %4386 = vmatpush1.msra.mxu0 %v4385
    %4387 = vmatprep.subr.mxu0 0.0
    %v4388 = vand.u32 %v1490, 4294901760
    %4389 = vmatpush1.msra.mxu0 %v4388
    %4390 = vmatprep.subr.mxu0 0.0
    %v4391 = vand.u32 %v1491, 4294901760
    %4392 = vmatpush1.msra.mxu0 %v4391
    %4393 = vmatprep.subr.mxu0 0.0
    %v4394 = vand.u32 %v1492, 4294901760
    %4395 = vmatpush1.msra.mxu0 %v4394
    %4396 = vmatprep.subr.mxu0 0.0
    %v4397 = vand.u32 %v1493, 4294901760
    %4398 = vmatpush1.msra.mxu0 %v4397
    %v4399 = vand.u32 %v1666, 4294901760
    %v4400 = vsub.f32 %v1666, %v4399
    %v4401 = vand.u32 %v4400, 4294901760
    %v4402 = vsub.f32 %v4400, %v4401
    %v4403 = vand.u32 %v4402, 4294901760
    %4404 = vmatprep.mubr.f32.mxu0 %v4403
    %v4405 = vand.u32 %v1664, 4294901760
    %v4406 = vsub.f32 %v1664, %v4405
    %v4407 = vand.u32 %v4406, 4294901760
    %v4408 = vsub.f32 %v4406, %v4407
    %v4409 = vand.u32 %v4408, 4294901760
    %4410 = vmatmul.mubr.f32.gmra.mrb[0].mxu0 %v4409
    %v4411 = vpop.f32.mrb[0].mxu0
    %v4412 = vadd.f32 %v4300, %v4411
    %v4413 = vpop.f32.mrb[0].mxu0
    %4414 = vdwg.mxu0
    %4415 = vmatprep.subr.mxu0 0.0
    %v4416 = vand.u32 %v1462, 4294901760
    %v4417 = vsub.f32 %v1462, %v4416
    %v4418 = vand.u32 %v4417, 4294901760
    %v4419 = vsub.f32 %v4417, %v4418
    %v4420 = vand.u32 %v4419, 4294901760
    %4421 = vmatpush1.msra.mxu0 %v4420
    %4422 = vmatprep.subr.mxu0 0.0
    %v4423 = vand.u32 %v1463, 4294901760
    %v4424 = vsub.f32 %v1463, %v4423
    %v4425 = vand.u32 %v4424, 4294901760
    %v4426 = vsub.f32 %v4424, %v4425
    %v4427 = vand.u32 %v4426, 4294901760
    %4428 = vmatpush1.msra.mxu0 %v4427
    %4429 = vmatprep.subr.mxu0 0.0
    %v4430 = vand.u32 %v1464, 4294901760
    %v4431 = vsub.f32 %v1464, %v4430
    %v4432 = vand.u32 %v4431, 4294901760
    %v4433 = vsub.f32 %v4431, %v4432
    %v4434 = vand.u32 %v4433, 4294901760
    %4435 = vmatpush1.msra.mxu0 %v4434
    %4436 = vmatprep.subr.mxu0 0.0
    %v4437 = vand.u32 %v1465, 4294901760
    %v4438 = vsub.f32 %v1465, %v4437
    %v4439 = vand.u32 %v4438, 4294901760
    %v4440 = vsub.f32 %v4438, %v4439
    %v4441 = vand.u32 %v4440, 4294901760
    %4442 = vmatpush1.msra.mxu0 %v4441
    %4443 = vmatprep.subr.mxu0 0.0
    %v4444 = vand.u32 %v1466, 4294901760
    %v4445 = vsub.f32 %v1466, %v4444
    %v4446 = vand.u32 %v4445, 4294901760
    %v4447 = vsub.f32 %v4445, %v4446
    %v4448 = vand.u32 %v4447, 4294901760
    %4449 = vmatpush1.msra.mxu0 %v4448
    %4450 = vmatprep.subr.mxu0 0.0
    %v4451 = vand.u32 %v1467, 4294901760
    %v4452 = vsub.f32 %v1467, %v4451
    %v4453 = vand.u32 %v4452, 4294901760
    %v4454 = vsub.f32 %v4452, %v4453
    %v4455 = vand.u32 %v4454, 4294901760
    %4456 = vmatpush1.msra.mxu0 %v4455
    %4457 = vmatprep.subr.mxu0 0.0
    %v4458 = vand.u32 %v1468, 4294901760
    %v4459 = vsub.f32 %v1468, %v4458
    %v4460 = vand.u32 %v4459, 4294901760
    %v4461 = vsub.f32 %v4459, %v4460
    %v4462 = vand.u32 %v4461, 4294901760
    %4463 = vmatpush1.msra.mxu0 %v4462
    %4464 = vmatprep.subr.mxu0 0.0
    %v4465 = vand.u32 %v1469, 4294901760
    %v4466 = vsub.f32 %v1469, %v4465
    %v4467 = vand.u32 %v4466, 4294901760
    %v4468 = vsub.f32 %v4466, %v4467
    %v4469 = vand.u32 %v4468, 4294901760
    %4470 = vmatpush1.msra.mxu0 %v4469
    %4471 = vmatprep.subr.mxu0 0.0
    %v4472 = vand.u32 %v1470, 4294901760
    %v4473 = vsub.f32 %v1470, %v4472
    %v4474 = vand.u32 %v4473, 4294901760
    %v4475 = vsub.f32 %v4473, %v4474
    %v4476 = vand.u32 %v4475, 4294901760
    %4477 = vmatpush1.msra.mxu0 %v4476
    %4478 = vmatprep.subr.mxu0 0.0
    %v4479 = vand.u32 %v1471, 4294901760
    %v4480 = vsub.f32 %v1471, %v4479
    %v4481 = vand.u32 %v4480, 4294901760
    %v4482 = vsub.f32 %v4480, %v4481
    %v4483 = vand.u32 %v4482, 4294901760
    %4484 = vmatpush1.msra.mxu0 %v4483
    %4485 = vmatprep.subr.mxu0 0.0
    %v4486 = vand.u32 %v1472, 4294901760
    %v4487 = vsub.f32 %v1472, %v4486
    %v4488 = vand.u32 %v4487, 4294901760
    %v4489 = vsub.f32 %v4487, %v4488
    %v4490 = vand.u32 %v4489, 4294901760
    %4491 = vmatpush1.msra.mxu0 %v4490
    %4492 = vmatprep.subr.mxu0 0.0
    %v4493 = vand.u32 %v1473, 4294901760
    %v4494 = vsub.f32 %v1473, %v4493
    %v4495 = vand.u32 %v4494, 4294901760
    %v4496 = vsub.f32 %v4494, %v4495
    %v4497 = vand.u32 %v4496, 4294901760
    %4498 = vmatpush1.msra.mxu0 %v4497
    %4499 = vmatprep.subr.mxu0 0.0
    %v4500 = vand.u32 %v1474, 4294901760
    %v4501 = vsub.f32 %v1474, %v4500
    %v4502 = vand.u32 %v4501, 4294901760
    %v4503 = vsub.f32 %v4501, %v4502
    %v4504 = vand.u32 %v4503, 4294901760
    %4505 = vmatpush1.msra.mxu0 %v4504
    %4506 = vmatprep.subr.mxu0 0.0
    %v4507 = vand.u32 %v1475, 4294901760
    %v4508 = vsub.f32 %v1475, %v4507
    %v4509 = vand.u32 %v4508, 4294901760
    %v4510 = vsub.f32 %v4508, %v4509
    %v4511 = vand.u32 %v4510, 4294901760
    %4512 = vmatpush1.msra.mxu0 %v4511
    %4513 = vmatprep.subr.mxu0 0.0
    %v4514 = vand.u32 %v1476, 4294901760
    %v4515 = vsub.f32 %v1476, %v4514
    %v4516 = vand.u32 %v4515, 4294901760
    %v4517 = vsub.f32 %v4515, %v4516
    %v4518 = vand.u32 %v4517, 4294901760
    %4519 = vmatpush1.msra.mxu0 %v4518
    %4520 = vmatprep.subr.mxu0 0.0
    %v4521 = vand.u32 %v1477, 4294901760
    %v4522 = vsub.f32 %v1477, %v4521
    %v4523 = vand.u32 %v4522, 4294901760
    %v4524 = vsub.f32 %v4522, %v4523
    %v4525 = vand.u32 %v4524, 4294901760
    %4526 = vmatpush1.msra.mxu0 %v4525
    %4527 = vmatprep.subr.mxu0 0.0
    %v4528 = vand.u32 %v1478, 4294901760
    %v4529 = vsub.f32 %v1478, %v4528
    %v4530 = vand.u32 %v4529, 4294901760
    %v4531 = vsub.f32 %v4529, %v4530
    %v4532 = vand.u32 %v4531, 4294901760
    %4533 = vmatpush1.msra.mxu0 %v4532
    %4534 = vmatprep.subr.mxu0 0.0
    %v4535 = vand.u32 %v1479, 4294901760
    %v4536 = vsub.f32 %v1479, %v4535
    %v4537 = vand.u32 %v4536, 4294901760
    %v4538 = vsub.f32 %v4536, %v4537
    %v4539 = vand.u32 %v4538, 4294901760
    %4540 = vmatpush1.msra.mxu0 %v4539
    %4541 = vmatprep.subr.mxu0 0.0
    %v4542 = vand.u32 %v1480, 4294901760
    %v4543 = vsub.f32 %v1480, %v4542
    %v4544 = vand.u32 %v4543, 4294901760
    %v4545 = vsub.f32 %v4543, %v4544
    %v4546 = vand.u32 %v4545, 4294901760
    %4547 = vmatpush1.msra.mxu0 %v4546
    %4548 = vmatprep.subr.mxu0 0.0
    %v4549 = vand.u32 %v1481, 4294901760
    %v4550 = vsub.f32 %v1481, %v4549
    %v4551 = vand.u32 %v4550, 4294901760
    %v4552 = vsub.f32 %v4550, %v4551
    %v4553 = vand.u32 %v4552, 4294901760
    %4554 = vmatpush1.msra.mxu0 %v4553
    %4555 = vmatprep.subr.mxu0 0.0
    %v4556 = vand.u32 %v1482, 4294901760
    %v4557 = vsub.f32 %v1482, %v4556
    %v4558 = vand.u32 %v4557, 4294901760
    %v4559 = vsub.f32 %v4557, %v4558
    %v4560 = vand.u32 %v4559, 4294901760
    %4561 = vmatpush1.msra.mxu0 %v4560
    %4562 = vmatprep.subr.mxu0 0.0
    %v4563 = vand.u32 %v1483, 4294901760
    %v4564 = vsub.f32 %v1483, %v4563
    %v4565 = vand.u32 %v4564, 4294901760
    %v4566 = vsub.f32 %v4564, %v4565
    %v4567 = vand.u32 %v4566, 4294901760
    %4568 = vmatpush1.msra.mxu0 %v4567
    %4569 = vmatprep.subr.mxu0 0.0
    %v4570 = vand.u32 %v1484, 4294901760
    %v4571 = vsub.f32 %v1484, %v4570
    %v4572 = vand.u32 %v4571, 4294901760
    %v4573 = vsub.f32 %v4571, %v4572
    %v4574 = vand.u32 %v4573, 4294901760
    %4575 = vmatpush1.msra.mxu0 %v4574
    %4576 = vmatprep.subr.mxu0 0.0
    %v4577 = vand.u32 %v1485, 4294901760
    %v4578 = vsub.f32 %v1485, %v4577
    %v4579 = vand.u32 %v4578, 4294901760
    %v4580 = vsub.f32 %v4578, %v4579
    %v4581 = vand.u32 %v4580, 4294901760
    %4582 = vmatpush1.msra.mxu0 %v4581
    %4583 = vmatprep.subr.mxu0 0.0
    %v4584 = vand.u32 %v1486, 4294901760
    %v4585 = vsub.f32 %v1486, %v4584
    %v4586 = vand.u32 %v4585, 4294901760
    %v4587 = vsub.f32 %v4585, %v4586
    %v4588 = vand.u32 %v4587, 4294901760
    %4589 = vmatpush1.msra.mxu0 %v4588
    %4590 = vmatprep.subr.mxu0 0.0
    %v4591 = vand.u32 %v1487, 4294901760
    %v4592 = vsub.f32 %v1487, %v4591
    %v4593 = vand.u32 %v4592, 4294901760
    %v4594 = vsub.f32 %v4592, %v4593
    %v4595 = vand.u32 %v4594, 4294901760
    %4596 = vmatpush1.msra.mxu0 %v4595
    %4597 = vmatprep.subr.mxu0 0.0
    %v4598 = vand.u32 %v1488, 4294901760
    %v4599 = vsub.f32 %v1488, %v4598
    %v4600 = vand.u32 %v4599, 4294901760
    %v4601 = vsub.f32 %v4599, %v4600
    %v4602 = vand.u32 %v4601, 4294901760
    %4603 = vmatpush1.msra.mxu0 %v4602
    %4604 = vmatprep.subr.mxu0 0.0
    %v4605 = vand.u32 %v1489, 4294901760
    %v4606 = vsub.f32 %v1489, %v4605
    %v4607 = vand.u32 %v4606, 4294901760
    %v4608 = vsub.f32 %v4606, %v4607
    %v4609 = vand.u32 %v4608, 4294901760
    %4610 = vmatpush1.msra.mxu0 %v4609
    %4611 = vmatprep.subr.mxu0 0.0
    %v4612 = vand.u32 %v1490, 4294901760
    %v4613 = vsub.f32 %v1490, %v4612
    %v4614 = vand.u32 %v4613, 4294901760
    %v4615 = vsub.f32 %v4613, %v4614
    %v4616 = vand.u32 %v4615, 4294901760
    %4617 = vmatpush1.msra.mxu0 %v4616
    %4618 = vmatprep.subr.mxu0 0.0
    %v4619 = vand.u32 %v1491, 4294901760
    %v4620 = vsub.f32 %v1491, %v4619
    %v4621 = vand.u32 %v4620, 4294901760
    %v4622 = vsub.f32 %v4620, %v4621
    %v4623 = vand.u32 %v4622, 4294901760
    %4624 = vmatpush1.msra.mxu0 %v4623
    %4625 = vmatprep.subr.mxu0 0.0
    %v4626 = vand.u32 %v1492, 4294901760
    %v4627 = vsub.f32 %v1492, %v4626
    %v4628 = vand.u32 %v4627, 4294901760
    %v4629 = vsub.f32 %v4627, %v4628
    %v4630 = vand.u32 %v4629, 4294901760
    %4631 = vmatpush1.msra.mxu0 %v4630
    %4632 = vmatprep.subr.mxu0 0.0
    %v4633 = vand.u32 %v1493, 4294901760
    %v4634 = vsub.f32 %v1493, %v4633
    %v4635 = vand.u32 %v4634, 4294901760
    %v4636 = vsub.f32 %v4634, %v4635
    %v4637 = vand.u32 %v4636, 4294901760
    %4638 = vmatpush1.msra.mxu0 %v4637
    %v4639 = vand.u32 %v1666, 4294901760
    %4640 = vmatprep.mubr.f32.mxu0 %v4639
    %v4641 = vand.u32 %v1664, 4294901760
    %4642 = vmatmul.mubr.f32.gmra.mrb[0].mxu0 %v4641
    %v4643 = vpop.f32.mrb[0].mxu0
    %v4644 = vadd.f32 %v4412, %v4643
    %v4645 = vpop.f32.mrb[0].mxu0
    %4646 = vdwg.mxu0
    %4647 = vmatprep.subr.mxu0 0.0
    %v4648 = vand.u32 %v1462, 4294901760
    %v4649 = vsub.f32 %v1462, %v4648
    %4650 = vmatpush1.msra.mxu0 %v4649
    %4651 = vmatprep.subr.mxu0 0.0
    %v4652 = vand.u32 %v1463, 4294901760
    %v4653 = vsub.f32 %v1463, %v4652
    %4654 = vmatpush1.msra.mxu0 %v4653
    %4655 = vmatprep.subr.mxu0 0.0
    %v4656 = vand.u32 %v1464, 4294901760
    %v4657 = vsub.f32 %v1464, %v4656
    %4658 = vmatpush1.msra.mxu0 %v4657
    %4659 = vmatprep.subr.mxu0 0.0
    %v4660 = vand.u32 %v1465, 4294901760
    %v4661 = vsub.f32 %v1465, %v4660
    %4662 = vmatpush1.msra.mxu0 %v4661
    %4663 = vmatprep.subr.mxu0 0.0
    %v4664 = vand.u32 %v1466, 4294901760
    %v4665 = vsub.f32 %v1466, %v4664
    %4666 = vmatpush1.msra.mxu0 %v4665
    %4667 = vmatprep.subr.mxu0 0.0
    %v4668 = vand.u32 %v1467, 4294901760
    %v4669 = vsub.f32 %v1467, %v4668
    %4670 = vmatpush1.msra.mxu0 %v4669
    %4671 = vmatprep.subr.mxu0 0.0
    %v4672 = vand.u32 %v1468, 4294901760
    %v4673 = vsub.f32 %v1468, %v4672
    %4674 = vmatpush1.msra.mxu0 %v4673
    %4675 = vmatprep.subr.mxu0 0.0
    %v4676 = vand.u32 %v1469, 4294901760
    %v4677 = vsub.f32 %v1469, %v4676
    %4678 = vmatpush1.msra.mxu0 %v4677
    %4679 = vmatprep.subr.mxu0 0.0
    %v4680 = vand.u32 %v1470, 4294901760
    %v4681 = vsub.f32 %v1470, %v4680
    %4682 = vmatpush1.msra.mxu0 %v4681
    %4683 = vmatprep.subr.mxu0 0.0
    %v4684 = vand.u32 %v1471, 4294901760
    %v4685 = vsub.f32 %v1471, %v4684
    %4686 = vmatpush1.msra.mxu0 %v4685
    %4687 = vmatprep.subr.mxu0 0.0
    %v4688 = vand.u32 %v1472, 4294901760
    %v4689 = vsub.f32 %v1472, %v4688
    %4690 = vmatpush1.msra.mxu0 %v4689
    %4691 = vmatprep.subr.mxu0 0.0
    %v4692 = vand.u32 %v1473, 4294901760
    %v4693 = vsub.f32 %v1473, %v4692
    %4694 = vmatpush1.msra.mxu0 %v4693
    %4695 = vmatprep.subr.mxu0 0.0
    %v4696 = vand.u32 %v1474, 4294901760
    %v4697 = vsub.f32 %v1474, %v4696
    %4698 = vmatpush1.msra.mxu0 %v4697
    %4699 = vmatprep.subr.mxu0 0.0
    %v4700 = vand.u32 %v1475, 4294901760
    %v4701 = vsub.f32 %v1475, %v4700
    %4702 = vmatpush1.msra.mxu0 %v4701
    %4703 = vmatprep.subr.mxu0 0.0
    %v4704 = vand.u32 %v1476, 4294901760
    %v4705 = vsub.f32 %v1476, %v4704
    %4706 = vmatpush1.msra.mxu0 %v4705
    %4707 = vmatprep.subr.mxu0 0.0
    %v4708 = vand.u32 %v1477, 4294901760
    %v4709 = vsub.f32 %v1477, %v4708
    %4710 = vmatpush1.msra.mxu0 %v4709
    %4711 = vmatprep.subr.mxu0 0.0
    %v4712 = vand.u32 %v1478, 4294901760
    %v4713 = vsub.f32 %v1478, %v4712
    %4714 = vmatpush1.msra.mxu0 %v4713
    %4715 = vmatprep.subr.mxu0 0.0
    %v4716 = vand.u32 %v1479, 4294901760
    %v4717 = vsub.f32 %v1479, %v4716
    %4718 = vmatpush1.msra.mxu0 %v4717
    %4719 = vmatprep.subr.mxu0 0.0
    %v4720 = vand.u32 %v1480, 4294901760
    %v4721 = vsub.f32 %v1480, %v4720
    %4722 = vmatpush1.msra.mxu0 %v4721
    %4723 = vmatprep.subr.mxu0 0.0
    %v4724 = vand.u32 %v1481, 4294901760
    %v4725 = vsub.f32 %v1481, %v4724
    %4726 = vmatpush1.msra.mxu0 %v4725
    %4727 = vmatprep.subr.mxu0 0.0
    %v4728 = vand.u32 %v1482, 4294901760
    %v4729 = vsub.f32 %v1482, %v4728
    %4730 = vmatpush1.msra.mxu0 %v4729
    %4731 = vmatprep.subr.mxu0 0.0
    %v4732 = vand.u32 %v1483, 4294901760
    %v4733 = vsub.f32 %v1483, %v4732
    %4734 = vmatpush1.msra.mxu0 %v4733
    %4735 = vmatprep.subr.mxu0 0.0
    %v4736 = vand.u32 %v1484, 4294901760
    %v4737 = vsub.f32 %v1484, %v4736
    %4738 = vmatpush1.msra.mxu0 %v4737
    %4739 = vmatprep.subr.mxu0 0.0
    %v4740 = vand.u32 %v1485, 4294901760
    %v4741 = vsub.f32 %v1485, %v4740
    %4742 = vmatpush1.msra.mxu0 %v4741
    %4743 = vmatprep.subr.mxu0 0.0
    %v4744 = vand.u32 %v1486, 4294901760
    %v4745 = vsub.f32 %v1486, %v4744
    %4746 = vmatpush1.msra.mxu0 %v4745
    %4747 = vmatprep.subr.mxu0 0.0
    %v4748 = vand.u32 %v1487, 4294901760
    %v4749 = vsub.f32 %v1487, %v4748
    %4750 = vmatpush1.msra.mxu0 %v4749
    %4751 = vmatprep.subr.mxu0 0.0
    %v4752 = vand.u32 %v1488, 4294901760
    %v4753 = vsub.f32 %v1488, %v4752
    %4754 = vmatpush1.msra.mxu0 %v4753
    %4755 = vmatprep.subr.mxu0 0.0
    %v4756 = vand.u32 %v1489, 4294901760
    %v4757 = vsub.f32 %v1489, %v4756
    %4758 = vmatpush1.msra.mxu0 %v4757
    %4759 = vmatprep.subr.mxu0 0.0
    %v4760 = vand.u32 %v1490, 4294901760
    %v4761 = vsub.f32 %v1490, %v4760
    %4762 = vmatpush1.msra.mxu0 %v4761
    %4763 = vmatprep.subr.mxu0 0.0
    %v4764 = vand.u32 %v1491, 4294901760
    %v4765 = vsub.f32 %v1491, %v4764
    %4766 = vmatpush1.msra.mxu0 %v4765
    %4767 = vmatprep.subr.mxu0 0.0
    %v4768 = vand.u32 %v1492, 4294901760
    %v4769 = vsub.f32 %v1492, %v4768
    %4770 = vmatpush1.msra.mxu0 %v4769
    %4771 = vmatprep.subr.mxu0 0.0
    %v4772 = vand.u32 %v1493, 4294901760
    %v4773 = vsub.f32 %v1493, %v4772
    %4774 = vmatpush1.msra.mxu0 %v4773
    %v4775 = vand.u32 %v1666, 4294901760
    %v4776 = vsub.f32 %v1666, %v4775
    %4777 = vmatprep.mubr.f32.mxu0 %v4776
    %v4778 = vand.u32 %v1664, 4294901760
    %v4779 = vsub.f32 %v1664, %v4778
    %4780 = vmatmul.mubr.f32.gmra.mrb[0].mxu0 %v4779
    %v4781 = vpop.f32.mrb[0].mxu0
    %v4782 = vadd.f32 %v4644, %v4781
    %v4783 = vpop.f32.mrb[0].mxu0
    %4784 = vdwg.mxu0
    %4785 = vmatprep.subr.mxu0 0.0
    %v4786 = vand.u32 %v1462, 4294901760
    %4787 = vmatpush1.msra.mxu0 %v4786
    %4788 = vmatprep.subr.mxu0 0.0
    %v4789 = vand.u32 %v1463, 4294901760
    %4790 = vmatpush1.msra.mxu0 %v4789
    %4791 = vmatprep.subr.mxu0 0.0
    %v4792 = vand.u32 %v1464, 4294901760
    %4793 = vmatpush1.msra.mxu0 %v4792
    %4794 = vmatprep.subr.mxu0 0.0
    %v4795 = vand.u32 %v1465, 4294901760
    %4796 = vmatpush1.msra.mxu0 %v4795
    %4797 = vmatprep.subr.mxu0 0.0
    %v4798 = vand.u32 %v1466, 4294901760
    %4799 = vmatpush1.msra.mxu0 %v4798
    %4800 = vmatprep.subr.mxu0 0.0
    %v4801 = vand.u32 %v1467, 4294901760
    %4802 = vmatpush1.msra.mxu0 %v4801
    %4803 = vmatprep.subr.mxu0 0.0
    %v4804 = vand.u32 %v1468, 4294901760
    %4805 = vmatpush1.msra.mxu0 %v4804
    %4806 = vmatprep.subr.mxu0 0.0
    %v4807 = vand.u32 %v1469, 4294901760
    %4808 = vmatpush1.msra.mxu0 %v4807
    %4809 = vmatprep.subr.mxu0 0.0
    %v4810 = vand.u32 %v1470, 4294901760
    %4811 = vmatpush1.msra.mxu0 %v4810
    %4812 = vmatprep.subr.mxu0 0.0
    %v4813 = vand.u32 %v1471, 4294901760
    %4814 = vmatpush1.msra.mxu0 %v4813
    %4815 = vmatprep.subr.mxu0 0.0
    %v4816 = vand.u32 %v1472, 4294901760
    %4817 = vmatpush1.msra.mxu0 %v4816
    %4818 = vmatprep.subr.mxu0 0.0
    %v4819 = vand.u32 %v1473, 4294901760
    %4820 = vmatpush1.msra.mxu0 %v4819
    %4821 = vmatprep.subr.mxu0 0.0
    %v4822 = vand.u32 %v1474, 4294901760
    %4823 = vmatpush1.msra.mxu0 %v4822
    %4824 = vmatprep.subr.mxu0 0.0
    %v4825 = vand.u32 %v1475, 4294901760
    %4826 = vmatpush1.msra.mxu0 %v4825
    %4827 = vmatprep.subr.mxu0 0.0
    %v4828 = vand.u32 %v1476, 4294901760
    %4829 = vmatpush1.msra.mxu0 %v4828
    %4830 = vmatprep.subr.mxu0 0.0
    %v4831 = vand.u32 %v1477, 4294901760
    %4832 = vmatpush1.msra.mxu0 %v4831
    %4833 = vmatprep.subr.mxu0 0.0
    %v4834 = vand.u32 %v1478, 4294901760
    %4835 = vmatpush1.msra.mxu0 %v4834
    %4836 = vmatprep.subr.mxu0 0.0
    %v4837 = vand.u32 %v1479, 4294901760
    %4838 = vmatpush1.msra.mxu0 %v4837
    %4839 = vmatprep.subr.mxu0 0.0
    %v4840 = vand.u32 %v1480, 4294901760
    %4841 = vmatpush1.msra.mxu0 %v4840
    %4842 = vmatprep.subr.mxu0 0.0
    %v4843 = vand.u32 %v1481, 4294901760
    %4844 = vmatpush1.msra.mxu0 %v4843
    %4845 = vmatprep.subr.mxu0 0.0
    %v4846 = vand.u32 %v1482, 4294901760
    %4847 = vmatpush1.msra.mxu0 %v4846
    %4848 = vmatprep.subr.mxu0 0.0
    %v4849 = vand.u32 %v1483, 4294901760
    %4850 = vmatpush1.msra.mxu0 %v4849
    %4851 = vmatprep.subr.mxu0 0.0
    %v4852 = vand.u32 %v1484, 4294901760
    %4853 = vmatpush1.msra.mxu0 %v4852
    %4854 = vmatprep.subr.mxu0 0.0
    %v4855 = vand.u32 %v1485, 4294901760
    %4856 = vmatpush1.msra.mxu0 %v4855
    %4857 = vmatprep.subr.mxu0 0.0
    %v4858 = vand.u32 %v1486, 4294901760
    %4859 = vmatpush1.msra.mxu0 %v4858
    %4860 = vmatprep.subr.mxu0 0.0
    %v4861 = vand.u32 %v1487, 4294901760
    %4862 = vmatpush1.msra.mxu0 %v4861
    %4863 = vmatprep.subr.mxu0 0.0
    %v4864 = vand.u32 %v1488, 4294901760
    %4865 = vmatpush1.msra.mxu0 %v4864
    %4866 = vmatprep.subr.mxu0 0.0
    %v4867 = vand.u32 %v1489, 4294901760
    %4868 = vmatpush1.msra.mxu0 %v4867
    %4869 = vmatprep.subr.mxu0 0.0
    %v4870 = vand.u32 %v1490, 4294901760
    %4871 = vmatpush1.msra.mxu0 %v4870
    %4872 = vmatprep.subr.mxu0 0.0
    %v4873 = vand.u32 %v1491, 4294901760
    %4874 = vmatpush1.msra.mxu0 %v4873
    %4875 = vmatprep.subr.mxu0 0.0
    %v4876 = vand.u32 %v1492, 4294901760
    %4877 = vmatpush1.msra.mxu0 %v4876
    %4878 = vmatprep.subr.mxu0 0.0
    %v4879 = vand.u32 %v1493, 4294901760
    %4880 = vmatpush1.msra.mxu0 %v4879
    %v4881 = vand.u32 %v1666, 4294901760
    %v4882 = vsub.f32 %v1666, %v4881
    %v4883 = vand.u32 %v4882, 4294901760
    %4884 = vmatprep.mubr.f32.mxu0 %v4883
    %v4885 = vand.u32 %v1664, 4294901760
    %v4886 = vsub.f32 %v1664, %v4885
    %v4887 = vand.u32 %v4886, 4294901760
    %4888 = vmatmul.mubr.f32.gmra.mrb[0].mxu0 %v4887
    %v4889 = vpop.f32.mrb[0].mxu0
    %v4890 = vadd.f32 %v4782, %v4889
    %v4891 = vpop.f32.mrb[0].mxu0
    %4892 = vdwg.mxu0
    %4893 = vmatprep.subr.mxu0 0.0
    %v4894 = vand.u32 %v1462, 4294901760
    %v4895 = vsub.f32 %v1462, %v4894
    %v4896 = vand.u32 %v4895, 4294901760
    %4897 = vmatpush1.msra.mxu0 %v4896
    %4898 = vmatprep.subr.mxu0 0.0
    %v4899 = vand.u32 %v1463, 4294901760
    %v4900 = vsub.f32 %v1463, %v4899
    %v4901 = vand.u32 %v4900, 4294901760
    %4902 = vmatpush1.msra.mxu0 %v4901
    %4903 = vmatprep.subr.mxu0 0.0
    %v4904 = vand.u32 %v1464, 4294901760
    %v4905 = vsub.f32 %v1464, %v4904
    %v4906 = vand.u32 %v4905, 4294901760
    %4907 = vmatpush1.msra.mxu0 %v4906
    %4908 = vmatprep.subr.mxu0 0.0
    %v4909 = vand.u32 %v1465, 4294901760
    %v4910 = vsub.f32 %v1465, %v4909
    %v4911 = vand.u32 %v4910, 4294901760
    %4912 = vmatpush1.msra.mxu0 %v4911
    %4913 = vmatprep.subr.mxu0 0.0
    %v4914 = vand.u32 %v1466, 4294901760
    %v4915 = vsub.f32 %v1466, %v4914
    %v4916 = vand.u32 %v4915, 4294901760
    %4917 = vmatpush1.msra.mxu0 %v4916
    %4918 = vmatprep.subr.mxu0 0.0
    %v4919 = vand.u32 %v1467, 4294901760
    %v4920 = vsub.f32 %v1467, %v4919
    %v4921 = vand.u32 %v4920, 4294901760
    %4922 = vmatpush1.msra.mxu0 %v4921
    %4923 = vmatprep.subr.mxu0 0.0
    %v4924 = vand.u32 %v1468, 4294901760
    %v4925 = vsub.f32 %v1468, %v4924
    %v4926 = vand.u32 %v4925, 4294901760
    %4927 = vmatpush1.msra.mxu0 %v4926
    %4928 = vmatprep.subr.mxu0 0.0
    %v4929 = vand.u32 %v1469, 4294901760
    %v4930 = vsub.f32 %v1469, %v4929
    %v4931 = vand.u32 %v4930, 4294901760
    %4932 = vmatpush1.msra.mxu0 %v4931
    %4933 = vmatprep.subr.mxu0 0.0
    %v4934 = vand.u32 %v1470, 4294901760
    %v4935 = vsub.f32 %v1470, %v4934
    %v4936 = vand.u32 %v4935, 4294901760
    %4937 = vmatpush1.msra.mxu0 %v4936
    %4938 = vmatprep.subr.mxu0 0.0
    %v4939 = vand.u32 %v1471, 4294901760
    %v4940 = vsub.f32 %v1471, %v4939
    %v4941 = vand.u32 %v4940, 4294901760
    %4942 = vmatpush1.msra.mxu0 %v4941
    %4943 = vmatprep.subr.mxu0 0.0
    %v4944 = vand.u32 %v1472, 4294901760
    %v4945 = vsub.f32 %v1472, %v4944
    %v4946 = vand.u32 %v4945, 4294901760
    %4947 = vmatpush1.msra.mxu0 %v4946
    %4948 = vmatprep.subr.mxu0 0.0
    %v4949 = vand.u32 %v1473, 4294901760
    %v4950 = vsub.f32 %v1473, %v4949
    %v4951 = vand.u32 %v4950, 4294901760
    %4952 = vmatpush1.msra.mxu0 %v4951
    %4953 = vmatprep.subr.mxu0 0.0
    %v4954 = vand.u32 %v1474, 4294901760
    %v4955 = vsub.f32 %v1474, %v4954
    %v4956 = vand.u32 %v4955, 4294901760
    %4957 = vmatpush1.msra.mxu0 %v4956
    %4958 = vmatprep.subr.mxu0 0.0
    %v4959 = vand.u32 %v1475, 4294901760
    %v4960 = vsub.f32 %v1475, %v4959
    %v4961 = vand.u32 %v4960, 4294901760
    %4962 = vmatpush1.msra.mxu0 %v4961
    %4963 = vmatprep.subr.mxu0 0.0
    %v4964 = vand.u32 %v1476, 4294901760
    %v4965 = vsub.f32 %v1476, %v4964
    %v4966 = vand.u32 %v4965, 4294901760
    %4967 = vmatpush1.msra.mxu0 %v4966
    %4968 = vmatprep.subr.mxu0 0.0
    %v4969 = vand.u32 %v1477, 4294901760
    %v4970 = vsub.f32 %v1477, %v4969
    %v4971 = vand.u32 %v4970, 4294901760
    %4972 = vmatpush1.msra.mxu0 %v4971
    %4973 = vmatprep.subr.mxu0 0.0
    %v4974 = vand.u32 %v1478, 4294901760
    %v4975 = vsub.f32 %v1478, %v4974
    %v4976 = vand.u32 %v4975, 4294901760
    %4977 = vmatpush1.msra.mxu0 %v4976
    %4978 = vmatprep.subr.mxu0 0.0
    %v4979 = vand.u32 %v1479, 4294901760
    %v4980 = vsub.f32 %v1479, %v4979
    %v4981 = vand.u32 %v4980, 4294901760
    %4982 = vmatpush1.msra.mxu0 %v4981
    %4983 = vmatprep.subr.mxu0 0.0
    %v4984 = vand.u32 %v1480, 4294901760
    %v4985 = vsub.f32 %v1480, %v4984
    %v4986 = vand.u32 %v4985, 4294901760
    %4987 = vmatpush1.msra.mxu0 %v4986
    %4988 = vmatprep.subr.mxu0 0.0
    %v4989 = vand.u32 %v1481, 4294901760
    %v4990 = vsub.f32 %v1481, %v4989
    %v4991 = vand.u32 %v4990, 4294901760
    %4992 = vmatpush1.msra.mxu0 %v4991
    %4993 = vmatprep.subr.mxu0 0.0
    %v4994 = vand.u32 %v1482, 4294901760
    %v4995 = vsub.f32 %v1482, %v4994
    %v4996 = vand.u32 %v4995, 4294901760
    %4997 = vmatpush1.msra.mxu0 %v4996
    %4998 = vmatprep.subr.mxu0 0.0
    %v4999 = vand.u32 %v1483, 4294901760
    %v5000 = vsub.f32 %v1483, %v4999
    %v5001 = vand.u32 %v5000, 4294901760
    %5002 = vmatpush1.msra.mxu0 %v5001
    %5003 = vmatprep.subr.mxu0 0.0
    %v5004 = vand.u32 %v1484, 4294901760
    %v5005 = vsub.f32 %v1484, %v5004
    %v5006 = vand.u32 %v5005, 4294901760
    %5007 = vmatpush1.msra.mxu0 %v5006
    %5008 = vmatprep.subr.mxu0 0.0
    %v5009 = vand.u32 %v1485, 4294901760
    %v5010 = vsub.f32 %v1485, %v5009
    %v5011 = vand.u32 %v5010, 4294901760
    %5012 = vmatpush1.msra.mxu0 %v5011
    %5013 = vmatprep.subr.mxu0 0.0
    %v5014 = vand.u32 %v1486, 4294901760
    %v5015 = vsub.f32 %v1486, %v5014
    %v5016 = vand.u32 %v5015, 4294901760
    %5017 = vmatpush1.msra.mxu0 %v5016
    %5018 = vmatprep.subr.mxu0 0.0
    %v5019 = vand.u32 %v1487, 4294901760
    %v5020 = vsub.f32 %v1487, %v5019
    %v5021 = vand.u32 %v5020, 4294901760
    %5022 = vmatpush1.msra.mxu0 %v5021
    %5023 = vmatprep.subr.mxu0 0.0
    %v5024 = vand.u32 %v1488, 4294901760
    %v5025 = vsub.f32 %v1488, %v5024
    %v5026 = vand.u32 %v5025, 4294901760
    %5027 = vmatpush1.msra.mxu0 %v5026
    %5028 = vmatprep.subr.mxu0 0.0
    %v5029 = vand.u32 %v1489, 4294901760
    %v5030 = vsub.f32 %v1489, %v5029
    %v5031 = vand.u32 %v5030, 4294901760
    %5032 = vmatpush1.msra.mxu0 %v5031
    %5033 = vmatprep.subr.mxu0 0.0
    %v5034 = vand.u32 %v1490, 4294901760
    %v5035 = vsub.f32 %v1490, %v5034
    %v5036 = vand.u32 %v5035, 4294901760
    %5037 = vmatpush1.msra.mxu0 %v5036
    %5038 = vmatprep.subr.mxu0 0.0
    %v5039 = vand.u32 %v1491, 4294901760
    %v5040 = vsub.f32 %v1491, %v5039
    %v5041 = vand.u32 %v5040, 4294901760
    %5042 = vmatpush1.msra.mxu0 %v5041
    %5043 = vmatprep.subr.mxu0 0.0
    %v5044 = vand.u32 %v1492, 4294901760
    %v5045 = vsub.f32 %v1492, %v5044
    %v5046 = vand.u32 %v5045, 4294901760
    %5047 = vmatpush1.msra.mxu0 %v5046
    %5048 = vmatprep.subr.mxu0 0.0
    %v5049 = vand.u32 %v1493, 4294901760
    %v5050 = vsub.f32 %v1493, %v5049
    %v5051 = vand.u32 %v5050, 4294901760
    %5052 = vmatpush1.msra.mxu0 %v5051
    %v5053 = vand.u32 %v1666, 4294901760
    %5054 = vmatprep.mubr.f32.mxu0 %v5053
    %v5055 = vand.u32 %v1664, 4294901760
    %5056 = vmatmul.mubr.f32.gmra.mrb[0].mxu0 %v5055
    %v5057 = vpop.f32.mrb[0].mxu0
    %v5058 = vadd.f32 %v4890, %v5057
    %v5059 = vpop.f32.mrb[0].mxu0
    %5060 = vdwg.mxu0
    %5061 = vmatprep.subr.mxu0 0.0
    %v5062 = vand.u32 %v1462, 4294901760
    %5063 = vmatpush1.msra.mxu0 %v5062
    %5064 = vmatprep.subr.mxu0 0.0
    %v5065 = vand.u32 %v1463, 4294901760
    %5066 = vmatpush1.msra.mxu0 %v5065
    %5067 = vmatprep.subr.mxu0 0.0
    %v5068 = vand.u32 %v1464, 4294901760
    %5069 = vmatpush1.msra.mxu0 %v5068
    %5070 = vmatprep.subr.mxu0 0.0
    %v5071 = vand.u32 %v1465, 4294901760
    %5072 = vmatpush1.msra.mxu0 %v5071
    %5073 = vmatprep.subr.mxu0 0.0
    %v5074 = vand.u32 %v1466, 4294901760
    %5075 = vmatpush1.msra.mxu0 %v5074
    %5076 = vmatprep.subr.mxu0 0.0
    %v5077 = vand.u32 %v1467, 4294901760
    %5078 = vmatpush1.msra.mxu0 %v5077
    %5079 = vmatprep.subr.mxu0 0.0
    %v5080 = vand.u32 %v1468, 4294901760
    %5081 = vmatpush1.msra.mxu0 %v5080
    %5082 = vmatprep.subr.mxu0 0.0
    %v5083 = vand.u32 %v1469, 4294901760
    %5084 = vmatpush1.msra.mxu0 %v5083
    %5085 = vmatprep.subr.mxu0 0.0
    %v5086 = vand.u32 %v1470, 4294901760
    %5087 = vmatpush1.msra.mxu0 %v5086
    %5088 = vmatprep.subr.mxu0 0.0
    %v5089 = vand.u32 %v1471, 4294901760
    %5090 = vmatpush1.msra.mxu0 %v5089
    %5091 = vmatprep.subr.mxu0 0.0
    %v5092 = vand.u32 %v1472, 4294901760
    %5093 = vmatpush1.msra.mxu0 %v5092
    %5094 = vmatprep.subr.mxu0 0.0
    %v5095 = vand.u32 %v1473, 4294901760
    %5096 = vmatpush1.msra.mxu0 %v5095
    %5097 = vmatprep.subr.mxu0 0.0
    %v5098 = vand.u32 %v1474, 4294901760
    %5099 = vmatpush1.msra.mxu0 %v5098
    %5100 = vmatprep.subr.mxu0 0.0
    %v5101 = vand.u32 %v1475, 4294901760
    %5102 = vmatpush1.msra.mxu0 %v5101
    %5103 = vmatprep.subr.mxu0 0.0
    %v5104 = vand.u32 %v1476, 4294901760
    %5105 = vmatpush1.msra.mxu0 %v5104
    %5106 = vmatprep.subr.mxu0 0.0
    %v5107 = vand.u32 %v1477, 4294901760
    %5108 = vmatpush1.msra.mxu0 %v5107
    %5109 = vmatprep.subr.mxu0 0.0
    %v5110 = vand.u32 %v1478, 4294901760
    %5111 = vmatpush1.msra.mxu0 %v5110
    %5112 = vmatprep.subr.mxu0 0.0
    %v5113 = vand.u32 %v1479, 4294901760
    %5114 = vmatpush1.msra.mxu0 %v5113
    %5115 = vmatprep.subr.mxu0 0.0
    %v5116 = vand.u32 %v1480, 4294901760
    %5117 = vmatpush1.msra.mxu0 %v5116
    %5118 = vmatprep.subr.mxu0 0.0
    %v5119 = vand.u32 %v1481, 4294901760
    %5120 = vmatpush1.msra.mxu0 %v5119
    %5121 = vmatprep.subr.mxu0 0.0
    %v5122 = vand.u32 %v1482, 4294901760
    %5123 = vmatpush1.msra.mxu0 %v5122
    %5124 = vmatprep.subr.mxu0 0.0
    %v5125 = vand.u32 %v1483, 4294901760
    %5126 = vmatpush1.msra.mxu0 %v5125
    %5127 = vmatprep.subr.mxu0 0.0
    %v5128 = vand.u32 %v1484, 4294901760
    %5129 = vmatpush1.msra.mxu0 %v5128
    %5130 = vmatprep.subr.mxu0 0.0
    %v5131 = vand.u32 %v1485, 4294901760
    %5132 = vmatpush1.msra.mxu0 %v5131
    %5133 = vmatprep.subr.mxu0 0.0
    %v5134 = vand.u32 %v1486, 4294901760
    %5135 = vmatpush1.msra.mxu0 %v5134
    %5136 = vmatprep.subr.mxu0 0.0
    %v5137 = vand.u32 %v1487, 4294901760
    %5138 = vmatpush1.msra.mxu0 %v5137
    %5139 = vmatprep.subr.mxu0 0.0
    %v5140 = vand.u32 %v1488, 4294901760
    %5141 = vmatpush1.msra.mxu0 %v5140
    %5142 = vmatprep.subr.mxu0 0.0
    %v5143 = vand.u32 %v1489, 4294901760
    %5144 = vmatpush1.msra.mxu0 %v5143
    %5145 = vmatprep.subr.mxu0 0.0
    %v5146 = vand.u32 %v1490, 4294901760
    %5147 = vmatpush1.msra.mxu0 %v5146
    %5148 = vmatprep.subr.mxu0 0.0
    %v5149 = vand.u32 %v1491, 4294901760
    %5150 = vmatpush1.msra.mxu0 %v5149
    %5151 = vmatprep.subr.mxu0 0.0
    %v5152 = vand.u32 %v1492, 4294901760
    %5153 = vmatpush1.msra.mxu0 %v5152
    %5154 = vmatprep.subr.mxu0 0.0
    %v5155 = vand.u32 %v1493, 4294901760
    %5156 = vmatpush1.msra.mxu0 %v5155
    %v5157 = vand.u32 %v1666, 4294901760
    %5158 = vmatprep.mubr.f32.mxu0 %v5157
    %v5159 = vand.u32 %v1664, 4294901760
    %5160 = vmatmul.mubr.f32.gmra.mrb[0].mxu0 %v5159
    %v5161 = vpop.f32.mrb[0].mxu0
    %v5162 = vadd.f32 %v5058, %v5161
    %v5163 = vpop.f32.mrb[0].mxu0
    %5164 = vdwg.mxu0
    %5165 = vmatprep.subr.mxu0 0.0
    %v5166 = vand.u32 %v1494, 4294901760
    %5167 = vmatpush1.msra.mxu0 %v5166
    %5168 = vmatprep.subr.mxu0 0.0
    %v5169 = vand.u32 %v1495, 4294901760
    %5170 = vmatpush1.msra.mxu0 %v5169
    %5171 = vmatprep.subr.mxu0 0.0
    %v5172 = vand.u32 %v1496, 4294901760
    %5173 = vmatpush1.msra.mxu0 %v5172
    %5174 = vmatprep.subr.mxu0 0.0
    %v5175 = vand.u32 %v1497, 4294901760
    %5176 = vmatpush1.msra.mxu0 %v5175
    %5177 = vmatprep.subr.mxu0 0.0
    %v5178 = vand.u32 %v1498, 4294901760
    %5179 = vmatpush1.msra.mxu0 %v5178
    %5180 = vmatprep.subr.mxu0 0.0
    %v5181 = vand.u32 %v1499, 4294901760
    %5182 = vmatpush1.msra.mxu0 %v5181
    %5183 = vmatprep.subr.mxu0 0.0
    %v5184 = vand.u32 %v1500, 4294901760
    %5185 = vmatpush1.msra.mxu0 %v5184
    %5186 = vmatprep.subr.mxu0 0.0
    %v5187 = vand.u32 %v1501, 4294901760
    %5188 = vmatpush1.msra.mxu0 %v5187
    %5189 = vmatprep.subr.mxu0 0.0
    %v5190 = vand.u32 %v1502, 4294901760
    %5191 = vmatpush1.msra.mxu0 %v5190
    %5192 = vmatprep.subr.mxu0 0.0
    %v5193 = vand.u32 %v1503, 4294901760
    %5194 = vmatpush1.msra.mxu0 %v5193
    %5195 = vmatprep.subr.mxu0 0.0
    %v5196 = vand.u32 %v1504, 4294901760
    %5197 = vmatpush1.msra.mxu0 %v5196
    %5198 = vmatprep.subr.mxu0 0.0
    %v5199 = vand.u32 %v1505, 4294901760
    %5200 = vmatpush1.msra.mxu0 %v5199
    %5201 = vmatprep.subr.mxu0 0.0
    %v5202 = vand.u32 %v1506, 4294901760
    %5203 = vmatpush1.msra.mxu0 %v5202
    %5204 = vmatprep.subr.mxu0 0.0
    %v5205 = vand.u32 %v1507, 4294901760
    %5206 = vmatpush1.msra.mxu0 %v5205
    %5207 = vmatprep.subr.mxu0 0.0
    %v5208 = vand.u32 %v1508, 4294901760
    %5209 = vmatpush1.msra.mxu0 %v5208
    %5210 = vmatprep.subr.mxu0 0.0
    %v5211 = vand.u32 %v1509, 4294901760
    %5212 = vmatpush1.msra.mxu0 %v5211
    %5213 = vmatprep.subr.mxu0 0.0
    %v5214 = vand.u32 %v1510, 4294901760
    %5215 = vmatpush1.msra.mxu0 %v5214
    %5216 = vmatprep.subr.mxu0 0.0
    %v5217 = vand.u32 %v1511, 4294901760
    %5218 = vmatpush1.msra.mxu0 %v5217
    %5219 = vmatprep.subr.mxu0 0.0
    %v5220 = vand.u32 %v1512, 4294901760
    %5221 = vmatpush1.msra.mxu0 %v5220
    %5222 = vmatprep.subr.mxu0 0.0
    %v5223 = vand.u32 %v1513, 4294901760
    %5224 = vmatpush1.msra.mxu0 %v5223
    %5225 = vmatprep.subr.mxu0 0.0
    %v5226 = vand.u32 %v1514, 4294901760
    %5227 = vmatpush1.msra.mxu0 %v5226
    %5228 = vmatprep.subr.mxu0 0.0
    %v5229 = vand.u32 %v1515, 4294901760
    %5230 = vmatpush1.msra.mxu0 %v5229
    %5231 = vmatprep.subr.mxu0 0.0
    %v5232 = vand.u32 %v1516, 4294901760
    %5233 = vmatpush1.msra.mxu0 %v5232
    %5234 = vmatprep.subr.mxu0 0.0
    %v5235 = vand.u32 %v1517, 4294901760
    %5236 = vmatpush1.msra.mxu0 %v5235
    %5237 = vmatprep.subr.mxu0 0.0
    %v5238 = vand.u32 %v1518, 4294901760
    %5239 = vmatpush1.msra.mxu0 %v5238
    %5240 = vmatprep.subr.mxu0 0.0
    %v5241 = vand.u32 %v1519, 4294901760
    %5242 = vmatpush1.msra.mxu0 %v5241
    %5243 = vmatprep.subr.mxu0 0.0
    %v5244 = vand.u32 %v1520, 4294901760
    %5245 = vmatpush1.msra.mxu0 %v5244
    %5246 = vmatprep.subr.mxu0 0.0
    %v5247 = vand.u32 %v1521, 4294901760
    %5248 = vmatpush1.msra.mxu0 %v5247
    %5249 = vmatprep.subr.mxu0 0.0
    %v5250 = vand.u32 %v1522, 4294901760
    %5251 = vmatpush1.msra.mxu0 %v5250
    %5252 = vmatprep.subr.mxu0 0.0
    %v5253 = vand.u32 %v1523, 4294901760
    %5254 = vmatpush1.msra.mxu0 %v5253
    %5255 = vmatprep.subr.mxu0 0.0
    %v5256 = vand.u32 %v1524, 4294901760
    %5257 = vmatpush1.msra.mxu0 %v5256
    %5258 = vmatprep.subr.mxu0 0.0
    %v5259 = vand.u32 %v1525, 4294901760
    %5260 = vmatpush1.msra.mxu0 %v5259
    %v5261 = vand.u32 %v1682, 4294901760
    %v5262 = vsub.f32 %v1682, %v5261
    %v5263 = vand.u32 %v5262, 4294901760
    %v5264 = vsub.f32 %v5262, %v5263
    %v5265 = vand.u32 %v5264, 4294901760
    %5266 = vmatprep.mubr.f32.mxu0 %v5265
    %v5267 = vand.u32 %v1674, 4294901760
    %v5268 = vsub.f32 %v1674, %v5267
    %v5269 = vand.u32 %v5268, 4294901760
    %v5270 = vsub.f32 %v5268, %v5269
    %v5271 = vand.u32 %v5270, 4294901760
    %5272 = vmatmul.mubr.f32.gmra.mrb[0].mxu0 %v5271
    %v5273 = vpop.f32.mrb[0].mxu0
    %v5274 = vadd.f32 %v5162, %v5273
    %v5275 = vpop.f32.mrb[0].mxu0
    %5276 = vdwg.mxu0
    %5277 = vmatprep.subr.mxu0 0.0
    %v5278 = vand.u32 %v1494, 4294901760
    %v5279 = vsub.f32 %v1494, %v5278
    %v5280 = vand.u32 %v5279, 4294901760
    %v5281 = vsub.f32 %v5279, %v5280
    %v5282 = vand.u32 %v5281, 4294901760
    %5283 = vmatpush1.msra.mxu0 %v5282
    %5284 = vmatprep.subr.mxu0 0.0
    %v5285 = vand.u32 %v1495, 4294901760
    %v5286 = vsub.f32 %v1495, %v5285
    %v5287 = vand.u32 %v5286, 4294901760
    %v5288 = vsub.f32 %v5286, %v5287
    %v5289 = vand.u32 %v5288, 4294901760
    %5290 = vmatpush1.msra.mxu0 %v5289
    %5291 = vmatprep.subr.mxu0 0.0
    %v5292 = vand.u32 %v1496, 4294901760
    %v5293 = vsub.f32 %v1496, %v5292
    %v5294 = vand.u32 %v5293, 4294901760
    %v5295 = vsub.f32 %v5293, %v5294
    %v5296 = vand.u32 %v5295, 4294901760
    %5297 = vmatpush1.msra.mxu0 %v5296
    %5298 = vmatprep.subr.mxu0 0.0
    %v5299 = vand.u32 %v1497, 4294901760
    %v5300 = vsub.f32 %v1497, %v5299
    %v5301 = vand.u32 %v5300, 4294901760
    %v5302 = vsub.f32 %v5300, %v5301
    %v5303 = vand.u32 %v5302, 4294901760
    %5304 = vmatpush1.msra.mxu0 %v5303
    %5305 = vmatprep.subr.mxu0 0.0
    %v5306 = vand.u32 %v1498, 4294901760
    %v5307 = vsub.f32 %v1498, %v5306
    %v5308 = vand.u32 %v5307, 4294901760
    %v5309 = vsub.f32 %v5307, %v5308
    %v5310 = vand.u32 %v5309, 4294901760
    %5311 = vmatpush1.msra.mxu0 %v5310
    %5312 = vmatprep.subr.mxu0 0.0
    %v5313 = vand.u32 %v1499, 4294901760
    %v5314 = vsub.f32 %v1499, %v5313
    %v5315 = vand.u32 %v5314, 4294901760
    %v5316 = vsub.f32 %v5314, %v5315
    %v5317 = vand.u32 %v5316, 4294901760
    %5318 = vmatpush1.msra.mxu0 %v5317
    %5319 = vmatprep.subr.mxu0 0.0
    %v5320 = vand.u32 %v1500, 4294901760
    %v5321 = vsub.f32 %v1500, %v5320
    %v5322 = vand.u32 %v5321, 4294901760
    %v5323 = vsub.f32 %v5321, %v5322
    %v5324 = vand.u32 %v5323, 4294901760
    %5325 = vmatpush1.msra.mxu0 %v5324
    %5326 = vmatprep.subr.mxu0 0.0
    %v5327 = vand.u32 %v1501, 4294901760
    %v5328 = vsub.f32 %v1501, %v5327
    %v5329 = vand.u32 %v5328, 4294901760
    %v5330 = vsub.f32 %v5328, %v5329
    %v5331 = vand.u32 %v5330, 4294901760
    %5332 = vmatpush1.msra.mxu0 %v5331
    %5333 = vmatprep.subr.mxu0 0.0
    %v5334 = vand.u32 %v1502, 4294901760
    %v5335 = vsub.f32 %v1502, %v5334
    %v5336 = vand.u32 %v5335, 4294901760
    %v5337 = vsub.f32 %v5335, %v5336
    %v5338 = vand.u32 %v5337, 4294901760
    %5339 = vmatpush1.msra.mxu0 %v5338
    %5340 = vmatprep.subr.mxu0 0.0
    %v5341 = vand.u32 %v1503, 4294901760
    %v5342 = vsub.f32 %v1503, %v5341
    %v5343 = vand.u32 %v5342, 4294901760
    %v5344 = vsub.f32 %v5342, %v5343
    %v5345 = vand.u32 %v5344, 4294901760
    %5346 = vmatpush1.msra.mxu0 %v5345
    %5347 = vmatprep.subr.mxu0 0.0
    %v5348 = vand.u32 %v1504, 4294901760
    %v5349 = vsub.f32 %v1504, %v5348
    %v5350 = vand.u32 %v5349, 4294901760
    %v5351 = vsub.f32 %v5349, %v5350
    %v5352 = vand.u32 %v5351, 4294901760
    %5353 = vmatpush1.msra.mxu0 %v5352
    %5354 = vmatprep.subr.mxu0 0.0
    %v5355 = vand.u32 %v1505, 4294901760
    %v5356 = vsub.f32 %v1505, %v5355
    %v5357 = vand.u32 %v5356, 4294901760
    %v5358 = vsub.f32 %v5356, %v5357
    %v5359 = vand.u32 %v5358, 4294901760
    %5360 = vmatpush1.msra.mxu0 %v5359
    %5361 = vmatprep.subr.mxu0 0.0
    %v5362 = vand.u32 %v1506, 4294901760
    %v5363 = vsub.f32 %v1506, %v5362
    %v5364 = vand.u32 %v5363, 4294901760
    %v5365 = vsub.f32 %v5363, %v5364
    %v5366 = vand.u32 %v5365, 4294901760
    %5367 = vmatpush1.msra.mxu0 %v5366
    %5368 = vmatprep.subr.mxu0 0.0
    %v5369 = vand.u32 %v1507, 4294901760
    %v5370 = vsub.f32 %v1507, %v5369
    %v5371 = vand.u32 %v5370, 4294901760
    %v5372 = vsub.f32 %v5370, %v5371
    %v5373 = vand.u32 %v5372, 4294901760
    %5374 = vmatpush1.msra.mxu0 %v5373
    %5375 = vmatprep.subr.mxu0 0.0
    %v5376 = vand.u32 %v1508, 4294901760
    %v5377 = vsub.f32 %v1508, %v5376
    %v5378 = vand.u32 %v5377, 4294901760
    %v5379 = vsub.f32 %v5377, %v5378
    %v5380 = vand.u32 %v5379, 4294901760
    %5381 = vmatpush1.msra.mxu0 %v5380
    %5382 = vmatprep.subr.mxu0 0.0
    %v5383 = vand.u32 %v1509, 4294901760
    %v5384 = vsub.f32 %v1509, %v5383
    %v5385 = vand.u32 %v5384, 4294901760
    %v5386 = vsub.f32 %v5384, %v5385
    %v5387 = vand.u32 %v5386, 4294901760
    %5388 = vmatpush1.msra.mxu0 %v5387
    %5389 = vmatprep.subr.mxu0 0.0
    %v5390 = vand.u32 %v1510, 4294901760
    %v5391 = vsub.f32 %v1510, %v5390
    %v5392 = vand.u32 %v5391, 4294901760
    %v5393 = vsub.f32 %v5391, %v5392
    %v5394 = vand.u32 %v5393, 4294901760
    %5395 = vmatpush1.msra.mxu0 %v5394
    %5396 = vmatprep.subr.mxu0 0.0
    %v5397 = vand.u32 %v1511, 4294901760
    %v5398 = vsub.f32 %v1511, %v5397
    %v5399 = vand.u32 %v5398, 4294901760
    %v5400 = vsub.f32 %v5398, %v5399
    %v5401 = vand.u32 %v5400, 4294901760
    %5402 = vmatpush1.msra.mxu0 %v5401
    %5403 = vmatprep.subr.mxu0 0.0
    %v5404 = vand.u32 %v1512, 4294901760
    %v5405 = vsub.f32 %v1512, %v5404
    %v5406 = vand.u32 %v5405, 4294901760
    %v5407 = vsub.f32 %v5405, %v5406
    %v5408 = vand.u32 %v5407, 4294901760
    %5409 = vmatpush1.msra.mxu0 %v5408
    %5410 = vmatprep.subr.mxu0 0.0
    %v5411 = vand.u32 %v1513, 4294901760
    %v5412 = vsub.f32 %v1513, %v5411
    %v5413 = vand.u32 %v5412, 4294901760
    %v5414 = vsub.f32 %v5412, %v5413
    %v5415 = vand.u32 %v5414, 4294901760
    %5416 = vmatpush1.msra.mxu0 %v5415
    %5417 = vmatprep.subr.mxu0 0.0
    %v5418 = vand.u32 %v1514, 4294901760
    %v5419 = vsub.f32 %v1514, %v5418
    %v5420 = vand.u32 %v5419, 4294901760
    %v5421 = vsub.f32 %v5419, %v5420
    %v5422 = vand.u32 %v5421, 4294901760
    %5423 = vmatpush1.msra.mxu0 %v5422
    %5424 = vmatprep.subr.mxu0 0.0
    %v5425 = vand.u32 %v1515, 4294901760
    %v5426 = vsub.f32 %v1515, %v5425
    %v5427 = vand.u32 %v5426, 4294901760
    %v5428 = vsub.f32 %v5426, %v5427
    %v5429 = vand.u32 %v5428, 4294901760
    %5430 = vmatpush1.msra.mxu0 %v5429
    %5431 = vmatprep.subr.mxu0 0.0
    %v5432 = vand.u32 %v1516, 4294901760
    %v5433 = vsub.f32 %v1516, %v5432
    %v5434 = vand.u32 %v5433, 4294901760
    %v5435 = vsub.f32 %v5433, %v5434
    %v5436 = vand.u32 %v5435, 4294901760
    %5437 = vmatpush1.msra.mxu0 %v5436
    %5438 = vmatprep.subr.mxu0 0.0
    %v5439 = vand.u32 %v1517, 4294901760
    %v5440 = vsub.f32 %v1517, %v5439
    %v5441 = vand.u32 %v5440, 4294901760
    %v5442 = vsub.f32 %v5440, %v5441
    %v5443 = vand.u32 %v5442, 4294901760
    %5444 = vmatpush1.msra.mxu0 %v5443
    %5445 = vmatprep.subr.mxu0 0.0
    %v5446 = vand.u32 %v1518, 4294901760
    %v5447 = vsub.f32 %v1518, %v5446
    %v5448 = vand.u32 %v5447, 4294901760
    %v5449 = vsub.f32 %v5447, %v5448
    %v5450 = vand.u32 %v5449, 4294901760
    %5451 = vmatpush1.msra.mxu0 %v5450
    %5452 = vmatprep.subr.mxu0 0.0
    %v5453 = vand.u32 %v1519, 4294901760
    %v5454 = vsub.f32 %v1519, %v5453
    %v5455 = vand.u32 %v5454, 4294901760
    %v5456 = vsub.f32 %v5454, %v5455
    %v5457 = vand.u32 %v5456, 4294901760
    %5458 = vmatpush1.msra.mxu0 %v5457
    %5459 = vmatprep.subr.mxu0 0.0
    %v5460 = vand.u32 %v1520, 4294901760
    %v5461 = vsub.f32 %v1520, %v5460
    %v5462 = vand.u32 %v5461, 4294901760
    %v5463 = vsub.f32 %v5461, %v5462
    %v5464 = vand.u32 %v5463, 4294901760
    %5465 = vmatpush1.msra.mxu0 %v5464
    %5466 = vmatprep.subr.mxu0 0.0
    %v5467 = vand.u32 %v1521, 4294901760
    %v5468 = vsub.f32 %v1521, %v5467
    %v5469 = vand.u32 %v5468, 4294901760
    %v5470 = vsub.f32 %v5468, %v5469
    %v5471 = vand.u32 %v5470, 4294901760
    %5472 = vmatpush1.msra.mxu0 %v5471
    %5473 = vmatprep.subr.mxu0 0.0
    %v5474 = vand.u32 %v1522, 4294901760
    %v5475 = vsub.f32 %v1522, %v5474
    %v5476 = vand.u32 %v5475, 4294901760
    %v5477 = vsub.f32 %v5475, %v5476
    %v5478 = vand.u32 %v5477, 4294901760
    %5479 = vmatpush1.msra.mxu0 %v5478
    %5480 = vmatprep.subr.mxu0 0.0
    %v5481 = vand.u32 %v1523, 4294901760
    %v5482 = vsub.f32 %v1523, %v5481
    %v5483 = vand.u32 %v5482, 4294901760
    %v5484 = vsub.f32 %v5482, %v5483
    %v5485 = vand.u32 %v5484, 4294901760
    %5486 = vmatpush1.msra.mxu0 %v5485
    %5487 = vmatprep.subr.mxu0 0.0
    %v5488 = vand.u32 %v1524, 4294901760
    %v5489 = vsub.f32 %v1524, %v5488
    %v5490 = vand.u32 %v5489, 4294901760
    %v5491 = vsub.f32 %v5489, %v5490
    %v5492 = vand.u32 %v5491, 4294901760
    %5493 = vmatpush1.msra.mxu0 %v5492
    %5494 = vmatprep.subr.mxu0 0.0
    %v5495 = vand.u32 %v1525, 4294901760
    %v5496 = vsub.f32 %v1525, %v5495
    %v5497 = vand.u32 %v5496, 4294901760
    %v5498 = vsub.f32 %v5496, %v5497
    %v5499 = vand.u32 %v5498, 4294901760
    %5500 = vmatpush1.msra.mxu0 %v5499
    %v5501 = vand.u32 %v1682, 4294901760
    %5502 = vmatprep.mubr.f32.mxu0 %v5501
    %v5503 = vand.u32 %v1674, 4294901760
    %5504 = vmatmul.mubr.f32.gmra.mrb[0].mxu0 %v5503
    %v5505 = vpop.f32.mrb[0].mxu0
    %v5506 = vadd.f32 %v5274, %v5505
    %v5507 = vpop.f32.mrb[0].mxu0
    %5508 = vdwg.mxu0
    %5509 = vmatprep.subr.mxu0 0.0
    %v5510 = vand.u32 %v1494, 4294901760
    %v5511 = vsub.f32 %v1494, %v5510
    %5512 = vmatpush1.msra.mxu0 %v5511
    %5513 = vmatprep.subr.mxu0 0.0
    %v5514 = vand.u32 %v1495, 4294901760
    %v5515 = vsub.f32 %v1495, %v5514
    %5516 = vmatpush1.msra.mxu0 %v5515
    %5517 = vmatprep.subr.mxu0 0.0
    %v5518 = vand.u32 %v1496, 4294901760
    %v5519 = vsub.f32 %v1496, %v5518
    %5520 = vmatpush1.msra.mxu0 %v5519
    %5521 = vmatprep.subr.mxu0 0.0
    %v5522 = vand.u32 %v1497, 4294901760
    %v5523 = vsub.f32 %v1497, %v5522
    %5524 = vmatpush1.msra.mxu0 %v5523
    %5525 = vmatprep.subr.mxu0 0.0
    %v5526 = vand.u32 %v1498, 4294901760
    %v5527 = vsub.f32 %v1498, %v5526
    %5528 = vmatpush1.msra.mxu0 %v5527
    %5529 = vmatprep.subr.mxu0 0.0
    %v5530 = vand.u32 %v1499, 4294901760
    %v5531 = vsub.f32 %v1499, %v5530
    %5532 = vmatpush1.msra.mxu0 %v5531
    %5533 = vmatprep.subr.mxu0 0.0
    %v5534 = vand.u32 %v1500, 4294901760
    %v5535 = vsub.f32 %v1500, %v5534
    %5536 = vmatpush1.msra.mxu0 %v5535
    %5537 = vmatprep.subr.mxu0 0.0
    %v5538 = vand.u32 %v1501, 4294901760
    %v5539 = vsub.f32 %v1501, %v5538
    %5540 = vmatpush1.msra.mxu0 %v5539
    %5541 = vmatprep.subr.mxu0 0.0
    %v5542 = vand.u32 %v1502, 4294901760
    %v5543 = vsub.f32 %v1502, %v5542
    %5544 = vmatpush1.msra.mxu0 %v5543
    %5545 = vmatprep.subr.mxu0 0.0
    %v5546 = vand.u32 %v1503, 4294901760
    %v5547 = vsub.f32 %v1503, %v5546
    %5548 = vmatpush1.msra.mxu0 %v5547
    %5549 = vmatprep.subr.mxu0 0.0
    %v5550 = vand.u32 %v1504, 4294901760
    %v5551 = vsub.f32 %v1504, %v5550
    %5552 = vmatpush1.msra.mxu0 %v5551
    %5553 = vmatprep.subr.mxu0 0.0
    %v5554 = vand.u32 %v1505, 4294901760
    %v5555 = vsub.f32 %v1505, %v5554
    %5556 = vmatpush1.msra.mxu0 %v5555
    %5557 = vmatprep.subr.mxu0 0.0
    %v5558 = vand.u32 %v1506, 4294901760
    %v5559 = vsub.f32 %v1506, %v5558
    %5560 = vmatpush1.msra.mxu0 %v5559
    %5561 = vmatprep.subr.mxu0 0.0
    %v5562 = vand.u32 %v1507, 4294901760
    %v5563 = vsub.f32 %v1507, %v5562
    %5564 = vmatpush1.msra.mxu0 %v5563
    %5565 = vmatprep.subr.mxu0 0.0
    %v5566 = vand.u32 %v1508, 4294901760
    %v5567 = vsub.f32 %v1508, %v5566
    %5568 = vmatpush1.msra.mxu0 %v5567
    %5569 = vmatprep.subr.mxu0 0.0
    %v5570 = vand.u32 %v1509, 4294901760
    %v5571 = vsub.f32 %v1509, %v5570
    %5572 = vmatpush1.msra.mxu0 %v5571
    %5573 = vmatprep.subr.mxu0 0.0
    %v5574 = vand.u32 %v1510, 4294901760
    %v5575 = vsub.f32 %v1510, %v5574
    %5576 = vmatpush1.msra.mxu0 %v5575
    %5577 = vmatprep.subr.mxu0 0.0
    %v5578 = vand.u32 %v1511, 4294901760
    %v5579 = vsub.f32 %v1511, %v5578
    %5580 = vmatpush1.msra.mxu0 %v5579
    %5581 = vmatprep.subr.mxu0 0.0
    %v5582 = vand.u32 %v1512, 4294901760
    %v5583 = vsub.f32 %v1512, %v5582
    %5584 = vmatpush1.msra.mxu0 %v5583
    %5585 = vmatprep.subr.mxu0 0.0
    %v5586 = vand.u32 %v1513, 4294901760
    %v5587 = vsub.f32 %v1513, %v5586
    %5588 = vmatpush1.msra.mxu0 %v5587
    %5589 = vmatprep.subr.mxu0 0.0
    %v5590 = vand.u32 %v1514, 4294901760
    %v5591 = vsub.f32 %v1514, %v5590
    %5592 = vmatpush1.msra.mxu0 %v5591
    %5593 = vmatprep.subr.mxu0 0.0
    %v5594 = vand.u32 %v1515, 4294901760
    %v5595 = vsub.f32 %v1515, %v5594
    %5596 = vmatpush1.msra.mxu0 %v5595
    %5597 = vmatprep.subr.mxu0 0.0
    %v5598 = vand.u32 %v1516, 4294901760
    %v5599 = vsub.f32 %v1516, %v5598
    %5600 = vmatpush1.msra.mxu0 %v5599
    %5601 = vmatprep.subr.mxu0 0.0
    %v5602 = vand.u32 %v1517, 4294901760
    %v5603 = vsub.f32 %v1517, %v5602
    %5604 = vmatpush1.msra.mxu0 %v5603
    %5605 = vmatprep.subr.mxu0 0.0
    %v5606 = vand.u32 %v1518, 4294901760
    %v5607 = vsub.f32 %v1518, %v5606
    %5608 = vmatpush1.msra.mxu0 %v5607
    %5609 = vmatprep.subr.mxu0 0.0
    %v5610 = vand.u32 %v1519, 4294901760
    %v5611 = vsub.f32 %v1519, %v5610
    %5612 = vmatpush1.msra.mxu0 %v5611
    %5613 = vmatprep.subr.mxu0 0.0
    %v5614 = vand.u32 %v1520, 4294901760
    %v5615 = vsub.f32 %v1520, %v5614
    %5616 = vmatpush1.msra.mxu0 %v5615
    %5617 = vmatprep.subr.mxu0 0.0
    %v5618 = vand.u32 %v1521, 4294901760
    %v5619 = vsub.f32 %v1521, %v5618
    %5620 = vmatpush1.msra.mxu0 %v5619
    %5621 = vmatprep.subr.mxu0 0.0
    %v5622 = vand.u32 %v1522, 4294901760
    %v5623 = vsub.f32 %v1522, %v5622
    %5624 = vmatpush1.msra.mxu0 %v5623
    %5625 = vmatprep.subr.mxu0 0.0
    %v5626 = vand.u32 %v1523, 4294901760
    %v5627 = vsub.f32 %v1523, %v5626
    %5628 = vmatpush1.msra.mxu0 %v5627
    %5629 = vmatprep.subr.mxu0 0.0
    %v5630 = vand.u32 %v1524, 4294901760
    %v5631 = vsub.f32 %v1524, %v5630
    %5632 = vmatpush1.msra.mxu0 %v5631
    %5633 = vmatprep.subr.mxu0 0.0
    %v5634 = vand.u32 %v1525, 4294901760
    %v5635 = vsub.f32 %v1525, %v5634
    %5636 = vmatpush1.msra.mxu0 %v5635
    %v5637 = vand.u32 %v1682, 4294901760
    %v5638 = vsub.f32 %v1682, %v5637
    %5639 = vmatprep.mubr.f32.mxu0 %v5638
    %v5640 = vand.u32 %v1674, 4294901760
    %v5641 = vsub.f32 %v1674, %v5640
    %5642 = vmatmul.mubr.f32.gmra.mrb[0].mxu0 %v5641
    %v5643 = vpop.f32.mrb[0].mxu0
    %v5644 = vadd.f32 %v5506, %v5643
    %v5645 = vpop.f32.mrb[0].mxu0
    %5646 = vdwg.mxu0
    %5647 = vmatprep.subr.mxu0 0.0
    %v5648 = vand.u32 %v1494, 4294901760
    %5649 = vmatpush1.msra.mxu0 %v5648
    %5650 = vmatprep.subr.mxu0 0.0
    %v5651 = vand.u32 %v1495, 4294901760
    %5652 = vmatpush1.msra.mxu0 %v5651
    %5653 = vmatprep.subr.mxu0 0.0
    %v5654 = vand.u32 %v1496, 4294901760
    %5655 = vmatpush1.msra.mxu0 %v5654
    %5656 = vmatprep.subr.mxu0 0.0
    %v5657 = vand.u32 %v1497, 4294901760
    %5658 = vmatpush1.msra.mxu0 %v5657
    %5659 = vmatprep.subr.mxu0 0.0
    %v5660 = vand.u32 %v1498, 4294901760
    %5661 = vmatpush1.msra.mxu0 %v5660
    %5662 = vmatprep.subr.mxu0 0.0
    %v5663 = vand.u32 %v1499, 4294901760
    %5664 = vmatpush1.msra.mxu0 %v5663
    %5665 = vmatprep.subr.mxu0 0.0
    %v5666 = vand.u32 %v1500, 4294901760
    %5667 = vmatpush1.msra.mxu0 %v5666
    %5668 = vmatprep.subr.mxu0 0.0
    %v5669 = vand.u32 %v1501, 4294901760
    %5670 = vmatpush1.msra.mxu0 %v5669
    %5671 = vmatprep.subr.mxu0 0.0
    %v5672 = vand.u32 %v1502, 4294901760
    %5673 = vmatpush1.msra.mxu0 %v5672
    %5674 = vmatprep.subr.mxu0 0.0
    %v5675 = vand.u32 %v1503, 4294901760
    %5676 = vmatpush1.msra.mxu0 %v5675
    %5677 = vmatprep.subr.mxu0 0.0
    %v5678 = vand.u32 %v1504, 4294901760
    %5679 = vmatpush1.msra.mxu0 %v5678
    %5680 = vmatprep.subr.mxu0 0.0
    %v5681 = vand.u32 %v1505, 4294901760
    %5682 = vmatpush1.msra.mxu0 %v5681
    %5683 = vmatprep.subr.mxu0 0.0
    %v5684 = vand.u32 %v1506, 4294901760
    %5685 = vmatpush1.msra.mxu0 %v5684
    %5686 = vmatprep.subr.mxu0 0.0
    %v5687 = vand.u32 %v1507, 4294901760
    %5688 = vmatpush1.msra.mxu0 %v5687
    %5689 = vmatprep.subr.mxu0 0.0
    %v5690 = vand.u32 %v1508, 4294901760
    %5691 = vmatpush1.msra.mxu0 %v5690
    %5692 = vmatprep.subr.mxu0 0.0
    %v5693 = vand.u32 %v1509, 4294901760
    %5694 = vmatpush1.msra.mxu0 %v5693
    %5695 = vmatprep.subr.mxu0 0.0
    %v5696 = vand.u32 %v1510, 4294901760
    %5697 = vmatpush1.msra.mxu0 %v5696
    %5698 = vmatprep.subr.mxu0 0.0
    %v5699 = vand.u32 %v1511, 4294901760
    %5700 = vmatpush1.msra.mxu0 %v5699
    %5701 = vmatprep.subr.mxu0 0.0
    %v5702 = vand.u32 %v1512, 4294901760
    %5703 = vmatpush1.msra.mxu0 %v5702
    %5704 = vmatprep.subr.mxu0 0.0
    %v5705 = vand.u32 %v1513, 4294901760
    %5706 = vmatpush1.msra.mxu0 %v5705
    %5707 = vmatprep.subr.mxu0 0.0
    %v5708 = vand.u32 %v1514, 4294901760
    %5709 = vmatpush1.msra.mxu0 %v5708
    %5710 = vmatprep.subr.mxu0 0.0
    %v5711 = vand.u32 %v1515, 4294901760
    %5712 = vmatpush1.msra.mxu0 %v5711
    %5713 = vmatprep.subr.mxu0 0.0
    %v5714 = vand.u32 %v1516, 4294901760
    %5715 = vmatpush1.msra.mxu0 %v5714
    %5716 = vmatprep.subr.mxu0 0.0
    %v5717 = vand.u32 %v1517, 4294901760
    %5718 = vmatpush1.msra.mxu0 %v5717
    %5719 = vmatprep.subr.mxu0 0.0
    %v5720 = vand.u32 %v1518, 4294901760
    %5721 = vmatpush1.msra.mxu0 %v5720
    %5722 = vmatprep.subr.mxu0 0.0
    %v5723 = vand.u32 %v1519, 4294901760
    %5724 = vmatpush1.msra.mxu0 %v5723
    %5725 = vmatprep.subr.mxu0 0.0
    %v5726 = vand.u32 %v1520, 4294901760
    %5727 = vmatpush1.msra.mxu0 %v5726
    %5728 = vmatprep.subr.mxu0 0.0
    %v5729 = vand.u32 %v1521, 4294901760
    %5730 = vmatpush1.msra.mxu0 %v5729
    %5731 = vmatprep.subr.mxu0 0.0
    %v5732 = vand.u32 %v1522, 4294901760
    %5733 = vmatpush1.msra.mxu0 %v5732
    %5734 = vmatprep.subr.mxu0 0.0
    %v5735 = vand.u32 %v1523, 4294901760
    %5736 = vmatpush1.msra.mxu0 %v5735
    %5737 = vmatprep.subr.mxu0 0.0
    %v5738 = vand.u32 %v1524, 4294901760
    %5739 = vmatpush1.msra.mxu0 %v5738
    %5740 = vmatprep.subr.mxu0 0.0
    %v5741 = vand.u32 %v1525, 4294901760
    %5742 = vmatpush1.msra.mxu0 %v5741
    %v5743 = vand.u32 %v1682, 4294901760
    %v5744 = vsub.f32 %v1682, %v5743
    %v5745 = vand.u32 %v5744, 4294901760
    %5746 = vmatprep.mubr.f32.mxu0 %v5745
    %v5747 = vand.u32 %v1674, 4294901760
    %v5748 = vsub.f32 %v1674, %v5747
    %v5749 = vand.u32 %v5748, 4294901760
    %5750 = vmatmul.mubr.f32.gmra.mrb[0].mxu0 %v5749
    %v5751 = vpop.f32.mrb[0].mxu0
    %v5752 = vadd.f32 %v5644, %v5751
    %v5753 = vpop.f32.mrb[0].mxu0
    %5754 = vdwg.mxu0
    %5755 = vmatprep.subr.mxu0 0.0
    %v5756 = vand.u32 %v1494, 4294901760
    %v5757 = vsub.f32 %v1494, %v5756
    %v5758 = vand.u32 %v5757, 4294901760
    %5759 = vmatpush1.msra.mxu0 %v5758
    %5760 = vmatprep.subr.mxu0 0.0
    %v5761 = vand.u32 %v1495, 4294901760
    %v5762 = vsub.f32 %v1495, %v5761
    %v5763 = vand.u32 %v5762, 4294901760
    %5764 = vmatpush1.msra.mxu0 %v5763
    %5765 = vmatprep.subr.mxu0 0.0
    %v5766 = vand.u32 %v1496, 4294901760
    %v5767 = vsub.f32 %v1496, %v5766
    %v5768 = vand.u32 %v5767, 4294901760
    %5769 = vmatpush1.msra.mxu0 %v5768
    %5770 = vmatprep.subr.mxu0 0.0
    %v5771 = vand.u32 %v1497, 4294901760
    %v5772 = vsub.f32 %v1497, %v5771
    %v5773 = vand.u32 %v5772, 4294901760
    %5774 = vmatpush1.msra.mxu0 %v5773
    %5775 = vmatprep.subr.mxu0 0.0
    %v5776 = vand.u32 %v1498, 4294901760
    %v5777 = vsub.f32 %v1498, %v5776
    %v5778 = vand.u32 %v5777, 4294901760
    %5779 = vmatpush1.msra.mxu0 %v5778
    %5780 = vmatprep.subr.mxu0 0.0
    %v5781 = vand.u32 %v1499, 4294901760
    %v5782 = vsub.f32 %v1499, %v5781
    %v5783 = vand.u32 %v5782, 4294901760
    %5784 = vmatpush1.msra.mxu0 %v5783
    %5785 = vmatprep.subr.mxu0 0.0
    %v5786 = vand.u32 %v1500, 4294901760
    %v5787 = vsub.f32 %v1500, %v5786
    %v5788 = vand.u32 %v5787, 4294901760
    %5789 = vmatpush1.msra.mxu0 %v5788
    %5790 = vmatprep.subr.mxu0 0.0
    %v5791 = vand.u32 %v1501, 4294901760
    %v5792 = vsub.f32 %v1501, %v5791
    %v5793 = vand.u32 %v5792, 4294901760
    %5794 = vmatpush1.msra.mxu0 %v5793
    %5795 = vmatprep.subr.mxu0 0.0
    %v5796 = vand.u32 %v1502, 4294901760
    %v5797 = vsub.f32 %v1502, %v5796
    %v5798 = vand.u32 %v5797, 4294901760
    %5799 = vmatpush1.msra.mxu0 %v5798
    %5800 = vmatprep.subr.mxu0 0.0
    %v5801 = vand.u32 %v1503, 4294901760
    %v5802 = vsub.f32 %v1503, %v5801
    %v5803 = vand.u32 %v5802, 4294901760
    %5804 = vmatpush1.msra.mxu0 %v5803
    %5805 = vmatprep.subr.mxu0 0.0
    %v5806 = vand.u32 %v1504, 4294901760
    %v5807 = vsub.f32 %v1504, %v5806
    %v5808 = vand.u32 %v5807, 4294901760
    %5809 = vmatpush1.msra.mxu0 %v5808
    %5810 = vmatprep.subr.mxu0 0.0
    %v5811 = vand.u32 %v1505, 4294901760
    %v5812 = vsub.f32 %v1505, %v5811
    %v5813 = vand.u32 %v5812, 4294901760
    %5814 = vmatpush1.msra.mxu0 %v5813
    %5815 = vmatprep.subr.mxu0 0.0
    %v5816 = vand.u32 %v1506, 4294901760
    %v5817 = vsub.f32 %v1506, %v5816
    %v5818 = vand.u32 %v5817, 4294901760
    %5819 = vmatpush1.msra.mxu0 %v5818
    %5820 = vmatprep.subr.mxu0 0.0
    %v5821 = vand.u32 %v1507, 4294901760
    %v5822 = vsub.f32 %v1507, %v5821
    %v5823 = vand.u32 %v5822, 4294901760
    %5824 = vmatpush1.msra.mxu0 %v5823
    %5825 = vmatprep.subr.mxu0 0.0
    %v5826 = vand.u32 %v1508, 4294901760
    %v5827 = vsub.f32 %v1508, %v5826
    %v5828 = vand.u32 %v5827, 4294901760
    %5829 = vmatpush1.msra.mxu0 %v5828
    %5830 = vmatprep.subr.mxu0 0.0
    %v5831 = vand.u32 %v1509, 4294901760
    %v5832 = vsub.f32 %v1509, %v5831
    %v5833 = vand.u32 %v5832, 4294901760
    %5834 = vmatpush1.msra.mxu0 %v5833
    %5835 = vmatprep.subr.mxu0 0.0
    %v5836 = vand.u32 %v1510, 4294901760
    %v5837 = vsub.f32 %v1510, %v5836
    %v5838 = vand.u32 %v5837, 4294901760
    %5839 = vmatpush1.msra.mxu0 %v5838
    %5840 = vmatprep.subr.mxu0 0.0
    %v5841 = vand.u32 %v1511, 4294901760
    %v5842 = vsub.f32 %v1511, %v5841
    %v5843 = vand.u32 %v5842, 4294901760
    %5844 = vmatpush1.msra.mxu0 %v5843
    %5845 = vmatprep.subr.mxu0 0.0
    %v5846 = vand.u32 %v1512, 4294901760
    %v5847 = vsub.f32 %v1512, %v5846
    %v5848 = vand.u32 %v5847, 4294901760
    %5849 = vmatpush1.msra.mxu0 %v5848
    %5850 = vmatprep.subr.mxu0 0.0
    %v5851 = vand.u32 %v1513, 4294901760
    %v5852 = vsub.f32 %v1513, %v5851
    %v5853 = vand.u32 %v5852, 4294901760
    %5854 = vmatpush1.msra.mxu0 %v5853
    %5855 = vmatprep.subr.mxu0 0.0
    %v5856 = vand.u32 %v1514, 4294901760
    %v5857 = vsub.f32 %v1514, %v5856
    %v5858 = vand.u32 %v5857, 4294901760
    %5859 = vmatpush1.msra.mxu0 %v5858
    %5860 = vmatprep.subr.mxu0 0.0
    %v5861 = vand.u32 %v1515, 4294901760
    %v5862 = vsub.f32 %v1515, %v5861
    %v5863 = vand.u32 %v5862, 4294901760
    %5864 = vmatpush1.msra.mxu0 %v5863
    %5865 = vmatprep.subr.mxu0 0.0
    %v5866 = vand.u32 %v1516, 4294901760
    %v5867 = vsub.f32 %v1516, %v5866
    %v5868 = vand.u32 %v5867, 4294901760
    %5869 = vmatpush1.msra.mxu0 %v5868
    %5870 = vmatprep.subr.mxu0 0.0
    %v5871 = vand.u32 %v1517, 4294901760
    %v5872 = vsub.f32 %v1517, %v5871
    %v5873 = vand.u32 %v5872, 4294901760
    %5874 = vmatpush1.msra.mxu0 %v5873
    %5875 = vmatprep.subr.mxu0 0.0
    %v5876 = vand.u32 %v1518, 4294901760
    %v5877 = vsub.f32 %v1518, %v5876
    %v5878 = vand.u32 %v5877, 4294901760
    %5879 = vmatpush1.msra.mxu0 %v5878
    %5880 = vmatprep.subr.mxu0 0.0
    %v5881 = vand.u32 %v1519, 4294901760
    %v5882 = vsub.f32 %v1519, %v5881
    %v5883 = vand.u32 %v5882, 4294901760
    %5884 = vmatpush1.msra.mxu0 %v5883
    %5885 = vmatprep.subr.mxu0 0.0
    %v5886 = vand.u32 %v1520, 4294901760
    %v5887 = vsub.f32 %v1520, %v5886
    %v5888 = vand.u32 %v5887, 4294901760
    %5889 = vmatpush1.msra.mxu0 %v5888
    %5890 = vmatprep.subr.mxu0 0.0
    %v5891 = vand.u32 %v1521, 4294901760
    %v5892 = vsub.f32 %v1521, %v5891
    %v5893 = vand.u32 %v5892, 4294901760
    %5894 = vmatpush1.msra.mxu0 %v5893
    %5895 = vmatprep.subr.mxu0 0.0
    %v5896 = vand.u32 %v1522, 4294901760
    %v5897 = vsub.f32 %v1522, %v5896
    %v5898 = vand.u32 %v5897, 4294901760
    %5899 = vmatpush1.msra.mxu0 %v5898
    %5900 = vmatprep.subr.mxu0 0.0
    %v5901 = vand.u32 %v1523, 4294901760
    %v5902 = vsub.f32 %v1523, %v5901
    %v5903 = vand.u32 %v5902, 4294901760
    %5904 = vmatpush1.msra.mxu0 %v5903
    %5905 = vmatprep.subr.mxu0 0.0
    %v5906 = vand.u32 %v1524, 4294901760
    %v5907 = vsub.f32 %v1524, %v5906
    %v5908 = vand.u32 %v5907, 4294901760
    %5909 = vmatpush1.msra.mxu0 %v5908
    %5910 = vmatprep.subr.mxu0 0.0
    %v5911 = vand.u32 %v1525, 4294901760
    %v5912 = vsub.f32 %v1525, %v5911
    %v5913 = vand.u32 %v5912, 4294901760
    %5914 = vmatpush1.msra.mxu0 %v5913
    %v5915 = vand.u32 %v1682, 4294901760
    %5916 = vmatprep.mubr.f32.mxu0 %v5915
    %v5917 = vand.u32 %v1674, 4294901760
    %5918 = vmatmul.mubr.f32.gmra.mrb[0].mxu0 %v5917
    %v5919 = vpop.f32.mrb[0].mxu0
    %v5920 = vadd.f32 %v5752, %v5919
    %v5921 = vpop.f32.mrb[0].mxu0
    %5922 = vdwg.mxu0
    %5923 = vmatprep.subr.mxu0 0.0
    %v5924 = vand.u32 %v1494, 4294901760
    %5925 = vmatpush1.msra.mxu0 %v5924
    %5926 = vmatprep.subr.mxu0 0.0
    %v5927 = vand.u32 %v1495, 4294901760
    %5928 = vmatpush1.msra.mxu0 %v5927
    %5929 = vmatprep.subr.mxu0 0.0
    %v5930 = vand.u32 %v1496, 4294901760
    %5931 = vmatpush1.msra.mxu0 %v5930
    %5932 = vmatprep.subr.mxu0 0.0
    %v5933 = vand.u32 %v1497, 4294901760
    %5934 = vmatpush1.msra.mxu0 %v5933
    %5935 = vmatprep.subr.mxu0 0.0
    %v5936 = vand.u32 %v1498, 4294901760
    %5937 = vmatpush1.msra.mxu0 %v5936
    %5938 = vmatprep.subr.mxu0 0.0
    %v5939 = vand.u32 %v1499, 4294901760
    %5940 = vmatpush1.msra.mxu0 %v5939
    %5941 = vmatprep.subr.mxu0 0.0
    %v5942 = vand.u32 %v1500, 4294901760
    %5943 = vmatpush1.msra.mxu0 %v5942
    %5944 = vmatprep.subr.mxu0 0.0
    %v5945 = vand.u32 %v1501, 4294901760
    %5946 = vmatpush1.msra.mxu0 %v5945
    %5947 = vmatprep.subr.mxu0 0.0
    %v5948 = vand.u32 %v1502, 4294901760
    %5949 = vmatpush1.msra.mxu0 %v5948
    %5950 = vmatprep.subr.mxu0 0.0
    %v5951 = vand.u32 %v1503, 4294901760
    %5952 = vmatpush1.msra.mxu0 %v5951
    %5953 = vmatprep.subr.mxu0 0.0
    %v5954 = vand.u32 %v1504, 4294901760
    %5955 = vmatpush1.msra.mxu0 %v5954
    %5956 = vmatprep.subr.mxu0 0.0
    %v5957 = vand.u32 %v1505, 4294901760
    %5958 = vmatpush1.msra.mxu0 %v5957
    %5959 = vmatprep.subr.mxu0 0.0
    %v5960 = vand.u32 %v1506, 4294901760
    %5961 = vmatpush1.msra.mxu0 %v5960
    %5962 = vmatprep.subr.mxu0 0.0
    %v5963 = vand.u32 %v1507, 4294901760
    %5964 = vmatpush1.msra.mxu0 %v5963
    %5965 = vmatprep.subr.mxu0 0.0
    %v5966 = vand.u32 %v1508, 4294901760
    %5967 = vmatpush1.msra.mxu0 %v5966
    %5968 = vmatprep.subr.mxu0 0.0
    %v5969 = vand.u32 %v1509, 4294901760
    %5970 = vmatpush1.msra.mxu0 %v5969
    %5971 = vmatprep.subr.mxu0 0.0
    %v5972 = vand.u32 %v1510, 4294901760
    %5973 = vmatpush1.msra.mxu0 %v5972
    %5974 = vmatprep.subr.mxu0 0.0
    %v5975 = vand.u32 %v1511, 4294901760
    %5976 = vmatpush1.msra.mxu0 %v5975
    %5977 = vmatprep.subr.mxu0 0.0
    %v5978 = vand.u32 %v1512, 4294901760
    %5979 = vmatpush1.msra.mxu0 %v5978
    %5980 = vmatprep.subr.mxu0 0.0
    %v5981 = vand.u32 %v1513, 4294901760
    %5982 = vmatpush1.msra.mxu0 %v5981
    %5983 = vmatprep.subr.mxu0 0.0
    %v5984 = vand.u32 %v1514, 4294901760
    %5985 = vmatpush1.msra.mxu0 %v5984
    %5986 = vmatprep.subr.mxu0 0.0
    %v5987 = vand.u32 %v1515, 4294901760
    %5988 = vmatpush1.msra.mxu0 %v5987
    %5989 = vmatprep.subr.mxu0 0.0
    %v5990 = vand.u32 %v1516, 4294901760
    %5991 = vmatpush1.msra.mxu0 %v5990
    %5992 = vmatprep.subr.mxu0 0.0
    %v5993 = vand.u32 %v1517, 4294901760
    %5994 = vmatpush1.msra.mxu0 %v5993
    %5995 = vmatprep.subr.mxu0 0.0
    %v5996 = vand.u32 %v1518, 4294901760
    %5997 = vmatpush1.msra.mxu0 %v5996
    %5998 = vmatprep.subr.mxu0 0.0
    %v5999 = vand.u32 %v1519, 4294901760
    %6000 = vmatpush1.msra.mxu0 %v5999
    %6001 = vmatprep.subr.mxu0 0.0
    %v6002 = vand.u32 %v1520, 4294901760
    %6003 = vmatpush1.msra.mxu0 %v6002
    %6004 = vmatprep.subr.mxu0 0.0
    %v6005 = vand.u32 %v1521, 4294901760
    %6006 = vmatpush1.msra.mxu0 %v6005
    %6007 = vmatprep.subr.mxu0 0.0
    %v6008 = vand.u32 %v1522, 4294901760
    %6009 = vmatpush1.msra.mxu0 %v6008
    %6010 = vmatprep.subr.mxu0 0.0
    %v6011 = vand.u32 %v1523, 4294901760
    %6012 = vmatpush1.msra.mxu0 %v6011
    %6013 = vmatprep.subr.mxu0 0.0
    %v6014 = vand.u32 %v1524, 4294901760
    %6015 = vmatpush1.msra.mxu0 %v6014
    %6016 = vmatprep.subr.mxu0 0.0
    %v6017 = vand.u32 %v1525, 4294901760
    %6018 = vmatpush1.msra.mxu0 %v6017
    %v6019 = vand.u32 %v1682, 4294901760
    %6020 = vmatprep.mubr.f32.mxu0 %v6019
    %v6021 = vand.u32 %v1674, 4294901760
    %6022 = vmatmul.mubr.f32.gmra.mrb[0].mxu0 %v6021
    %v6023 = vpop.f32.mrb[0].mxu0
    %v6024 = vadd.f32 %v5920, %v6023
    %v6025 = vpop.f32.mrb[0].mxu0
    %6026 = vdwg.mxu0
    %6027 = vmatprep.subr.mxu0 0.0
    %v6028 = vand.u32 %v1526, 4294901760
    %6029 = vmatpush1.msra.mxu0 %v6028
    %6030 = vmatprep.subr.mxu0 0.0
    %v6031 = vand.u32 %v1527, 4294901760
    %6032 = vmatpush1.msra.mxu0 %v6031
    %6033 = vmatprep.subr.mxu0 0.0
    %v6034 = vand.u32 %v1528, 4294901760
    %6035 = vmatpush1.msra.mxu0 %v6034
    %6036 = vmatprep.subr.mxu0 0.0
    %v6037 = vand.u32 %v1529, 4294901760
    %6038 = vmatpush1.msra.mxu0 %v6037
    %6039 = vmatprep.subr.mxu0 0.0
    %v6040 = vand.u32 %v1530, 4294901760
    %6041 = vmatpush1.msra.mxu0 %v6040
    %6042 = vmatprep.subr.mxu0 0.0
    %v6043 = vand.u32 %v1531, 4294901760
    %6044 = vmatpush1.msra.mxu0 %v6043
    %6045 = vmatprep.subr.mxu0 0.0
    %v6046 = vand.u32 %v1532, 4294901760
    %6047 = vmatpush1.msra.mxu0 %v6046
    %6048 = vmatprep.subr.mxu0 0.0
    %v6049 = vand.u32 %v1533, 4294901760
    %6050 = vmatpush1.msra.mxu0 %v6049
    %6051 = vmatprep.subr.mxu0 0.0
    %v6052 = vand.u32 %v1534, 4294901760
    %6053 = vmatpush1.msra.mxu0 %v6052
    %6054 = vmatprep.subr.mxu0 0.0
    %v6055 = vand.u32 %v1535, 4294901760
    %6056 = vmatpush1.msra.mxu0 %v6055
    %6057 = vmatprep.subr.mxu0 0.0
    %v6058 = vand.u32 %v1536, 4294901760
    %6059 = vmatpush1.msra.mxu0 %v6058
    %6060 = vmatprep.subr.mxu0 0.0
    %v6061 = vand.u32 %v1537, 4294901760
    %6062 = vmatpush1.msra.mxu0 %v6061
    %6063 = vmatprep.subr.mxu0 0.0
    %v6064 = vand.u32 %v1538, 4294901760
    %6065 = vmatpush1.msra.mxu0 %v6064
    %6066 = vmatprep.subr.mxu0 0.0
    %v6067 = vand.u32 %v1539, 4294901760
    %6068 = vmatpush1.msra.mxu0 %v6067
    %6069 = vmatprep.subr.mxu0 0.0
    %v6070 = vand.u32 %v1540, 4294901760
    %6071 = vmatpush1.msra.mxu0 %v6070
    %6072 = vmatprep.subr.mxu0 0.0
    %v6073 = vand.u32 %v1541, 4294901760
    %6074 = vmatpush1.msra.mxu0 %v6073
    %6075 = vmatprep.subr.mxu0 0.0
    %v6076 = vand.u32 %v1542, 4294901760
    %6077 = vmatpush1.msra.mxu0 %v6076
    %6078 = vmatprep.subr.mxu0 0.0
    %v6079 = vand.u32 %v1543, 4294901760
    %6080 = vmatpush1.msra.mxu0 %v6079
    %6081 = vmatprep.subr.mxu0 0.0
    %v6082 = vand.u32 %v1544, 4294901760
    %6083 = vmatpush1.msra.mxu0 %v6082
    %6084 = vmatprep.subr.mxu0 0.0
    %v6085 = vand.u32 %v1545, 4294901760
    %6086 = vmatpush1.msra.mxu0 %v6085
    %6087 = vmatprep.subr.mxu0 0.0
    %v6088 = vand.u32 %v1546, 4294901760
    %6089 = vmatpush1.msra.mxu0 %v6088
    %6090 = vmatprep.subr.mxu0 0.0
    %v6091 = vand.u32 %v1547, 4294901760
    %6092 = vmatpush1.msra.mxu0 %v6091
    %6093 = vmatprep.subr.mxu0 0.0
    %v6094 = vand.u32 %v1548, 4294901760
    %6095 = vmatpush1.msra.mxu0 %v6094
    %6096 = vmatprep.subr.mxu0 0.0
    %v6097 = vand.u32 %v1549, 4294901760
    %6098 = vmatpush1.msra.mxu0 %v6097
    %6099 = vmatprep.subr.mxu0 0.0
    %v6100 = vand.u32 %v1550, 4294901760
    %6101 = vmatpush1.msra.mxu0 %v6100
    %6102 = vmatprep.subr.mxu0 0.0
    %v6103 = vand.u32 %v1551, 4294901760
    %6104 = vmatpush1.msra.mxu0 %v6103
    %6105 = vmatprep.subr.mxu0 0.0
    %v6106 = vand.u32 %v1552, 4294901760
    %6107 = vmatpush1.msra.mxu0 %v6106
    %6108 = vmatprep.subr.mxu0 0.0
    %v6109 = vand.u32 %v1553, 4294901760
    %6110 = vmatpush1.msra.mxu0 %v6109
    %6111 = vmatprep.subr.mxu0 0.0
    %v6112 = vand.u32 %v1554, 4294901760
    %6113 = vmatpush1.msra.mxu0 %v6112
    %6114 = vmatprep.subr.mxu0 0.0
    %v6115 = vand.u32 %v1555, 4294901760
    %6116 = vmatpush1.msra.mxu0 %v6115
    %6117 = vmatprep.subr.mxu0 0.0
    %v6118 = vand.u32 %v1556, 4294901760
    %6119 = vmatpush1.msra.mxu0 %v6118
    %6120 = vmatprep.subr.mxu0 0.0
    %v6121 = vand.u32 %v1557, 4294901760
    %6122 = vmatpush1.msra.mxu0 %v6121
    %v6123 = vand.u32 %v1683, 4294901760
    %v6124 = vsub.f32 %v1683, %v6123
    %v6125 = vand.u32 %v6124, 4294901760
    %v6126 = vsub.f32 %v6124, %v6125
    %v6127 = vand.u32 %v6126, 4294901760
    %6128 = vmatprep.mubr.f32.mxu0 %v6127
    %v6129 = vand.u32 %v1681, 4294901760
    %v6130 = vsub.f32 %v1681, %v6129
    %v6131 = vand.u32 %v6130, 4294901760
    %v6132 = vsub.f32 %v6130, %v6131
    %v6133 = vand.u32 %v6132, 4294901760
    %6134 = vmatmul.mubr.f32.gmra.mrb[0].mxu0 %v6133
    %v6135 = vpop.f32.mrb[0].mxu0
    %v6136 = vadd.f32 %v6024, %v6135
    %v6137 = vpop.f32.mrb[0].mxu0
    %6138 = vdwg.mxu0
    %6139 = vmatprep.subr.mxu0 0.0
    %v6140 = vand.u32 %v1526, 4294901760
    %v6141 = vsub.f32 %v1526, %v6140
    %v6142 = vand.u32 %v6141, 4294901760
    %v6143 = vsub.f32 %v6141, %v6142
    %v6144 = vand.u32 %v6143, 4294901760
    %6145 = vmatpush1.msra.mxu0 %v6144
    %6146 = vmatprep.subr.mxu0 0.0
    %v6147 = vand.u32 %v1527, 4294901760
    %v6148 = vsub.f32 %v1527, %v6147
    %v6149 = vand.u32 %v6148, 4294901760
    %v6150 = vsub.f32 %v6148, %v6149
    %v6151 = vand.u32 %v6150, 4294901760
    %6152 = vmatpush1.msra.mxu0 %v6151
    %6153 = vmatprep.subr.mxu0 0.0
    %v6154 = vand.u32 %v1528, 4294901760
    %v6155 = vsub.f32 %v1528, %v6154
    %v6156 = vand.u32 %v6155, 4294901760
    %v6157 = vsub.f32 %v6155, %v6156
    %v6158 = vand.u32 %v6157, 4294901760
    %6159 = vmatpush1.msra.mxu0 %v6158
    %6160 = vmatprep.subr.mxu0 0.0
    %v6161 = vand.u32 %v1529, 4294901760
    %v6162 = vsub.f32 %v1529, %v6161
    %v6163 = vand.u32 %v6162, 4294901760
    %v6164 = vsub.f32 %v6162, %v6163
    %v6165 = vand.u32 %v6164, 4294901760
    %6166 = vmatpush1.msra.mxu0 %v6165
    %6167 = vmatprep.subr.mxu0 0.0
    %v6168 = vand.u32 %v1530, 4294901760
    %v6169 = vsub.f32 %v1530, %v6168
    %v6170 = vand.u32 %v6169, 4294901760
    %v6171 = vsub.f32 %v6169, %v6170
    %v6172 = vand.u32 %v6171, 4294901760
    %6173 = vmatpush1.msra.mxu0 %v6172
    %6174 = vmatprep.subr.mxu0 0.0
    %v6175 = vand.u32 %v1531, 4294901760
    %v6176 = vsub.f32 %v1531, %v6175
    %v6177 = vand.u32 %v6176, 4294901760
    %v6178 = vsub.f32 %v6176, %v6177
    %v6179 = vand.u32 %v6178, 4294901760
    %6180 = vmatpush1.msra.mxu0 %v6179
    %6181 = vmatprep.subr.mxu0 0.0
    %v6182 = vand.u32 %v1532, 4294901760
    %v6183 = vsub.f32 %v1532, %v6182
    %v6184 = vand.u32 %v6183, 4294901760
    %v6185 = vsub.f32 %v6183, %v6184
    %v6186 = vand.u32 %v6185, 4294901760
    %6187 = vmatpush1.msra.mxu0 %v6186
    %6188 = vmatprep.subr.mxu0 0.0
    %v6189 = vand.u32 %v1533, 4294901760
    %v6190 = vsub.f32 %v1533, %v6189
    %v6191 = vand.u32 %v6190, 4294901760
    %v6192 = vsub.f32 %v6190, %v6191
    %v6193 = vand.u32 %v6192, 4294901760
    %6194 = vmatpush1.msra.mxu0 %v6193
    %6195 = vmatprep.subr.mxu0 0.0
    %v6196 = vand.u32 %v1534, 4294901760
    %v6197 = vsub.f32 %v1534, %v6196
    %v6198 = vand.u32 %v6197, 4294901760
    %v6199 = vsub.f32 %v6197, %v6198
    %v6200 = vand.u32 %v6199, 4294901760
    %6201 = vmatpush1.msra.mxu0 %v6200
    %6202 = vmatprep.subr.mxu0 0.0
    %v6203 = vand.u32 %v1535, 4294901760
    %v6204 = vsub.f32 %v1535, %v6203
    %v6205 = vand.u32 %v6204, 4294901760
    %v6206 = vsub.f32 %v6204, %v6205
    %v6207 = vand.u32 %v6206, 4294901760
    %6208 = vmatpush1.msra.mxu0 %v6207
    %6209 = vmatprep.subr.mxu0 0.0
    %v6210 = vand.u32 %v1536, 4294901760
    %v6211 = vsub.f32 %v1536, %v6210
    %v6212 = vand.u32 %v6211, 4294901760
    %v6213 = vsub.f32 %v6211, %v6212
    %v6214 = vand.u32 %v6213, 4294901760
    %6215 = vmatpush1.msra.mxu0 %v6214
    %6216 = vmatprep.subr.mxu0 0.0
    %v6217 = vand.u32 %v1537, 4294901760
    %v6218 = vsub.f32 %v1537, %v6217
    %v6219 = vand.u32 %v6218, 4294901760
    %v6220 = vsub.f32 %v6218, %v6219
    %v6221 = vand.u32 %v6220, 4294901760
    %6222 = vmatpush1.msra.mxu0 %v6221
    %6223 = vmatprep.subr.mxu0 0.0
    %v6224 = vand.u32 %v1538, 4294901760
    %v6225 = vsub.f32 %v1538, %v6224
    %v6226 = vand.u32 %v6225, 4294901760
    %v6227 = vsub.f32 %v6225, %v6226
    %v6228 = vand.u32 %v6227, 4294901760
    %6229 = vmatpush1.msra.mxu0 %v6228
    %6230 = vmatprep.subr.mxu0 0.0
    %v6231 = vand.u32 %v1539, 4294901760
    %v6232 = vsub.f32 %v1539, %v6231
    %v6233 = vand.u32 %v6232, 4294901760
    %v6234 = vsub.f32 %v6232, %v6233
    %v6235 = vand.u32 %v6234, 4294901760
    %6236 = vmatpush1.msra.mxu0 %v6235
    %6237 = vmatprep.subr.mxu0 0.0
    %v6238 = vand.u32 %v1540, 4294901760
    %v6239 = vsub.f32 %v1540, %v6238
    %v6240 = vand.u32 %v6239, 4294901760
    %v6241 = vsub.f32 %v6239, %v6240
    %v6242 = vand.u32 %v6241, 4294901760
    %6243 = vmatpush1.msra.mxu0 %v6242
    %6244 = vmatprep.subr.mxu0 0.0
    %v6245 = vand.u32 %v1541, 4294901760
    %v6246 = vsub.f32 %v1541, %v6245
    %v6247 = vand.u32 %v6246, 4294901760
    %v6248 = vsub.f32 %v6246, %v6247
    %v6249 = vand.u32 %v6248, 4294901760
    %6250 = vmatpush1.msra.mxu0 %v6249
    %6251 = vmatprep.subr.mxu0 0.0
    %v6252 = vand.u32 %v1542, 4294901760
    %v6253 = vsub.f32 %v1542, %v6252
    %v6254 = vand.u32 %v6253, 4294901760
    %v6255 = vsub.f32 %v6253, %v6254
    %v6256 = vand.u32 %v6255, 4294901760
    %6257 = vmatpush1.msra.mxu0 %v6256
    %6258 = vmatprep.subr.mxu0 0.0
    %v6259 = vand.u32 %v1543, 4294901760
    %v6260 = vsub.f32 %v1543, %v6259
    %v6261 = vand.u32 %v6260, 4294901760
    %v6262 = vsub.f32 %v6260, %v6261
    %v6263 = vand.u32 %v6262, 4294901760
    %6264 = vmatpush1.msra.mxu0 %v6263
    %6265 = vmatprep.subr.mxu0 0.0
    %v6266 = vand.u32 %v1544, 4294901760
    %v6267 = vsub.f32 %v1544, %v6266
    %v6268 = vand.u32 %v6267, 4294901760
    %v6269 = vsub.f32 %v6267, %v6268
    %v6270 = vand.u32 %v6269, 4294901760
    %6271 = vmatpush1.msra.mxu0 %v6270
    %6272 = vmatprep.subr.mxu0 0.0
    %v6273 = vand.u32 %v1545, 4294901760
    %v6274 = vsub.f32 %v1545, %v6273
    %v6275 = vand.u32 %v6274, 4294901760
    %v6276 = vsub.f32 %v6274, %v6275
    %v6277 = vand.u32 %v6276, 4294901760
    %6278 = vmatpush1.msra.mxu0 %v6277
    %6279 = vmatprep.subr.mxu0 0.0
    %v6280 = vand.u32 %v1546, 4294901760
    %v6281 = vsub.f32 %v1546, %v6280
    %v6282 = vand.u32 %v6281, 4294901760
    %v6283 = vsub.f32 %v6281, %v6282
    %v6284 = vand.u32 %v6283, 4294901760
    %6285 = vmatpush1.msra.mxu0 %v6284
    %6286 = vmatprep.subr.mxu0 0.0
    %v6287 = vand.u32 %v1547, 4294901760
    %v6288 = vsub.f32 %v1547, %v6287
    %v6289 = vand.u32 %v6288, 4294901760
    %v6290 = vsub.f32 %v6288, %v6289
    %v6291 = vand.u32 %v6290, 4294901760
    %6292 = vmatpush1.msra.mxu0 %v6291
    %6293 = vmatprep.subr.mxu0 0.0
    %v6294 = vand.u32 %v1548, 4294901760
    %v6295 = vsub.f32 %v1548, %v6294
    %v6296 = vand.u32 %v6295, 4294901760
    %v6297 = vsub.f32 %v6295, %v6296
    %v6298 = vand.u32 %v6297, 4294901760
    %6299 = vmatpush1.msra.mxu0 %v6298
    %6300 = vmatprep.subr.mxu0 0.0
    %v6301 = vand.u32 %v1549, 4294901760
    %v6302 = vsub.f32 %v1549, %v6301
    %v6303 = vand.u32 %v6302, 4294901760
    %v6304 = vsub.f32 %v6302, %v6303
    %v6305 = vand.u32 %v6304, 4294901760
    %6306 = vmatpush1.msra.mxu0 %v6305
    %6307 = vmatprep.subr.mxu0 0.0
    %v6308 = vand.u32 %v1550, 4294901760
    %v6309 = vsub.f32 %v1550, %v6308
    %v6310 = vand.u32 %v6309, 4294901760
    %v6311 = vsub.f32 %v6309, %v6310
    %v6312 = vand.u32 %v6311, 4294901760
    %6313 = vmatpush1.msra.mxu0 %v6312
    %6314 = vmatprep.subr.mxu0 0.0
    %v6315 = vand.u32 %v1551, 4294901760
    %v6316 = vsub.f32 %v1551, %v6315
    %v6317 = vand.u32 %v6316, 4294901760
    %v6318 = vsub.f32 %v6316, %v6317
    %v6319 = vand.u32 %v6318, 4294901760
    %6320 = vmatpush1.msra.mxu0 %v6319
    %6321 = vmatprep.subr.mxu0 0.0
    %v6322 = vand.u32 %v1552, 4294901760
    %v6323 = vsub.f32 %v1552, %v6322
    %v6324 = vand.u32 %v6323, 4294901760
    %v6325 = vsub.f32 %v6323, %v6324
    %v6326 = vand.u32 %v6325, 4294901760
    %6327 = vmatpush1.msra.mxu0 %v6326
    %6328 = vmatprep.subr.mxu0 0.0
    %v6329 = vand.u32 %v1553, 4294901760
    %v6330 = vsub.f32 %v1553, %v6329
    %v6331 = vand.u32 %v6330, 4294901760
    %v6332 = vsub.f32 %v6330, %v6331
    %v6333 = vand.u32 %v6332, 4294901760
    %6334 = vmatpush1.msra.mxu0 %v6333
    %6335 = vmatprep.subr.mxu0 0.0
    %v6336 = vand.u32 %v1554, 4294901760
    %v6337 = vsub.f32 %v1554, %v6336
    %v6338 = vand.u32 %v6337, 4294901760
    %v6339 = vsub.f32 %v6337, %v6338
    %v6340 = vand.u32 %v6339, 4294901760
    %6341 = vmatpush1.msra.mxu0 %v6340
    %6342 = vmatprep.subr.mxu0 0.0
    %v6343 = vand.u32 %v1555, 4294901760
    %v6344 = vsub.f32 %v1555, %v6343
    %v6345 = vand.u32 %v6344, 4294901760
    %v6346 = vsub.f32 %v6344, %v6345
    %v6347 = vand.u32 %v6346, 4294901760
    %6348 = vmatpush1.msra.mxu0 %v6347
    %6349 = vmatprep.subr.mxu0 0.0
    %v6350 = vand.u32 %v1556, 4294901760
    %v6351 = vsub.f32 %v1556, %v6350
    %v6352 = vand.u32 %v6351, 4294901760
    %v6353 = vsub.f32 %v6351, %v6352
    %v6354 = vand.u32 %v6353, 4294901760
    %6355 = vmatpush1.msra.mxu0 %v6354
    %6356 = vmatprep.subr.mxu0 0.0
    %v6357 = vand.u32 %v1557, 4294901760
    %v6358 = vsub.f32 %v1557, %v6357
    %v6359 = vand.u32 %v6358, 4294901760
    %v6360 = vsub.f32 %v6358, %v6359
    %v6361 = vand.u32 %v6360, 4294901760
    %6362 = vmatpush1.msra.mxu0 %v6361
    %v6363 = vand.u32 %v1683, 4294901760
    %6364 = vmatprep.mubr.f32.mxu0 %v6363
    %v6365 = vand.u32 %v1681, 4294901760
    %6366 = vmatmul.mubr.f32.gmra.mrb[0].mxu0 %v6365
    %v6367 = vpop.f32.mrb[0].mxu0
    %v6368 = vadd.f32 %v6136, %v6367
    %v6369 = vpop.f32.mrb[0].mxu0
    %6370 = vdwg.mxu0
    %6371 = vmatprep.subr.mxu0 0.0
    %v6372 = vand.u32 %v1526, 4294901760
    %v6373 = vsub.f32 %v1526, %v6372
    %6374 = vmatpush1.msra.mxu0 %v6373
    %6375 = vmatprep.subr.mxu0 0.0
    %v6376 = vand.u32 %v1527, 4294901760
    %v6377 = vsub.f32 %v1527, %v6376
    %6378 = vmatpush1.msra.mxu0 %v6377
    %6379 = vmatprep.subr.mxu0 0.0
    %v6380 = vand.u32 %v1528, 4294901760
    %v6381 = vsub.f32 %v1528, %v6380
    %6382 = vmatpush1.msra.mxu0 %v6381
    %6383 = vmatprep.subr.mxu0 0.0
    %v6384 = vand.u32 %v1529, 4294901760
    %v6385 = vsub.f32 %v1529, %v6384
    %6386 = vmatpush1.msra.mxu0 %v6385
    %6387 = vmatprep.subr.mxu0 0.0
    %v6388 = vand.u32 %v1530, 4294901760
    %v6389 = vsub.f32 %v1530, %v6388
    %6390 = vmatpush1.msra.mxu0 %v6389
    %6391 = vmatprep.subr.mxu0 0.0
    %v6392 = vand.u32 %v1531, 4294901760
    %v6393 = vsub.f32 %v1531, %v6392
    %6394 = vmatpush1.msra.mxu0 %v6393
    %6395 = vmatprep.subr.mxu0 0.0
    %v6396 = vand.u32 %v1532, 4294901760
    %v6397 = vsub.f32 %v1532, %v6396
    %6398 = vmatpush1.msra.mxu0 %v6397
    %6399 = vmatprep.subr.mxu0 0.0
    %v6400 = vand.u32 %v1533, 4294901760
    %v6401 = vsub.f32 %v1533, %v6400
    %6402 = vmatpush1.msra.mxu0 %v6401
    %6403 = vmatprep.subr.mxu0 0.0
    %v6404 = vand.u32 %v1534, 4294901760
    %v6405 = vsub.f32 %v1534, %v6404
    %6406 = vmatpush1.msra.mxu0 %v6405
    %6407 = vmatprep.subr.mxu0 0.0
    %v6408 = vand.u32 %v1535, 4294901760
    %v6409 = vsub.f32 %v1535, %v6408
    %6410 = vmatpush1.msra.mxu0 %v6409
    %6411 = vmatprep.subr.mxu0 0.0
    %v6412 = vand.u32 %v1536, 4294901760
    %v6413 = vsub.f32 %v1536, %v6412
    %6414 = vmatpush1.msra.mxu0 %v6413
    %6415 = vmatprep.subr.mxu0 0.0
    %v6416 = vand.u32 %v1537, 4294901760
    %v6417 = vsub.f32 %v1537, %v6416
    %6418 = vmatpush1.msra.mxu0 %v6417
    %6419 = vmatprep.subr.mxu0 0.0
    %v6420 = vand.u32 %v1538, 4294901760
    %v6421 = vsub.f32 %v1538, %v6420
    %6422 = vmatpush1.msra.mxu0 %v6421
    %6423 = vmatprep.subr.mxu0 0.0
    %v6424 = vand.u32 %v1539, 4294901760
    %v6425 = vsub.f32 %v1539, %v6424
    %6426 = vmatpush1.msra.mxu0 %v6425
    %6427 = vmatprep.subr.mxu0 0.0
    %v6428 = vand.u32 %v1540, 4294901760
    %v6429 = vsub.f32 %v1540, %v6428
    %6430 = vmatpush1.msra.mxu0 %v6429
    %6431 = vmatprep.subr.mxu0 0.0
    %v6432 = vand.u32 %v1541, 4294901760
    %v6433 = vsub.f32 %v1541, %v6432
    %6434 = vmatpush1.msra.mxu0 %v6433
    %6435 = vmatprep.subr.mxu0 0.0
    %v6436 = vand.u32 %v1542, 4294901760
    %v6437 = vsub.f32 %v1542, %v6436
    %6438 = vmatpush1.msra.mxu0 %v6437
    %6439 = vmatprep.subr.mxu0 0.0
    %v6440 = vand.u32 %v1543, 4294901760
    %v6441 = vsub.f32 %v1543, %v6440
    %6442 = vmatpush1.msra.mxu0 %v6441
    %6443 = vmatprep.subr.mxu0 0.0
    %v6444 = vand.u32 %v1544, 4294901760
    %v6445 = vsub.f32 %v1544, %v6444
    %6446 = vmatpush1.msra.mxu0 %v6445
    %6447 = vmatprep.subr.mxu0 0.0
    %v6448 = vand.u32 %v1545, 4294901760
    %v6449 = vsub.f32 %v1545, %v6448
    %6450 = vmatpush1.msra.mxu0 %v6449
    %6451 = vmatprep.subr.mxu0 0.0
    %v6452 = vand.u32 %v1546, 4294901760
    %v6453 = vsub.f32 %v1546, %v6452
    %6454 = vmatpush1.msra.mxu0 %v6453
    %6455 = vmatprep.subr.mxu0 0.0
    %v6456 = vand.u32 %v1547, 4294901760
    %v6457 = vsub.f32 %v1547, %v6456
    %6458 = vmatpush1.msra.mxu0 %v6457
    %6459 = vmatprep.subr.mxu0 0.0
    %v6460 = vand.u32 %v1548, 4294901760
    %v6461 = vsub.f32 %v1548, %v6460
    %6462 = vmatpush1.msra.mxu0 %v6461
    %6463 = vmatprep.subr.mxu0 0.0
    %v6464 = vand.u32 %v1549, 4294901760
    %v6465 = vsub.f32 %v1549, %v6464
    %6466 = vmatpush1.msra.mxu0 %v6465
    %6467 = vmatprep.subr.mxu0 0.0
    %v6468 = vand.u32 %v1550, 4294901760
    %v6469 = vsub.f32 %v1550, %v6468
    %6470 = vmatpush1.msra.mxu0 %v6469
    %6471 = vmatprep.subr.mxu0 0.0
    %v6472 = vand.u32 %v1551, 4294901760
    %v6473 = vsub.f32 %v1551, %v6472
    %6474 = vmatpush1.msra.mxu0 %v6473
    %6475 = vmatprep.subr.mxu0 0.0
    %v6476 = vand.u32 %v1552, 4294901760
    %v6477 = vsub.f32 %v1552, %v6476
    %6478 = vmatpush1.msra.mxu0 %v6477
    %6479 = vmatprep.subr.mxu0 0.0
    %v6480 = vand.u32 %v1553, 4294901760
    %v6481 = vsub.f32 %v1553, %v6480
    %6482 = vmatpush1.msra.mxu0 %v6481
    %6483 = vmatprep.subr.mxu0 0.0
    %v6484 = vand.u32 %v1554, 4294901760
    %v6485 = vsub.f32 %v1554, %v6484
    %6486 = vmatpush1.msra.mxu0 %v6485
    %6487 = vmatprep.subr.mxu0 0.0
    %v6488 = vand.u32 %v1555, 4294901760
    %v6489 = vsub.f32 %v1555, %v6488
    %6490 = vmatpush1.msra.mxu0 %v6489
    %6491 = vmatprep.subr.mxu0 0.0
    %v6492 = vand.u32 %v1556, 4294901760
    %v6493 = vsub.f32 %v1556, %v6492
    %6494 = vmatpush1.msra.mxu0 %v6493
    %6495 = vmatprep.subr.mxu0 0.0
    %v6496 = vand.u32 %v1557, 4294901760
    %v6497 = vsub.f32 %v1557, %v6496
    %6498 = vmatpush1.msra.mxu0 %v6497
    %v6499 = vand.u32 %v1683, 4294901760
    %v6500 = vsub.f32 %v1683, %v6499
    %6501 = vmatprep.mubr.f32.mxu0 %v6500
    %v6502 = vand.u32 %v1681, 4294901760
    %v6503 = vsub.f32 %v1681, %v6502
    %6504 = vmatmul.mubr.f32.gmra.mrb[0].mxu0 %v6503
    %v6505 = vpop.f32.mrb[0].mxu0
    %v6506 = vadd.f32 %v6368, %v6505
    %v6507 = vpop.f32.mrb[0].mxu0
    %6508 = vdwg.mxu0
    %6509 = vmatprep.subr.mxu0 0.0
    %v6510 = vand.u32 %v1526, 4294901760
    %6511 = vmatpush1.msra.mxu0 %v6510
    %6512 = vmatprep.subr.mxu0 0.0
    %v6513 = vand.u32 %v1527, 4294901760
    %6514 = vmatpush1.msra.mxu0 %v6513
    %6515 = vmatprep.subr.mxu0 0.0
    %v6516 = vand.u32 %v1528, 4294901760
    %6517 = vmatpush1.msra.mxu0 %v6516
    %6518 = vmatprep.subr.mxu0 0.0
    %v6519 = vand.u32 %v1529, 4294901760
    %6520 = vmatpush1.msra.mxu0 %v6519
    %6521 = vmatprep.subr.mxu0 0.0
    %v6522 = vand.u32 %v1530, 4294901760
    %6523 = vmatpush1.msra.mxu0 %v6522
    %6524 = vmatprep.subr.mxu0 0.0
    %v6525 = vand.u32 %v1531, 4294901760
    %6526 = vmatpush1.msra.mxu0 %v6525
    %6527 = vmatprep.subr.mxu0 0.0
    %v6528 = vand.u32 %v1532, 4294901760
    %6529 = vmatpush1.msra.mxu0 %v6528
    %6530 = vmatprep.subr.mxu0 0.0
    %v6531 = vand.u32 %v1533, 4294901760
    %6532 = vmatpush1.msra.mxu0 %v6531
    %6533 = vmatprep.subr.mxu0 0.0
    %v6534 = vand.u32 %v1534, 4294901760
    %6535 = vmatpush1.msra.mxu0 %v6534
    %6536 = vmatprep.subr.mxu0 0.0
    %v6537 = vand.u32 %v1535, 4294901760
    %6538 = vmatpush1.msra.mxu0 %v6537
    %6539 = vmatprep.subr.mxu0 0.0
    %v6540 = vand.u32 %v1536, 4294901760
    %6541 = vmatpush1.msra.mxu0 %v6540
    %6542 = vmatprep.subr.mxu0 0.0
    %v6543 = vand.u32 %v1537, 4294901760
    %6544 = vmatpush1.msra.mxu0 %v6543
    %6545 = vmatprep.subr.mxu0 0.0
    %v6546 = vand.u32 %v1538, 4294901760
    %6547 = vmatpush1.msra.mxu0 %v6546
    %6548 = vmatprep.subr.mxu0 0.0
    %v6549 = vand.u32 %v1539, 4294901760
    %6550 = vmatpush1.msra.mxu0 %v6549
    %6551 = vmatprep.subr.mxu0 0.0
    %v6552 = vand.u32 %v1540, 4294901760
    %6553 = vmatpush1.msra.mxu0 %v6552
    %6554 = vmatprep.subr.mxu0 0.0
    %v6555 = vand.u32 %v1541, 4294901760
    %6556 = vmatpush1.msra.mxu0 %v6555
    %6557 = vmatprep.subr.mxu0 0.0
    %v6558 = vand.u32 %v1542, 4294901760
    %6559 = vmatpush1.msra.mxu0 %v6558
    %6560 = vmatprep.subr.mxu0 0.0
    %v6561 = vand.u32 %v1543, 4294901760
    %6562 = vmatpush1.msra.mxu0 %v6561
    %6563 = vmatprep.subr.mxu0 0.0
    %v6564 = vand.u32 %v1544, 4294901760
    %6565 = vmatpush1.msra.mxu0 %v6564
    %6566 = vmatprep.subr.mxu0 0.0
    %v6567 = vand.u32 %v1545, 4294901760
    %6568 = vmatpush1.msra.mxu0 %v6567
    %6569 = vmatprep.subr.mxu0 0.0
    %v6570 = vand.u32 %v1546, 4294901760
    %6571 = vmatpush1.msra.mxu0 %v6570
    %6572 = vmatprep.subr.mxu0 0.0
    %v6573 = vand.u32 %v1547, 4294901760
    %6574 = vmatpush1.msra.mxu0 %v6573
    %6575 = vmatprep.subr.mxu0 0.0
    %v6576 = vand.u32 %v1548, 4294901760
    %6577 = vmatpush1.msra.mxu0 %v6576
    %6578 = vmatprep.subr.mxu0 0.0
    %v6579 = vand.u32 %v1549, 4294901760
    %6580 = vmatpush1.msra.mxu0 %v6579
    %6581 = vmatprep.subr.mxu0 0.0
    %v6582 = vand.u32 %v1550, 4294901760
    %6583 = vmatpush1.msra.mxu0 %v6582
    %6584 = vmatprep.subr.mxu0 0.0
    %v6585 = vand.u32 %v1551, 4294901760
    %6586 = vmatpush1.msra.mxu0 %v6585
    %6587 = vmatprep.subr.mxu0 0.0
    %v6588 = vand.u32 %v1552, 4294901760
    %6589 = vmatpush1.msra.mxu0 %v6588
    %6590 = vmatprep.subr.mxu0 0.0
    %v6591 = vand.u32 %v1553, 4294901760
    %6592 = vmatpush1.msra.mxu0 %v6591
    %6593 = vmatprep.subr.mxu0 0.0
    %v6594 = vand.u32 %v1554, 4294901760
    %6595 = vmatpush1.msra.mxu0 %v6594
    %6596 = vmatprep.subr.mxu0 0.0
    %v6597 = vand.u32 %v1555, 4294901760
    %6598 = vmatpush1.msra.mxu0 %v6597
    %6599 = vmatprep.subr.mxu0 0.0
    %v6600 = vand.u32 %v1556, 4294901760
    %6601 = vmatpush1.msra.mxu0 %v6600
    %6602 = vmatprep.subr.mxu0 0.0
    %v6603 = vand.u32 %v1557, 4294901760
    %6604 = vmatpush1.msra.mxu0 %v6603
    %v6605 = vand.u32 %v1683, 4294901760
    %v6606 = vsub.f32 %v1683, %v6605
    %v6607 = vand.u32 %v6606, 4294901760
    %6608 = vmatprep.mubr.f32.mxu0 %v6607
    %v6609 = vand.u32 %v1681, 4294901760
    %v6610 = vsub.f32 %v1681, %v6609
    %v6611 = vand.u32 %v6610, 4294901760
    %6612 = vmatmul.mubr.f32.gmra.mrb[0].mxu0 %v6611
    %v6613 = vpop.f32.mrb[0].mxu0
    %v6614 = vadd.f32 %v6506, %v6613
    %v6615 = vpop.f32.mrb[0].mxu0
    %6616 = vdwg.mxu0
    %6617 = vmatprep.subr.mxu0 0.0
    %v6618 = vand.u32 %v1526, 4294901760
    %v6619 = vsub.f32 %v1526, %v6618
    %v6620 = vand.u32 %v6619, 4294901760
    %6621 = vmatpush1.msra.mxu0 %v6620
    %6622 = vmatprep.subr.mxu0 0.0
    %v6623 = vand.u32 %v1527, 4294901760
    %v6624 = vsub.f32 %v1527, %v6623
    %v6625 = vand.u32 %v6624, 4294901760
    %6626 = vmatpush1.msra.mxu0 %v6625
    %6627 = vmatprep.subr.mxu0 0.0
    %v6628 = vand.u32 %v1528, 4294901760
    %v6629 = vsub.f32 %v1528, %v6628
    %v6630 = vand.u32 %v6629, 4294901760
    %6631 = vmatpush1.msra.mxu0 %v6630
    %6632 = vmatprep.subr.mxu0 0.0
    %v6633 = vand.u32 %v1529, 4294901760
    %v6634 = vsub.f32 %v1529, %v6633
    %v6635 = vand.u32 %v6634, 4294901760
    %6636 = vmatpush1.msra.mxu0 %v6635
    %6637 = vmatprep.subr.mxu0 0.0
    %v6638 = vand.u32 %v1530, 4294901760
    %v6639 = vsub.f32 %v1530, %v6638
    %v6640 = vand.u32 %v6639, 4294901760
    %6641 = vmatpush1.msra.mxu0 %v6640
    %6642 = vmatprep.subr.mxu0 0.0
    %v6643 = vand.u32 %v1531, 4294901760
    %v6644 = vsub.f32 %v1531, %v6643
    %v6645 = vand.u32 %v6644, 4294901760
    %6646 = vmatpush1.msra.mxu0 %v6645
    %6647 = vmatprep.subr.mxu0 0.0
    %v6648 = vand.u32 %v1532, 4294901760
    %v6649 = vsub.f32 %v1532, %v6648
    %v6650 = vand.u32 %v6649, 4294901760
    %6651 = vmatpush1.msra.mxu0 %v6650
    %6652 = vmatprep.subr.mxu0 0.0
    %v6653 = vand.u32 %v1533, 4294901760
    %v6654 = vsub.f32 %v1533, %v6653
    %v6655 = vand.u32 %v6654, 4294901760
    %6656 = vmatpush1.msra.mxu0 %v6655
    %6657 = vmatprep.subr.mxu0 0.0
    %v6658 = vand.u32 %v1534, 4294901760
    %v6659 = vsub.f32 %v1534, %v6658
    %v6660 = vand.u32 %v6659, 4294901760
    %6661 = vmatpush1.msra.mxu0 %v6660
    %6662 = vmatprep.subr.mxu0 0.0
    %v6663 = vand.u32 %v1535, 4294901760
    %v6664 = vsub.f32 %v1535, %v6663
    %v6665 = vand.u32 %v6664, 4294901760
    %6666 = vmatpush1.msra.mxu0 %v6665
    %6667 = vmatprep.subr.mxu0 0.0
    %v6668 = vand.u32 %v1536, 4294901760
    %v6669 = vsub.f32 %v1536, %v6668
    %v6670 = vand.u32 %v6669, 4294901760
    %6671 = vmatpush1.msra.mxu0 %v6670
    %6672 = vmatprep.subr.mxu0 0.0
    %v6673 = vand.u32 %v1537, 4294901760
    %v6674 = vsub.f32 %v1537, %v6673
    %v6675 = vand.u32 %v6674, 4294901760
    %6676 = vmatpush1.msra.mxu0 %v6675
    %6677 = vmatprep.subr.mxu0 0.0
    %v6678 = vand.u32 %v1538, 4294901760
    %v6679 = vsub.f32 %v1538, %v6678
    %v6680 = vand.u32 %v6679, 4294901760
    %6681 = vmatpush1.msra.mxu0 %v6680
    %6682 = vmatprep.subr.mxu0 0.0
    %v6683 = vand.u32 %v1539, 4294901760
    %v6684 = vsub.f32 %v1539, %v6683
    %v6685 = vand.u32 %v6684, 4294901760
    %6686 = vmatpush1.msra.mxu0 %v6685
    %6687 = vmatprep.subr.mxu0 0.0
    %v6688 = vand.u32 %v1540, 4294901760
    %v6689 = vsub.f32 %v1540, %v6688
    %v6690 = vand.u32 %v6689, 4294901760
    %6691 = vmatpush1.msra.mxu0 %v6690
    %6692 = vmatprep.subr.mxu0 0.0
    %v6693 = vand.u32 %v1541, 4294901760
    %v6694 = vsub.f32 %v1541, %v6693
    %v6695 = vand.u32 %v6694, 4294901760
    %6696 = vmatpush1.msra.mxu0 %v6695
    %6697 = vmatprep.subr.mxu0 0.0
    %v6698 = vand.u32 %v1542, 4294901760
    %v6699 = vsub.f32 %v1542, %v6698
    %v6700 = vand.u32 %v6699, 4294901760
    %6701 = vmatpush1.msra.mxu0 %v6700
    %6702 = vmatprep.subr.mxu0 0.0
    %v6703 = vand.u32 %v1543, 4294901760
    %v6704 = vsub.f32 %v1543, %v6703
    %v6705 = vand.u32 %v6704, 4294901760
    %6706 = vmatpush1.msra.mxu0 %v6705
    %6707 = vmatprep.subr.mxu0 0.0
    %v6708 = vand.u32 %v1544, 4294901760
    %v6709 = vsub.f32 %v1544, %v6708
    %v6710 = vand.u32 %v6709, 4294901760
    %6711 = vmatpush1.msra.mxu0 %v6710
    %6712 = vmatprep.subr.mxu0 0.0
    %v6713 = vand.u32 %v1545, 4294901760
    %v6714 = vsub.f32 %v1545, %v6713
    %v6715 = vand.u32 %v6714, 4294901760
    %6716 = vmatpush1.msra.mxu0 %v6715
    %6717 = vmatprep.subr.mxu0 0.0
    %v6718 = vand.u32 %v1546, 4294901760
    %v6719 = vsub.f32 %v1546, %v6718
    %v6720 = vand.u32 %v6719, 4294901760
    %6721 = vmatpush1.msra.mxu0 %v6720
    %6722 = vmatprep.subr.mxu0 0.0
    %v6723 = vand.u32 %v1547, 4294901760
    %v6724 = vsub.f32 %v1547, %v6723
    %v6725 = vand.u32 %v6724, 4294901760
    %6726 = vmatpush1.msra.mxu0 %v6725
    %6727 = vmatprep.subr.mxu0 0.0
    %v6728 = vand.u32 %v1548, 4294901760
    %v6729 = vsub.f32 %v1548, %v6728
    %v6730 = vand.u32 %v6729, 4294901760
    %6731 = vmatpush1.msra.mxu0 %v6730
    %6732 = vmatprep.subr.mxu0 0.0
    %v6733 = vand.u32 %v1549, 4294901760
    %v6734 = vsub.f32 %v1549, %v6733
    %v6735 = vand.u32 %v6734, 4294901760
    %6736 = vmatpush1.msra.mxu0 %v6735
    %6737 = vmatprep.subr.mxu0 0.0
    %v6738 = vand.u32 %v1550, 4294901760
    %v6739 = vsub.f32 %v1550, %v6738
    %v6740 = vand.u32 %v6739, 4294901760
    %6741 = vmatpush1.msra.mxu0 %v6740
    %6742 = vmatprep.subr.mxu0 0.0
    %v6743 = vand.u32 %v1551, 4294901760
    %v6744 = vsub.f32 %v1551, %v6743
    %v6745 = vand.u32 %v6744, 4294901760
    %6746 = vmatpush1.msra.mxu0 %v6745
    %6747 = vmatprep.subr.mxu0 0.0
    %v6748 = vand.u32 %v1552, 4294901760
    %v6749 = vsub.f32 %v1552, %v6748
    %v6750 = vand.u32 %v6749, 4294901760
    %6751 = vmatpush1.msra.mxu0 %v6750
    %6752 = vmatprep.subr.mxu0 0.0
    %v6753 = vand.u32 %v1553, 4294901760
    %v6754 = vsub.f32 %v1553, %v6753
    %v6755 = vand.u32 %v6754, 4294901760
    %6756 = vmatpush1.msra.mxu0 %v6755
    %6757 = vmatprep.subr.mxu0 0.0
    %v6758 = vand.u32 %v1554, 4294901760
    %v6759 = vsub.f32 %v1554, %v6758
    %v6760 = vand.u32 %v6759, 4294901760
    %6761 = vmatpush1.msra.mxu0 %v6760
    %6762 = vmatprep.subr.mxu0 0.0
    %v6763 = vand.u32 %v1555, 4294901760
    %v6764 = vsub.f32 %v1555, %v6763
    %v6765 = vand.u32 %v6764, 4294901760
    %6766 = vmatpush1.msra.mxu0 %v6765
    %6767 = vmatprep.subr.mxu0 0.0
    %v6768 = vand.u32 %v1556, 4294901760
    %v6769 = vsub.f32 %v1556, %v6768
    %v6770 = vand.u32 %v6769, 4294901760
    %6771 = vmatpush1.msra.mxu0 %v6770
    %6772 = vmatprep.subr.mxu0 0.0
    %v6773 = vand.u32 %v1557, 4294901760
    %v6774 = vsub.f32 %v1557, %v6773
    %v6775 = vand.u32 %v6774, 4294901760
    %6776 = vmatpush1.msra.mxu0 %v6775
    %v6777 = vand.u32 %v1683, 4294901760
    %6778 = vmatprep.mubr.f32.mxu0 %v6777
    %v6779 = vand.u32 %v1681, 4294901760
    %6780 = vmatmul.mubr.f32.gmra.mrb[0].mxu0 %v6779
    %v6781 = vpop.f32.mrb[0].mxu0
    %v6782 = vadd.f32 %v6614, %v6781
    %v6783 = vpop.f32.mrb[0].mxu0
    %6784 = vdwg.mxu0
    %6785 = vmatprep.subr.mxu0 0.0
    %v6786 = vand.u32 %v1526, 4294901760
    %6787 = vmatpush1.msra.mxu0 %v6786
    %6788 = vmatprep.subr.mxu0 0.0
    %v6789 = vand.u32 %v1527, 4294901760
    %6790 = vmatpush1.msra.mxu0 %v6789
    %6791 = vmatprep.subr.mxu0 0.0
    %v6792 = vand.u32 %v1528, 4294901760
    %6793 = vmatpush1.msra.mxu0 %v6792
    %6794 = vmatprep.subr.mxu0 0.0
    %v6795 = vand.u32 %v1529, 4294901760
    %6796 = vmatpush1.msra.mxu0 %v6795
    %6797 = vmatprep.subr.mxu0 0.0
    %v6798 = vand.u32 %v1530, 4294901760
    %6799 = vmatpush1.msra.mxu0 %v6798
    %6800 = vmatprep.subr.mxu0 0.0
    %v6801 = vand.u32 %v1531, 4294901760
    %6802 = vmatpush1.msra.mxu0 %v6801
    %6803 = vmatprep.subr.mxu0 0.0
    %v6804 = vand.u32 %v1532, 4294901760
    %6805 = vmatpush1.msra.mxu0 %v6804
    %6806 = vmatprep.subr.mxu0 0.0
    %v6807 = vand.u32 %v1533, 4294901760
    %6808 = vmatpush1.msra.mxu0 %v6807
    %6809 = vmatprep.subr.mxu0 0.0
    %v6810 = vand.u32 %v1534, 4294901760
    %6811 = vmatpush1.msra.mxu0 %v6810
    %6812 = vmatprep.subr.mxu0 0.0
    %v6813 = vand.u32 %v1535, 4294901760
    %6814 = vmatpush1.msra.mxu0 %v6813
    %6815 = vmatprep.subr.mxu0 0.0
    %v6816 = vand.u32 %v1536, 4294901760
    %6817 = vmatpush1.msra.mxu0 %v6816
    %6818 = vmatprep.subr.mxu0 0.0
    %v6819 = vand.u32 %v1537, 4294901760
    %6820 = vmatpush1.msra.mxu0 %v6819
    %6821 = vmatprep.subr.mxu0 0.0
    %v6822 = vand.u32 %v1538, 4294901760
    %6823 = vmatpush1.msra.mxu0 %v6822
    %6824 = vmatprep.subr.mxu0 0.0
    %v6825 = vand.u32 %v1539, 4294901760
    %6826 = vmatpush1.msra.mxu0 %v6825
    %6827 = vmatprep.subr.mxu0 0.0
    %v6828 = vand.u32 %v1540, 4294901760
    %6829 = vmatpush1.msra.mxu0 %v6828
    %6830 = vmatprep.subr.mxu0 0.0
    %v6831 = vand.u32 %v1541, 4294901760
    %6832 = vmatpush1.msra.mxu0 %v6831
    %6833 = vmatprep.subr.mxu0 0.0
    %v6834 = vand.u32 %v1542, 4294901760
    %6835 = vmatpush1.msra.mxu0 %v6834
    %6836 = vmatprep.subr.mxu0 0.0
    %v6837 = vand.u32 %v1543, 4294901760
    %6838 = vmatpush1.msra.mxu0 %v6837
    %6839 = vmatprep.subr.mxu0 0.0
    %v6840 = vand.u32 %v1544, 4294901760
    %6841 = vmatpush1.msra.mxu0 %v6840
    %6842 = vmatprep.subr.mxu0 0.0
    %v6843 = vand.u32 %v1545, 4294901760
    %6844 = vmatpush1.msra.mxu0 %v6843
    %6845 = vmatprep.subr.mxu0 0.0
    %v6846 = vand.u32 %v1546, 4294901760
    %6847 = vmatpush1.msra.mxu0 %v6846
    %6848 = vmatprep.subr.mxu0 0.0
    %v6849 = vand.u32 %v1547, 4294901760
    %6850 = vmatpush1.msra.mxu0 %v6849
    %6851 = vmatprep.subr.mxu0 0.0
    %v6852 = vand.u32 %v1548, 4294901760
    %6853 = vmatpush1.msra.mxu0 %v6852
    %6854 = vmatprep.subr.mxu0 0.0
    %v6855 = vand.u32 %v1549, 4294901760
    %6856 = vmatpush1.msra.mxu0 %v6855
    %6857 = vmatprep.subr.mxu0 0.0
    %v6858 = vand.u32 %v1550, 4294901760
    %6859 = vmatpush1.msra.mxu0 %v6858
    %6860 = vmatprep.subr.mxu0 0.0
    %v6861 = vand.u32 %v1551, 4294901760
    %6862 = vmatpush1.msra.mxu0 %v6861
    %6863 = vmatprep.subr.mxu0 0.0
    %v6864 = vand.u32 %v1552, 4294901760
    %6865 = vmatpush1.msra.mxu0 %v6864
    %6866 = vmatprep.subr.mxu0 0.0
    %v6867 = vand.u32 %v1553, 4294901760
    %6868 = vmatpush1.msra.mxu0 %v6867
    %6869 = vmatprep.subr.mxu0 0.0
    %v6870 = vand.u32 %v1554, 4294901760
    %6871 = vmatpush1.msra.mxu0 %v6870
    %6872 = vmatprep.subr.mxu0 0.0
    %v6873 = vand.u32 %v1555, 4294901760
    %6874 = vmatpush1.msra.mxu0 %v6873
    %6875 = vmatprep.subr.mxu0 0.0
    %v6876 = vand.u32 %v1556, 4294901760
    %6877 = vmatpush1.msra.mxu0 %v6876
    %6878 = vmatprep.subr.mxu0 0.0
    %v6879 = vand.u32 %v1557, 4294901760
    %6880 = vmatpush1.msra.mxu0 %v6879
    %v6881 = vand.u32 %v1683, 4294901760
    %6882 = vmatprep.mubr.f32.mxu0 %v6881
    %v6883 = vand.u32 %v1681, 4294901760
    %6884 = vmatmul.mubr.f32.gmra.mrb[0].mxu0 %v6883
    %v6885 = vpop.f32.mrb[0].mxu0
    %v6886 = vadd.f32 %v6782, %v6885
    %v6887 = vpop.f32.mrb[0].mxu0
    %6888 = vdwg.mxu0
    %6889 = vmatprep.subr.mxu0 0.0
    %v6890 = vand.u32 %v1558, 4294901760
    %6891 = vmatpush1.msra.mxu0 %v6890
    %6892 = vmatprep.subr.mxu0 0.0
    %v6893 = vand.u32 %v1559, 4294901760
    %6894 = vmatpush1.msra.mxu0 %v6893
    %6895 = vmatprep.subr.mxu0 0.0
    %v6896 = vand.u32 %v1560, 4294901760
    %6897 = vmatpush1.msra.mxu0 %v6896
    %6898 = vmatprep.subr.mxu0 0.0
    %v6899 = vand.u32 %v1561, 4294901760
    %6900 = vmatpush1.msra.mxu0 %v6899
    %6901 = vmatprep.subr.mxu0 0.0
    %v6902 = vand.u32 %v1562, 4294901760
    %6903 = vmatpush1.msra.mxu0 %v6902
    %6904 = vmatprep.subr.mxu0 0.0
    %v6905 = vand.u32 %v1563, 4294901760
    %6906 = vmatpush1.msra.mxu0 %v6905
    %6907 = vmatprep.subr.mxu0 0.0
    %v6908 = vand.u32 %v1564, 4294901760
    %6909 = vmatpush1.msra.mxu0 %v6908
    %6910 = vmatprep.subr.mxu0 0.0
    %v6911 = vand.u32 %v1565, 4294901760
    %6912 = vmatpush1.msra.mxu0 %v6911
    %6913 = vmatprep.subr.mxu0 0.0
    %v6914 = vand.u32 %v1566, 4294901760
    %6915 = vmatpush1.msra.mxu0 %v6914
    %6916 = vmatprep.subr.mxu0 0.0
    %v6917 = vand.u32 %v1567, 4294901760
    %6918 = vmatpush1.msra.mxu0 %v6917
    %6919 = vmatprep.subr.mxu0 0.0
    %v6920 = vand.u32 %v1568, 4294901760
    %6921 = vmatpush1.msra.mxu0 %v6920
    %6922 = vmatprep.subr.mxu0 0.0
    %v6923 = vand.u32 %v1569, 4294901760
    %6924 = vmatpush1.msra.mxu0 %v6923
    %6925 = vmatprep.subr.mxu0 0.0
    %v6926 = vand.u32 %v1570, 4294901760
    %6927 = vmatpush1.msra.mxu0 %v6926
    %6928 = vmatprep.subr.mxu0 0.0
    %v6929 = vand.u32 %v1571, 4294901760
    %6930 = vmatpush1.msra.mxu0 %v6929
    %6931 = vmatprep.subr.mxu0 0.0
    %v6932 = vand.u32 %v1572, 4294901760
    %6933 = vmatpush1.msra.mxu0 %v6932
    %6934 = vmatprep.subr.mxu0 0.0
    %v6935 = vand.u32 %v1573, 4294901760
    %6936 = vmatpush1.msra.mxu0 %v6935
    %6937 = vmatprep.subr.mxu0 0.0
    %v6938 = vand.u32 %v1574, 4294901760
    %6939 = vmatpush1.msra.mxu0 %v6938
    %6940 = vmatprep.subr.mxu0 0.0
    %v6941 = vand.u32 %v1575, 4294901760
    %6942 = vmatpush1.msra.mxu0 %v6941
    %6943 = vmatprep.subr.mxu0 0.0
    %v6944 = vand.u32 %v1576, 4294901760
    %6945 = vmatpush1.msra.mxu0 %v6944
    %6946 = vmatprep.subr.mxu0 0.0
    %v6947 = vand.u32 %v1577, 4294901760
    %6948 = vmatpush1.msra.mxu0 %v6947
    %6949 = vmatprep.subr.mxu0 0.0
    %v6950 = vand.u32 %v1578, 4294901760
    %6951 = vmatpush1.msra.mxu0 %v6950
    %6952 = vmatprep.subr.mxu0 0.0
    %v6953 = vand.u32 %v1579, 4294901760
    %6954 = vmatpush1.msra.mxu0 %v6953
    %6955 = vmatprep.subr.mxu0 0.0
    %v6956 = vand.u32 %v1580, 4294901760
    %6957 = vmatpush1.msra.mxu0 %v6956
    %6958 = vmatprep.subr.mxu0 0.0
    %v6959 = vand.u32 %v1581, 4294901760
    %6960 = vmatpush1.msra.mxu0 %v6959
    %6961 = vmatprep.subr.mxu0 0.0
    %v6962 = vand.u32 %v1582, 4294901760
    %6963 = vmatpush1.msra.mxu0 %v6962
    %6964 = vmatprep.subr.mxu0 0.0
    %v6965 = vand.u32 %v1583, 4294901760
    %6966 = vmatpush1.msra.mxu0 %v6965
    %6967 = vmatprep.subr.mxu0 0.0
    %v6968 = vand.u32 %v1584, 4294901760
    %6969 = vmatpush1.msra.mxu0 %v6968
    %6970 = vmatprep.subr.mxu0 0.0
    %v6971 = vand.u32 %v1585, 4294901760
    %6972 = vmatpush1.msra.mxu0 %v6971
    %6973 = vmatprep.subr.mxu0 0.0
    %v6974 = vand.u32 %v1586, 4294901760
    %6975 = vmatpush1.msra.mxu0 %v6974
    %6976 = vmatprep.subr.mxu0 0.0
    %v6977 = vand.u32 %v1587, 4294901760
    %6978 = vmatpush1.msra.mxu0 %v6977
    %6979 = vmatprep.subr.mxu0 0.0
    %v6980 = vand.u32 %v1588, 4294901760
    %6981 = vmatpush1.msra.mxu0 %v6980
    %6982 = vmatprep.subr.mxu0 0.0
    %v6983 = vand.u32 %v1589, 4294901760
    %6984 = vmatpush1.msra.mxu0 %v6983
    %v6985 = vand.u32 %v1699, 4294901760
    %v6986 = vsub.f32 %v1699, %v6985
    %v6987 = vand.u32 %v6986, 4294901760
    %v6988 = vsub.f32 %v6986, %v6987
    %v6989 = vand.u32 %v6988, 4294901760
    %6990 = vmatprep.mubr.f32.mxu0 %v6989
    %v6991 = vand.u32 %v1691, 4294901760
    %v6992 = vsub.f32 %v1691, %v6991
    %v6993 = vand.u32 %v6992, 4294901760
    %v6994 = vsub.f32 %v6992, %v6993
    %v6995 = vand.u32 %v6994, 4294901760
    %6996 = vmatmul.mubr.f32.gmra.mrb[0].mxu0 %v6995
    %v6997 = vpop.f32.mrb[0].mxu0
    %v6998 = vadd.f32 %v6886, %v6997
    %v6999 = vpop.f32.mrb[0].mxu0
    %7000 = vdwg.mxu0
    %7001 = vmatprep.subr.mxu0 0.0
    %v7002 = vand.u32 %v1558, 4294901760
    %v7003 = vsub.f32 %v1558, %v7002
    %v7004 = vand.u32 %v7003, 4294901760
    %v7005 = vsub.f32 %v7003, %v7004
    %v7006 = vand.u32 %v7005, 4294901760
    %7007 = vmatpush1.msra.mxu0 %v7006
    %7008 = vmatprep.subr.mxu0 0.0
    %v7009 = vand.u32 %v1559, 4294901760
    %v7010 = vsub.f32 %v1559, %v7009
    %v7011 = vand.u32 %v7010, 4294901760
    %v7012 = vsub.f32 %v7010, %v7011
    %v7013 = vand.u32 %v7012, 4294901760
    %7014 = vmatpush1.msra.mxu0 %v7013
    %7015 = vmatprep.subr.mxu0 0.0
    %v7016 = vand.u32 %v1560, 4294901760
    %v7017 = vsub.f32 %v1560, %v7016
    %v7018 = vand.u32 %v7017, 4294901760
    %v7019 = vsub.f32 %v7017, %v7018
    %v7020 = vand.u32 %v7019, 4294901760
    %7021 = vmatpush1.msra.mxu0 %v7020
    %7022 = vmatprep.subr.mxu0 0.0
    %v7023 = vand.u32 %v1561, 4294901760
    %v7024 = vsub.f32 %v1561, %v7023
    %v7025 = vand.u32 %v7024, 4294901760
    %v7026 = vsub.f32 %v7024, %v7025
    %v7027 = vand.u32 %v7026, 4294901760
    %7028 = vmatpush1.msra.mxu0 %v7027
    %7029 = vmatprep.subr.mxu0 0.0
    %v7030 = vand.u32 %v1562, 4294901760
    %v7031 = vsub.f32 %v1562, %v7030
    %v7032 = vand.u32 %v7031, 4294901760
    %v7033 = vsub.f32 %v7031, %v7032
    %v7034 = vand.u32 %v7033, 4294901760
    %7035 = vmatpush1.msra.mxu0 %v7034
    %7036 = vmatprep.subr.mxu0 0.0
    %v7037 = vand.u32 %v1563, 4294901760
    %v7038 = vsub.f32 %v1563, %v7037
    %v7039 = vand.u32 %v7038, 4294901760
    %v7040 = vsub.f32 %v7038, %v7039
    %v7041 = vand.u32 %v7040, 4294901760
    %7042 = vmatpush1.msra.mxu0 %v7041
    %7043 = vmatprep.subr.mxu0 0.0
    %v7044 = vand.u32 %v1564, 4294901760
    %v7045 = vsub.f32 %v1564, %v7044
    %v7046 = vand.u32 %v7045, 4294901760
    %v7047 = vsub.f32 %v7045, %v7046
    %v7048 = vand.u32 %v7047, 4294901760
    %7049 = vmatpush1.msra.mxu0 %v7048
    %7050 = vmatprep.subr.mxu0 0.0
    %v7051 = vand.u32 %v1565, 4294901760
    %v7052 = vsub.f32 %v1565, %v7051
    %v7053 = vand.u32 %v7052, 4294901760
    %v7054 = vsub.f32 %v7052, %v7053
    %v7055 = vand.u32 %v7054, 4294901760
    %7056 = vmatpush1.msra.mxu0 %v7055
    %7057 = vmatprep.subr.mxu0 0.0
    %v7058 = vand.u32 %v1566, 4294901760
    %v7059 = vsub.f32 %v1566, %v7058
    %v7060 = vand.u32 %v7059, 4294901760
    %v7061 = vsub.f32 %v7059, %v7060
    %v7062 = vand.u32 %v7061, 4294901760
    %7063 = vmatpush1.msra.mxu0 %v7062
    %7064 = vmatprep.subr.mxu0 0.0
    %v7065 = vand.u32 %v1567, 4294901760
    %v7066 = vsub.f32 %v1567, %v7065
    %v7067 = vand.u32 %v7066, 4294901760
    %v7068 = vsub.f32 %v7066, %v7067
    %v7069 = vand.u32 %v7068, 4294901760
    %7070 = vmatpush1.msra.mxu0 %v7069
    %7071 = vmatprep.subr.mxu0 0.0
    %v7072 = vand.u32 %v1568, 4294901760
    %v7073 = vsub.f32 %v1568, %v7072
    %v7074 = vand.u32 %v7073, 4294901760
    %v7075 = vsub.f32 %v7073, %v7074
    %v7076 = vand.u32 %v7075, 4294901760
    %7077 = vmatpush1.msra.mxu0 %v7076
    %7078 = vmatprep.subr.mxu0 0.0
    %v7079 = vand.u32 %v1569, 4294901760
    %v7080 = vsub.f32 %v1569, %v7079
    %v7081 = vand.u32 %v7080, 4294901760
    %v7082 = vsub.f32 %v7080, %v7081
    %v7083 = vand.u32 %v7082, 4294901760
    %7084 = vmatpush1.msra.mxu0 %v7083
    %7085 = vmatprep.subr.mxu0 0.0
    %v7086 = vand.u32 %v1570, 4294901760
    %v7087 = vsub.f32 %v1570, %v7086
    %v7088 = vand.u32 %v7087, 4294901760
    %v7089 = vsub.f32 %v7087, %v7088
    %v7090 = vand.u32 %v7089, 4294901760
    %7091 = vmatpush1.msra.mxu0 %v7090
    %7092 = vmatprep.subr.mxu0 0.0
    %v7093 = vand.u32 %v1571, 4294901760
    %v7094 = vsub.f32 %v1571, %v7093
    %v7095 = vand.u32 %v7094, 4294901760
    %v7096 = vsub.f32 %v7094, %v7095
    %v7097 = vand.u32 %v7096, 4294901760
    %7098 = vmatpush1.msra.mxu0 %v7097
    %7099 = vmatprep.subr.mxu0 0.0
    %v7100 = vand.u32 %v1572, 4294901760
    %v7101 = vsub.f32 %v1572, %v7100
    %v7102 = vand.u32 %v7101, 4294901760
    %v7103 = vsub.f32 %v7101, %v7102
    %v7104 = vand.u32 %v7103, 4294901760
    %7105 = vmatpush1.msra.mxu0 %v7104
    %7106 = vmatprep.subr.mxu0 0.0
    %v7107 = vand.u32 %v1573, 4294901760
    %v7108 = vsub.f32 %v1573, %v7107
    %v7109 = vand.u32 %v7108, 4294901760
    %v7110 = vsub.f32 %v7108, %v7109
    %v7111 = vand.u32 %v7110, 4294901760
    %7112 = vmatpush1.msra.mxu0 %v7111
    %7113 = vmatprep.subr.mxu0 0.0
    %v7114 = vand.u32 %v1574, 4294901760
    %v7115 = vsub.f32 %v1574, %v7114
    %v7116 = vand.u32 %v7115, 4294901760
    %v7117 = vsub.f32 %v7115, %v7116
    %v7118 = vand.u32 %v7117, 4294901760
    %7119 = vmatpush1.msra.mxu0 %v7118
    %7120 = vmatprep.subr.mxu0 0.0
    %v7121 = vand.u32 %v1575, 4294901760
    %v7122 = vsub.f32 %v1575, %v7121
    %v7123 = vand.u32 %v7122, 4294901760
    %v7124 = vsub.f32 %v7122, %v7123
    %v7125 = vand.u32 %v7124, 4294901760
    %7126 = vmatpush1.msra.mxu0 %v7125
    %7127 = vmatprep.subr.mxu0 0.0
    %v7128 = vand.u32 %v1576, 4294901760
    %v7129 = vsub.f32 %v1576, %v7128
    %v7130 = vand.u32 %v7129, 4294901760
    %v7131 = vsub.f32 %v7129, %v7130
    %v7132 = vand.u32 %v7131, 4294901760
    %7133 = vmatpush1.msra.mxu0 %v7132
    %7134 = vmatprep.subr.mxu0 0.0
    %v7135 = vand.u32 %v1577, 4294901760
    %v7136 = vsub.f32 %v1577, %v7135
    %v7137 = vand.u32 %v7136, 4294901760
    %v7138 = vsub.f32 %v7136, %v7137
    %v7139 = vand.u32 %v7138, 4294901760
    %7140 = vmatpush1.msra.mxu0 %v7139
    %7141 = vmatprep.subr.mxu0 0.0
    %v7142 = vand.u32 %v1578, 4294901760
    %v7143 = vsub.f32 %v1578, %v7142
    %v7144 = vand.u32 %v7143, 4294901760
    %v7145 = vsub.f32 %v7143, %v7144
    %v7146 = vand.u32 %v7145, 4294901760
    %7147 = vmatpush1.msra.mxu0 %v7146
    %7148 = vmatprep.subr.mxu0 0.0
    %v7149 = vand.u32 %v1579, 4294901760
    %v7150 = vsub.f32 %v1579, %v7149
    %v7151 = vand.u32 %v7150, 4294901760
    %v7152 = vsub.f32 %v7150, %v7151
    %v7153 = vand.u32 %v7152, 4294901760
    %7154 = vmatpush1.msra.mxu0 %v7153
    %7155 = vmatprep.subr.mxu0 0.0
    %v7156 = vand.u32 %v1580, 4294901760
    %v7157 = vsub.f32 %v1580, %v7156
    %v7158 = vand.u32 %v7157, 4294901760
    %v7159 = vsub.f32 %v7157, %v7158
    %v7160 = vand.u32 %v7159, 4294901760
    %7161 = vmatpush1.msra.mxu0 %v7160
    %7162 = vmatprep.subr.mxu0 0.0
    %v7163 = vand.u32 %v1581, 4294901760
    %v7164 = vsub.f32 %v1581, %v7163
    %v7165 = vand.u32 %v7164, 4294901760
    %v7166 = vsub.f32 %v7164, %v7165
    %v7167 = vand.u32 %v7166, 4294901760
    %7168 = vmatpush1.msra.mxu0 %v7167
    %7169 = vmatprep.subr.mxu0 0.0
    %v7170 = vand.u32 %v1582, 4294901760
    %v7171 = vsub.f32 %v1582, %v7170
    %v7172 = vand.u32 %v7171, 4294901760
    %v7173 = vsub.f32 %v7171, %v7172
    %v7174 = vand.u32 %v7173, 4294901760
    %7175 = vmatpush1.msra.mxu0 %v7174
    %7176 = vmatprep.subr.mxu0 0.0
    %v7177 = vand.u32 %v1583, 4294901760
    %v7178 = vsub.f32 %v1583, %v7177
    %v7179 = vand.u32 %v7178, 4294901760
    %v7180 = vsub.f32 %v7178, %v7179
    %v7181 = vand.u32 %v7180, 4294901760
    %7182 = vmatpush1.msra.mxu0 %v7181
    %7183 = vmatprep.subr.mxu0 0.0
    %v7184 = vand.u32 %v1584, 4294901760
    %v7185 = vsub.f32 %v1584, %v7184
    %v7186 = vand.u32 %v7185, 4294901760
    %v7187 = vsub.f32 %v7185, %v7186
    %v7188 = vand.u32 %v7187, 4294901760
    %7189 = vmatpush1.msra.mxu0 %v7188
    %7190 = vmatprep.subr.mxu0 0.0
    %v7191 = vand.u32 %v1585, 4294901760
    %v7192 = vsub.f32 %v1585, %v7191
    %v7193 = vand.u32 %v7192, 4294901760
    %v7194 = vsub.f32 %v7192, %v7193
    %v7195 = vand.u32 %v7194, 4294901760
    %7196 = vmatpush1.msra.mxu0 %v7195
    %7197 = vmatprep.subr.mxu0 0.0
    %v7198 = vand.u32 %v1586, 4294901760
    %v7199 = vsub.f32 %v1586, %v7198
    %v7200 = vand.u32 %v7199, 4294901760
    %v7201 = vsub.f32 %v7199, %v7200
    %v7202 = vand.u32 %v7201, 4294901760
    %7203 = vmatpush1.msra.mxu0 %v7202
    %7204 = vmatprep.subr.mxu0 0.0
    %v7205 = vand.u32 %v1587, 4294901760
    %v7206 = vsub.f32 %v1587, %v7205
    %v7207 = vand.u32 %v7206, 4294901760
    %v7208 = vsub.f32 %v7206, %v7207
    %v7209 = vand.u32 %v7208, 4294901760
    %7210 = vmatpush1.msra.mxu0 %v7209
    %7211 = vmatprep.subr.mxu0 0.0
    %v7212 = vand.u32 %v1588, 4294901760
    %v7213 = vsub.f32 %v1588, %v7212
    %v7214 = vand.u32 %v7213, 4294901760
    %v7215 = vsub.f32 %v7213, %v7214
    %v7216 = vand.u32 %v7215, 4294901760
    %7217 = vmatpush1.msra.mxu0 %v7216
    %7218 = vmatprep.subr.mxu0 0.0
    %v7219 = vand.u32 %v1589, 4294901760
    %v7220 = vsub.f32 %v1589, %v7219
    %v7221 = vand.u32 %v7220, 4294901760
    %v7222 = vsub.f32 %v7220, %v7221
    %v7223 = vand.u32 %v7222, 4294901760
    %7224 = vmatpush1.msra.mxu0 %v7223
    %v7225 = vand.u32 %v1699, 4294901760
    %7226 = vmatprep.mubr.f32.mxu0 %v7225
    %v7227 = vand.u32 %v1691, 4294901760
    %7228 = vmatmul.mubr.f32.gmra.mrb[0].mxu0 %v7227
    %v7229 = vpop.f32.mrb[0].mxu0
    %v7230 = vadd.f32 %v6998, %v7229
    %v7231 = vpop.f32.mrb[0].mxu0
    %7232 = vdwg.mxu0
    %7233 = vmatprep.subr.mxu0 0.0
    %v7234 = vand.u32 %v1558, 4294901760
    %v7235 = vsub.f32 %v1558, %v7234
    %7236 = vmatpush1.msra.mxu0 %v7235
    %7237 = vmatprep.subr.mxu0 0.0
    %v7238 = vand.u32 %v1559, 4294901760
    %v7239 = vsub.f32 %v1559, %v7238
    %7240 = vmatpush1.msra.mxu0 %v7239
    %7241 = vmatprep.subr.mxu0 0.0
    %v7242 = vand.u32 %v1560, 4294901760
    %v7243 = vsub.f32 %v1560, %v7242
    %7244 = vmatpush1.msra.mxu0 %v7243
    %7245 = vmatprep.subr.mxu0 0.0
    %v7246 = vand.u32 %v1561, 4294901760
    %v7247 = vsub.f32 %v1561, %v7246
    %7248 = vmatpush1.msra.mxu0 %v7247
    %7249 = vmatprep.subr.mxu0 0.0
    %v7250 = vand.u32 %v1562, 4294901760
    %v7251 = vsub.f32 %v1562, %v7250
    %7252 = vmatpush1.msra.mxu0 %v7251
    %7253 = vmatprep.subr.mxu0 0.0
    %v7254 = vand.u32 %v1563, 4294901760
    %v7255 = vsub.f32 %v1563, %v7254
    %7256 = vmatpush1.msra.mxu0 %v7255
    %7257 = vmatprep.subr.mxu0 0.0
    %v7258 = vand.u32 %v1564, 4294901760
    %v7259 = vsub.f32 %v1564, %v7258
    %7260 = vmatpush1.msra.mxu0 %v7259
    %7261 = vmatprep.subr.mxu0 0.0
    %v7262 = vand.u32 %v1565, 4294901760
    %v7263 = vsub.f32 %v1565, %v7262
    %7264 = vmatpush1.msra.mxu0 %v7263
    %7265 = vmatprep.subr.mxu0 0.0
    %v7266 = vand.u32 %v1566, 4294901760
    %v7267 = vsub.f32 %v1566, %v7266
    %7268 = vmatpush1.msra.mxu0 %v7267
    %7269 = vmatprep.subr.mxu0 0.0
    %v7270 = vand.u32 %v1567, 4294901760
    %v7271 = vsub.f32 %v1567, %v7270
    %7272 = vmatpush1.msra.mxu0 %v7271
    %7273 = vmatprep.subr.mxu0 0.0
    %v7274 = vand.u32 %v1568, 4294901760
    %v7275 = vsub.f32 %v1568, %v7274
    %7276 = vmatpush1.msra.mxu0 %v7275
    %7277 = vmatprep.subr.mxu0 0.0
    %v7278 = vand.u32 %v1569, 4294901760
    %v7279 = vsub.f32 %v1569, %v7278
    %7280 = vmatpush1.msra.mxu0 %v7279
    %7281 = vmatprep.subr.mxu0 0.0
    %v7282 = vand.u32 %v1570, 4294901760
    %v7283 = vsub.f32 %v1570, %v7282
    %7284 = vmatpush1.msra.mxu0 %v7283
    %7285 = vmatprep.subr.mxu0 0.0
    %v7286 = vand.u32 %v1571, 4294901760
    %v7287 = vsub.f32 %v1571, %v7286
    %7288 = vmatpush1.msra.mxu0 %v7287
    %7289 = vmatprep.subr.mxu0 0.0
    %v7290 = vand.u32 %v1572, 4294901760
    %v7291 = vsub.f32 %v1572, %v7290
    %7292 = vmatpush1.msra.mxu0 %v7291
    %7293 = vmatprep.subr.mxu0 0.0
    %v7294 = vand.u32 %v1573, 4294901760
    %v7295 = vsub.f32 %v1573, %v7294
    %7296 = vmatpush1.msra.mxu0 %v7295
    %7297 = vmatprep.subr.mxu0 0.0
    %v7298 = vand.u32 %v1574, 4294901760
    %v7299 = vsub.f32 %v1574, %v7298
    %7300 = vmatpush1.msra.mxu0 %v7299
    %7301 = vmatprep.subr.mxu0 0.0
    %v7302 = vand.u32 %v1575, 4294901760
    %v7303 = vsub.f32 %v1575, %v7302
    %7304 = vmatpush1.msra.mxu0 %v7303
    %7305 = vmatprep.subr.mxu0 0.0
    %v7306 = vand.u32 %v1576, 4294901760
    %v7307 = vsub.f32 %v1576, %v7306
    %7308 = vmatpush1.msra.mxu0 %v7307
    %7309 = vmatprep.subr.mxu0 0.0
    %v7310 = vand.u32 %v1577, 4294901760
    %v7311 = vsub.f32 %v1577, %v7310
    %7312 = vmatpush1.msra.mxu0 %v7311
    %7313 = vmatprep.subr.mxu0 0.0
    %v7314 = vand.u32 %v1578, 4294901760
    %v7315 = vsub.f32 %v1578, %v7314
    %7316 = vmatpush1.msra.mxu0 %v7315
    %7317 = vmatprep.subr.mxu0 0.0
    %v7318 = vand.u32 %v1579, 4294901760
    %v7319 = vsub.f32 %v1579, %v7318
    %7320 = vmatpush1.msra.mxu0 %v7319
    %7321 = vmatprep.subr.mxu0 0.0
    %v7322 = vand.u32 %v1580, 4294901760
    %v7323 = vsub.f32 %v1580, %v7322
    %7324 = vmatpush1.msra.mxu0 %v7323
    %7325 = vmatprep.subr.mxu0 0.0
    %v7326 = vand.u32 %v1581, 4294901760
    %v7327 = vsub.f32 %v1581, %v7326
    %7328 = vmatpush1.msra.mxu0 %v7327
    %7329 = vmatprep.subr.mxu0 0.0
    %v7330 = vand.u32 %v1582, 4294901760
    %v7331 = vsub.f32 %v1582, %v7330
    %7332 = vmatpush1.msra.mxu0 %v7331
    %7333 = vmatprep.subr.mxu0 0.0
    %v7334 = vand.u32 %v1583, 4294901760
    %v7335 = vsub.f32 %v1583, %v7334
    %7336 = vmatpush1.msra.mxu0 %v7335
    %7337 = vmatprep.subr.mxu0 0.0
    %v7338 = vand.u32 %v1584, 4294901760
    %v7339 = vsub.f32 %v1584, %v7338
    %7340 = vmatpush1.msra.mxu0 %v7339
    %7341 = vmatprep.subr.mxu0 0.0
    %v7342 = vand.u32 %v1585, 4294901760
    %v7343 = vsub.f32 %v1585, %v7342
    %7344 = vmatpush1.msra.mxu0 %v7343
    %7345 = vmatprep.subr.mxu0 0.0
    %v7346 = vand.u32 %v1586, 4294901760
    %v7347 = vsub.f32 %v1586, %v7346
    %7348 = vmatpush1.msra.mxu0 %v7347
    %7349 = vmatprep.subr.mxu0 0.0
    %v7350 = vand.u32 %v1587, 4294901760
    %v7351 = vsub.f32 %v1587, %v7350
    %7352 = vmatpush1.msra.mxu0 %v7351
    %7353 = vmatprep.subr.mxu0 0.0
    %v7354 = vand.u32 %v1588, 4294901760
    %v7355 = vsub.f32 %v1588, %v7354
    %7356 = vmatpush1.msra.mxu0 %v7355
    %7357 = vmatprep.subr.mxu0 0.0
    %v7358 = vand.u32 %v1589, 4294901760
    %v7359 = vsub.f32 %v1589, %v7358
    %7360 = vmatpush1.msra.mxu0 %v7359
    %v7361 = vand.u32 %v1699, 4294901760
    %v7362 = vsub.f32 %v1699, %v7361
    %7363 = vmatprep.mubr.f32.mxu0 %v7362
    %v7364 = vand.u32 %v1691, 4294901760
    %v7365 = vsub.f32 %v1691, %v7364
    %7366 = vmatmul.mubr.f32.gmra.mrb[0].mxu0 %v7365
    %v7367 = vpop.f32.mrb[0].mxu0
    %v7368 = vadd.f32 %v7230, %v7367
    %v7369 = vpop.f32.mrb[0].mxu0
    %7370 = vdwg.mxu0
    %7371 = vmatprep.subr.mxu0 0.0
    %v7372 = vand.u32 %v1558, 4294901760
    %7373 = vmatpush1.msra.mxu0 %v7372
    %7374 = vmatprep.subr.mxu0 0.0
    %v7375 = vand.u32 %v1559, 4294901760
    %7376 = vmatpush1.msra.mxu0 %v7375
    %7377 = vmatprep.subr.mxu0 0.0
    %v7378 = vand.u32 %v1560, 4294901760
    %7379 = vmatpush1.msra.mxu0 %v7378
    %7380 = vmatprep.subr.mxu0 0.0
    %v7381 = vand.u32 %v1561, 4294901760
    %7382 = vmatpush1.msra.mxu0 %v7381
    %7383 = vmatprep.subr.mxu0 0.0
    %v7384 = vand.u32 %v1562, 4294901760
    %7385 = vmatpush1.msra.mxu0 %v7384
    %7386 = vmatprep.subr.mxu0 0.0
    %v7387 = vand.u32 %v1563, 4294901760
    %7388 = vmatpush1.msra.mxu0 %v7387
    %7389 = vmatprep.subr.mxu0 0.0
    %v7390 = vand.u32 %v1564, 4294901760
    %7391 = vmatpush1.msra.mxu0 %v7390
    %7392 = vmatprep.subr.mxu0 0.0
    %v7393 = vand.u32 %v1565, 4294901760
    %7394 = vmatpush1.msra.mxu0 %v7393
    %7395 = vmatprep.subr.mxu0 0.0
    %v7396 = vand.u32 %v1566, 4294901760
    %7397 = vmatpush1.msra.mxu0 %v7396
    %7398 = vmatprep.subr.mxu0 0.0
    %v7399 = vand.u32 %v1567, 4294901760
    %7400 = vmatpush1.msra.mxu0 %v7399
    %7401 = vmatprep.subr.mxu0 0.0
    %v7402 = vand.u32 %v1568, 4294901760
    %7403 = vmatpush1.msra.mxu0 %v7402
    %7404 = vmatprep.subr.mxu0 0.0
    %v7405 = vand.u32 %v1569, 4294901760
    %7406 = vmatpush1.msra.mxu0 %v7405
    %7407 = vmatprep.subr.mxu0 0.0
    %v7408 = vand.u32 %v1570, 4294901760
    %7409 = vmatpush1.msra.mxu0 %v7408
    %7410 = vmatprep.subr.mxu0 0.0
    %v7411 = vand.u32 %v1571, 4294901760
    %7412 = vmatpush1.msra.mxu0 %v7411
    %7413 = vmatprep.subr.mxu0 0.0
    %v7414 = vand.u32 %v1572, 4294901760
    %7415 = vmatpush1.msra.mxu0 %v7414
    %7416 = vmatprep.subr.mxu0 0.0
    %v7417 = vand.u32 %v1573, 4294901760
    %7418 = vmatpush1.msra.mxu0 %v7417
    %7419 = vmatprep.subr.mxu0 0.0
    %v7420 = vand.u32 %v1574, 4294901760
    %7421 = vmatpush1.msra.mxu0 %v7420
    %7422 = vmatprep.subr.mxu0 0.0
    %v7423 = vand.u32 %v1575, 4294901760
    %7424 = vmatpush1.msra.mxu0 %v7423
    %7425 = vmatprep.subr.mxu0 0.0
    %v7426 = vand.u32 %v1576, 4294901760
    %7427 = vmatpush1.msra.mxu0 %v7426
    %7428 = vmatprep.subr.mxu0 0.0
    %v7429 = vand.u32 %v1577, 4294901760
    %7430 = vmatpush1.msra.mxu0 %v7429
    %7431 = vmatprep.subr.mxu0 0.0
    %v7432 = vand.u32 %v1578, 4294901760
    %7433 = vmatpush1.msra.mxu0 %v7432
    %7434 = vmatprep.subr.mxu0 0.0
    %v7435 = vand.u32 %v1579, 4294901760
    %7436 = vmatpush1.msra.mxu0 %v7435
    %7437 = vmatprep.subr.mxu0 0.0
    %v7438 = vand.u32 %v1580, 4294901760
    %7439 = vmatpush1.msra.mxu0 %v7438
    %7440 = vmatprep.subr.mxu0 0.0
    %v7441 = vand.u32 %v1581, 4294901760
    %7442 = vmatpush1.msra.mxu0 %v7441
    %7443 = vmatprep.subr.mxu0 0.0
    %v7444 = vand.u32 %v1582, 4294901760
    %7445 = vmatpush1.msra.mxu0 %v7444
    %7446 = vmatprep.subr.mxu0 0.0
    %v7447 = vand.u32 %v1583, 4294901760
    %7448 = vmatpush1.msra.mxu0 %v7447
    %7449 = vmatprep.subr.mxu0 0.0
    %v7450 = vand.u32 %v1584, 4294901760
    %7451 = vmatpush1.msra.mxu0 %v7450
    %7452 = vmatprep.subr.mxu0 0.0
    %v7453 = vand.u32 %v1585, 4294901760
    %7454 = vmatpush1.msra.mxu0 %v7453
    %7455 = vmatprep.subr.mxu0 0.0
    %v7456 = vand.u32 %v1586, 4294901760
    %7457 = vmatpush1.msra.mxu0 %v7456
    %7458 = vmatprep.subr.mxu0 0.0
    %v7459 = vand.u32 %v1587, 4294901760
    %7460 = vmatpush1.msra.mxu0 %v7459
    %7461 = vmatprep.subr.mxu0 0.0
    %v7462 = vand.u32 %v1588, 4294901760
    %7463 = vmatpush1.msra.mxu0 %v7462
    %7464 = vmatprep.subr.mxu0 0.0
    %v7465 = vand.u32 %v1589, 4294901760
    %7466 = vmatpush1.msra.mxu0 %v7465
    %v7467 = vand.u32 %v1699, 4294901760
    %v7468 = vsub.f32 %v1699, %v7467
    %v7469 = vand.u32 %v7468, 4294901760
    %7470 = vmatprep.mubr.f32.mxu0 %v7469
    %v7471 = vand.u32 %v1691, 4294901760
    %v7472 = vsub.f32 %v1691, %v7471
    %v7473 = vand.u32 %v7472, 4294901760
    %7474 = vmatmul.mubr.f32.gmra.mrb[0].mxu0 %v7473
    %v7475 = vpop.f32.mrb[0].mxu0
    %v7476 = vadd.f32 %v7368, %v7475
    %v7477 = vpop.f32.mrb[0].mxu0
    %7478 = vdwg.mxu0
    %7479 = vmatprep.subr.mxu0 0.0
    %v7480 = vand.u32 %v1558, 4294901760
    %v7481 = vsub.f32 %v1558, %v7480
    %v7482 = vand.u32 %v7481, 4294901760
    %7483 = vmatpush1.msra.mxu0 %v7482
    %7484 = vmatprep.subr.mxu0 0.0
    %v7485 = vand.u32 %v1559, 4294901760
    %v7486 = vsub.f32 %v1559, %v7485
    %v7487 = vand.u32 %v7486, 4294901760
    %7488 = vmatpush1.msra.mxu0 %v7487
    %7489 = vmatprep.subr.mxu0 0.0
    %v7490 = vand.u32 %v1560, 4294901760
    %v7491 = vsub.f32 %v1560, %v7490
    %v7492 = vand.u32 %v7491, 4294901760
    %7493 = vmatpush1.msra.mxu0 %v7492
    %7494 = vmatprep.subr.mxu0 0.0
    %v7495 = vand.u32 %v1561, 4294901760
    %v7496 = vsub.f32 %v1561, %v7495
    %v7497 = vand.u32 %v7496, 4294901760
    %7498 = vmatpush1.msra.mxu0 %v7497
    %7499 = vmatprep.subr.mxu0 0.0
    %v7500 = vand.u32 %v1562, 4294901760
    %v7501 = vsub.f32 %v1562, %v7500
    %v7502 = vand.u32 %v7501, 4294901760
    %7503 = vmatpush1.msra.mxu0 %v7502
    %7504 = vmatprep.subr.mxu0 0.0
    %v7505 = vand.u32 %v1563, 4294901760
    %v7506 = vsub.f32 %v1563, %v7505
    %v7507 = vand.u32 %v7506, 4294901760
    %7508 = vmatpush1.msra.mxu0 %v7507
    %7509 = vmatprep.subr.mxu0 0.0
    %v7510 = vand.u32 %v1564, 4294901760
    %v7511 = vsub.f32 %v1564, %v7510
    %v7512 = vand.u32 %v7511, 4294901760
    %7513 = vmatpush1.msra.mxu0 %v7512
    %7514 = vmatprep.subr.mxu0 0.0
    %v7515 = vand.u32 %v1565, 4294901760
    %v7516 = vsub.f32 %v1565, %v7515
    %v7517 = vand.u32 %v7516, 4294901760
    %7518 = vmatpush1.msra.mxu0 %v7517
    %7519 = vmatprep.subr.mxu0 0.0
    %v7520 = vand.u32 %v1566, 4294901760
    %v7521 = vsub.f32 %v1566, %v7520
    %v7522 = vand.u32 %v7521, 4294901760
    %7523 = vmatpush1.msra.mxu0 %v7522
    %7524 = vmatprep.subr.mxu0 0.0
    %v7525 = vand.u32 %v1567, 4294901760
    %v7526 = vsub.f32 %v1567, %v7525
    %v7527 = vand.u32 %v7526, 4294901760
    %7528 = vmatpush1.msra.mxu0 %v7527
    %7529 = vmatprep.subr.mxu0 0.0
    %v7530 = vand.u32 %v1568, 4294901760
    %v7531 = vsub.f32 %v1568, %v7530
    %v7532 = vand.u32 %v7531, 4294901760
    %7533 = vmatpush1.msra.mxu0 %v7532
    %7534 = vmatprep.subr.mxu0 0.0
    %v7535 = vand.u32 %v1569, 4294901760
    %v7536 = vsub.f32 %v1569, %v7535
    %v7537 = vand.u32 %v7536, 4294901760
    %7538 = vmatpush1.msra.mxu0 %v7537
    %7539 = vmatprep.subr.mxu0 0.0
    %v7540 = vand.u32 %v1570, 4294901760
    %v7541 = vsub.f32 %v1570, %v7540
    %v7542 = vand.u32 %v7541, 4294901760
    %7543 = vmatpush1.msra.mxu0 %v7542
    %7544 = vmatprep.subr.mxu0 0.0
    %v7545 = vand.u32 %v1571, 4294901760
    %v7546 = vsub.f32 %v1571, %v7545
    %v7547 = vand.u32 %v7546, 4294901760
    %7548 = vmatpush1.msra.mxu0 %v7547
    %7549 = vmatprep.subr.mxu0 0.0
    %v7550 = vand.u32 %v1572, 4294901760
    %v7551 = vsub.f32 %v1572, %v7550
    %v7552 = vand.u32 %v7551, 4294901760
    %7553 = vmatpush1.msra.mxu0 %v7552
    %7554 = vmatprep.subr.mxu0 0.0
    %v7555 = vand.u32 %v1573, 4294901760
    %v7556 = vsub.f32 %v1573, %v7555
    %v7557 = vand.u32 %v7556, 4294901760
    %7558 = vmatpush1.msra.mxu0 %v7557
    %7559 = vmatprep.subr.mxu0 0.0
    %v7560 = vand.u32 %v1574, 4294901760
    %v7561 = vsub.f32 %v1574, %v7560
    %v7562 = vand.u32 %v7561, 4294901760
    %7563 = vmatpush1.msra.mxu0 %v7562
    %7564 = vmatprep.subr.mxu0 0.0
    %v7565 = vand.u32 %v1575, 4294901760
    %v7566 = vsub.f32 %v1575, %v7565
    %v7567 = vand.u32 %v7566, 4294901760
    %7568 = vmatpush1.msra.mxu0 %v7567
    %7569 = vmatprep.subr.mxu0 0.0
    %v7570 = vand.u32 %v1576, 4294901760
    %v7571 = vsub.f32 %v1576, %v7570
    %v7572 = vand.u32 %v7571, 4294901760
    %7573 = vmatpush1.msra.mxu0 %v7572
    %7574 = vmatprep.subr.mxu0 0.0
    %v7575 = vand.u32 %v1577, 4294901760
    %v7576 = vsub.f32 %v1577, %v7575
    %v7577 = vand.u32 %v7576, 4294901760
    %7578 = vmatpush1.msra.mxu0 %v7577
    %7579 = vmatprep.subr.mxu0 0.0
    %v7580 = vand.u32 %v1578, 4294901760
    %v7581 = vsub.f32 %v1578, %v7580
    %v7582 = vand.u32 %v7581, 4294901760
    %7583 = vmatpush1.msra.mxu0 %v7582
    %7584 = vmatprep.subr.mxu0 0.0
    %v7585 = vand.u32 %v1579, 4294901760
    %v7586 = vsub.f32 %v1579, %v7585
    %v7587 = vand.u32 %v7586, 4294901760
    %7588 = vmatpush1.msra.mxu0 %v7587
    %7589 = vmatprep.subr.mxu0 0.0
    %v7590 = vand.u32 %v1580, 4294901760
    %v7591 = vsub.f32 %v1580, %v7590
    %v7592 = vand.u32 %v7591, 4294901760
    %7593 = vmatpush1.msra.mxu0 %v7592
    %7594 = vmatprep.subr.mxu0 0.0
    %v7595 = vand.u32 %v1581, 4294901760
    %v7596 = vsub.f32 %v1581, %v7595
    %v7597 = vand.u32 %v7596, 4294901760
    %7598 = vmatpush1.msra.mxu0 %v7597
    %7599 = vmatprep.subr.mxu0 0.0
    %v7600 = vand.u32 %v1582, 4294901760
    %v7601 = vsub.f32 %v1582, %v7600
    %v7602 = vand.u32 %v7601, 4294901760
    %7603 = vmatpush1.msra.mxu0 %v7602
    %7604 = vmatprep.subr.mxu0 0.0
    %v7605 = vand.u32 %v1583, 4294901760
    %v7606 = vsub.f32 %v1583, %v7605
    %v7607 = vand.u32 %v7606, 4294901760
    %7608 = vmatpush1.msra.mxu0 %v7607
    %7609 = vmatprep.subr.mxu0 0.0
    %v7610 = vand.u32 %v1584, 4294901760
    %v7611 = vsub.f32 %v1584, %v7610
    %v7612 = vand.u32 %v7611, 4294901760
    %7613 = vmatpush1.msra.mxu0 %v7612
    %7614 = vmatprep.subr.mxu0 0.0
    %v7615 = vand.u32 %v1585, 4294901760
    %v7616 = vsub.f32 %v1585, %v7615
    %v7617 = vand.u32 %v7616, 4294901760
    %7618 = vmatpush1.msra.mxu0 %v7617
    %7619 = vmatprep.subr.mxu0 0.0
    %v7620 = vand.u32 %v1586, 4294901760
    %v7621 = vsub.f32 %v1586, %v7620
    %v7622 = vand.u32 %v7621, 4294901760
    %7623 = vmatpush1.msra.mxu0 %v7622
    %7624 = vmatprep.subr.mxu0 0.0
    %v7625 = vand.u32 %v1587, 4294901760
    %v7626 = vsub.f32 %v1587, %v7625
    %v7627 = vand.u32 %v7626, 4294901760
    %7628 = vmatpush1.msra.mxu0 %v7627
    %7629 = vmatprep.subr.mxu0 0.0
    %v7630 = vand.u32 %v1588, 4294901760
    %v7631 = vsub.f32 %v1588, %v7630
    %v7632 = vand.u32 %v7631, 4294901760
    %7633 = vmatpush1.msra.mxu0 %v7632
    %7634 = vmatprep.subr.mxu0 0.0
    %v7635 = vand.u32 %v1589, 4294901760
    %v7636 = vsub.f32 %v1589, %v7635
    %v7637 = vand.u32 %v7636, 4294901760
    %7638 = vmatpush1.msra.mxu0 %v7637
    %v7639 = vand.u32 %v1699, 4294901760
    %7640 = vmatprep.mubr.f32.mxu0 %v7639
    %v7641 = vand.u32 %v1691, 4294901760
    %7642 = vmatmul.mubr.f32.gmra.mrb[0].mxu0 %v7641
    %v7643 = vpop.f32.mrb[0].mxu0
    %v7644 = vadd.f32 %v7476, %v7643
    %v7645 = vpop.f32.mrb[0].mxu0
    %7646 = vdwg.mxu0
    %7647 = vmatprep.subr.mxu0 0.0
    %v7648 = vand.u32 %v1558, 4294901760
    %7649 = vmatpush1.msra.mxu0 %v7648
    %7650 = vmatprep.subr.mxu0 0.0
    %v7651 = vand.u32 %v1559, 4294901760
    %7652 = vmatpush1.msra.mxu0 %v7651
    %7653 = vmatprep.subr.mxu0 0.0
    %v7654 = vand.u32 %v1560, 4294901760
    %7655 = vmatpush1.msra.mxu0 %v7654
    %7656 = vmatprep.subr.mxu0 0.0
    %v7657 = vand.u32 %v1561, 4294901760
    %7658 = vmatpush1.msra.mxu0 %v7657
    %7659 = vmatprep.subr.mxu0 0.0
    %v7660 = vand.u32 %v1562, 4294901760
    %7661 = vmatpush1.msra.mxu0 %v7660
    %7662 = vmatprep.subr.mxu0 0.0
    %v7663 = vand.u32 %v1563, 4294901760
    %7664 = vmatpush1.msra.mxu0 %v7663
    %7665 = vmatprep.subr.mxu0 0.0
    %v7666 = vand.u32 %v1564, 4294901760
    %7667 = vmatpush1.msra.mxu0 %v7666
    %7668 = vmatprep.subr.mxu0 0.0
    %v7669 = vand.u32 %v1565, 4294901760
    %7670 = vmatpush1.msra.mxu0 %v7669
    %7671 = vmatprep.subr.mxu0 0.0
    %v7672 = vand.u32 %v1566, 4294901760
    %7673 = vmatpush1.msra.mxu0 %v7672
    %7674 = vmatprep.subr.mxu0 0.0
    %v7675 = vand.u32 %v1567, 4294901760
    %7676 = vmatpush1.msra.mxu0 %v7675
    %7677 = vmatprep.subr.mxu0 0.0
    %v7678 = vand.u32 %v1568, 4294901760
    %7679 = vmatpush1.msra.mxu0 %v7678
    %7680 = vmatprep.subr.mxu0 0.0
    %v7681 = vand.u32 %v1569, 4294901760
    %7682 = vmatpush1.msra.mxu0 %v7681
    %7683 = vmatprep.subr.mxu0 0.0
    %v7684 = vand.u32 %v1570, 4294901760
    %7685 = vmatpush1.msra.mxu0 %v7684
    %7686 = vmatprep.subr.mxu0 0.0
    %v7687 = vand.u32 %v1571, 4294901760
    %7688 = vmatpush1.msra.mxu0 %v7687
    %7689 = vmatprep.subr.mxu0 0.0
    %v7690 = vand.u32 %v1572, 4294901760
    %7691 = vmatpush1.msra.mxu0 %v7690
    %7692 = vmatprep.subr.mxu0 0.0
    %v7693 = vand.u32 %v1573, 4294901760
    %7694 = vmatpush1.msra.mxu0 %v7693
    %7695 = vmatprep.subr.mxu0 0.0
    %v7696 = vand.u32 %v1574, 4294901760
    %7697 = vmatpush1.msra.mxu0 %v7696
    %7698 = vmatprep.subr.mxu0 0.0
    %v7699 = vand.u32 %v1575, 4294901760
    %7700 = vmatpush1.msra.mxu0 %v7699
    %7701 = vmatprep.subr.mxu0 0.0
    %v7702 = vand.u32 %v1576, 4294901760
    %7703 = vmatpush1.msra.mxu0 %v7702
    %7704 = vmatprep.subr.mxu0 0.0
    %v7705 = vand.u32 %v1577, 4294901760
    %7706 = vmatpush1.msra.mxu0 %v7705
    %7707 = vmatprep.subr.mxu0 0.0
    %v7708 = vand.u32 %v1578, 4294901760
    %7709 = vmatpush1.msra.mxu0 %v7708
    %7710 = vmatprep.subr.mxu0 0.0
    %v7711 = vand.u32 %v1579, 4294901760
    %7712 = vmatpush1.msra.mxu0 %v7711
    %7713 = vmatprep.subr.mxu0 0.0
    %v7714 = vand.u32 %v1580, 4294901760
    %7715 = vmatpush1.msra.mxu0 %v7714
    %7716 = vmatprep.subr.mxu0 0.0
    %v7717 = vand.u32 %v1581, 4294901760
    %7718 = vmatpush1.msra.mxu0 %v7717
    %7719 = vmatprep.subr.mxu0 0.0
    %v7720 = vand.u32 %v1582, 4294901760
    %7721 = vmatpush1.msra.mxu0 %v7720
    %7722 = vmatprep.subr.mxu0 0.0
    %v7723 = vand.u32 %v1583, 4294901760
    %7724 = vmatpush1.msra.mxu0 %v7723
    %7725 = vmatprep.subr.mxu0 0.0
    %v7726 = vand.u32 %v1584, 4294901760
    %7727 = vmatpush1.msra.mxu0 %v7726
    %7728 = vmatprep.subr.mxu0 0.0
    %v7729 = vand.u32 %v1585, 4294901760
    %7730 = vmatpush1.msra.mxu0 %v7729
    %7731 = vmatprep.subr.mxu0 0.0
    %v7732 = vand.u32 %v1586, 4294901760
    %7733 = vmatpush1.msra.mxu0 %v7732
    %7734 = vmatprep.subr.mxu0 0.0
    %v7735 = vand.u32 %v1587, 4294901760
    %7736 = vmatpush1.msra.mxu0 %v7735
    %7737 = vmatprep.subr.mxu0 0.0
    %v7738 = vand.u32 %v1588, 4294901760
    %7739 = vmatpush1.msra.mxu0 %v7738
    %7740 = vmatprep.subr.mxu0 0.0
    %v7741 = vand.u32 %v1589, 4294901760
    %7742 = vmatpush1.msra.mxu0 %v7741
    %v7743 = vand.u32 %v1699, 4294901760
    %7744 = vmatprep.mubr.f32.mxu0 %v7743
    %v7745 = vand.u32 %v1691, 4294901760
    %7746 = vmatmul.mubr.f32.gmra.mrb[0].mxu0 %v7745
    %v7747 = vpop.f32.mrb[0].mxu0
    %v7748 = vadd.f32 %v7644, %v7747
    %v7749 = vpop.f32.mrb[0].mxu0
    %7750 = vdwg.mxu0
    %7751 = vmatprep.subr.mxu0 0.0
    %v7752 = vand.u32 %v1590, 4294901760
    %7753 = vmatpush1.msra.mxu0 %v7752
    %7754 = vmatprep.subr.mxu0 0.0
    %v7755 = vand.u32 %v1591, 4294901760
    %7756 = vmatpush1.msra.mxu0 %v7755
    %7757 = vmatprep.subr.mxu0 0.0
    %v7758 = vand.u32 %v1592, 4294901760
    %7759 = vmatpush1.msra.mxu0 %v7758
    %7760 = vmatprep.subr.mxu0 0.0
    %v7761 = vand.u32 %v1593, 4294901760
    %7762 = vmatpush1.msra.mxu0 %v7761
    %7763 = vmatprep.subr.mxu0 0.0
    %v7764 = vand.u32 %v1594, 4294901760
    %7765 = vmatpush1.msra.mxu0 %v7764
    %7766 = vmatprep.subr.mxu0 0.0
    %v7767 = vand.u32 %v1595, 4294901760
    %7768 = vmatpush1.msra.mxu0 %v7767
    %7769 = vmatprep.subr.mxu0 0.0
    %v7770 = vand.u32 %v1596, 4294901760
    %7771 = vmatpush1.msra.mxu0 %v7770
    %7772 = vmatprep.subr.mxu0 0.0
    %v7773 = vand.u32 %v1597, 4294901760
    %7774 = vmatpush1.msra.mxu0 %v7773
    %7775 = vmatprep.subr.mxu0 0.0
    %v7776 = vand.u32 %v1598, 4294901760
    %7777 = vmatpush1.msra.mxu0 %v7776
    %7778 = vmatprep.subr.mxu0 0.0
    %v7779 = vand.u32 %v1599, 4294901760
    %7780 = vmatpush1.msra.mxu0 %v7779
    %7781 = vmatprep.subr.mxu0 0.0
    %v7782 = vand.u32 %v1600, 4294901760
    %7783 = vmatpush1.msra.mxu0 %v7782
    %7784 = vmatprep.subr.mxu0 0.0
    %v7785 = vand.u32 %v1601, 4294901760
    %7786 = vmatpush1.msra.mxu0 %v7785
    %7787 = vmatprep.subr.mxu0 0.0
    %v7788 = vand.u32 %v1602, 4294901760
    %7789 = vmatpush1.msra.mxu0 %v7788
    %7790 = vmatprep.subr.mxu0 0.0
    %v7791 = vand.u32 %v1603, 4294901760
    %7792 = vmatpush1.msra.mxu0 %v7791
    %7793 = vmatprep.subr.mxu0 0.0
    %v7794 = vand.u32 %v1604, 4294901760
    %7795 = vmatpush1.msra.mxu0 %v7794
    %7796 = vmatprep.subr.mxu0 0.0
    %v7797 = vand.u32 %v1605, 4294901760
    %7798 = vmatpush1.msra.mxu0 %v7797
    %7799 = vmatprep.subr.mxu0 0.0
    %v7800 = vand.u32 %v1606, 4294901760
    %7801 = vmatpush1.msra.mxu0 %v7800
    %7802 = vmatprep.subr.mxu0 0.0
    %v7803 = vand.u32 %v1607, 4294901760
    %7804 = vmatpush1.msra.mxu0 %v7803
    %7805 = vmatprep.subr.mxu0 0.0
    %v7806 = vand.u32 %v1608, 4294901760
    %7807 = vmatpush1.msra.mxu0 %v7806
    %7808 = vmatprep.subr.mxu0 0.0
    %v7809 = vand.u32 %v1609, 4294901760
    %7810 = vmatpush1.msra.mxu0 %v7809
    %7811 = vmatprep.subr.mxu0 0.0
    %v7812 = vand.u32 %v1610, 4294901760
    %7813 = vmatpush1.msra.mxu0 %v7812
    %7814 = vmatprep.subr.mxu0 0.0
    %v7815 = vand.u32 %v1611, 4294901760
    %7816 = vmatpush1.msra.mxu0 %v7815
    %7817 = vmatprep.subr.mxu0 0.0
    %v7818 = vand.u32 %v1612, 4294901760
    %7819 = vmatpush1.msra.mxu0 %v7818
    %7820 = vmatprep.subr.mxu0 0.0
    %v7821 = vand.u32 %v1613, 4294901760
    %7822 = vmatpush1.msra.mxu0 %v7821
    %7823 = vmatprep.subr.mxu0 0.0
    %v7824 = vand.u32 %v1614, 4294901760
    %7825 = vmatpush1.msra.mxu0 %v7824
    %7826 = vmatprep.subr.mxu0 0.0
    %v7827 = vand.u32 %v1615, 4294901760
    %7828 = vmatpush1.msra.mxu0 %v7827
    %7829 = vmatprep.subr.mxu0 0.0
    %v7830 = vand.u32 %v1616, 4294901760
    %7831 = vmatpush1.msra.mxu0 %v7830
    %7832 = vmatprep.subr.mxu0 0.0
    %v7833 = vand.u32 %v1617, 4294901760
    %7834 = vmatpush1.msra.mxu0 %v7833
    %7835 = vmatprep.subr.mxu0 0.0
    %v7836 = vand.u32 %v1618, 4294901760
    %7837 = vmatpush1.msra.mxu0 %v7836
    %7838 = vmatprep.subr.mxu0 0.0
    %v7839 = vand.u32 %v1619, 4294901760
    %7840 = vmatpush1.msra.mxu0 %v7839
    %7841 = vmatprep.subr.mxu0 0.0
    %v7842 = vand.u32 %v1620, 4294901760
    %7843 = vmatpush1.msra.mxu0 %v7842
    %7844 = vmatprep.subr.mxu0 0.0
    %v7845 = vand.u32 %v1621, 4294901760
    %7846 = vmatpush1.msra.mxu0 %v7845
    %v7847 = vand.u32 %v1700, 4294901760
    %v7848 = vsub.f32 %v1700, %v7847
    %v7849 = vand.u32 %v7848, 4294901760
    %v7850 = vsub.f32 %v7848, %v7849
    %v7851 = vand.u32 %v7850, 4294901760
    %7852 = vmatprep.mubr.f32.mxu0 %v7851
    %v7853 = vand.u32 %v1698, 4294901760
    %v7854 = vsub.f32 %v1698, %v7853
    %v7855 = vand.u32 %v7854, 4294901760
    %v7856 = vsub.f32 %v7854, %v7855
    %v7857 = vand.u32 %v7856, 4294901760
    %7858 = vmatmul.mubr.f32.gmra.mrb[0].mxu0 %v7857
    %v7859 = vpop.f32.mrb[0].mxu0
    %v7860 = vadd.f32 %v7748, %v7859
    %v7861 = vpop.f32.mrb[0].mxu0
    %7862 = vdwg.mxu0
    %7863 = vmatprep.subr.mxu0 0.0
    %v7864 = vand.u32 %v1590, 4294901760
    %v7865 = vsub.f32 %v1590, %v7864
    %v7866 = vand.u32 %v7865, 4294901760
    %v7867 = vsub.f32 %v7865, %v7866
    %v7868 = vand.u32 %v7867, 4294901760
    %7869 = vmatpush1.msra.mxu0 %v7868
    %7870 = vmatprep.subr.mxu0 0.0
    %v7871 = vand.u32 %v1591, 4294901760
    %v7872 = vsub.f32 %v1591, %v7871
    %v7873 = vand.u32 %v7872, 4294901760
    %v7874 = vsub.f32 %v7872, %v7873
    %v7875 = vand.u32 %v7874, 4294901760
    %7876 = vmatpush1.msra.mxu0 %v7875
    %7877 = vmatprep.subr.mxu0 0.0
    %v7878 = vand.u32 %v1592, 4294901760
    %v7879 = vsub.f32 %v1592, %v7878
    %v7880 = vand.u32 %v7879, 4294901760
    %v7881 = vsub.f32 %v7879, %v7880
    %v7882 = vand.u32 %v7881, 4294901760
    %7883 = vmatpush1.msra.mxu0 %v7882
    %7884 = vmatprep.subr.mxu0 0.0
    %v7885 = vand.u32 %v1593, 4294901760
    %v7886 = vsub.f32 %v1593, %v7885
    %v7887 = vand.u32 %v7886, 4294901760
    %v7888 = vsub.f32 %v7886, %v7887
    %v7889 = vand.u32 %v7888, 4294901760
    %7890 = vmatpush1.msra.mxu0 %v7889
    %7891 = vmatprep.subr.mxu0 0.0
    %v7892 = vand.u32 %v1594, 4294901760
    %v7893 = vsub.f32 %v1594, %v7892
    %v7894 = vand.u32 %v7893, 4294901760
    %v7895 = vsub.f32 %v7893, %v7894
    %v7896 = vand.u32 %v7895, 4294901760
    %7897 = vmatpush1.msra.mxu0 %v7896
    %7898 = vmatprep.subr.mxu0 0.0
    %v7899 = vand.u32 %v1595, 4294901760
    %v7900 = vsub.f32 %v1595, %v7899
    %v7901 = vand.u32 %v7900, 4294901760
    %v7902 = vsub.f32 %v7900, %v7901
    %v7903 = vand.u32 %v7902, 4294901760
    %7904 = vmatpush1.msra.mxu0 %v7903
    %7905 = vmatprep.subr.mxu0 0.0
    %v7906 = vand.u32 %v1596, 4294901760
    %v7907 = vsub.f32 %v1596, %v7906
    %v7908 = vand.u32 %v7907, 4294901760
    %v7909 = vsub.f32 %v7907, %v7908
    %v7910 = vand.u32 %v7909, 4294901760
    %7911 = vmatpush1.msra.mxu0 %v7910
    %7912 = vmatprep.subr.mxu0 0.0
    %v7913 = vand.u32 %v1597, 4294901760
    %v7914 = vsub.f32 %v1597, %v7913
    %v7915 = vand.u32 %v7914, 4294901760
    %v7916 = vsub.f32 %v7914, %v7915
    %v7917 = vand.u32 %v7916, 4294901760
    %7918 = vmatpush1.msra.mxu0 %v7917
    %7919 = vmatprep.subr.mxu0 0.0
    %v7920 = vand.u32 %v1598, 4294901760
    %v7921 = vsub.f32 %v1598, %v7920
    %v7922 = vand.u32 %v7921, 4294901760
    %v7923 = vsub.f32 %v7921, %v7922
    %v7924 = vand.u32 %v7923, 4294901760
    %7925 = vmatpush1.msra.mxu0 %v7924
    %7926 = vmatprep.subr.mxu0 0.0
    %v7927 = vand.u32 %v1599, 4294901760
    %v7928 = vsub.f32 %v1599, %v7927
    %v7929 = vand.u32 %v7928, 4294901760
    %v7930 = vsub.f32 %v7928, %v7929
    %v7931 = vand.u32 %v7930, 4294901760
    %7932 = vmatpush1.msra.mxu0 %v7931
    %7933 = vmatprep.subr.mxu0 0.0
    %v7934 = vand.u32 %v1600, 4294901760
    %v7935 = vsub.f32 %v1600, %v7934
    %v7936 = vand.u32 %v7935, 4294901760
    %v7937 = vsub.f32 %v7935, %v7936
    %v7938 = vand.u32 %v7937, 4294901760
    %7939 = vmatpush1.msra.mxu0 %v7938
    %7940 = vmatprep.subr.mxu0 0.0
    %v7941 = vand.u32 %v1601, 4294901760
    %v7942 = vsub.f32 %v1601, %v7941
    %v7943 = vand.u32 %v7942, 4294901760
    %v7944 = vsub.f32 %v7942, %v7943
    %v7945 = vand.u32 %v7944, 4294901760
    %7946 = vmatpush1.msra.mxu0 %v7945
    %7947 = vmatprep.subr.mxu0 0.0
    %v7948 = vand.u32 %v1602, 4294901760
    %v7949 = vsub.f32 %v1602, %v7948
    %v7950 = vand.u32 %v7949, 4294901760
    %v7951 = vsub.f32 %v7949, %v7950
    %v7952 = vand.u32 %v7951, 4294901760
    %7953 = vmatpush1.msra.mxu0 %v7952
    %7954 = vmatprep.subr.mxu0 0.0
    %v7955 = vand.u32 %v1603, 4294901760
    %v7956 = vsub.f32 %v1603, %v7955
    %v7957 = vand.u32 %v7956, 4294901760
    %v7958 = vsub.f32 %v7956, %v7957
    %v7959 = vand.u32 %v7958, 4294901760
    %7960 = vmatpush1.msra.mxu0 %v7959
    %7961 = vmatprep.subr.mxu0 0.0
    %v7962 = vand.u32 %v1604, 4294901760
    %v7963 = vsub.f32 %v1604, %v7962
    %v7964 = vand.u32 %v7963, 4294901760
    %v7965 = vsub.f32 %v7963, %v7964
    %v7966 = vand.u32 %v7965, 4294901760
    %7967 = vmatpush1.msra.mxu0 %v7966
    %7968 = vmatprep.subr.mxu0 0.0
    %v7969 = vand.u32 %v1605, 4294901760
    %v7970 = vsub.f32 %v1605, %v7969
    %v7971 = vand.u32 %v7970, 4294901760
    %v7972 = vsub.f32 %v7970, %v7971
    %v7973 = vand.u32 %v7972, 4294901760
    %7974 = vmatpush1.msra.mxu0 %v7973
    %7975 = vmatprep.subr.mxu0 0.0
    %v7976 = vand.u32 %v1606, 4294901760
    %v7977 = vsub.f32 %v1606, %v7976
    %v7978 = vand.u32 %v7977, 4294901760
    %v7979 = vsub.f32 %v7977, %v7978
    %v7980 = vand.u32 %v7979, 4294901760
    %7981 = vmatpush1.msra.mxu0 %v7980
    %7982 = vmatprep.subr.mxu0 0.0
    %v7983 = vand.u32 %v1607, 4294901760
    %v7984 = vsub.f32 %v1607, %v7983
    %v7985 = vand.u32 %v7984, 4294901760
    %v7986 = vsub.f32 %v7984, %v7985
    %v7987 = vand.u32 %v7986, 4294901760
    %7988 = vmatpush1.msra.mxu0 %v7987
    %7989 = vmatprep.subr.mxu0 0.0
    %v7990 = vand.u32 %v1608, 4294901760
    %v7991 = vsub.f32 %v1608, %v7990
    %v7992 = vand.u32 %v7991, 4294901760
    %v7993 = vsub.f32 %v7991, %v7992
    %v7994 = vand.u32 %v7993, 4294901760
    %7995 = vmatpush1.msra.mxu0 %v7994
    %7996 = vmatprep.subr.mxu0 0.0
    %v7997 = vand.u32 %v1609, 4294901760
    %v7998 = vsub.f32 %v1609, %v7997
    %v7999 = vand.u32 %v7998, 4294901760
    %v8000 = vsub.f32 %v7998, %v7999
    %v8001 = vand.u32 %v8000, 4294901760
    %8002 = vmatpush1.msra.mxu0 %v8001
    %8003 = vmatprep.subr.mxu0 0.0
    %v8004 = vand.u32 %v1610, 4294901760
    %v8005 = vsub.f32 %v1610, %v8004
    %v8006 = vand.u32 %v8005, 4294901760
    %v8007 = vsub.f32 %v8005, %v8006
    %v8008 = vand.u32 %v8007, 4294901760
    %8009 = vmatpush1.msra.mxu0 %v8008
    %8010 = vmatprep.subr.mxu0 0.0
    %v8011 = vand.u32 %v1611, 4294901760
    %v8012 = vsub.f32 %v1611, %v8011
    %v8013 = vand.u32 %v8012, 4294901760
    %v8014 = vsub.f32 %v8012, %v8013
    %v8015 = vand.u32 %v8014, 4294901760
    %8016 = vmatpush1.msra.mxu0 %v8015
    %8017 = vmatprep.subr.mxu0 0.0
    %v8018 = vand.u32 %v1612, 4294901760
    %v8019 = vsub.f32 %v1612, %v8018
    %v8020 = vand.u32 %v8019, 4294901760
    %v8021 = vsub.f32 %v8019, %v8020
    %v8022 = vand.u32 %v8021, 4294901760
    %8023 = vmatpush1.msra.mxu0 %v8022
    %8024 = vmatprep.subr.mxu0 0.0
    %v8025 = vand.u32 %v1613, 4294901760
    %v8026 = vsub.f32 %v1613, %v8025
    %v8027 = vand.u32 %v8026, 4294901760
    %v8028 = vsub.f32 %v8026, %v8027
    %v8029 = vand.u32 %v8028, 4294901760
    %8030 = vmatpush1.msra.mxu0 %v8029
    %8031 = vmatprep.subr.mxu0 0.0
    %v8032 = vand.u32 %v1614, 4294901760
    %v8033 = vsub.f32 %v1614, %v8032
    %v8034 = vand.u32 %v8033, 4294901760
    %v8035 = vsub.f32 %v8033, %v8034
    %v8036 = vand.u32 %v8035, 4294901760
    %8037 = vmatpush1.msra.mxu0 %v8036
    %8038 = vmatprep.subr.mxu0 0.0
    %v8039 = vand.u32 %v1615, 4294901760
    %v8040 = vsub.f32 %v1615, %v8039
    %v8041 = vand.u32 %v8040, 4294901760
    %v8042 = vsub.f32 %v8040, %v8041
    %v8043 = vand.u32 %v8042, 4294901760
    %8044 = vmatpush1.msra.mxu0 %v8043
    %8045 = vmatprep.subr.mxu0 0.0
    %v8046 = vand.u32 %v1616, 4294901760
    %v8047 = vsub.f32 %v1616, %v8046
    %v8048 = vand.u32 %v8047, 4294901760
    %v8049 = vsub.f32 %v8047, %v8048
    %v8050 = vand.u32 %v8049, 4294901760
    %8051 = vmatpush1.msra.mxu0 %v8050
    %8052 = vmatprep.subr.mxu0 0.0
    %v8053 = vand.u32 %v1617, 4294901760
    %v8054 = vsub.f32 %v1617, %v8053
    %v8055 = vand.u32 %v8054, 4294901760
    %v8056 = vsub.f32 %v8054, %v8055
    %v8057 = vand.u32 %v8056, 4294901760
    %8058 = vmatpush1.msra.mxu0 %v8057
    %8059 = vmatprep.subr.mxu0 0.0
    %v8060 = vand.u32 %v1618, 4294901760
    %v8061 = vsub.f32 %v1618, %v8060
    %v8062 = vand.u32 %v8061, 4294901760
    %v8063 = vsub.f32 %v8061, %v8062
    %v8064 = vand.u32 %v8063, 4294901760
    %8065 = vmatpush1.msra.mxu0 %v8064
    %8066 = vmatprep.subr.mxu0 0.0
    %v8067 = vand.u32 %v1619, 4294901760
    %v8068 = vsub.f32 %v1619, %v8067
    %v8069 = vand.u32 %v8068, 4294901760
    %v8070 = vsub.f32 %v8068, %v8069
    %v8071 = vand.u32 %v8070, 4294901760
    %8072 = vmatpush1.msra.mxu0 %v8071
    %8073 = vmatprep.subr.mxu0 0.0
    %v8074 = vand.u32 %v1620, 4294901760
    %v8075 = vsub.f32 %v1620, %v8074
    %v8076 = vand.u32 %v8075, 4294901760
    %v8077 = vsub.f32 %v8075, %v8076
    %v8078 = vand.u32 %v8077, 4294901760
    %8079 = vmatpush1.msra.mxu0 %v8078
    %8080 = vmatprep.subr.mxu0 0.0
    %v8081 = vand.u32 %v1621, 4294901760
    %v8082 = vsub.f32 %v1621, %v8081
    %v8083 = vand.u32 %v8082, 4294901760
    %v8084 = vsub.f32 %v8082, %v8083
    %v8085 = vand.u32 %v8084, 4294901760
    %8086 = vmatpush1.msra.mxu0 %v8085
    %v8087 = vand.u32 %v1700, 4294901760
    %8088 = vmatprep.mubr.f32.mxu0 %v8087
    %v8089 = vand.u32 %v1698, 4294901760
    %8090 = vmatmul.mubr.f32.gmra.mrb[0].mxu0 %v8089
    %v8091 = vpop.f32.mrb[0].mxu0
    %v8092 = vadd.f32 %v7860, %v8091
    %v8093 = vpop.f32.mrb[0].mxu0
    %8094 = vdwg.mxu0
    %8095 = vmatprep.subr.mxu0 0.0
    %v8096 = vand.u32 %v1590, 4294901760
    %v8097 = vsub.f32 %v1590, %v8096
    %8098 = vmatpush1.msra.mxu0 %v8097
    %8099 = vmatprep.subr.mxu0 0.0
    %v8100 = vand.u32 %v1591, 4294901760
    %v8101 = vsub.f32 %v1591, %v8100
    %8102 = vmatpush1.msra.mxu0 %v8101
    %8103 = vmatprep.subr.mxu0 0.0
    %v8104 = vand.u32 %v1592, 4294901760
    %v8105 = vsub.f32 %v1592, %v8104
    %8106 = vmatpush1.msra.mxu0 %v8105
    %8107 = vmatprep.subr.mxu0 0.0
    %v8108 = vand.u32 %v1593, 4294901760
    %v8109 = vsub.f32 %v1593, %v8108
    %8110 = vmatpush1.msra.mxu0 %v8109
    %8111 = vmatprep.subr.mxu0 0.0
    %v8112 = vand.u32 %v1594, 4294901760
    %v8113 = vsub.f32 %v1594, %v8112
    %8114 = vmatpush1.msra.mxu0 %v8113
    %8115 = vmatprep.subr.mxu0 0.0
    %v8116 = vand.u32 %v1595, 4294901760
    %v8117 = vsub.f32 %v1595, %v8116
    %8118 = vmatpush1.msra.mxu0 %v8117
    %8119 = vmatprep.subr.mxu0 0.0
    %v8120 = vand.u32 %v1596, 4294901760
    %v8121 = vsub.f32 %v1596, %v8120
    %8122 = vmatpush1.msra.mxu0 %v8121
    %8123 = vmatprep.subr.mxu0 0.0
    %v8124 = vand.u32 %v1597, 4294901760
    %v8125 = vsub.f32 %v1597, %v8124
    %8126 = vmatpush1.msra.mxu0 %v8125
    %8127 = vmatprep.subr.mxu0 0.0
    %v8128 = vand.u32 %v1598, 4294901760
    %v8129 = vsub.f32 %v1598, %v8128
    %8130 = vmatpush1.msra.mxu0 %v8129
    %8131 = vmatprep.subr.mxu0 0.0
    %v8132 = vand.u32 %v1599, 4294901760
    %v8133 = vsub.f32 %v1599, %v8132
    %8134 = vmatpush1.msra.mxu0 %v8133
    %8135 = vmatprep.subr.mxu0 0.0
    %v8136 = vand.u32 %v1600, 4294901760
    %v8137 = vsub.f32 %v1600, %v8136
    %8138 = vmatpush1.msra.mxu0 %v8137
    %8139 = vmatprep.subr.mxu0 0.0
    %v8140 = vand.u32 %v1601, 4294901760
    %v8141 = vsub.f32 %v1601, %v8140
    %8142 = vmatpush1.msra.mxu0 %v8141
    %8143 = vmatprep.subr.mxu0 0.0
    %v8144 = vand.u32 %v1602, 4294901760
    %v8145 = vsub.f32 %v1602, %v8144
    %8146 = vmatpush1.msra.mxu0 %v8145
    %8147 = vmatprep.subr.mxu0 0.0
    %v8148 = vand.u32 %v1603, 4294901760
    %v8149 = vsub.f32 %v1603, %v8148
    %8150 = vmatpush1.msra.mxu0 %v8149
    %8151 = vmatprep.subr.mxu0 0.0
    %v8152 = vand.u32 %v1604, 4294901760
    %v8153 = vsub.f32 %v1604, %v8152
    %8154 = vmatpush1.msra.mxu0 %v8153
    %8155 = vmatprep.subr.mxu0 0.0
    %v8156 = vand.u32 %v1605, 4294901760
    %v8157 = vsub.f32 %v1605, %v8156
    %8158 = vmatpush1.msra.mxu0 %v8157
    %8159 = vmatprep.subr.mxu0 0.0
    %v8160 = vand.u32 %v1606, 4294901760
    %v8161 = vsub.f32 %v1606, %v8160
    %8162 = vmatpush1.msra.mxu0 %v8161
    %8163 = vmatprep.subr.mxu0 0.0
    %v8164 = vand.u32 %v1607, 4294901760
    %v8165 = vsub.f32 %v1607, %v8164
    %8166 = vmatpush1.msra.mxu0 %v8165
    %8167 = vmatprep.subr.mxu0 0.0
    %v8168 = vand.u32 %v1608, 4294901760
    %v8169 = vsub.f32 %v1608, %v8168
    %8170 = vmatpush1.msra.mxu0 %v8169
    %8171 = vmatprep.subr.mxu0 0.0
    %v8172 = vand.u32 %v1609, 4294901760
    %v8173 = vsub.f32 %v1609, %v8172
    %8174 = vmatpush1.msra.mxu0 %v8173
    %8175 = vmatprep.subr.mxu0 0.0
    %v8176 = vand.u32 %v1610, 4294901760
    %v8177 = vsub.f32 %v1610, %v8176
    %8178 = vmatpush1.msra.mxu0 %v8177
    %8179 = vmatprep.subr.mxu0 0.0
    %v8180 = vand.u32 %v1611, 4294901760
    %v8181 = vsub.f32 %v1611, %v8180
    %8182 = vmatpush1.msra.mxu0 %v8181
    %8183 = vmatprep.subr.mxu0 0.0
    %v8184 = vand.u32 %v1612, 4294901760
    %v8185 = vsub.f32 %v1612, %v8184
    %8186 = vmatpush1.msra.mxu0 %v8185
    %8187 = vmatprep.subr.mxu0 0.0
    %v8188 = vand.u32 %v1613, 4294901760
    %v8189 = vsub.f32 %v1613, %v8188
    %8190 = vmatpush1.msra.mxu0 %v8189
    %8191 = vmatprep.subr.mxu0 0.0
    %v8192 = vand.u32 %v1614, 4294901760
    %v8193 = vsub.f32 %v1614, %v8192
    %8194 = vmatpush1.msra.mxu0 %v8193
    %8195 = vmatprep.subr.mxu0 0.0
    %v8196 = vand.u32 %v1615, 4294901760
    %v8197 = vsub.f32 %v1615, %v8196
    %8198 = vmatpush1.msra.mxu0 %v8197
    %8199 = vmatprep.subr.mxu0 0.0
    %v8200 = vand.u32 %v1616, 4294901760
    %v8201 = vsub.f32 %v1616, %v8200
    %8202 = vmatpush1.msra.mxu0 %v8201
    %8203 = vmatprep.subr.mxu0 0.0
    %v8204 = vand.u32 %v1617, 4294901760
    %v8205 = vsub.f32 %v1617, %v8204
    %8206 = vmatpush1.msra.mxu0 %v8205
    %8207 = vmatprep.subr.mxu0 0.0
    %v8208 = vand.u32 %v1618, 4294901760
    %v8209 = vsub.f32 %v1618, %v8208
    %8210 = vmatpush1.msra.mxu0 %v8209
    %8211 = vmatprep.subr.mxu0 0.0
    %v8212 = vand.u32 %v1619, 4294901760
    %v8213 = vsub.f32 %v1619, %v8212
    %8214 = vmatpush1.msra.mxu0 %v8213
    %8215 = vmatprep.subr.mxu0 0.0
    %v8216 = vand.u32 %v1620, 4294901760
    %v8217 = vsub.f32 %v1620, %v8216
    %8218 = vmatpush1.msra.mxu0 %v8217
    %8219 = vmatprep.subr.mxu0 0.0
    %v8220 = vand.u32 %v1621, 4294901760
    %v8221 = vsub.f32 %v1621, %v8220
    %8222 = vmatpush1.msra.mxu0 %v8221
    %v8223 = vand.u32 %v1700, 4294901760
    %v8224 = vsub.f32 %v1700, %v8223
    %8225 = vmatprep.mubr.f32.mxu0 %v8224
    %v8226 = vand.u32 %v1698, 4294901760
    %v8227 = vsub.f32 %v1698, %v8226
    %8228 = vmatmul.mubr.f32.gmra.mrb[0].mxu0 %v8227
    %v8229 = vpop.f32.mrb[0].mxu0
    %v8230 = vadd.f32 %v8092, %v8229
    %v8231 = vpop.f32.mrb[0].mxu0
    %8232 = vdwg.mxu0
    %8233 = vmatprep.subr.mxu0 0.0
    %v8234 = vand.u32 %v1590, 4294901760
    %8235 = vmatpush1.msra.mxu0 %v8234
    %8236 = vmatprep.subr.mxu0 0.0
    %v8237 = vand.u32 %v1591, 4294901760
    %8238 = vmatpush1.msra.mxu0 %v8237
    %8239 = vmatprep.subr.mxu0 0.0
    %v8240 = vand.u32 %v1592, 4294901760
    %8241 = vmatpush1.msra.mxu0 %v8240
    %8242 = vmatprep.subr.mxu0 0.0
    %v8243 = vand.u32 %v1593, 4294901760
    %8244 = vmatpush1.msra.mxu0 %v8243
    %8245 = vmatprep.subr.mxu0 0.0
    %v8246 = vand.u32 %v1594, 4294901760
    %8247 = vmatpush1.msra.mxu0 %v8246
    %8248 = vmatprep.subr.mxu0 0.0
    %v8249 = vand.u32 %v1595, 4294901760
    %8250 = vmatpush1.msra.mxu0 %v8249
    %8251 = vmatprep.subr.mxu0 0.0
    %v8252 = vand.u32 %v1596, 4294901760
    %8253 = vmatpush1.msra.mxu0 %v8252
    %8254 = vmatprep.subr.mxu0 0.0
    %v8255 = vand.u32 %v1597, 4294901760
    %8256 = vmatpush1.msra.mxu0 %v8255
    %8257 = vmatprep.subr.mxu0 0.0
    %v8258 = vand.u32 %v1598, 4294901760
    %8259 = vmatpush1.msra.mxu0 %v8258
    %8260 = vmatprep.subr.mxu0 0.0
    %v8261 = vand.u32 %v1599, 4294901760
    %8262 = vmatpush1.msra.mxu0 %v8261
    %8263 = vmatprep.subr.mxu0 0.0
    %v8264 = vand.u32 %v1600, 4294901760
    %8265 = vmatpush1.msra.mxu0 %v8264
    %8266 = vmatprep.subr.mxu0 0.0
    %v8267 = vand.u32 %v1601, 4294901760
    %8268 = vmatpush1.msra.mxu0 %v8267
    %8269 = vmatprep.subr.mxu0 0.0
    %v8270 = vand.u32 %v1602, 4294901760
    %8271 = vmatpush1.msra.mxu0 %v8270
    %8272 = vmatprep.subr.mxu0 0.0
    %v8273 = vand.u32 %v1603, 4294901760
    %8274 = vmatpush1.msra.mxu0 %v8273
    %8275 = vmatprep.subr.mxu0 0.0
    %v8276 = vand.u32 %v1604, 4294901760
    %8277 = vmatpush1.msra.mxu0 %v8276
    %8278 = vmatprep.subr.mxu0 0.0
    %v8279 = vand.u32 %v1605, 4294901760
    %8280 = vmatpush1.msra.mxu0 %v8279
    %8281 = vmatprep.subr.mxu0 0.0
    %v8282 = vand.u32 %v1606, 4294901760
    %8283 = vmatpush1.msra.mxu0 %v8282
    %8284 = vmatprep.subr.mxu0 0.0
    %v8285 = vand.u32 %v1607, 4294901760
    %8286 = vmatpush1.msra.mxu0 %v8285
    %8287 = vmatprep.subr.mxu0 0.0
    %v8288 = vand.u32 %v1608, 4294901760
    %8289 = vmatpush1.msra.mxu0 %v8288
    %8290 = vmatprep.subr.mxu0 0.0
    %v8291 = vand.u32 %v1609, 4294901760
    %8292 = vmatpush1.msra.mxu0 %v8291
    %8293 = vmatprep.subr.mxu0 0.0
    %v8294 = vand.u32 %v1610, 4294901760
    %8295 = vmatpush1.msra.mxu0 %v8294
    %8296 = vmatprep.subr.mxu0 0.0
    %v8297 = vand.u32 %v1611, 4294901760
    %8298 = vmatpush1.msra.mxu0 %v8297
    %8299 = vmatprep.subr.mxu0 0.0
    %v8300 = vand.u32 %v1612, 4294901760
    %8301 = vmatpush1.msra.mxu0 %v8300
    %8302 = vmatprep.subr.mxu0 0.0
    %v8303 = vand.u32 %v1613, 4294901760
    %8304 = vmatpush1.msra.mxu0 %v8303
    %8305 = vmatprep.subr.mxu0 0.0
    %v8306 = vand.u32 %v1614, 4294901760
    %8307 = vmatpush1.msra.mxu0 %v8306
    %8308 = vmatprep.subr.mxu0 0.0
    %v8309 = vand.u32 %v1615, 4294901760
    %8310 = vmatpush1.msra.mxu0 %v8309
    %8311 = vmatprep.subr.mxu0 0.0
    %v8312 = vand.u32 %v1616, 4294901760
    %8313 = vmatpush1.msra.mxu0 %v8312
    %8314 = vmatprep.subr.mxu0 0.0
    %v8315 = vand.u32 %v1617, 4294901760
    %8316 = vmatpush1.msra.mxu0 %v8315
    %8317 = vmatprep.subr.mxu0 0.0
    %v8318 = vand.u32 %v1618, 4294901760
    %8319 = vmatpush1.msra.mxu0 %v8318
    %8320 = vmatprep.subr.mxu0 0.0
    %v8321 = vand.u32 %v1619, 4294901760
    %8322 = vmatpush1.msra.mxu0 %v8321
    %8323 = vmatprep.subr.mxu0 0.0
    %v8324 = vand.u32 %v1620, 4294901760
    %8325 = vmatpush1.msra.mxu0 %v8324
    %8326 = vmatprep.subr.mxu0 0.0
    %v8327 = vand.u32 %v1621, 4294901760
    %8328 = vmatpush1.msra.mxu0 %v8327
    %v8329 = vand.u32 %v1700, 4294901760
    %v8330 = vsub.f32 %v1700, %v8329
    %v8331 = vand.u32 %v8330, 4294901760
    %8332 = vmatprep.mubr.f32.mxu0 %v8331
    %v8333 = vand.u32 %v1698, 4294901760
    %v8334 = vsub.f32 %v1698, %v8333
    %v8335 = vand.u32 %v8334, 4294901760
    %8336 = vmatmul.mubr.f32.gmra.mrb[0].mxu0 %v8335
    %v8337 = vpop.f32.mrb[0].mxu0
    %v8338 = vadd.f32 %v8230, %v8337
    %v8339 = vpop.f32.mrb[0].mxu0
    %8340 = vdwg.mxu0
    %8341 = vmatprep.subr.mxu0 0.0
    %v8342 = vand.u32 %v1590, 4294901760
    %v8343 = vsub.f32 %v1590, %v8342
    %v8344 = vand.u32 %v8343, 4294901760
    %8345 = vmatpush1.msra.mxu0 %v8344
    %8346 = vmatprep.subr.mxu0 0.0
    %v8347 = vand.u32 %v1591, 4294901760
    %v8348 = vsub.f32 %v1591, %v8347
    %v8349 = vand.u32 %v8348, 4294901760
    %8350 = vmatpush1.msra.mxu0 %v8349
    %8351 = vmatprep.subr.mxu0 0.0
    %v8352 = vand.u32 %v1592, 4294901760
    %v8353 = vsub.f32 %v1592, %v8352
    %v8354 = vand.u32 %v8353, 4294901760
    %8355 = vmatpush1.msra.mxu0 %v8354
    %8356 = vmatprep.subr.mxu0 0.0
    %v8357 = vand.u32 %v1593, 4294901760
    %v8358 = vsub.f32 %v1593, %v8357
    %v8359 = vand.u32 %v8358, 4294901760
    %8360 = vmatpush1.msra.mxu0 %v8359
    %8361 = vmatprep.subr.mxu0 0.0
    %v8362 = vand.u32 %v1594, 4294901760
    %v8363 = vsub.f32 %v1594, %v8362
    %v8364 = vand.u32 %v8363, 4294901760
    %8365 = vmatpush1.msra.mxu0 %v8364
    %8366 = vmatprep.subr.mxu0 0.0
    %v8367 = vand.u32 %v1595, 4294901760
    %v8368 = vsub.f32 %v1595, %v8367
    %v8369 = vand.u32 %v8368, 4294901760
    %8370 = vmatpush1.msra.mxu0 %v8369
    %8371 = vmatprep.subr.mxu0 0.0
    %v8372 = vand.u32 %v1596, 4294901760
    %v8373 = vsub.f32 %v1596, %v8372
    %v8374 = vand.u32 %v8373, 4294901760
    %8375 = vmatpush1.msra.mxu0 %v8374
    %8376 = vmatprep.subr.mxu0 0.0
    %v8377 = vand.u32 %v1597, 4294901760
    %v8378 = vsub.f32 %v1597, %v8377
    %v8379 = vand.u32 %v8378, 4294901760
    %8380 = vmatpush1.msra.mxu0 %v8379
    %8381 = vmatprep.subr.mxu0 0.0
    %v8382 = vand.u32 %v1598, 4294901760
    %v8383 = vsub.f32 %v1598, %v8382
    %v8384 = vand.u32 %v8383, 4294901760
    %8385 = vmatpush1.msra.mxu0 %v8384
    %8386 = vmatprep.subr.mxu0 0.0
    %v8387 = vand.u32 %v1599, 4294901760
    %v8388 = vsub.f32 %v1599, %v8387
    %v8389 = vand.u32 %v8388, 4294901760
    %8390 = vmatpush1.msra.mxu0 %v8389
    %8391 = vmatprep.subr.mxu0 0.0
    %v8392 = vand.u32 %v1600, 4294901760
    %v8393 = vsub.f32 %v1600, %v8392
    %v8394 = vand.u32 %v8393, 4294901760
    %8395 = vmatpush1.msra.mxu0 %v8394
    %8396 = vmatprep.subr.mxu0 0.0
    %v8397 = vand.u32 %v1601, 4294901760
    %v8398 = vsub.f32 %v1601, %v8397
    %v8399 = vand.u32 %v8398, 4294901760
    %8400 = vmatpush1.msra.mxu0 %v8399
    %8401 = vmatprep.subr.mxu0 0.0
    %v8402 = vand.u32 %v1602, 4294901760
    %v8403 = vsub.f32 %v1602, %v8402
    %v8404 = vand.u32 %v8403, 4294901760
    %8405 = vmatpush1.msra.mxu0 %v8404
    %8406 = vmatprep.subr.mxu0 0.0
    %v8407 = vand.u32 %v1603, 4294901760
    %v8408 = vsub.f32 %v1603, %v8407
    %v8409 = vand.u32 %v8408, 4294901760
    %8410 = vmatpush1.msra.mxu0 %v8409
    %8411 = vmatprep.subr.mxu0 0.0
    %v8412 = vand.u32 %v1604, 4294901760
    %v8413 = vsub.f32 %v1604, %v8412
    %v8414 = vand.u32 %v8413, 4294901760
    %8415 = vmatpush1.msra.mxu0 %v8414
    %8416 = vmatprep.subr.mxu0 0.0
    %v8417 = vand.u32 %v1605, 4294901760
    %v8418 = vsub.f32 %v1605, %v8417
    %v8419 = vand.u32 %v8418, 4294901760
    %8420 = vmatpush1.msra.mxu0 %v8419
    %8421 = vmatprep.subr.mxu0 0.0
    %v8422 = vand.u32 %v1606, 4294901760
    %v8423 = vsub.f32 %v1606, %v8422
    %v8424 = vand.u32 %v8423, 4294901760
    %8425 = vmatpush1.msra.mxu0 %v8424
    %8426 = vmatprep.subr.mxu0 0.0
    %v8427 = vand.u32 %v1607, 4294901760
    %v8428 = vsub.f32 %v1607, %v8427
    %v8429 = vand.u32 %v8428, 4294901760
    %8430 = vmatpush1.msra.mxu0 %v8429
    %8431 = vmatprep.subr.mxu0 0.0
    %v8432 = vand.u32 %v1608, 4294901760
    %v8433 = vsub.f32 %v1608, %v8432
    %v8434 = vand.u32 %v8433, 4294901760
    %8435 = vmatpush1.msra.mxu0 %v8434
    %8436 = vmatprep.subr.mxu0 0.0
    %v8437 = vand.u32 %v1609, 4294901760
    %v8438 = vsub.f32 %v1609, %v8437
    %v8439 = vand.u32 %v8438, 4294901760
    %8440 = vmatpush1.msra.mxu0 %v8439
    %8441 = vmatprep.subr.mxu0 0.0
    %v8442 = vand.u32 %v1610, 4294901760
    %v8443 = vsub.f32 %v1610, %v8442
    %v8444 = vand.u32 %v8443, 4294901760
    %8445 = vmatpush1.msra.mxu0 %v8444
    %8446 = vmatprep.subr.mxu0 0.0
    %v8447 = vand.u32 %v1611, 4294901760
    %v8448 = vsub.f32 %v1611, %v8447
    %v8449 = vand.u32 %v8448, 4294901760
    %8450 = vmatpush1.msra.mxu0 %v8449
    %8451 = vmatprep.subr.mxu0 0.0
    %v8452 = vand.u32 %v1612, 4294901760
    %v8453 = vsub.f32 %v1612, %v8452
    %v8454 = vand.u32 %v8453, 4294901760
    %8455 = vmatpush1.msra.mxu0 %v8454
    %8456 = vmatprep.subr.mxu0 0.0
    %v8457 = vand.u32 %v1613, 4294901760
    %v8458 = vsub.f32 %v1613, %v8457
    %v8459 = vand.u32 %v8458, 4294901760
    %8460 = vmatpush1.msra.mxu0 %v8459
    %8461 = vmatprep.subr.mxu0 0.0
    %v8462 = vand.u32 %v1614, 4294901760
    %v8463 = vsub.f32 %v1614, %v8462
    %v8464 = vand.u32 %v8463, 4294901760
    %8465 = vmatpush1.msra.mxu0 %v8464
    %8466 = vmatprep.subr.mxu0 0.0
    %v8467 = vand.u32 %v1615, 4294901760
    %v8468 = vsub.f32 %v1615, %v8467
    %v8469 = vand.u32 %v8468, 4294901760
    %8470 = vmatpush1.msra.mxu0 %v8469
    %8471 = vmatprep.subr.mxu0 0.0
    %v8472 = vand.u32 %v1616, 4294901760
    %v8473 = vsub.f32 %v1616, %v8472
    %v8474 = vand.u32 %v8473, 4294901760
    %8475 = vmatpush1.msra.mxu0 %v8474
    %8476 = vmatprep.subr.mxu0 0.0
    %v8477 = vand.u32 %v1617, 4294901760
    %v8478 = vsub.f32 %v1617, %v8477
    %v8479 = vand.u32 %v8478, 4294901760
    %8480 = vmatpush1.msra.mxu0 %v8479
    %8481 = vmatprep.subr.mxu0 0.0
    %v8482 = vand.u32 %v1618, 4294901760
    %v8483 = vsub.f32 %v1618, %v8482
    %v8484 = vand.u32 %v8483, 4294901760
    %8485 = vmatpush1.msra.mxu0 %v8484
    %8486 = vmatprep.subr.mxu0 0.0
    %v8487 = vand.u32 %v1619, 4294901760
    %v8488 = vsub.f32 %v1619, %v8487
    %v8489 = vand.u32 %v8488, 4294901760
    %8490 = vmatpush1.msra.mxu0 %v8489
    %8491 = vmatprep.subr.mxu0 0.0
    %v8492 = vand.u32 %v1620, 4294901760
    %v8493 = vsub.f32 %v1620, %v8492
    %v8494 = vand.u32 %v8493, 4294901760
    %8495 = vmatpush1.msra.mxu0 %v8494
    %8496 = vmatprep.subr.mxu0 0.0
    %v8497 = vand.u32 %v1621, 4294901760
    %v8498 = vsub.f32 %v1621, %v8497
    %v8499 = vand.u32 %v8498, 4294901760
    %8500 = vmatpush1.msra.mxu0 %v8499
    %v8501 = vand.u32 %v1700, 4294901760
    %8502 = vmatprep.mubr.f32.mxu0 %v8501
    %v8503 = vand.u32 %v1698, 4294901760
    %8504 = vmatmul.mubr.f32.gmra.mrb[0].mxu0 %v8503
    %v8505 = vpop.f32.mrb[0].mxu0
    %v8506 = vadd.f32 %v8338, %v8505
    %v8507 = vpop.f32.mrb[0].mxu0
    %8508 = vdwg.mxu0
    %8509 = vmatprep.subr.mxu0 0.0
    %v8510 = vand.u32 %v1590, 4294901760
    %8511 = vmatpush1.msra.mxu0 %v8510
    %8512 = vmatprep.subr.mxu0 0.0
    %v8513 = vand.u32 %v1591, 4294901760
    %8514 = vmatpush1.msra.mxu0 %v8513
    %8515 = vmatprep.subr.mxu0 0.0
    %v8516 = vand.u32 %v1592, 4294901760
    %8517 = vmatpush1.msra.mxu0 %v8516
    %8518 = vmatprep.subr.mxu0 0.0
    %v8519 = vand.u32 %v1593, 4294901760
    %8520 = vmatpush1.msra.mxu0 %v8519
    %8521 = vmatprep.subr.mxu0 0.0
    %v8522 = vand.u32 %v1594, 4294901760
    %8523 = vmatpush1.msra.mxu0 %v8522
    %8524 = vmatprep.subr.mxu0 0.0
    %v8525 = vand.u32 %v1595, 4294901760
    %8526 = vmatpush1.msra.mxu0 %v8525
    %8527 = vmatprep.subr.mxu0 0.0
    %v8528 = vand.u32 %v1596, 4294901760
    %8529 = vmatpush1.msra.mxu0 %v8528
    %8530 = vmatprep.subr.mxu0 0.0
    %v8531 = vand.u32 %v1597, 4294901760
    %8532 = vmatpush1.msra.mxu0 %v8531
    %8533 = vmatprep.subr.mxu0 0.0
    %v8534 = vand.u32 %v1598, 4294901760
    %8535 = vmatpush1.msra.mxu0 %v8534
    %8536 = vmatprep.subr.mxu0 0.0
    %v8537 = vand.u32 %v1599, 4294901760
    %8538 = vmatpush1.msra.mxu0 %v8537
    %8539 = vmatprep.subr.mxu0 0.0
    %v8540 = vand.u32 %v1600, 4294901760
    %8541 = vmatpush1.msra.mxu0 %v8540
    %8542 = vmatprep.subr.mxu0 0.0
    %v8543 = vand.u32 %v1601, 4294901760
    %8544 = vmatpush1.msra.mxu0 %v8543
    %8545 = vmatprep.subr.mxu0 0.0
    %v8546 = vand.u32 %v1602, 4294901760
    %8547 = vmatpush1.msra.mxu0 %v8546
    %8548 = vmatprep.subr.mxu0 0.0
    %v8549 = vand.u32 %v1603, 4294901760
    %8550 = vmatpush1.msra.mxu0 %v8549
    %8551 = vmatprep.subr.mxu0 0.0
    %v8552 = vand.u32 %v1604, 4294901760
    %8553 = vmatpush1.msra.mxu0 %v8552
    %8554 = vmatprep.subr.mxu0 0.0
    %v8555 = vand.u32 %v1605, 4294901760
    %8556 = vmatpush1.msra.mxu0 %v8555
    %8557 = vmatprep.subr.mxu0 0.0
    %v8558 = vand.u32 %v1606, 4294901760
    %8559 = vmatpush1.msra.mxu0 %v8558
    %8560 = vmatprep.subr.mxu0 0.0
    %v8561 = vand.u32 %v1607, 4294901760
    %8562 = vmatpush1.msra.mxu0 %v8561
    %8563 = vmatprep.subr.mxu0 0.0
    %v8564 = vand.u32 %v1608, 4294901760
    %8565 = vmatpush1.msra.mxu0 %v8564
    %8566 = vmatprep.subr.mxu0 0.0
    %v8567 = vand.u32 %v1609, 4294901760
    %8568 = vmatpush1.msra.mxu0 %v8567
    %8569 = vmatprep.subr.mxu0 0.0
    %v8570 = vand.u32 %v1610, 4294901760
    %8571 = vmatpush1.msra.mxu0 %v8570
    %8572 = vmatprep.subr.mxu0 0.0
    %v8573 = vand.u32 %v1611, 4294901760
    %8574 = vmatpush1.msra.mxu0 %v8573
    %8575 = vmatprep.subr.mxu0 0.0
    %v8576 = vand.u32 %v1612, 4294901760
    %8577 = vmatpush1.msra.mxu0 %v8576
    %8578 = vmatprep.subr.mxu0 0.0
    %v8579 = vand.u32 %v1613, 4294901760
    %8580 = vmatpush1.msra.mxu0 %v8579
    %8581 = vmatprep.subr.mxu0 0.0
    %v8582 = vand.u32 %v1614, 4294901760
    %8583 = vmatpush1.msra.mxu0 %v8582
    %8584 = vmatprep.subr.mxu0 0.0
    %v8585 = vand.u32 %v1615, 4294901760
    %8586 = vmatpush1.msra.mxu0 %v8585
    %8587 = vmatprep.subr.mxu0 0.0
    %v8588 = vand.u32 %v1616, 4294901760
    %8589 = vmatpush1.msra.mxu0 %v8588
    %8590 = vmatprep.subr.mxu0 0.0
    %v8591 = vand.u32 %v1617, 4294901760
    %8592 = vmatpush1.msra.mxu0 %v8591
    %8593 = vmatprep.subr.mxu0 0.0
    %v8594 = vand.u32 %v1618, 4294901760
    %8595 = vmatpush1.msra.mxu0 %v8594
    %8596 = vmatprep.subr.mxu0 0.0
    %v8597 = vand.u32 %v1619, 4294901760
    %8598 = vmatpush1.msra.mxu0 %v8597
    %8599 = vmatprep.subr.mxu0 0.0
    %v8600 = vand.u32 %v1620, 4294901760
    %8601 = vmatpush1.msra.mxu0 %v8600
    %8602 = vmatprep.subr.mxu0 0.0
    %v8603 = vand.u32 %v1621, 4294901760
    %8604 = vmatpush1.msra.mxu0 %v8603
    %v8605 = vand.u32 %v1700, 4294901760
    %8606 = vmatprep.mubr.f32.mxu0 %v8605
    %v8607 = vand.u32 %v1698, 4294901760
    %8608 = vmatmul.mubr.f32.gmra.mrb[0].mxu0 %v8607
    %v8609 = vpop.f32.mrb[0].mxu0
    %v8610 = vadd.f32 %v8506, %v8609
    %v8611 = vpop.f32.mrb[0].mxu0
    %8612 = vdwg.mxu0
    %vm8613 = vcmask 74752
    %8614 = vst.msk [vmem:[#allocation3] sm:$0x3] %vm8613, %v8610
    // Predicated region
    $region22: #{wrapped_module_forward.1} parent=1 // pred_check
      _
    $region23: #{wrapped_module_forward.1} parent=1 // pred_check_branch
      %8616 = sbr.rel (0) target = $region25
    $region24: #{wrapped_module_forward.1} parent=1 // pred_region
      %s8618 = ssub.s32 32, 32
      %8619 = vsyncadd [#allocation4], %s8618
      %s8621 = sshll.u32 [#allocation3], 4
      %s8622 = int_to_ptr.vmem [resolvable:$true] %s8621
      %8624 = dma.vmem_to_hbm [thread:$0]  %s8622, 32, %s5, [#allocation4]
    $region25: #{wrapped_module_forward.1} parent=1 // pred_fallthru
      _
    // Predicated region
    $region26: #{wrapped_module_forward.1} parent=1 // pred_check
      _
    $region27: #{wrapped_module_forward.1} parent=1 // pred_check_branch
      %8626 = sbr.rel (0) target = $region29
    $region28: #{wrapped_module_forward.1} parent=1 // pred_region
      %8627 = dma.done [#allocation4], 32
    $region29: #{wrapped_module_forward.1} parent=1 // pred_fallthru
      _
    %8628 = vsyncpa [#allocation4], 1

</llo_original>
